<compile_context>
chip_gen: v7x
topology: tpu7x:2x2x1
jax: 0.10.0
libtpu: 0.0.40
codegen_flags: <defaults>
</compile_context>

<pallas_src>
import math
from functools import partial

import jax
import jax.numpy as jnp
from jax import lax
from jax.experimental import pallas as pl
from jax.experimental.pallas import tpu as pltpu

EPS = 1e-5
NEG_INF = -1e30          # finite causal-mask fill (softmax-safe, matches -inf result)


# --------------- fused norm1 + differential attention + residual ----------- #
def _mhda_kernel(lam_ref, xcn_ref, xres_ref, n1s_ref, samerow_ref,
                 wq_ref, wk_ref, wv_ref, wo_ref, rs_ref,
                 o_ref, xn_ref, *, W, d_head, lambda_init):
    h = pl.program_id(1)

    @pl.when(h == 0)
    def _init():
        # ---- fused RMSNorm (norm1) in channel-major layout ----------------
        # x[b] is (C, N) with N = H*W; norm1 normalizes each W-sized chunk of
        # the N axis per channel.  The chunk mean-square is computed with a
        # block-diagonal ones matmul (no in-kernel reshape / int-div needed).
        x_cn = xcn_ref[0]                                           # (C, N) f32
        ms = jnp.dot(x_cn * x_cn, samerow_ref[...],
                     preferred_element_type=jnp.float32) * (1.0 / W)
        xn_cn = x_cn * lax.rsqrt(ms + EPS) * n1s_ref[...]           # (C, N)
        # ---- transpose once per batch to the (N, d_model) sequence view ---
        xn_ref[...] = jnp.transpose(xn_cn, (1, 0)).astype(jnp.bfloat16)
        # seed the output block with the residual (raw-reshaped original x)
        o_ref[0] = xres_ref[0]

    xn = xn_ref[...]                                                # (N, d_model) bf16
    N = xn.shape[0]

    wq = wq_ref[0]                                                  # (d_model, 2*d_head) bf16
    wk = wk_ref[0]
    wv = wv_ref[0]
    wo = wo_ref[0]                                                  # (2*d_head, d_model) bf16

    # per-head projections (bf16 MXU, f32 accumulation)
    qh = jnp.dot(xn, wq, preferred_element_type=jnp.float32)        # (N, 2*d_head)
    kh = jnp.dot(xn, wk, preferred_element_type=jnp.float32)
    vh = jnp.dot(xn, wv, preferred_element_type=jnp.float32)

    q1 = qh[:, :d_head].astype(jnp.bfloat16)
    q2 = qh[:, d_head:].astype(jnp.bfloat16)
    k1 = kh[:, :d_head].astype(jnp.bfloat16)
    k2 = kh[:, d_head:].astype(jnp.bfloat16)

    row = lax.broadcasted_iota(jnp.int32, (N, N), 0)
    col = lax.broadcasted_iota(jnp.int32, (N, N), 1)
    bias = jnp.where(row >= col, 0.0, NEG_INF).astype(jnp.float32)  # causal mask

    scaling = 1.0 / math.sqrt(d_head)
    dn = (((1,), (1,)), ((), ()))                                   # Q @ K^T
    a1 = lax.dot_general(q1, k1, dn, preferred_element_type=jnp.float32) * scaling + bias
    a2 = lax.dot_general(q2, k2, dn, preferred_element_type=jnp.float32) * scaling + bias

    def softmax(a):                                                 # stats in f32
        m = jnp.max(a, axis=-1, keepdims=True)
        e = jnp.exp(a - m)
        return e * pl.reciprocal(jnp.sum(e, axis=-1, keepdims=True), approx=True)

    lam = lam_ref[h]                                                # scalar from SMEM
    attn = softmax(a1) - lam * softmax(a2)                          # (N, N) f32

    oh = jnp.dot(attn.astype(jnp.bfloat16), vh.astype(jnp.bfloat16),
                 preferred_element_type=jnp.float32)                # (N, 2*d_head)

    # per-(batch*head) sub-RMSNorm over the 2*d_head dim
    ms_o = jnp.mean(oh * oh, axis=-1, keepdims=True)
    ohn = oh * lax.rsqrt(ms_o + EPS) * rs_ref[...] * (1.0 - lambda_init)

    # per-head output projection accumulated straight into the f32 output block
    o_ref[0] = o_ref[0] + jnp.dot(ohn.astype(jnp.bfloat16), wo,
                                  preferred_element_type=jnp.float32)


def mhda_fused(x, params, *, num_heads, lambda_init):
    """Fused norm1 + differential attention + residual.

    x: (B, C, H, W) f32 with C == W == d_model.  Returns y as (B, N, d_model),
    a raw reshape of the residual-added NCHW output (PyTorch `.view` quirk).
    """
    B, C, H, W = x.shape
    d_model = C
    d_head = d_model // num_heads
    N = H * W

    # per-head lambda scalars (tiny scalar compute -> plain JAX glue, SMEM in-kernel)
    lam = (jnp.exp(jnp.sum(params["lambda_q1"] * params["lambda_k1"], axis=-1))
           - jnp.exp(jnp.sum(params["lambda_q2"] * params["lambda_k2"], axis=-1))
           + lambda_init).astype(jnp.float32)                       # (num_heads,)

    # per-head, bf16 weight blocks -> lane-dense per-head GEMMs, no concat
    wq_h = params["wq_t"].reshape(d_model, num_heads, 2 * d_head).transpose(1, 0, 2).astype(jnp.bfloat16)
    wk_h = params["wk_t"].reshape(d_model, num_heads, 2 * d_head).transpose(1, 0, 2).astype(jnp.bfloat16)
    wv_h = params["wv_t"].reshape(d_model, num_heads, 2 * d_head).transpose(1, 0, 2).astype(jnp.bfloat16)
    wo_h = params["wo_t"].reshape(num_heads, 2 * d_head, d_model).astype(jnp.bfloat16)

    x_cn = x.reshape(B, C, N)                      # channel-major view (free reshape)
    x_res = x.reshape(B, N, d_model)               # raw residual view   (free reshape)
    n1s = jnp.tile(params["norm1_scale"], H).reshape(1, N)     # norm1 scale per column
    rs = params["rms_scale"].reshape(1, 2 * d_head)
    pos = jnp.arange(N, dtype=jnp.int32) // W
    same_row = (pos[:, None] == pos[None, :]).astype(jnp.float32)   # (N, N) block-diag ones

    kernel = partial(_mhda_kernel, W=W, d_head=d_head, lambda_init=lambda_init)
    return pl.pallas_call(
        kernel,
        out_shape=jax.ShapeDtypeStruct((B, N, d_model), jnp.float32),
        grid=(B, num_heads),
        in_specs=[
            pl.BlockSpec(memory_space=pltpu.MemorySpace.SMEM),               # lambda per head
            pl.BlockSpec((1, C, N), lambda b, h: (b, 0, 0)),                 # x (channel-major)
            pl.BlockSpec((1, N, d_model), lambda b, h: (b, 0, 0)),           # residual view
            pl.BlockSpec((1, N), lambda b, h: (0, 0)),                       # tiled norm1 scale
            pl.BlockSpec((N, N), lambda b, h: (0, 0)),                       # block-diag ones
            pl.BlockSpec((1, d_model, 2 * d_head), lambda b, h: (h, 0, 0)),  # Wq (head h)
            pl.BlockSpec((1, d_model, 2 * d_head), lambda b, h: (h, 0, 0)),  # Wk (head h)
            pl.BlockSpec((1, d_model, 2 * d_head), lambda b, h: (h, 0, 0)),  # Wv (head h)
            pl.BlockSpec((1, 2 * d_head, d_model), lambda b, h: (h, 0, 0)),  # Wo (head h)
            pl.BlockSpec((1, 2 * d_head), lambda b, h: (0, 0)),              # sub-RMS scale
        ],
        out_specs=pl.BlockSpec((1, N, d_model), lambda b, h: (b, 0, 0)),
        scratch_shapes=[pltpu.VMEM((N, d_model), jnp.bfloat16)],             # normed x (cached)
        compiler_params=pltpu.CompilerParams(
            dimension_semantics=("parallel", "arbitrary"),
            vmem_limit_bytes=64 * 1024 * 1024),
    )(lam, x_cn, x_res, n1s, same_row, wq_h, wk_h, wv_h, wo_h, rs)


# ------------------- fused norm2 + SwiGLU + residual kernel ---------------- #
def _ffn_kernel(y_ref, n2s_ref, wg_ref, bg_ref, w1_ref, b1_ref, w2_ref, b2_ref, o_ref):
    y = y_ref[...]                                                  # (tile_m, D) f32
    ms = jnp.mean(y * y, axis=-1, keepdims=True)
    yn = (y * lax.rsqrt(ms + EPS) * n2s_ref[...]).astype(jnp.bfloat16)
    u = jnp.dot(yn, wg_ref[...], preferred_element_type=jnp.float32) + bg_ref[...]
    g = u * pl.reciprocal(1.0 + jnp.exp(-u), approx=True)           # silu (EUP exp + recip)
    z = jnp.dot(yn, w1_ref[...], preferred_element_type=jnp.float32) + b1_ref[...]
    ff = jnp.dot((g * z).astype(jnp.bfloat16), w2_ref[...],
                 preferred_element_type=jnp.float32) + b2_ref[...]
    o_ref[...] = ff + y                                             # fused residual


def _pick_tile_m(M):
    for t in (512, 256, 128, 64, 32, 16, 8):
        if M % t == 0:
            return t
    return M


def ffn_fused(y2d, params):
    """Fused norm2 + SwiGLU + residual over rows (M, D)."""
    M, D = y2d.shape
    D2 = 2 * D
    tile_m = _pick_tile_m(M)
    wg = params["wg_t"].astype(jnp.bfloat16)
    w1 = params["w1_t"].astype(jnp.bfloat16)
    w2 = params["w2_t"].astype(jnp.bfloat16)
    return pl.pallas_call(
        _ffn_kernel,
        out_shape=jax.ShapeDtypeStruct((M, D), jnp.float32),
        grid=(M // tile_m,),
        in_specs=[
            pl.BlockSpec((tile_m, D), lambda i: (i, 0)),
            pl.BlockSpec((1, D), lambda i: (0, 0)),
            pl.BlockSpec((D, D2), lambda i: (0, 0)),
            pl.BlockSpec((1, D2), lambda i: (0, 0)),
            pl.BlockSpec((D, D2), lambda i: (0, 0)),
            pl.BlockSpec((1, D2), lambda i: (0, 0)),
            pl.BlockSpec((D2, D), lambda i: (0, 0)),
            pl.BlockSpec((1, D), lambda i: (0, 0)),
        ],
        out_specs=pl.BlockSpec((tile_m, D), lambda i: (i, 0)),
        compiler_params=pltpu.CompilerParams(
            dimension_semantics=("parallel",),
            vmem_limit_bytes=64 * 1024 * 1024),
    )(y2d, params["norm2_scale"].reshape(1, D), wg,
      params["bg"].reshape(1, D2), w1, params["b1"].reshape(1, D2),
      w2, params["b2"].reshape(1, D))


# ------------------------------ full layer glue ---------------------------- #
@partial(jax.jit, static_argnames=("num_heads", "lambda_init"))
def diff_transformer_layer(x, params, *, num_heads, lambda_init):
    B, C, H, W = x.shape
    assert W == C, "layer requires C == W == d_model (as in the PyTorch code)"
    assert C % num_heads == 0

    # y = attn(norm1(x)) + x   -- norm1, transpose, attention, residual fused
    y_seq = mhda_fused(x, params, num_heads=num_heads, lambda_init=lambda_init)

    # z = ff(norm2(y)) + y     -- norm2, SwiGLU, residual fused
    # The PyTorch module raw-.view()s the (B, N, d_model) attention output back
    # to (B, C, H, W); both reshapes below are raw (free) views of that buffer.
    y_rows = y_seq.reshape(B * C * H, W)
    z = ffn_fused(y_rows, params)
    return z.reshape(B, C, H, W)


# ------------------------------ parameter init ----------------------------- #
def init_params(key, d_model, num_heads):
    d_head = d_model // num_heads
    ks = jax.random.split(key, 12)

    def xavier(k, shape):        # uniform(-lim, lim), lim = sqrt(6/(fan_in+fan_out))
        lim = math.sqrt(6.0 / (shape[0] + shape[1]))
        return jax.random.uniform(k, shape, jnp.float32, -lim, lim)

    def torch_linear(k, fan_in, shape):
        lim = 1.0 / math.sqrt(fan_in)
        return jax.random.uniform(k, shape, jnp.float32, -lim, lim)

    return {
        # projection weights stored pre-transposed: (in_dim, out_dim)
        "wq_t": xavier(ks[0], (d_model, 2 * d_model)),
        "wk_t": xavier(ks[1], (d_model, 2 * d_model)),
        "wv_t": xavier(ks[2], (d_model, 2 * d_model)),
        "wo_t": xavier(ks[3], (2 * d_model, d_model)),
        "lambda_q1": 0.1 * jax.random.normal(ks[4], (num_heads, d_head), jnp.float32),
        "lambda_k1": 0.1 * jax.random.normal(ks[5], (num_heads, d_head), jnp.float32),
        "lambda_q2": 0.1 * jax.random.normal(ks[6], (num_heads, d_head), jnp.float32),
        "lambda_k2": 0.1 * jax.random.normal(ks[7], (num_heads, d_head), jnp.float32),
        "rms_scale": jnp.ones((2 * d_head,), jnp.float32),
        "norm1_scale": jnp.ones((d_model,), jnp.float32),
        "norm2_scale": jnp.ones((d_model,), jnp.float32),
        # SwiGLU
        "wg_t": torch_linear(ks[8], d_model, (d_model, 2 * d_model)),
        "bg": jnp.zeros((2 * d_model,), jnp.float32),
        "w1_t": torch_linear(ks[9], d_model, (d_model, 2 * d_model)),
        "b1": jnp.zeros((2 * d_model,), jnp.float32),
        "w2_t": torch_linear(ks[10], 2 * d_model, (2 * d_model, d_model)),
        "b2": jnp.zeros((d_model,), jnp.float32),
    }


if __name__ == "__main__":
    # small shapes consistent with the module's implicit constraint C == W == d_model
    # (chosen lane-aligned: d_model = 128, N = H*W = 256)
    B, C, H, W = 2, 128, 2, 128
    d_model, num_heads, lambda_init = C, 2, 0.8

    key = jax.random.PRNGKey(0)
    kx, kp = jax.random.split(key)
    x = jax.random.normal(kx, (B, C, H, W), jnp.float32)
    params = init_params(kp, d_model, num_heads)

    out = diff_transformer_layer(x, params, num_heads=num_heads, lambda_init=lambda_init)
    out = jax.block_until_ready(out)
    assert out.shape == (B, C, H, W)
    assert bool(jnp.all(jnp.isfinite(out)))
    print("KERNEL_OK")
</pallas_src>

<mosaic_0001>
module attributes {stable_mosaic.version = 11 : i64} {
  func.func @_mhda_kernel(%arg0: i32, %arg1: i32, %arg2: memref<2xf32, #tpu.memory_space<smem>>, %arg3: memref<1x128x256xf32, #tpu.memory_space<vmem>>, %arg4: memref<1x256x128xf32, #tpu.memory_space<vmem>>, %arg5: memref<1x256xf32, #tpu.memory_space<vmem>>, %arg6: memref<256x256xf32, #tpu.memory_space<vmem>>, %arg7: memref<1x128x128xbf16, #tpu.memory_space<vmem>>, %arg8: memref<1x128x128xbf16, #tpu.memory_space<vmem>>, %arg9: memref<1x128x128xbf16, #tpu.memory_space<vmem>>, %arg10: memref<1x128x128xbf16, #tpu.memory_space<vmem>>, %arg11: memref<1x128xf32, #tpu.memory_space<vmem>>, %arg12: memref<1x256x128xf32, #tpu.memory_space<vmem>>, %arg13: memref<256x128xbf16, #tpu.memory_space<vmem>>) attributes {dimension_semantics = [#tpu.dimension_semantics<parallel>, #tpu.dimension_semantics<arbitrary>], iteration_bounds = array<i64: 2, 2>, scalar_prefetch = 0 : i64, scratch_operands = 1 : i64, tpu.core_type = #tpu.core_type<tc>, window_params = [{transform_indices = @transform_0, window_bounds = array<i64: 2>}, {transform_indices = @transform_1, window_bounds = array<i64: 1, 128, 256>}, {transform_indices = @transform_2, window_bounds = array<i64: 1, 256, 128>}, {pipeline_mode = #tpu.pipeline_mode<synchronous>, transform_indices = @transform_3, window_bounds = array<i64: 1, 256>}, {pipeline_mode = #tpu.pipeline_mode<synchronous>, transform_indices = @transform_4, window_bounds = array<i64: 256, 256>}, {transform_indices = @transform_5, window_bounds = array<i64: 1, 128, 128>}, {transform_indices = @transform_6, window_bounds = array<i64: 1, 128, 128>}, {transform_indices = @transform_7, window_bounds = array<i64: 1, 128, 128>}, {transform_indices = @transform_8, window_bounds = array<i64: 1, 128, 128>}, {pipeline_mode = #tpu.pipeline_mode<synchronous>, transform_indices = @transform_9, window_bounds = array<i64: 1, 128>}, {transform_indices = @transform_10, window_bounds = array<i64: 1, 256, 128>}]} {
    %c0_i32 = arith.constant 0 : i32
    %0 = arith.cmpi eq, %arg1, %c0_i32 : i32
    %1 = arith.extui %0 : i1 to i32
    %c0_i32_0 = arith.constant 0 : i32
    %2 = arith.cmpi ne, %1, %c0_i32_0 : i32
    scf.if %2 {
      %c0_40 = arith.constant 0 : index
      %c0_41 = arith.constant 0 : index
      %c0_42 = arith.constant 0 : index
      %88 = vector.load %arg3[%c0_40, %c0_41, %c0_42] : memref<1x128x256xf32, #tpu.memory_space<vmem>>, vector<1x128x256xf32>
      %89 = vector.shape_cast %88 : vector<1x128x256xf32> to vector<128x256xf32>
      %90 = arith.mulf %89, %89 : vector<128x256xf32>
      %c0_43 = arith.constant 0 : index
      %c0_44 = arith.constant 0 : index
      %91 = vector.load %arg6[%c0_43, %c0_44] : memref<256x256xf32, #tpu.memory_space<vmem>>, vector<256x256xf32>
      %cst_45 = arith.constant dense<0.000000e+00> : vector<128x256xf32>
      %92 = tpu.matmul %90, %91, %cst_45 {dimension_numbers = #tpu.dot_dimension_numbers<[1], [0], [0], [1], [0, 0, 1, 1], [], []>} : vector<128x256xf32>, vector<256x256xf32>, vector<128x256xf32> -> vector<128x256xf32>
      %cst_46 = arith.constant 7.812500e-03 : f32
      %93 = vector.broadcast %cst_46 : f32 to vector<128x256xf32>
      %94 = arith.mulf %92, %93 : vector<128x256xf32>
      %cst_47 = arith.constant 9.99999974E-6 : f32
      %95 = vector.broadcast %cst_47 : f32 to vector<128x256xf32>
      %96 = arith.addf %94, %95 : vector<128x256xf32>
      %97 = math.rsqrt %96 : vector<128x256xf32>
      %98 = arith.mulf %89, %97 : vector<128x256xf32>
      %c0_48 = arith.constant 0 : index
      %c0_49 = arith.constant 0 : index
      %99 = vector.load %arg5[%c0_48, %c0_49] : memref<1x256xf32, #tpu.memory_space<vmem>>, vector<1x256xf32>
      %100 = vector.broadcast %99 : vector<1x256xf32> to vector<128x256xf32>
      %101 = arith.mulf %98, %100 : vector<128x256xf32>
      %102 = tpu.transpose %101, [1, 0] : vector<128x256xf32> -> vector<256x128xf32>
      %103 = arith.truncf %102 : vector<256x128xf32> to vector<256x128xbf16>
      %c0_50 = arith.constant 0 : index
      %c0_51 = arith.constant 0 : index
      %104 = vector.load %arg13[%c0_50, %c0_51] : memref<256x128xbf16, #tpu.memory_space<vmem>>, vector<256x128xbf16>
      tpu.vector_store %arg13[%c0_50, %c0_51], %103 {strides = array<i32>} : memref<256x128xbf16, #tpu.memory_space<vmem>>, vector<256x128xbf16>,
      %c0_52 = arith.constant 0 : index
      %c0_53 = arith.constant 0 : index
      %c0_54 = arith.constant 0 : index
      %105 = vector.load %arg4[%c0_52, %c0_53, %c0_54] : memref<1x256x128xf32, #tpu.memory_space<vmem>>, vector<1x256x128xf32>
      %106 = vector.shape_cast %105 : vector<1x256x128xf32> to vector<256x128xf32>
      %c0_55 = arith.constant 0 : index
      %c0_56 = arith.constant 0 : index
      %c0_57 = arith.constant 0 : index
      %107 = vector.load %arg12[%c0_55, %c0_56, %c0_57] : memref<1x256x128xf32, #tpu.memory_space<vmem>>, vector<1x256x128xf32>
      %108 = vector.shape_cast %107 : vector<1x256x128xf32> to vector<256x128xf32>
      %109 = vector.shape_cast %106 : vector<256x128xf32> to vector<1x256x128xf32>
      tpu.vector_store %arg12[%c0_55, %c0_56, %c0_57], %109 {strides = array<i32>} : memref<1x256x128xf32, #tpu.memory_space<vmem>>, vector<1x256x128xf32>,
    } else {
    }
    %c0 = arith.constant 0 : index
    %c0_1 = arith.constant 0 : index
    %3 = vector.load %arg13[%c0, %c0_1] : memref<256x128xbf16, #tpu.memory_space<vmem>>, vector<256x128xbf16>
    %c0_2 = arith.constant 0 : index
    %c0_3 = arith.constant 0 : index
    %c0_4 = arith.constant 0 : index
    %4 = vector.load %arg7[%c0_2, %c0_3, %c0_4] : memref<1x128x128xbf16, #tpu.memory_space<vmem>>, vector<1x128x128xbf16>
    %5 = vector.shape_cast %4 : vector<1x128x128xbf16> to vector<128x128xbf16>
    %c0_5 = arith.constant 0 : index
    %c0_6 = arith.constant 0 : index
    %c0_7 = arith.constant 0 : index
    %6 = vector.load %arg8[%c0_5, %c0_6, %c0_7] : memref<1x128x128xbf16, #tpu.memory_space<vmem>>, vector<1x128x128xbf16>
    %7 = vector.shape_cast %6 : vector<1x128x128xbf16> to vector<128x128xbf16>
    %c0_8 = arith.constant 0 : index
    %c0_9 = arith.constant 0 : index
    %c0_10 = arith.constant 0 : index
    %8 = vector.load %arg9[%c0_8, %c0_9, %c0_10] : memref<1x128x128xbf16, #tpu.memory_space<vmem>>, vector<1x128x128xbf16>
    %9 = vector.shape_cast %8 : vector<1x128x128xbf16> to vector<128x128xbf16>
    %c0_11 = arith.constant 0 : index
    %c0_12 = arith.constant 0 : index
    %c0_13 = arith.constant 0 : index
    %10 = vector.load %arg10[%c0_11, %c0_12, %c0_13] : memref<1x128x128xbf16, #tpu.memory_space<vmem>>, vector<1x128x128xbf16>
    %11 = vector.shape_cast %10 : vector<1x128x128xbf16> to vector<128x128xbf16>
    %cst = arith.constant dense<0.000000e+00> : vector<256x128xf32>
    %12 = tpu.matmul %3, %5, %cst {dimension_numbers = #tpu.dot_dimension_numbers<[1], [0], [0], [1], [0, 0, 1, 1], [], []>} : vector<256x128xbf16>, vector<128x128xbf16>, vector<256x128xf32> -> vector<256x128xf32>
    %cst_14 = arith.constant dense<0.000000e+00> : vector<256x128xf32>
    %13 = tpu.matmul %3, %7, %cst_14 {dimension_numbers = #tpu.dot_dimension_numbers<[1], [0], [0], [1], [0, 0, 1, 1], [], []>} : vector<256x128xbf16>, vector<128x128xbf16>, vector<256x128xf32> -> vector<256x128xf32>
    %cst_15 = arith.constant dense<0.000000e+00> : vector<256x128xf32>
    %14 = tpu.matmul %3, %9, %cst_15 {dimension_numbers = #tpu.dot_dimension_numbers<[1], [0], [0], [1], [0, 0, 1, 1], [], []>} : vector<256x128xbf16>, vector<128x128xbf16>, vector<256x128xf32> -> vector<256x128xf32>
    %15 = vector.extract_strided_slice %12 {offsets = [0, 0], sizes = [256, 64], strides = [1, 1]} : vector<256x128xf32> to vector<256x64xf32>
    %16 = arith.truncf %15 : vector<256x64xf32> to vector<256x64xbf16>
    %17 = vector.extract_strided_slice %12 {offsets = [0, 64], sizes = [256, 64], strides = [1, 1]} : vector<256x128xf32> to vector<256x64xf32>
    %18 = arith.truncf %17 : vector<256x64xf32> to vector<256x64xbf16>
    %19 = vector.extract_strided_slice %13 {offsets = [0, 0], sizes = [256, 64], strides = [1, 1]} : vector<256x128xf32> to vector<256x64xf32>
    %20 = arith.truncf %19 : vector<256x64xf32> to vector<256x64xbf16>
    %21 = vector.extract_strided_slice %13 {offsets = [0, 64], sizes = [256, 64], strides = [1, 1]} : vector<256x128xf32> to vector<256x64xf32>
    %22 = arith.truncf %21 : vector<256x64xf32> to vector<256x64xbf16>
    %23 = tpu.iota {dimensions = array<i32: 0>} : vector<256x256xi32>
    %24 = tpu.iota {dimensions = array<i32: 1>} : vector<256x256xi32>
    %25 = arith.cmpi sge, %23, %24 : vector<256x256xi32>
    %cst_16 = arith.constant 0.000000e+00 : f32
    %cst_17 = arith.constant -1.000000e+30 : f32
    %26 = vector.broadcast %cst_16 : f32 to vector<256x256xf32>
    %27 = vector.broadcast %cst_17 : f32 to vector<256x256xf32>
    %28 = arith.select %25, %26, %27 : vector<256x256xi1>, vector<256x256xf32>
    %cst_18 = arith.constant dense<0.000000e+00> : vector<256x256xf32>
    %29 = tpu.matmul %16, %20, %cst_18 {dimension_numbers = #tpu.dot_dimension_numbers<[1], [1], [0], [0], [0, 0, 1, 0], [], []>} : vector<256x64xbf16>, vector<256x64xbf16>, vector<256x256xf32> -> vector<256x256xf32>
    %cst_19 = arith.constant 1.250000e-01 : f32
    %30 = vector.broadcast %cst_19 : f32 to vector<256x256xf32>
    %31 = arith.mulf %29, %30 : vector<256x256xf32>
    %32 = arith.addf %31, %28 : vector<256x256xf32>
    %cst_20 = arith.constant dense<0.000000e+00> : vector<256x256xf32>
    %33 = tpu.matmul %18, %22, %cst_20 {dimension_numbers = #tpu.dot_dimension_numbers<[1], [1], [0], [0], [0, 0, 1, 0], [], []>} : vector<256x64xbf16>, vector<256x64xbf16>, vector<256x256xf32> -> vector<256x256xf32>
    %cst_21 = arith.constant 1.250000e-01 : f32
    %34 = vector.broadcast %cst_21 : f32 to vector<256x256xf32>
    %35 = arith.mulf %33, %34 : vector<256x256xf32>
    %36 = arith.addf %35, %28 : vector<256x256xf32>
    %37 = arith.index_cast %arg1 : i32 to index
    %38 = memref.load %arg2[%37] : memref<2xf32, #tpu.memory_space<smem>>
    %cst_22 = arith.constant dense<0xFF800000> : vector<256xf32>
    %39 = vector.multi_reduction <maximumf>, %32, %cst_22 [1] : vector<256x256xf32> to vector<256xf32>
    %40 = vector.shape_cast %39 : vector<256xf32> to vector<256x1xf32>
    %41 = vector.broadcast %40 : vector<256x1xf32> to vector<256x256xf32>
    %42 = arith.subf %32, %41 : vector<256x256xf32>
    %43 = math.exp %42 : vector<256x256xf32>
    %cst_23 = arith.constant dense<0.000000e+00> : vector<256xf32>
    %44 = vector.multi_reduction <add>, %43, %cst_23 [1] : vector<256x256xf32> to vector<256xf32>
    %45 = vector.shape_cast %44 : vector<256xf32> to vector<256x1xf32>
    %46 = tpu.reciprocal %45 {approx = true} : vector<256x1xf32> -> vector<256x1xf32>
    %47 = vector.broadcast %46 : vector<256x1xf32> to vector<256x256xf32>
    %48 = arith.mulf %43, %47 : vector<256x256xf32>
    %cst_24 = arith.constant dense<0xFF800000> : vector<256xf32>
    %49 = vector.multi_reduction <maximumf>, %36, %cst_24 [1] : vector<256x256xf32> to vector<256xf32>
    %50 = vector.shape_cast %49 : vector<256xf32> to vector<256x1xf32>
    %51 = vector.broadcast %50 : vector<256x1xf32> to vector<256x256xf32>
    %52 = arith.subf %36, %51 : vector<256x256xf32>
    %53 = math.exp %52 : vector<256x256xf32>
    %cst_25 = arith.constant dense<0.000000e+00> : vector<256xf32>
    %54 = vector.multi_reduction <add>, %53, %cst_25 [1] : vector<256x256xf32> to vector<256xf32>
    %55 = vector.shape_cast %54 : vector<256xf32> to vector<256x1xf32>
    %56 = tpu.reciprocal %55 {approx = true} : vector<256x1xf32> -> vector<256x1xf32>
    %57 = vector.broadcast %56 : vector<256x1xf32> to vector<256x256xf32>
    %58 = arith.mulf %53, %57 : vector<256x256xf32>
    %59 = vector.broadcast %38 : f32 to vector<256x256xf32>
    %60 = arith.mulf %59, %58 : vector<256x256xf32>
    %61 = arith.subf %48, %60 : vector<256x256xf32>
    %62 = arith.truncf %61 : vector<256x256xf32> to vector<256x256xbf16>
    %63 = arith.truncf %14 : vector<256x128xf32> to vector<256x128xbf16>
    %cst_26 = arith.constant dense<0.000000e+00> : vector<256x128xf32>
    %64 = tpu.matmul %62, %63, %cst_26 {dimension_numbers = #tpu.dot_dimension_numbers<[1], [0], [0], [1], [0, 0, 1, 1], [], []>} : vector<256x256xbf16>, vector<256x128xbf16>, vector<256x128xf32> -> vector<256x128xf32>
    %65 = arith.mulf %64, %64 : vector<256x128xf32>
    %cst_27 = arith.constant dense<0.000000e+00> : vector<256xf32>
    %66 = vector.multi_reduction <add>, %65, %cst_27 [1] : vector<256x128xf32> to vector<256xf32>
    %67 = vector.shape_cast %66 : vector<256xf32> to vector<256x1xf32>
    %cst_28 = arith.constant 1.280000e+02 : f32
    %68 = vector.broadcast %cst_28 : f32 to vector<256x1xf32>
    %69 = arith.divf %67, %68 : vector<256x1xf32>
    %cst_29 = arith.constant 9.99999974E-6 : f32
    %70 = vector.broadcast %cst_29 : f32 to vector<256x1xf32>
    %71 = arith.addf %69, %70 : vector<256x1xf32>
    %72 = math.rsqrt %71 : vector<256x1xf32>
    %73 = vector.broadcast %72 : vector<256x1xf32> to vector<256x128xf32>
    %74 = arith.mulf %64, %73 : vector<256x128xf32>
    %c0_30 = arith.constant 0 : index
    %c0_31 = arith.constant 0 : index
    %75 = vector.load %arg11[%c0_30, %c0_31] : memref<1x128xf32, #tpu.memory_space<vmem>>, vector<1x128xf32>
    %76 = vector.broadcast %75 : vector<1x128xf32> to vector<256x128xf32>
    %77 = arith.mulf %74, %76 : vector<256x128xf32>
    %cst_32 = arith.constant 2.000000e-01 : f32
    %78 = vector.broadcast %cst_32 : f32 to vector<256x128xf32>
    %79 = arith.mulf %77, %78 : vector<256x128xf32>
    %c0_33 = arith.constant 0 : index
    %c0_34 = arith.constant 0 : index
    %c0_35 = arith.constant 0 : index
    %80 = vector.load %arg12[%c0_33, %c0_34, %c0_35] : memref<1x256x128xf32, #tpu.memory_space<vmem>>, vector<1x256x128xf32>
    %81 = vector.shape_cast %80 : vector<1x256x128xf32> to vector<256x128xf32>
    %82 = arith.truncf %79 : vector<256x128xf32> to vector<256x128xbf16>
    %cst_36 = arith.constant dense<0.000000e+00> : vector<256x128xf32>
    %83 = tpu.matmul %82, %11, %cst_36 {dimension_numbers = #tpu.dot_dimension_numbers<[1], [0], [0], [1], [0, 0, 1, 1], [], []>} : vector<256x128xbf16>, vector<128x128xbf16>, vector<256x128xf32> -> vector<256x128xf32>
    %84 = arith.addf %81, %83 : vector<256x128xf32>
    %c0_37 = arith.constant 0 : index
    %c0_38 = arith.constant 0 : index
    %c0_39 = arith.constant 0 : index
    %85 = vector.load %arg12[%c0_37, %c0_38, %c0_39] : memref<1x256x128xf32, #tpu.memory_space<vmem>>, vector<1x256x128xf32>
    %86 = vector.shape_cast %85 : vector<1x256x128xf32> to vector<256x128xf32>
    %87 = vector.shape_cast %84 : vector<256x128xf32> to vector<1x256x128xf32>
    tpu.vector_store %arg12[%c0_37, %c0_38, %c0_39], %87 {strides = array<i32>} : memref<1x256x128xf32, #tpu.memory_space<vmem>>, vector<1x256x128xf32>,
    return
  }
  func.func @transform_0(%arg0: i32, %arg1: i32) -> i32 {
    %c0_i32 = arith.constant 0 : i32
    %c0_i32_0 = arith.constant 0 : i32
    return %c0_i32 : i32
  }
  func.func @transform_1(%arg0: i32, %arg1: i32) -> (i32, i32, i32) {
    %c0_i32 = arith.constant 0 : i32
    %c0_i32_0 = arith.constant 0 : i32
    %c0_i32_1 = arith.constant 0 : i32
    return %arg0, %c0_i32, %c0_i32_0 : i32, i32, i32
  }
  func.func @transform_2(%arg0: i32, %arg1: i32) -> (i32, i32, i32) {
    %c0_i32 = arith.constant 0 : i32
    %c0_i32_0 = arith.constant 0 : i32
    %c0_i32_1 = arith.constant 0 : i32
    return %arg0, %c0_i32, %c0_i32_0 : i32, i32, i32
  }
  func.func @transform_3(%arg0: i32, %arg1: i32) -> (i32, i32) {
    %c0_i32 = arith.constant 0 : i32
    %c0_i32_0 = arith.constant 0 : i32
    %c0_i32_1 = arith.constant 0 : i32
    return %c0_i32, %c0_i32_0 : i32, i32
  }
  func.func @transform_4(%arg0: i32, %arg1: i32) -> (i32, i32) {
    %c0_i32 = arith.constant 0 : i32
    %c0_i32_0 = arith.constant 0 : i32
    %c0_i32_1 = arith.constant 0 : i32
    return %c0_i32, %c0_i32_0 : i32, i32
  }
  func.func @transform_5(%arg0: i32, %arg1: i32) -> (i32, i32, i32) {
    %c0_i32 = arith.constant 0 : i32
    %c0_i32_0 = arith.constant 0 : i32
    %c0_i32_1 = arith.constant 0 : i32
    return %arg1, %c0_i32, %c0_i32_0 : i32, i32, i32
  }
  func.func @transform_6(%arg0: i32, %arg1: i32) -> (i32, i32, i32) {
    %c0_i32 = arith.constant 0 : i32
    %c0_i32_0 = arith.constant 0 : i32
    %c0_i32_1 = arith.constant 0 : i32
    return %arg1, %c0_i32, %c0_i32_0 : i32, i32, i32
  }
  func.func @transform_7(%arg0: i32, %arg1: i32) -> (i32, i32, i32) {
    %c0_i32 = arith.constant 0 : i32
    %c0_i32_0 = arith.constant 0 : i32
    %c0_i32_1 = arith.constant 0 : i32
    return %arg1, %c0_i32, %c0_i32_0 : i32, i32, i32
  }
  func.func @transform_8(%arg0: i32, %arg1: i32) -> (i32, i32, i32) {
    %c0_i32 = arith.constant 0 : i32
    %c0_i32_0 = arith.constant 0 : i32
    %c0_i32_1 = arith.constant 0 : i32
    return %arg1, %c0_i32, %c0_i32_0 : i32, i32, i32
  }
  func.func @transform_9(%arg0: i32, %arg1: i32) -> (i32, i32) {
    %c0_i32 = arith.constant 0 : i32
    %c0_i32_0 = arith.constant 0 : i32
    %c0_i32_1 = arith.constant 0 : i32
    return %c0_i32, %c0_i32_0 : i32, i32
  }
  func.func @transform_10(%arg0: i32, %arg1: i32) -> (i32, i32, i32) {
    %c0_i32 = arith.constant 0 : i32
    %c0_i32_0 = arith.constant 0 : i32
    %c0_i32_1 = arith.constant 0 : i32
    return %arg0, %c0_i32, %c0_i32_0 : i32, i32, i32
  }
}

module attributes {stable_mosaic.version = 11 : i64} {
  func.func @_ffn_kernel(%arg0: i32, %arg1: memref<512x128xf32, #tpu.memory_space<vmem>>, %arg2: memref<1x128xf32, #tpu.memory_space<vmem>>, %arg3: memref<128x256xbf16, #tpu.memory_space<vmem>>, %arg4: memref<1x256xf32, #tpu.memory_space<vmem>>, %arg5: memref<128x256xbf16, #tpu.memory_space<vmem>>, %arg6: memref<1x256xf32, #tpu.memory_space<vmem>>, %arg7: memref<256x128xbf16, #tpu.memory_space<vmem>>, %arg8: memref<1x128xf32, #tpu.memory_space<vmem>>, %arg9: memref<512x128xf32, #tpu.memory_space<vmem>>) attributes {dimension_semantics = [#tpu.dimension_semantics<parallel>], iteration_bounds = array<i64: 1>, scalar_prefetch = 0 : i64, scratch_operands = 0 : i64, tpu.core_type = #tpu.core_type<tc>, window_params = [{transform_indices = @transform_0, window_bounds = array<i64: 512, 128>}, {pipeline_mode = #tpu.pipeline_mode<synchronous>, transform_indices = @transform_1, window_bounds = array<i64: 1, 128>}, {pipeline_mode = #tpu.pipeline_mode<synchronous>, transform_indices = @transform_2, window_bounds = array<i64: 128, 256>}, {pipeline_mode = #tpu.pipeline_mode<synchronous>, transform_indices = @transform_3, window_bounds = array<i64: 1, 256>}, {pipeline_mode = #tpu.pipeline_mode<synchronous>, transform_indices = @transform_4, window_bounds = array<i64: 128, 256>}, {pipeline_mode = #tpu.pipeline_mode<synchronous>, transform_indices = @transform_5, window_bounds = array<i64: 1, 256>}, {pipeline_mode = #tpu.pipeline_mode<synchronous>, transform_indices = @transform_6, window_bounds = array<i64: 256, 128>}, {pipeline_mode = #tpu.pipeline_mode<synchronous>, transform_indices = @transform_7, window_bounds = array<i64: 1, 128>}, {transform_indices = @transform_8, window_bounds = array<i64: 512, 128>}]} {
    %c0 = arith.constant 0 : index
    %c0_0 = arith.constant 0 : index
    %0 = vector.load %arg1[%c0, %c0_0] : memref<512x128xf32, #tpu.memory_space<vmem>>, vector<512x128xf32>
    %1 = arith.mulf %0, %0 : vector<512x128xf32>
    %cst = arith.constant dense<0.000000e+00> : vector<512xf32>
    %2 = vector.multi_reduction <add>, %1, %cst [1] : vector<512x128xf32> to vector<512xf32>
    %3 = vector.shape_cast %2 : vector<512xf32> to vector<512x1xf32>
    %cst_1 = arith.constant 1.280000e+02 : f32
    %4 = vector.broadcast %cst_1 : f32 to vector<512x1xf32>
    %5 = arith.divf %3, %4 : vector<512x1xf32>
    %cst_2 = arith.constant 9.99999974E-6 : f32
    %6 = vector.broadcast %cst_2 : f32 to vector<512x1xf32>
    %7 = arith.addf %5, %6 : vector<512x1xf32>
    %8 = math.rsqrt %7 : vector<512x1xf32>
    %9 = vector.broadcast %8 : vector<512x1xf32> to vector<512x128xf32>
    %10 = arith.mulf %0, %9 : vector<512x128xf32>
    %c0_3 = arith.constant 0 : index
    %c0_4 = arith.constant 0 : index
    %11 = vector.load %arg2[%c0_3, %c0_4] : memref<1x128xf32, #tpu.memory_space<vmem>>, vector<1x128xf32>
    %12 = vector.broadcast %11 : vector<1x128xf32> to vector<512x128xf32>
    %13 = arith.mulf %10, %12 : vector<512x128xf32>
    %14 = arith.truncf %13 : vector<512x128xf32> to vector<512x128xbf16>
    %c0_5 = arith.constant 0 : index
    %c0_6 = arith.constant 0 : index
    %15 = vector.load %arg3[%c0_5, %c0_6] : memref<128x256xbf16, #tpu.memory_space<vmem>>, vector<128x256xbf16>
    %cst_7 = arith.constant dense<0.000000e+00> : vector<512x256xf32>
    %16 = tpu.matmul %14, %15, %cst_7 {dimension_numbers = #tpu.dot_dimension_numbers<[1], [0], [0], [1], [0, 0, 1, 1], [], []>} : vector<512x128xbf16>, vector<128x256xbf16>, vector<512x256xf32> -> vector<512x256xf32>
    %c0_8 = arith.constant 0 : index
    %c0_9 = arith.constant 0 : index
    %17 = vector.load %arg4[%c0_8, %c0_9] : memref<1x256xf32, #tpu.memory_space<vmem>>, vector<1x256xf32>
    %18 = vector.broadcast %17 : vector<1x256xf32> to vector<512x256xf32>
    %19 = arith.addf %16, %18 : vector<512x256xf32>
    %cst_10 = arith.constant 0.000000e+00 : f32
    %20 = vector.broadcast %cst_10 : f32 to vector<512x256xf32>
    %21 = arith.subf %20, %19 : vector<512x256xf32>
    %22 = math.exp %21 : vector<512x256xf32>
    %cst_11 = arith.constant 1.000000e+00 : f32
    %23 = vector.broadcast %cst_11 : f32 to vector<512x256xf32>
    %24 = arith.addf %23, %22 : vector<512x256xf32>
    %25 = tpu.reciprocal %24 {approx = true} : vector<512x256xf32> -> vector<512x256xf32>
    %26 = arith.mulf %19, %25 : vector<512x256xf32>
    %c0_12 = arith.constant 0 : index
    %c0_13 = arith.constant 0 : index
    %27 = vector.load %arg5[%c0_12, %c0_13] : memref<128x256xbf16, #tpu.memory_space<vmem>>, vector<128x256xbf16>
    %cst_14 = arith.constant dense<0.000000e+00> : vector<512x256xf32>
    %28 = tpu.matmul %14, %27, %cst_14 {dimension_numbers = #tpu.dot_dimension_numbers<[1], [0], [0], [1], [0, 0, 1, 1], [], []>} : vector<512x128xbf16>, vector<128x256xbf16>, vector<512x256xf32> -> vector<512x256xf32>
    %c0_15 = arith.constant 0 : index
    %c0_16 = arith.constant 0 : index
    %29 = vector.load %arg6[%c0_15, %c0_16] : memref<1x256xf32, #tpu.memory_space<vmem>>, vector<1x256xf32>
    %30 = vector.broadcast %29 : vector<1x256xf32> to vector<512x256xf32>
    %31 = arith.addf %28, %30 : vector<512x256xf32>
    %32 = arith.mulf %26, %31 : vector<512x256xf32>
    %33 = arith.truncf %32 : vector<512x256xf32> to vector<512x256xbf16>
    %c0_17 = arith.constant 0 : index
    %c0_18 = arith.constant 0 : index
    %34 = vector.load %arg7[%c0_17, %c0_18] : memref<256x128xbf16, #tpu.memory_space<vmem>>, vector<256x128xbf16>
    %cst_19 = arith.constant dense<0.000000e+00> : vector<512x128xf32>
    %35 = tpu.matmul %33, %34, %cst_19 {dimension_numbers = #tpu.dot_dimension_numbers<[1], [0], [0], [1], [0, 0, 1, 1], [], []>} : vector<512x256xbf16>, vector<256x128xbf16>, vector<512x128xf32> -> vector<512x128xf32>
    %c0_20 = arith.constant 0 : index
    %c0_21 = arith.constant 0 : index
    %36 = vector.load %arg8[%c0_20, %c0_21] : memref<1x128xf32, #tpu.memory_space<vmem>>, vector<1x128xf32>
    %37 = vector.broadcast %36 : vector<1x128xf32> to vector<512x128xf32>
    %38 = arith.addf %35, %37 : vector<512x128xf32>
    %39 = arith.addf %38, %0 : vector<512x128xf32>
    %c0_22 = arith.constant 0 : index
    %c0_23 = arith.constant 0 : index
    %40 = vector.load %arg9[%c0_22, %c0_23] : memref<512x128xf32, #tpu.memory_space<vmem>>, vector<512x128xf32>
    tpu.vector_store %arg9[%c0_22, %c0_23], %39 {strides = array<i32>} : memref<512x128xf32, #tpu.memory_space<vmem>>, vector<512x128xf32>,
    return
  }
  func.func @transform_0(%arg0: i32) -> (i32, i32) {
    %c0_i32 = arith.constant 0 : i32
    %c0_i32_0 = arith.constant 0 : i32
    return %arg0, %c0_i32 : i32, i32
  }
  func.func @transform_1(%arg0: i32) -> (i32, i32) {
    %c0_i32 = arith.constant 0 : i32
    %c0_i32_0 = arith.constant 0 : i32
    %c0_i32_1 = arith.constant 0 : i32
    return %c0_i32, %c0_i32_0 : i32, i32
  }
  func.func @transform_2(%arg0: i32) -> (i32, i32) {
    %c0_i32 = arith.constant 0 : i32
    %c0_i32_0 = arith.constant 0 : i32
    %c0_i32_1 = arith.constant 0 : i32
    return %c0_i32, %c0_i32_0 : i32, i32
  }
  func.func @transform_3(%arg0: i32) -> (i32, i32) {
    %c0_i32 = arith.constant 0 : i32
    %c0_i32_0 = arith.constant 0 : i32
    %c0_i32_1 = arith.constant 0 : i32
    return %c0_i32, %c0_i32_0 : i32, i32
  }
  func.func @transform_4(%arg0: i32) -> (i32, i32) {
    %c0_i32 = arith.constant 0 : i32
    %c0_i32_0 = arith.constant 0 : i32
    %c0_i32_1 = arith.constant 0 : i32
    return %c0_i32, %c0_i32_0 : i32, i32
  }
  func.func @transform_5(%arg0: i32) -> (i32, i32) {
    %c0_i32 = arith.constant 0 : i32
    %c0_i32_0 = arith.constant 0 : i32
    %c0_i32_1 = arith.constant 0 : i32
    return %c0_i32, %c0_i32_0 : i32, i32
  }
  func.func @transform_6(%arg0: i32) -> (i32, i32) {
    %c0_i32 = arith.constant 0 : i32
    %c0_i32_0 = arith.constant 0 : i32
    %c0_i32_1 = arith.constant 0 : i32
    return %c0_i32, %c0_i32_0 : i32, i32
  }
  func.func @transform_7(%arg0: i32) -> (i32, i32) {
    %c0_i32 = arith.constant 0 : i32
    %c0_i32_0 = arith.constant 0 : i32
    %c0_i32_1 = arith.constant 0 : i32
    return %c0_i32, %c0_i32_0 : i32, i32
  }
  func.func @transform_8(%arg0: i32) -> (i32, i32) {
    %c0_i32 = arith.constant 0 : i32
    %c0_i32_0 = arith.constant 0 : i32
    return %arg0, %c0_i32 : i32, i32
  }
}

</mosaic_0001>

<llo_original>
// kernel: tile.8
$region0: #{tile.8}
  #allocation2 [shape = 's32[1]{0}', space=sflag, size = 0x4, scoped, tag = 'scoped memory for tile.8']
  %s0 = inlined_call_operand.vmem [shape: f32[128], index: 0, kind: input, shape index: {}]
  %s1 = inlined_call_operand.hbm [shape: f32[2,128], index: 1, kind: output, shape index: {}]
  $region1: #{tile.8} parent=0
    #allocation0 [shape = 'u8[1024]{0}', space=vmem, size = 0x400, scoped, tag = 'operand span for operand 1']
    #allocation1 [shape = 's32[1]{0}', space=sflag, size = 0x4, scoped, tag = 'scoped memory for tile.8']
    %2 = vsyncpa [#allocation1], 0
    // Predicated region
    $region2: #{tile.8} parent=1 // pred_check
      _
    $region3: #{tile.8} parent=1 // pred_check_branch
      %4 = sbr.rel (0) target = $region5
    $region4: #{tile.8} parent=1 // pred_region
      _
    $region5: #{tile.8} parent=1 // pred_fallthru
      _
    %v5 = vld [vmem:[%s0] ss:$0 sm:$0xff]
    %6 = vst [vmem:[#allocation0] sm:$0x3] %v5
    %s8 = ssub.s32 32, 32
    %9 = vsyncadd [#allocation1], %s8
    %s11 = sshll.u32 [#allocation0], 4
    %s12 = int_to_ptr.vmem [resolvable:$true] %s11
    %14 = dma.vmem_to_hbm [thread:$0]  %s12, 32, %s1, [#allocation1]
    %15 = dma.done [#allocation1], 32
    %16 = vsyncpa [#allocation1], 1

// kernel: diff_transformer_layer.3
$region0: #{diff_transformer_layer.3}
  #allocation0 [shape = 'u32[]', space=smem, size = 0x4, offset = 0x4, fixed_abs, tag = 'smem constant byte address 0x4 - core index']
  #allocation1 [shape = 'u32[144,128]{1,0:T(1,128)}', space=vmem, size = 0x12000, scoped, tag = 'internal scratch']
  %s0 = inlined_call_operand.hbm [shape: f32[512,128], index: 0, kind: input, shape index: {}]
  %s1 = inlined_call_operand.hbm [shape: f32[1,128], index: 1, kind: input, shape index: {}]
  %s2 = inlined_call_operand.hbm [shape: bf16[128,256], index: 2, kind: input, shape index: {}]
  %s3 = inlined_call_operand.hbm [shape: f32[1,256], index: 3, kind: input, shape index: {}]
  %s4 = inlined_call_operand.hbm [shape: bf16[128,256], index: 4, kind: input, shape index: {}]
  %s5 = inlined_call_operand.hbm [shape: f32[1,256], index: 5, kind: input, shape index: {}]
  %s6 = inlined_call_operand.hbm [shape: bf16[256,128], index: 6, kind: input, shape index: {}]
  %s7 = inlined_call_operand.hbm [shape: f32[1,128], index: 7, kind: input, shape index: {}]
  %s8 = inlined_call_operand.hbm [shape: f32[512,128], index: 8, kind: output, shape index: {}]
  %s9 = sld [smem:[#allocation0]]
  $region74: #{diff_transformer_layer.3} parent=0
    _
  %s11 = ssub.s32 1, %s9
  %s12 = scalar_select 0, %s11, %s9
  $region1: #{diff_transformer_layer.3} parent=0
    #allocation2 [shape = 'u8[262144]{0}', space=vmem, size = 0x40000, scoped, tag = 'input window, operand 0, single buffered']
    #allocation3 [shape = 's32[1]{0}', space=sflag, size = 0x4, scoped, tag = 'scoped memory for diff_transformer_layer.3']
    #allocation4 [shape = 's32[1]{0}', space=sflag, size = 0x4, scoped, tag = 'scoped memory for diff_transformer_layer.3']
    #allocation5 [shape = 'u8[512]{0}', space=vmem, size = 0x400, scoped, tag = 'input window, operand 1, single buffered']
    #allocation6 [shape = 's32[1]{0}', space=sflag, size = 0x4, scoped, tag = 'scoped memory for diff_transformer_layer.3']
    #allocation7 [shape = 'u8[65536]{0}', space=vmem, size = 0x10000, scoped, tag = 'input window, operand 2, single buffered']
    #allocation8 [shape = 'u8[1024]{0}', space=vmem, size = 0x400, scoped, tag = 'input window, operand 3, single buffered']
    #allocation9 [shape = 's32[1]{0}', space=sflag, size = 0x4, scoped, tag = 'scoped memory for diff_transformer_layer.3']
    #allocation10 [shape = 'u8[65536]{0}', space=vmem, size = 0x10000, scoped, tag = 'input window, operand 4, single buffered']
    #allocation11 [shape = 'u8[1024]{0}', space=vmem, size = 0x400, scoped, tag = 'input window, operand 5, single buffered']
    #allocation12 [shape = 's32[1]{0}', space=sflag, size = 0x4, scoped, tag = 'scoped memory for diff_transformer_layer.3']
    #allocation13 [shape = 'u8[65536]{0}', space=vmem, size = 0x10000, scoped, tag = 'input window, operand 6, single buffered']
    #allocation14 [shape = 'u8[512]{0}', space=vmem, size = 0x400, scoped, tag = 'input window, operand 7, single buffered']
    #allocation15 [shape = 's32[1]{0}', space=sflag, size = 0x4, scoped, tag = 'scoped memory for diff_transformer_layer.3']
    #allocation16 [shape = 'u8[262144]{0}', space=vmem, size = 0x40000, scoped, tag = 'output window, operand 0, single buffered']
    %13 = vsyncpa [#allocation3], 0
    %14 = vsyncpa [#allocation6], 0
    %15 = vsyncpa [#allocation9], 0
    %16 = vsyncpa [#allocation12], 0
    %17 = vsyncpa [#allocation15], 0
    %18 = vsyncpa [#allocation4], 0
    // Predicated region
    $region2: #{diff_transformer_layer.3} parent=1 // pred_check
      _
    $region3: #{diff_transformer_layer.3} parent=1 // pred_check_branch
      %20 = sbr.rel (0) target = $region5
    $region4: #{diff_transformer_layer.3} parent=1 // pred_region
      %s22 = ssub.s32 8192, 8192
      %23 = vsyncadd [#allocation3], %s22
      %s24 = sshll.u32 [#allocation2], 4
      %s25 = int_to_ptr.vmem [resolvable:$true] %s24
      %30 = dma.hbm_to_vmem [thread:$0]  %s0, 8192, %s25, [#allocation3], 128, 128, 8
    $region5: #{diff_transformer_layer.3} parent=1 // pred_fallthru
      _
    // Predicated region
    $region6: #{diff_transformer_layer.3} parent=1 // pred_check
      _
    $region7: #{diff_transformer_layer.3} parent=1 // pred_check_branch
      %32 = sbr.rel (0) target = $region9
    $region8: #{diff_transformer_layer.3} parent=1 // pred_region
      %s34 = ssub.s32 16, 16
      %35 = vsyncadd [#allocation6], %s34
      %s37 = sshll.u32 [#allocation5], 4
      %s38 = int_to_ptr.vmem [resolvable:$true] %s37
      %40 = dma.hbm_to_vmem [thread:$0]  %s1, 16, %s38, [#allocation6]
    $region9: #{diff_transformer_layer.3} parent=1 // pred_fallthru
      _
    // Predicated region
    $region10: #{diff_transformer_layer.3} parent=1 // pred_check
      _
    $region11: #{diff_transformer_layer.3} parent=1 // pred_check_branch
      %42 = sbr.rel (0) target = $region13
    $region12: #{diff_transformer_layer.3} parent=1 // pred_region
      %s44 = ssub.s32 2048, 2048
      %45 = vsyncadd [#allocation6], %s44
      %s46 = sshll.u32 [#allocation7], 4
      %s47 = int_to_ptr.vmem [resolvable:$true] %s46
      %52 = dma.hbm_to_vmem [thread:$0]  %s2, 2048, %s47, [#allocation6], 128, 128, 8
    $region13: #{diff_transformer_layer.3} parent=1 // pred_fallthru
      _
    // Predicated region
    $region14: #{diff_transformer_layer.3} parent=1 // pred_check
      _
    $region15: #{diff_transformer_layer.3} parent=1 // pred_check_branch
      %54 = sbr.rel (0) target = $region17
    $region16: #{diff_transformer_layer.3} parent=1 // pred_region
      %s56 = ssub.s32 32, 32
      %57 = vsyncadd [#allocation9], %s56
      %s59 = sshll.u32 [#allocation8], 4
      %s60 = int_to_ptr.vmem [resolvable:$true] %s59
      %62 = dma.hbm_to_vmem [thread:$0]  %s3, 32, %s60, [#allocation9]
    $region17: #{diff_transformer_layer.3} parent=1 // pred_fallthru
      _
    // Predicated region
    $region18: #{diff_transformer_layer.3} parent=1 // pred_check
      _
    $region19: #{diff_transformer_layer.3} parent=1 // pred_check_branch
      %64 = sbr.rel (0) target = $region21
    $region20: #{diff_transformer_layer.3} parent=1 // pred_region
      %s66 = ssub.s32 2048, 2048
      %67 = vsyncadd [#allocation9], %s66
      %s68 = sshll.u32 [#allocation10], 4
      %s69 = int_to_ptr.vmem [resolvable:$true] %s68
      %74 = dma.hbm_to_vmem [thread:$0]  %s4, 2048, %s69, [#allocation9], 128, 128, 8
    $region21: #{diff_transformer_layer.3} parent=1 // pred_fallthru
      _
    // Predicated region
    $region22: #{diff_transformer_layer.3} parent=1 // pred_check
      _
    $region23: #{diff_transformer_layer.3} parent=1 // pred_check_branch
      %76 = sbr.rel (0) target = $region25
    $region24: #{diff_transformer_layer.3} parent=1 // pred_region
      %s78 = ssub.s32 32, 32
      %79 = vsyncadd [#allocation12], %s78
      %s81 = sshll.u32 [#allocation11], 4
      %s82 = int_to_ptr.vmem [resolvable:$true] %s81
      %84 = dma.hbm_to_vmem [thread:$0]  %s5, 32, %s82, [#allocation12]
    $region25: #{diff_transformer_layer.3} parent=1 // pred_fallthru
      _
    // Predicated region
    $region26: #{diff_transformer_layer.3} parent=1 // pred_check
      _
    $region27: #{diff_transformer_layer.3} parent=1 // pred_check_branch
      %86 = sbr.rel (0) target = $region29
    $region28: #{diff_transformer_layer.3} parent=1 // pred_region
      %s88 = ssub.s32 2048, 2048
      %89 = vsyncadd [#allocation12], %s88
      %s90 = sshll.u32 [#allocation13], 4
      %s91 = int_to_ptr.vmem [resolvable:$true] %s90
      %96 = dma.hbm_to_vmem [thread:$0]  %s6, 2048, %s91, [#allocation12], 64, 64, 4
    $region29: #{diff_transformer_layer.3} parent=1 // pred_fallthru
      _
    // Predicated region
    $region30: #{diff_transformer_layer.3} parent=1 // pred_check
      _
    $region31: #{diff_transformer_layer.3} parent=1 // pred_check_branch
      %98 = sbr.rel (0) target = $region33
    $region32: #{diff_transformer_layer.3} parent=1 // pred_region
      %s100 = ssub.s32 16, 16
      %101 = vsyncadd [#allocation15], %s100
      %s103 = sshll.u32 [#allocation14], 4
      %s104 = int_to_ptr.vmem [resolvable:$true] %s103
      %106 = dma.hbm_to_vmem [thread:$0]  %s7, 16, %s104, [#allocation15]
    $region33: #{diff_transformer_layer.3} parent=1 // pred_fallthru
      _
    // Predicated region
    $region34: #{diff_transformer_layer.3} parent=1 // pred_check
      _
    $region35: #{diff_transformer_layer.3} parent=1 // pred_check_branch
      %108 = sbr.rel (0) target = $region37
    $region36: #{diff_transformer_layer.3} parent=1 // pred_region
      %109 = dma.done [#allocation3], 8192
    $region37: #{diff_transformer_layer.3} parent=1 // pred_fallthru
      _
    // Predicated region
    $region38: #{diff_transformer_layer.3} parent=1 // pred_check
      _
    $region39: #{diff_transformer_layer.3} parent=1 // pred_check_branch
      %111 = sbr.rel (0) target = $region41
    $region40: #{diff_transformer_layer.3} parent=1 // pred_region
      %112 = dma.done [#allocation6], 16
    $region41: #{diff_transformer_layer.3} parent=1 // pred_fallthru
      _
    // Predicated region
    $region42: #{diff_transformer_layer.3} parent=1 // pred_check
      _
    $region43: #{diff_transformer_layer.3} parent=1 // pred_check_branch
      %114 = sbr.rel (0) target = $region45
    $region44: #{diff_transformer_layer.3} parent=1 // pred_region
      %115 = dma.done [#allocation6], 2048
    $region45: #{diff_transformer_layer.3} parent=1 // pred_fallthru
      _
    // Predicated region
    $region46: #{diff_transformer_layer.3} parent=1 // pred_check
      _
    $region47: #{diff_transformer_layer.3} parent=1 // pred_check_branch
      %117 = sbr.rel (0) target = $region49
    $region48: #{diff_transformer_layer.3} parent=1 // pred_region
      %118 = dma.done [#allocation9], 32
    $region49: #{diff_transformer_layer.3} parent=1 // pred_fallthru
      _
    // Predicated region
    $region50: #{diff_transformer_layer.3} parent=1 // pred_check
      _
    $region51: #{diff_transformer_layer.3} parent=1 // pred_check_branch
      %120 = sbr.rel (0) target = $region53
    $region52: #{diff_transformer_layer.3} parent=1 // pred_region
      %121 = dma.done [#allocation9], 2048
    $region53: #{diff_transformer_layer.3} parent=1 // pred_fallthru
      _
    // Predicated region
    $region54: #{diff_transformer_layer.3} parent=1 // pred_check
      _
    $region55: #{diff_transformer_layer.3} parent=1 // pred_check_branch
      %123 = sbr.rel (0) target = $region57
    $region56: #{diff_transformer_layer.3} parent=1 // pred_region
      %124 = dma.done [#allocation12], 32
    $region57: #{diff_transformer_layer.3} parent=1 // pred_fallthru
      _
    // Predicated region
    $region58: #{diff_transformer_layer.3} parent=1 // pred_check
      _
    $region59: #{diff_transformer_layer.3} parent=1 // pred_check_branch
      %126 = sbr.rel (0) target = $region61
    $region60: #{diff_transformer_layer.3} parent=1 // pred_region
      %127 = dma.done [#allocation12], 2048
    $region61: #{diff_transformer_layer.3} parent=1 // pred_fallthru
      _
    // Predicated region
    $region62: #{diff_transformer_layer.3} parent=1 // pred_check
      _
    $region63: #{diff_transformer_layer.3} parent=1 // pred_check_branch
      %129 = sbr.rel (0) target = $region65
    $region64: #{diff_transformer_layer.3} parent=1 // pred_region
      %130 = dma.done [#allocation15], 16
    $region65: #{diff_transformer_layer.3} parent=1 // pred_fallthru
      _
    %v132 = vld [vmem:[#allocation2] sm:$0xff]
    %v133 = vld [vmem:[#allocation2 + $0x8] sm:$0xff]
    %v134 = vld [vmem:[#allocation2 + $0x10] sm:$0xff]
    %v135 = vld [vmem:[#allocation2 + $0x18] sm:$0xff]
    %v136 = vld [vmem:[#allocation2 + $0x20] sm:$0xff]
    %v137 = vld [vmem:[#allocation2 + $0x28] sm:$0xff]
    %v138 = vld [vmem:[#allocation2 + $0x30] sm:$0xff]
    %v139 = vld [vmem:[#allocation2 + $0x38] sm:$0xff]
    %v140 = vld [vmem:[#allocation2 + $0x40] sm:$0xff]
    %v141 = vld [vmem:[#allocation2 + $0x48] sm:$0xff]
    %v142 = vld [vmem:[#allocation2 + $0x50] sm:$0xff]
    %v143 = vld [vmem:[#allocation2 + $0x58] sm:$0xff]
    %v144 = vld [vmem:[#allocation2 + $0x60] sm:$0xff]
    %v145 = vld [vmem:[#allocation2 + $0x68] sm:$0xff]
    %v146 = vld [vmem:[#allocation2 + $0x70] sm:$0xff]
    %v147 = vld [vmem:[#allocation2 + $0x78] sm:$0xff]
    %v148 = vld [vmem:[#allocation2 + $0x80] sm:$0xff]
    %v149 = vld [vmem:[#allocation2 + $0x88] sm:$0xff]
    %v150 = vld [vmem:[#allocation2 + $0x90] sm:$0xff]
    %v151 = vld [vmem:[#allocation2 + $0x98] sm:$0xff]
    %v152 = vld [vmem:[#allocation2 + $0xa0] sm:$0xff]
    %v153 = vld [vmem:[#allocation2 + $0xa8] sm:$0xff]
    %v154 = vld [vmem:[#allocation2 + $0xb0] sm:$0xff]
    %v155 = vld [vmem:[#allocation2 + $0xb8] sm:$0xff]
    %v156 = vld [vmem:[#allocation2 + $0xc0] sm:$0xff]
    %v157 = vld [vmem:[#allocation2 + $0xc8] sm:$0xff]
    %v158 = vld [vmem:[#allocation2 + $0xd0] sm:$0xff]
    %v159 = vld [vmem:[#allocation2 + $0xd8] sm:$0xff]
    %v160 = vld [vmem:[#allocation2 + $0xe0] sm:$0xff]
    %v161 = vld [vmem:[#allocation2 + $0xe8] sm:$0xff]
    %v162 = vld [vmem:[#allocation2 + $0xf0] sm:$0xff]
    %v163 = vld [vmem:[#allocation2 + $0xf8] sm:$0xff]
    %v164 = vld [vmem:[#allocation2 + $0x100] sm:$0xff]
    %v165 = vld [vmem:[#allocation2 + $0x108] sm:$0xff]
    %v166 = vld [vmem:[#allocation2 + $0x110] sm:$0xff]
    %v167 = vld [vmem:[#allocation2 + $0x118] sm:$0xff]
    %v168 = vld [vmem:[#allocation2 + $0x120] sm:$0xff]
    %v169 = vld [vmem:[#allocation2 + $0x128] sm:$0xff]
    %v170 = vld [vmem:[#allocation2 + $0x130] sm:$0xff]
    %v171 = vld [vmem:[#allocation2 + $0x138] sm:$0xff]
    %v172 = vld [vmem:[#allocation2 + $0x140] sm:$0xff]
    %v173 = vld [vmem:[#allocation2 + $0x148] sm:$0xff]
    %v174 = vld [vmem:[#allocation2 + $0x150] sm:$0xff]
    %v175 = vld [vmem:[#allocation2 + $0x158] sm:$0xff]
    %v176 = vld [vmem:[#allocation2 + $0x160] sm:$0xff]
    %v177 = vld [vmem:[#allocation2 + $0x168] sm:$0xff]
    %v178 = vld [vmem:[#allocation2 + $0x170] sm:$0xff]
    %v179 = vld [vmem:[#allocation2 + $0x178] sm:$0xff]
    %v180 = vld [vmem:[#allocation2 + $0x180] sm:$0xff]
    %v181 = vld [vmem:[#allocation2 + $0x188] sm:$0xff]
    %v182 = vld [vmem:[#allocation2 + $0x190] sm:$0xff]
    %v183 = vld [vmem:[#allocation2 + $0x198] sm:$0xff]
    %v184 = vld [vmem:[#allocation2 + $0x1a0] sm:$0xff]
    %v185 = vld [vmem:[#allocation2 + $0x1a8] sm:$0xff]
    %v186 = vld [vmem:[#allocation2 + $0x1b0] sm:$0xff]
    %v187 = vld [vmem:[#allocation2 + $0x1b8] sm:$0xff]
    %v188 = vld [vmem:[#allocation2 + $0x1c0] sm:$0xff]
    %v189 = vld [vmem:[#allocation2 + $0x1c8] sm:$0xff]
    %v190 = vld [vmem:[#allocation2 + $0x1d0] sm:$0xff]
    %v191 = vld [vmem:[#allocation2 + $0x1d8] sm:$0xff]
    %v192 = vld [vmem:[#allocation2 + $0x1e0] sm:$0xff]
    %v193 = vld [vmem:[#allocation2 + $0x1e8] sm:$0xff]
    %v194 = vld [vmem:[#allocation2 + $0x1f0] sm:$0xff]
    %v195 = vld [vmem:[#allocation2 + $0x1f8] sm:$0xff]
    %v196 = vmul.f32 %v132, %v132
    %v197 = vmul.f32 %v133, %v133
    %v198 = vmul.f32 %v134, %v134
    %v199 = vmul.f32 %v135, %v135
    %v200 = vmul.f32 %v136, %v136
    %v201 = vmul.f32 %v137, %v137
    %v202 = vmul.f32 %v138, %v138
    %v203 = vmul.f32 %v139, %v139
    %v204 = vmul.f32 %v140, %v140
    %v205 = vmul.f32 %v141, %v141
    %v206 = vmul.f32 %v142, %v142
    %v207 = vmul.f32 %v143, %v143
    %v208 = vmul.f32 %v144, %v144
    %v209 = vmul.f32 %v145, %v145
    %v210 = vmul.f32 %v146, %v146
    %v211 = vmul.f32 %v147, %v147
    %v212 = vmul.f32 %v148, %v148
    %v213 = vmul.f32 %v149, %v149
    %v214 = vmul.f32 %v150, %v150
    %v215 = vmul.f32 %v151, %v151
    %v216 = vmul.f32 %v152, %v152
    %v217 = vmul.f32 %v153, %v153
    %v218 = vmul.f32 %v154, %v154
    %v219 = vmul.f32 %v155, %v155
    %v220 = vmul.f32 %v156, %v156
    %v221 = vmul.f32 %v157, %v157
    %v222 = vmul.f32 %v158, %v158
    %v223 = vmul.f32 %v159, %v159
    %v224 = vmul.f32 %v160, %v160
    %v225 = vmul.f32 %v161, %v161
    %v226 = vmul.f32 %v162, %v162
    %v227 = vmul.f32 %v163, %v163
    %v228 = vmul.f32 %v164, %v164
    %v229 = vmul.f32 %v165, %v165
    %v230 = vmul.f32 %v166, %v166
    %v231 = vmul.f32 %v167, %v167
    %v232 = vmul.f32 %v168, %v168
    %v233 = vmul.f32 %v169, %v169
    %v234 = vmul.f32 %v170, %v170
    %v235 = vmul.f32 %v171, %v171
    %v236 = vmul.f32 %v172, %v172
    %v237 = vmul.f32 %v173, %v173
    %v238 = vmul.f32 %v174, %v174
    %v239 = vmul.f32 %v175, %v175
    %v240 = vmul.f32 %v176, %v176
    %v241 = vmul.f32 %v177, %v177
    %v242 = vmul.f32 %v178, %v178
    %v243 = vmul.f32 %v179, %v179
    %v244 = vmul.f32 %v180, %v180
    %v245 = vmul.f32 %v181, %v181
    %v246 = vmul.f32 %v182, %v182
    %v247 = vmul.f32 %v183, %v183
    %v248 = vmul.f32 %v184, %v184
    %v249 = vmul.f32 %v185, %v185
    %v250 = vmul.f32 %v186, %v186
    %v251 = vmul.f32 %v187, %v187
    %v252 = vmul.f32 %v188, %v188
    %v253 = vmul.f32 %v189, %v189
    %v254 = vmul.f32 %v190, %v190
    %v255 = vmul.f32 %v191, %v191
    %v256 = vmul.f32 %v192, %v192
    %v257 = vmul.f32 %v193, %v193
    %v258 = vmul.f32 %v194, %v194
    %v259 = vmul.f32 %v195, %v195
    %260 = vadd.xlane.f32.xlu0 %v196
    %v261 = vpop.xlane.xlu0 %260
    %262 = vadd.xlane.f32.xlu0 %v197
    %v263 = vpop.xlane.xlu0 %262
    %264 = vadd.xlane.f32.xlu0 %v198
    %v265 = vpop.xlane.xlu0 %264
    %266 = vadd.xlane.f32.xlu0 %v199
    %v267 = vpop.xlane.xlu0 %266
    %268 = vadd.xlane.f32.xlu0 %v200
    %v269 = vpop.xlane.xlu0 %268
    %270 = vadd.xlane.f32.xlu0 %v201
    %v271 = vpop.xlane.xlu0 %270
    %272 = vadd.xlane.f32.xlu0 %v202
    %v273 = vpop.xlane.xlu0 %272
    %274 = vadd.xlane.f32.xlu0 %v203
    %v275 = vpop.xlane.xlu0 %274
    %276 = vadd.xlane.f32.xlu0 %v204
    %v277 = vpop.xlane.xlu0 %276
    %278 = vadd.xlane.f32.xlu0 %v205
    %v279 = vpop.xlane.xlu0 %278
    %280 = vadd.xlane.f32.xlu0 %v206
    %v281 = vpop.xlane.xlu0 %280
    %282 = vadd.xlane.f32.xlu0 %v207
    %v283 = vpop.xlane.xlu0 %282
    %284 = vadd.xlane.f32.xlu0 %v208
    %v285 = vpop.xlane.xlu0 %284
    %286 = vadd.xlane.f32.xlu0 %v209
    %v287 = vpop.xlane.xlu0 %286
    %288 = vadd.xlane.f32.xlu0 %v210
    %v289 = vpop.xlane.xlu0 %288
    %290 = vadd.xlane.f32.xlu0 %v211
    %v291 = vpop.xlane.xlu0 %290
    %292 = vadd.xlane.f32.xlu0 %v212
    %v293 = vpop.xlane.xlu0 %292
    %294 = vadd.xlane.f32.xlu0 %v213
    %v295 = vpop.xlane.xlu0 %294
    %296 = vadd.xlane.f32.xlu0 %v214
    %v297 = vpop.xlane.xlu0 %296
    %298 = vadd.xlane.f32.xlu0 %v215
    %v299 = vpop.xlane.xlu0 %298
    %300 = vadd.xlane.f32.xlu0 %v216
    %v301 = vpop.xlane.xlu0 %300
    %302 = vadd.xlane.f32.xlu0 %v217
    %v303 = vpop.xlane.xlu0 %302
    %304 = vadd.xlane.f32.xlu0 %v218
    %v305 = vpop.xlane.xlu0 %304
    %306 = vadd.xlane.f32.xlu0 %v219
    %v307 = vpop.xlane.xlu0 %306
    %308 = vadd.xlane.f32.xlu0 %v220
    %v309 = vpop.xlane.xlu0 %308
    %310 = vadd.xlane.f32.xlu0 %v221
    %v311 = vpop.xlane.xlu0 %310
    %312 = vadd.xlane.f32.xlu0 %v222
    %v313 = vpop.xlane.xlu0 %312
    %314 = vadd.xlane.f32.xlu0 %v223
    %v315 = vpop.xlane.xlu0 %314
    %316 = vadd.xlane.f32.xlu0 %v224
    %v317 = vpop.xlane.xlu0 %316
    %318 = vadd.xlane.f32.xlu0 %v225
    %v319 = vpop.xlane.xlu0 %318
    %320 = vadd.xlane.f32.xlu0 %v226
    %v321 = vpop.xlane.xlu0 %320
    %322 = vadd.xlane.f32.xlu0 %v227
    %v323 = vpop.xlane.xlu0 %322
    %324 = vadd.xlane.f32.xlu0 %v228
    %v325 = vpop.xlane.xlu0 %324
    %326 = vadd.xlane.f32.xlu0 %v229
    %v327 = vpop.xlane.xlu0 %326
    %328 = vadd.xlane.f32.xlu0 %v230
    %v329 = vpop.xlane.xlu0 %328
    %330 = vadd.xlane.f32.xlu0 %v231
    %v331 = vpop.xlane.xlu0 %330
    %332 = vadd.xlane.f32.xlu0 %v232
    %v333 = vpop.xlane.xlu0 %332
    %334 = vadd.xlane.f32.xlu0 %v233
    %v335 = vpop.xlane.xlu0 %334
    %336 = vadd.xlane.f32.xlu0 %v234
    %v337 = vpop.xlane.xlu0 %336
    %338 = vadd.xlane.f32.xlu0 %v235
    %v339 = vpop.xlane.xlu0 %338
    %340 = vadd.xlane.f32.xlu0 %v236
    %v341 = vpop.xlane.xlu0 %340
    %342 = vadd.xlane.f32.xlu0 %v237
    %v343 = vpop.xlane.xlu0 %342
    %344 = vadd.xlane.f32.xlu0 %v238
    %v345 = vpop.xlane.xlu0 %344
    %346 = vadd.xlane.f32.xlu0 %v239
    %v347 = vpop.xlane.xlu0 %346
    %348 = vadd.xlane.f32.xlu0 %v240
    %v349 = vpop.xlane.xlu0 %348
    %350 = vadd.xlane.f32.xlu0 %v241
    %v351 = vpop.xlane.xlu0 %350
    %352 = vadd.xlane.f32.xlu0 %v242
    %v353 = vpop.xlane.xlu0 %352
    %354 = vadd.xlane.f32.xlu0 %v243
    %v355 = vpop.xlane.xlu0 %354
    %356 = vadd.xlane.f32.xlu0 %v244
    %v357 = vpop.xlane.xlu0 %356
    %358 = vadd.xlane.f32.xlu0 %v245
    %v359 = vpop.xlane.xlu0 %358
    %360 = vadd.xlane.f32.xlu0 %v246
    %v361 = vpop.xlane.xlu0 %360
    %362 = vadd.xlane.f32.xlu0 %v247
    %v363 = vpop.xlane.xlu0 %362
    %364 = vadd.xlane.f32.xlu0 %v248
    %v365 = vpop.xlane.xlu0 %364
    %366 = vadd.xlane.f32.xlu0 %v249
    %v367 = vpop.xlane.xlu0 %366
    %368 = vadd.xlane.f32.xlu0 %v250
    %v369 = vpop.xlane.xlu0 %368
    %370 = vadd.xlane.f32.xlu0 %v251
    %v371 = vpop.xlane.xlu0 %370
    %372 = vadd.xlane.f32.xlu0 %v252
    %v373 = vpop.xlane.xlu0 %372
    %374 = vadd.xlane.f32.xlu0 %v253
    %v375 = vpop.xlane.xlu0 %374
    %376 = vadd.xlane.f32.xlu0 %v254
    %v377 = vpop.xlane.xlu0 %376
    %378 = vadd.xlane.f32.xlu0 %v255
    %v379 = vpop.xlane.xlu0 %378
    %380 = vadd.xlane.f32.xlu0 %v256
    %v381 = vpop.xlane.xlu0 %380
    %382 = vadd.xlane.f32.xlu0 %v257
    %v383 = vpop.xlane.xlu0 %382
    %384 = vadd.xlane.f32.xlu0 %v258
    %v385 = vpop.xlane.xlu0 %384
    %386 = vadd.xlane.f32.xlu0 %v259
    %v387 = vpop.xlane.xlu0 %386
    %v388 = vrcp.pop 128.0
    %v389 = vmul.f32 %v261, %v388
    %v390 = vmul.f32 %v263, %v388
    %v391 = vmul.f32 %v265, %v388
    %v392 = vmul.f32 %v267, %v388
    %v393 = vmul.f32 %v269, %v388
    %v394 = vmul.f32 %v271, %v388
    %v395 = vmul.f32 %v273, %v388
    %v396 = vmul.f32 %v275, %v388
    %v397 = vmul.f32 %v277, %v388
    %v398 = vmul.f32 %v279, %v388
    %v399 = vmul.f32 %v281, %v388
    %v400 = vmul.f32 %v283, %v388
    %v401 = vmul.f32 %v285, %v388
    %v402 = vmul.f32 %v287, %v388
    %v403 = vmul.f32 %v289, %v388
    %v404 = vmul.f32 %v291, %v388
    %v405 = vmul.f32 %v293, %v388
    %v406 = vmul.f32 %v295, %v388
    %v407 = vmul.f32 %v297, %v388
    %v408 = vmul.f32 %v299, %v388
    %v409 = vmul.f32 %v301, %v388
    %v410 = vmul.f32 %v303, %v388
    %v411 = vmul.f32 %v305, %v388
    %v412 = vmul.f32 %v307, %v388
    %v413 = vmul.f32 %v309, %v388
    %v414 = vmul.f32 %v311, %v388
    %v415 = vmul.f32 %v313, %v388
    %v416 = vmul.f32 %v315, %v388
    %v417 = vmul.f32 %v317, %v388
    %v418 = vmul.f32 %v319, %v388
    %v419 = vmul.f32 %v321, %v388
    %v420 = vmul.f32 %v323, %v388
    %v421 = vmul.f32 %v325, %v388
    %v422 = vmul.f32 %v327, %v388
    %v423 = vmul.f32 %v329, %v388
    %v424 = vmul.f32 %v331, %v388
    %v425 = vmul.f32 %v333, %v388
    %v426 = vmul.f32 %v335, %v388
    %v427 = vmul.f32 %v337, %v388
    %v428 = vmul.f32 %v339, %v388
    %v429 = vmul.f32 %v341, %v388
    %v430 = vmul.f32 %v343, %v388
    %v431 = vmul.f32 %v345, %v388
    %v432 = vmul.f32 %v347, %v388
    %v433 = vmul.f32 %v349, %v388
    %v434 = vmul.f32 %v351, %v388
    %v435 = vmul.f32 %v353, %v388
    %v436 = vmul.f32 %v355, %v388
    %v437 = vmul.f32 %v357, %v388
    %v438 = vmul.f32 %v359, %v388
    %v439 = vmul.f32 %v361, %v388
    %v440 = vmul.f32 %v363, %v388
    %v441 = vmul.f32 %v365, %v388
    %v442 = vmul.f32 %v367, %v388
    %v443 = vmul.f32 %v369, %v388
    %v444 = vmul.f32 %v371, %v388
    %v445 = vmul.f32 %v373, %v388
    %v446 = vmul.f32 %v375, %v388
    %v447 = vmul.f32 %v377, %v388
    %v448 = vmul.f32 %v379, %v388
    %v449 = vmul.f32 %v381, %v388
    %v450 = vmul.f32 %v383, %v388
    %v451 = vmul.f32 %v385, %v388
    %v452 = vmul.f32 %v387, %v388
    %v453 = vadd.f32 %v389, 1e-05
    %v454 = vadd.f32 %v390, 1e-05
    %v455 = vadd.f32 %v391, 1e-05
    %v456 = vadd.f32 %v392, 1e-05
    %v457 = vadd.f32 %v393, 1e-05
    %v458 = vadd.f32 %v394, 1e-05
    %v459 = vadd.f32 %v395, 1e-05
    %v460 = vadd.f32 %v396, 1e-05
    %v461 = vadd.f32 %v397, 1e-05
    %v462 = vadd.f32 %v398, 1e-05
    %v463 = vadd.f32 %v399, 1e-05
    %v464 = vadd.f32 %v400, 1e-05
    %v465 = vadd.f32 %v401, 1e-05
    %v466 = vadd.f32 %v402, 1e-05
    %v467 = vadd.f32 %v403, 1e-05
    %v468 = vadd.f32 %v404, 1e-05
    %v469 = vadd.f32 %v405, 1e-05
    %v470 = vadd.f32 %v406, 1e-05
    %v471 = vadd.f32 %v407, 1e-05
    %v472 = vadd.f32 %v408, 1e-05
    %v473 = vadd.f32 %v409, 1e-05
    %v474 = vadd.f32 %v410, 1e-05
    %v475 = vadd.f32 %v411, 1e-05
    %v476 = vadd.f32 %v412, 1e-05
    %v477 = vadd.f32 %v413, 1e-05
    %v478 = vadd.f32 %v414, 1e-05
    %v479 = vadd.f32 %v415, 1e-05
    %v480 = vadd.f32 %v416, 1e-05
    %v481 = vadd.f32 %v417, 1e-05
    %v482 = vadd.f32 %v418, 1e-05
    %v483 = vadd.f32 %v419, 1e-05
    %v484 = vadd.f32 %v420, 1e-05
    %v485 = vadd.f32 %v421, 1e-05
    %v486 = vadd.f32 %v422, 1e-05
    %v487 = vadd.f32 %v423, 1e-05
    %v488 = vadd.f32 %v424, 1e-05
    %v489 = vadd.f32 %v425, 1e-05
    %v490 = vadd.f32 %v426, 1e-05
    %v491 = vadd.f32 %v427, 1e-05
    %v492 = vadd.f32 %v428, 1e-05
    %v493 = vadd.f32 %v429, 1e-05
    %v494 = vadd.f32 %v430, 1e-05
    %v495 = vadd.f32 %v431, 1e-05
    %v496 = vadd.f32 %v432, 1e-05
    %v497 = vadd.f32 %v433, 1e-05
    %v498 = vadd.f32 %v434, 1e-05
    %v499 = vadd.f32 %v435, 1e-05
    %v500 = vadd.f32 %v436, 1e-05
    %v501 = vadd.f32 %v437, 1e-05
    %v502 = vadd.f32 %v438, 1e-05
    %v503 = vadd.f32 %v439, 1e-05
    %v504 = vadd.f32 %v440, 1e-05
    %v505 = vadd.f32 %v441, 1e-05
    %v506 = vadd.f32 %v442, 1e-05
    %v507 = vadd.f32 %v443, 1e-05
    %v508 = vadd.f32 %v444, 1e-05
    %v509 = vadd.f32 %v445, 1e-05
    %v510 = vadd.f32 %v446, 1e-05
    %v511 = vadd.f32 %v447, 1e-05
    %v512 = vadd.f32 %v448, 1e-05
    %v513 = vadd.f32 %v449, 1e-05
    %v514 = vadd.f32 %v450, 1e-05
    %v515 = vadd.f32 %v451, 1e-05
    %v516 = vadd.f32 %v452, 1e-05
    %v517 = vrsqrt.pop %v453
    %v518 = vrsqrt.pop %v454
    %v519 = vrsqrt.pop %v455
    %v520 = vrsqrt.pop %v456
    %v521 = vrsqrt.pop %v457
    %v522 = vrsqrt.pop %v458
    %v523 = vrsqrt.pop %v459
    %v524 = vrsqrt.pop %v460
    %v525 = vrsqrt.pop %v461
    %v526 = vrsqrt.pop %v462
    %v527 = vrsqrt.pop %v463
    %v528 = vrsqrt.pop %v464
    %v529 = vrsqrt.pop %v465
    %v530 = vrsqrt.pop %v466
    %v531 = vrsqrt.pop %v467
    %v532 = vrsqrt.pop %v468
    %v533 = vrsqrt.pop %v469
    %v534 = vrsqrt.pop %v470
    %v535 = vrsqrt.pop %v471
    %v536 = vrsqrt.pop %v472
    %v537 = vrsqrt.pop %v473
    %v538 = vrsqrt.pop %v474
    %v539 = vrsqrt.pop %v475
    %v540 = vrsqrt.pop %v476
    %v541 = vrsqrt.pop %v477
    %v542 = vrsqrt.pop %v478
    %v543 = vrsqrt.pop %v479
    %v544 = vrsqrt.pop %v480
    %v545 = vrsqrt.pop %v481
    %v546 = vrsqrt.pop %v482
    %v547 = vrsqrt.pop %v483
    %v548 = vrsqrt.pop %v484
    %v549 = vrsqrt.pop %v485
    %v550 = vrsqrt.pop %v486
    %v551 = vrsqrt.pop %v487
    %v552 = vrsqrt.pop %v488
    %v553 = vrsqrt.pop %v489
    %v554 = vrsqrt.pop %v490
    %v555 = vrsqrt.pop %v491
    %v556 = vrsqrt.pop %v492
    %v557 = vrsqrt.pop %v493
    %v558 = vrsqrt.pop %v494
    %v559 = vrsqrt.pop %v495
    %v560 = vrsqrt.pop %v496
    %v561 = vrsqrt.pop %v497
    %v562 = vrsqrt.pop %v498
    %v563 = vrsqrt.pop %v499
    %v564 = vrsqrt.pop %v500
    %v565 = vrsqrt.pop %v501
    %v566 = vrsqrt.pop %v502
    %v567 = vrsqrt.pop %v503
    %v568 = vrsqrt.pop %v504
    %v569 = vrsqrt.pop %v505
    %v570 = vrsqrt.pop %v506
    %v571 = vrsqrt.pop %v507
    %v572 = vrsqrt.pop %v508
    %v573 = vrsqrt.pop %v509
    %v574 = vrsqrt.pop %v510
    %v575 = vrsqrt.pop %v511
    %v576 = vrsqrt.pop %v512
    %v577 = vrsqrt.pop %v513
    %v578 = vrsqrt.pop %v514
    %v579 = vrsqrt.pop %v515
    %v580 = vrsqrt.pop %v516
    %v581 = vmul.f32 %v132, %v517
    %v582 = vmul.f32 %v133, %v518
    %v583 = vmul.f32 %v134, %v519
    %v584 = vmul.f32 %v135, %v520
    %v585 = vmul.f32 %v136, %v521
    %v586 = vmul.f32 %v137, %v522
    %v587 = vmul.f32 %v138, %v523
    %v588 = vmul.f32 %v139, %v524
    %v589 = vmul.f32 %v140, %v525
    %v590 = vmul.f32 %v141, %v526
    %v591 = vmul.f32 %v142, %v527
    %v592 = vmul.f32 %v143, %v528
    %v593 = vmul.f32 %v144, %v529
    %v594 = vmul.f32 %v145, %v530
    %v595 = vmul.f32 %v146, %v531
    %v596 = vmul.f32 %v147, %v532
    %v597 = vmul.f32 %v148, %v533
    %v598 = vmul.f32 %v149, %v534
    %v599 = vmul.f32 %v150, %v535
    %v600 = vmul.f32 %v151, %v536
    %v601 = vmul.f32 %v152, %v537
    %v602 = vmul.f32 %v153, %v538
    %v603 = vmul.f32 %v154, %v539
    %v604 = vmul.f32 %v155, %v540
    %v605 = vmul.f32 %v156, %v541
    %v606 = vmul.f32 %v157, %v542
    %v607 = vmul.f32 %v158, %v543
    %v608 = vmul.f32 %v159, %v544
    %v609 = vmul.f32 %v160, %v545
    %v610 = vmul.f32 %v161, %v546
    %v611 = vmul.f32 %v162, %v547
    %v612 = vmul.f32 %v163, %v548
    %v613 = vmul.f32 %v164, %v549
    %v614 = vmul.f32 %v165, %v550
    %v615 = vmul.f32 %v166, %v551
    %v616 = vmul.f32 %v167, %v552
    %v617 = vmul.f32 %v168, %v553
    %v618 = vmul.f32 %v169, %v554
    %v619 = vmul.f32 %v170, %v555
    %v620 = vmul.f32 %v171, %v556
    %v621 = vmul.f32 %v172, %v557
    %v622 = vmul.f32 %v173, %v558
    %v623 = vmul.f32 %v174, %v559
    %v624 = vmul.f32 %v175, %v560
    %v625 = vmul.f32 %v176, %v561
    %v626 = vmul.f32 %v177, %v562
    %v627 = vmul.f32 %v178, %v563
    %v628 = vmul.f32 %v179, %v564
    %v629 = vmul.f32 %v180, %v565
    %v630 = vmul.f32 %v181, %v566
    %v631 = vmul.f32 %v182, %v567
    %v632 = vmul.f32 %v183, %v568
    %v633 = vmul.f32 %v184, %v569
    %v634 = vmul.f32 %v185, %v570
    %v635 = vmul.f32 %v186, %v571
    %v636 = vmul.f32 %v187, %v572
    %v637 = vmul.f32 %v188, %v573
    %v638 = vmul.f32 %v189, %v574
    %v639 = vmul.f32 %v190, %v575
    %v640 = vmul.f32 %v191, %v576
    %v641 = vmul.f32 %v192, %v577
    %v642 = vmul.f32 %v193, %v578
    %v643 = vmul.f32 %v194, %v579
    %v644 = vmul.f32 %v195, %v580
    %v645 = vld [vmem:[#allocation5] sm:$0x1]
    %v647 = vlaneseq
    %v648 = vshrl.u32 %v647, 7
    %v649 = vsub.s32 0, %v648
    %v650 = vrot.slane %v645, %v649
    %v652 = vmul.f32 %v581, %v650
    %v653 = vmul.f32 %v582, %v650
    %v654 = vmul.f32 %v583, %v650
    %v655 = vmul.f32 %v584, %v650
    %v656 = vmul.f32 %v585, %v650
    %v657 = vmul.f32 %v586, %v650
    %v658 = vmul.f32 %v587, %v650
    %v659 = vmul.f32 %v588, %v650
    %v660 = vmul.f32 %v589, %v650
    %v661 = vmul.f32 %v590, %v650
    %v662 = vmul.f32 %v591, %v650
    %v663 = vmul.f32 %v592, %v650
    %v664 = vmul.f32 %v593, %v650
    %v665 = vmul.f32 %v594, %v650
    %v666 = vmul.f32 %v595, %v650
    %v667 = vmul.f32 %v596, %v650
    %v668 = vmul.f32 %v597, %v650
    %v669 = vmul.f32 %v598, %v650
    %v670 = vmul.f32 %v599, %v650
    %v671 = vmul.f32 %v600, %v650
    %v672 = vmul.f32 %v601, %v650
    %v673 = vmul.f32 %v602, %v650
    %v674 = vmul.f32 %v603, %v650
    %v675 = vmul.f32 %v604, %v650
    %v676 = vmul.f32 %v605, %v650
    %v677 = vmul.f32 %v606, %v650
    %v678 = vmul.f32 %v607, %v650
    %v679 = vmul.f32 %v608, %v650
    %v680 = vmul.f32 %v609, %v650
    %v681 = vmul.f32 %v610, %v650
    %v682 = vmul.f32 %v611, %v650
    %v683 = vmul.f32 %v612, %v650
    %v684 = vmul.f32 %v613, %v650
    %v685 = vmul.f32 %v614, %v650
    %v686 = vmul.f32 %v615, %v650
    %v687 = vmul.f32 %v616, %v650
    %v688 = vmul.f32 %v617, %v650
    %v689 = vmul.f32 %v618, %v650
    %v690 = vmul.f32 %v619, %v650
    %v691 = vmul.f32 %v620, %v650
    %v692 = vmul.f32 %v621, %v650
    %v693 = vmul.f32 %v622, %v650
    %v694 = vmul.f32 %v623, %v650
    %v695 = vmul.f32 %v624, %v650
    %v696 = vmul.f32 %v625, %v650
    %v697 = vmul.f32 %v626, %v650
    %v698 = vmul.f32 %v627, %v650
    %v699 = vmul.f32 %v628, %v650
    %v700 = vmul.f32 %v629, %v650
    %v701 = vmul.f32 %v630, %v650
    %v702 = vmul.f32 %v631, %v650
    %v703 = vmul.f32 %v632, %v650
    %v704 = vmul.f32 %v633, %v650
    %v705 = vmul.f32 %v634, %v650
    %v706 = vmul.f32 %v635, %v650
    %v707 = vmul.f32 %v636, %v650
    %v708 = vmul.f32 %v637, %v650
    %v709 = vmul.f32 %v638, %v650
    %v710 = vmul.f32 %v639, %v650
    %v711 = vmul.f32 %v640, %v650
    %v712 = vmul.f32 %v641, %v650
    %v713 = vmul.f32 %v642, %v650
    %v714 = vmul.f32 %v643, %v650
    %v715 = vmul.f32 %v644, %v650
    %v716 = vpack.c.bf16 %v653, %v652
    %v717 = vpack.c.bf16 %v655, %v654
    %v718 = vpack.c.bf16 %v657, %v656
    %v719 = vpack.c.bf16 %v659, %v658
    %v720 = vpack.c.bf16 %v661, %v660
    %v721 = vpack.c.bf16 %v663, %v662
    %v722 = vpack.c.bf16 %v665, %v664
    %v723 = vpack.c.bf16 %v667, %v666
    %v724 = vpack.c.bf16 %v669, %v668
    %v725 = vpack.c.bf16 %v671, %v670
    %v726 = vpack.c.bf16 %v673, %v672
    %v727 = vpack.c.bf16 %v675, %v674
    %v728 = vpack.c.bf16 %v677, %v676
    %v729 = vpack.c.bf16 %v679, %v678
    %v730 = vpack.c.bf16 %v681, %v680
    %v731 = vpack.c.bf16 %v683, %v682
    %v732 = vpack.c.bf16 %v685, %v684
    %v733 = vpack.c.bf16 %v687, %v686
    %v734 = vpack.c.bf16 %v689, %v688
    %v735 = vpack.c.bf16 %v691, %v690
    %v736 = vpack.c.bf16 %v693, %v692
    %v737 = vpack.c.bf16 %v695, %v694
    %v738 = vpack.c.bf16 %v697, %v696
    %v739 = vpack.c.bf16 %v699, %v698
    %v740 = vpack.c.bf16 %v701, %v700
    %v741 = vpack.c.bf16 %v703, %v702
    %v742 = vpack.c.bf16 %v705, %v704
    %v743 = vpack.c.bf16 %v707, %v706
    %v744 = vpack.c.bf16 %v709, %v708
    %v745 = vpack.c.bf16 %v711, %v710
    %v746 = vpack.c.bf16 %v713, %v712
    %v747 = vpack.c.bf16 %v715, %v714
    %v748 = vld [vmem:[#allocation7] sm:$0xff]
    %v749 = vld [vmem:[#allocation7 + $0x8] sm:$0xff]
    %v750 = vld [vmem:[#allocation7 + $0x10] sm:$0xff]
    %v751 = vld [vmem:[#allocation7 + $0x18] sm:$0xff]
    %v752 = vld [vmem:[#allocation7 + $0x20] sm:$0xff]
    %v753 = vld [vmem:[#allocation7 + $0x28] sm:$0xff]
    %v754 = vld [vmem:[#allocation7 + $0x30] sm:$0xff]
    %v755 = vld [vmem:[#allocation7 + $0x38] sm:$0xff]
    %v756 = vld [vmem:[#allocation7 + $0x40] sm:$0xff]
    %v757 = vld [vmem:[#allocation7 + $0x48] sm:$0xff]
    %v758 = vld [vmem:[#allocation7 + $0x50] sm:$0xff]
    %v759 = vld [vmem:[#allocation7 + $0x58] sm:$0xff]
    %v760 = vld [vmem:[#allocation7 + $0x60] sm:$0xff]
    %v761 = vld [vmem:[#allocation7 + $0x68] sm:$0xff]
    %v762 = vld [vmem:[#allocation7 + $0x70] sm:$0xff]
    %v763 = vld [vmem:[#allocation7 + $0x78] sm:$0xff]
    %v764 = vld [vmem:[#allocation8] sm:$0x3]
    %v766 = vlaneseq
    %v767 = vshrl.u32 %v766, 7
    %v768 = vsub.s32 0, %v767
    %v769 = vrot.slane %v764, %v768
    %v770 = vlaneseq
    %v771 = vshrl.u32 %v770, 7
    %v772 = vsub.s32 1, %v771
    %v773 = vrot.slane %v764, %v772
    %v792 = vunpack.c.l.b16 %v748
    %v793 = vunpack.c.h.b16 %v748
    %v794 = vunpack.c.l.b16 %v749
    %v795 = vunpack.c.h.b16 %v749
    %v796 = vunpack.c.l.b16 %v750
    %v797 = vunpack.c.h.b16 %v750
    %v798 = vunpack.c.l.b16 %v751
    %v799 = vunpack.c.h.b16 %v751
    %v800 = vunpack.c.l.b16 %v752
    %v801 = vunpack.c.h.b16 %v752
    %v802 = vunpack.c.l.b16 %v753
    %v803 = vunpack.c.h.b16 %v753
    %v804 = vunpack.c.l.b16 %v754
    %v805 = vunpack.c.h.b16 %v754
    %v806 = vunpack.c.l.b16 %v755
    %v807 = vunpack.c.h.b16 %v755
    %v808 = vunpack.c.l.b16 %v756
    %v809 = vunpack.c.h.b16 %v756
    %v810 = vunpack.c.l.b16 %v757
    %v811 = vunpack.c.h.b16 %v757
    %v812 = vunpack.c.l.b16 %v758
    %v813 = vunpack.c.h.b16 %v758
    %v814 = vunpack.c.l.b16 %v759
    %v815 = vunpack.c.h.b16 %v759
    %v816 = vunpack.c.l.b16 %v760
    %v817 = vunpack.c.h.b16 %v760
    %v818 = vunpack.c.l.b16 %v761
    %v819 = vunpack.c.h.b16 %v761
    %v820 = vunpack.c.l.b16 %v762
    %v821 = vunpack.c.h.b16 %v762
    %v822 = vunpack.c.l.b16 %v763
    %v823 = vunpack.c.h.b16 %v763
    %v824 = vpack.c.b16 %v794, %v792
    %v825 = vpack.c.b16 %v795, %v793
    %v826 = vpack.c.b16 %v798, %v796
    %v827 = vpack.c.b16 %v799, %v797
    %v828 = vpack.c.b16 %v802, %v800
    %v829 = vpack.c.b16 %v803, %v801
    %v830 = vpack.c.b16 %v806, %v804
    %v831 = vpack.c.b16 %v807, %v805
    %v832 = vpack.c.b16 %v810, %v808
    %v833 = vpack.c.b16 %v811, %v809
    %v834 = vpack.c.b16 %v814, %v812
    %v835 = vpack.c.b16 %v815, %v813
    %v836 = vpack.c.b16 %v818, %v816
    %v837 = vpack.c.b16 %v819, %v817
    %v838 = vpack.c.b16 %v822, %v820
    %v839 = vpack.c.b16 %v823, %v821
    %856 = vmatprep.subr.bf16.mxu0 %v825
    %857 = vmatpush1.bf16.msra.mxu0 %v824
    %858 = vmatprep.subr.bf16.mxu0 %v827
    %859 = vmatpush1.bf16.msra.mxu0 %v826
    %860 = vmatprep.subr.bf16.mxu0 %v829
    %861 = vmatpush1.bf16.msra.mxu0 %v828
    %862 = vmatprep.subr.bf16.mxu0 %v831
    %863 = vmatpush1.bf16.msra.mxu0 %v830
    %864 = vmatprep.subr.bf16.mxu0 %v833
    %865 = vmatpush1.bf16.msra.mxu0 %v832
    %866 = vmatprep.subr.bf16.mxu0 %v835
    %867 = vmatpush1.bf16.msra.mxu0 %v834
    %868 = vmatprep.subr.bf16.mxu0 %v837
    %869 = vmatpush1.bf16.msra.mxu0 %v836
    %870 = vmatprep.subr.bf16.mxu0 %v839
    %871 = vmatpush1.bf16.msra.mxu0 %v838
    %872 = vmatprep.subr.bf16.mxu0 0
    %873 = vmatpush1.bf16.msra.mxu0 0
    %874 = vmatprep.subr.bf16.mxu0 0
    %875 = vmatpush1.bf16.msra.mxu0 0
    %876 = vmatprep.subr.bf16.mxu0 0
    %877 = vmatpush1.bf16.msra.mxu0 0
    %878 = vmatprep.subr.bf16.mxu0 0
    %879 = vmatpush1.bf16.msra.mxu0 0
    %880 = vmatprep.subr.bf16.mxu0 0
    %881 = vmatpush1.bf16.msra.mxu0 0
    %882 = vmatprep.subr.bf16.mxu0 0
    %883 = vmatpush1.bf16.msra.mxu0 0
    %884 = vmatprep.subr.bf16.mxu0 0
    %885 = vmatpush1.bf16.msra.mxu0 0
    %886 = vmatprep.subr.bf16.mxu0 0
    %887 = vmatpush1.bf16.msra.mxu0 0
    %888 = vmatprep.mubr.bf16.mxu0 0
    %889 = vmatmul.mubr.bf16.gmra.mrb[0].mxu0 %v716
    %v890 = vpop.f32.mrb[0].mxu0
    %v891 = vadd.f32 %v769, %v890
    %v892 = vpop.f32.mrb[0].mxu0
    %v893 = vadd.f32 %v773, %v892
    %v894 = vpop.f32.mrb[0].mxu0
    %v895 = vadd.f32 %v769, %v894
    %v896 = vpop.f32.mrb[0].mxu0
    %v897 = vadd.f32 %v773, %v896
    %898 = vmatprep.mubr.bf16.mxu0 0
    %899 = vmatmul.mubr.bf16.gmra.mrb[0].mxu0 %v717
    %v900 = vpop.f32.mrb[0].mxu0
    %v901 = vadd.f32 %v769, %v900
    %v902 = vpop.f32.mrb[0].mxu0
    %v903 = vadd.f32 %v773, %v902
    %v904 = vpop.f32.mrb[0].mxu0
    %v905 = vadd.f32 %v769, %v904
    %v906 = vpop.f32.mrb[0].mxu0
    %v907 = vadd.f32 %v773, %v906
    %908 = vmatprep.mubr.bf16.mxu0 0
    %909 = vmatmul.mubr.bf16.gmra.mrb[0].mxu0 %v718
    %v910 = vpop.f32.mrb[0].mxu0
    %v911 = vadd.f32 %v769, %v910
    %v912 = vpop.f32.mrb[0].mxu0
    %v913 = vadd.f32 %v773, %v912
    %v914 = vpop.f32.mrb[0].mxu0
    %v915 = vadd.f32 %v769, %v914
    %v916 = vpop.f32.mrb[0].mxu0
    %v917 = vadd.f32 %v773, %v916
    %918 = vmatprep.mubr.bf16.mxu0 0
    %919 = vmatmul.mubr.bf16.gmra.mrb[0].mxu0 %v719
    %v920 = vpop.f32.mrb[0].mxu0
    %v921 = vadd.f32 %v769, %v920
    %v922 = vpop.f32.mrb[0].mxu0
    %v923 = vadd.f32 %v773, %v922
    %v924 = vpop.f32.mrb[0].mxu0
    %v925 = vadd.f32 %v769, %v924
    %v926 = vpop.f32.mrb[0].mxu0
    %v927 = vadd.f32 %v773, %v926
    %928 = vmatprep.mubr.bf16.mxu0 0
    %929 = vmatmul.mubr.bf16.gmra.mrb[0].mxu0 %v720
    %v930 = vpop.f32.mrb[0].mxu0
    %v931 = vadd.f32 %v769, %v930
    %v932 = vpop.f32.mrb[0].mxu0
    %v933 = vadd.f32 %v773, %v932
    %v934 = vpop.f32.mrb[0].mxu0
    %v935 = vadd.f32 %v769, %v934
    %v936 = vpop.f32.mrb[0].mxu0
    %v937 = vadd.f32 %v773, %v936
    %938 = vmatprep.mubr.bf16.mxu0 0
    %939 = vmatmul.mubr.bf16.gmra.mrb[0].mxu0 %v721
    %v940 = vpop.f32.mrb[0].mxu0
    %v941 = vadd.f32 %v769, %v940
    %v942 = vpop.f32.mrb[0].mxu0
    %v943 = vadd.f32 %v773, %v942
    %v944 = vpop.f32.mrb[0].mxu0
    %v945 = vadd.f32 %v769, %v944
    %v946 = vpop.f32.mrb[0].mxu0
    %v947 = vadd.f32 %v773, %v946
    %948 = vmatprep.mubr.bf16.mxu0 0
    %949 = vmatmul.mubr.bf16.gmra.mrb[0].mxu0 %v722
    %v950 = vpop.f32.mrb[0].mxu0
    %v951 = vadd.f32 %v769, %v950
    %v952 = vpop.f32.mrb[0].mxu0
    %v953 = vadd.f32 %v773, %v952
    %v954 = vpop.f32.mrb[0].mxu0
    %v955 = vadd.f32 %v769, %v954
    %v956 = vpop.f32.mrb[0].mxu0
    %v957 = vadd.f32 %v773, %v956
    %958 = vmatprep.mubr.bf16.mxu0 0
    %959 = vmatmul.mubr.bf16.gmra.mrb[0].mxu0 %v723
    %v960 = vpop.f32.mrb[0].mxu0
    %v961 = vadd.f32 %v769, %v960
    %v962 = vpop.f32.mrb[0].mxu0
    %v963 = vadd.f32 %v773, %v962
    %v964 = vpop.f32.mrb[0].mxu0
    %v965 = vadd.f32 %v769, %v964
    %v966 = vpop.f32.mrb[0].mxu0
    %v967 = vadd.f32 %v773, %v966
    %968 = vmatprep.mubr.bf16.mxu0 0
    %969 = vmatmul.mubr.bf16.gmra.mrb[0].mxu0 %v724
    %v970 = vpop.f32.mrb[0].mxu0
    %v971 = vadd.f32 %v769, %v970
    %v972 = vpop.f32.mrb[0].mxu0
    %v973 = vadd.f32 %v773, %v972
    %v974 = vpop.f32.mrb[0].mxu0
    %v975 = vadd.f32 %v769, %v974
    %v976 = vpop.f32.mrb[0].mxu0
    %v977 = vadd.f32 %v773, %v976
    %978 = vmatprep.mubr.bf16.mxu0 0
    %979 = vmatmul.mubr.bf16.gmra.mrb[0].mxu0 %v725
    %v980 = vpop.f32.mrb[0].mxu0
    %v981 = vadd.f32 %v769, %v980
    %v982 = vpop.f32.mrb[0].mxu0
    %v983 = vadd.f32 %v773, %v982
    %v984 = vpop.f32.mrb[0].mxu0
    %v985 = vadd.f32 %v769, %v984
    %v986 = vpop.f32.mrb[0].mxu0
    %v987 = vadd.f32 %v773, %v986
    %988 = vmatprep.mubr.bf16.mxu0 0
    %989 = vmatmul.mubr.bf16.gmra.mrb[0].mxu0 %v726
    %v990 = vpop.f32.mrb[0].mxu0
    %v991 = vadd.f32 %v769, %v990
    %v992 = vpop.f32.mrb[0].mxu0
    %v993 = vadd.f32 %v773, %v992
    %v994 = vpop.f32.mrb[0].mxu0
    %v995 = vadd.f32 %v769, %v994
    %v996 = vpop.f32.mrb[0].mxu0
    %v997 = vadd.f32 %v773, %v996
    %998 = vmatprep.mubr.bf16.mxu0 0
    %999 = vmatmul.mubr.bf16.gmra.mrb[0].mxu0 %v727
    %v1000 = vpop.f32.mrb[0].mxu0
    %v1001 = vadd.f32 %v769, %v1000
    %v1002 = vpop.f32.mrb[0].mxu0
    %v1003 = vadd.f32 %v773, %v1002
    %v1004 = vpop.f32.mrb[0].mxu0
    %v1005 = vadd.f32 %v769, %v1004
    %v1006 = vpop.f32.mrb[0].mxu0
    %v1007 = vadd.f32 %v773, %v1006
    %1008 = vmatprep.mubr.bf16.mxu0 0
    %1009 = vmatmul.mubr.bf16.gmra.mrb[0].mxu0 %v728
    %v1010 = vpop.f32.mrb[0].mxu0
    %v1011 = vadd.f32 %v769, %v1010
    %v1012 = vpop.f32.mrb[0].mxu0
    %v1013 = vadd.f32 %v773, %v1012
    %v1014 = vpop.f32.mrb[0].mxu0
    %v1015 = vadd.f32 %v769, %v1014
    %v1016 = vpop.f32.mrb[0].mxu0
    %v1017 = vadd.f32 %v773, %v1016
    %1018 = vmatprep.mubr.bf16.mxu0 0
    %1019 = vmatmul.mubr.bf16.gmra.mrb[0].mxu0 %v729
    %v1020 = vpop.f32.mrb[0].mxu0
    %v1021 = vadd.f32 %v769, %v1020
    %v1022 = vpop.f32.mrb[0].mxu0
    %v1023 = vadd.f32 %v773, %v1022
    %v1024 = vpop.f32.mrb[0].mxu0
    %v1025 = vadd.f32 %v769, %v1024
    %v1026 = vpop.f32.mrb[0].mxu0
    %v1027 = vadd.f32 %v773, %v1026
    %1028 = vmatprep.mubr.bf16.mxu0 0
    %1029 = vmatmul.mubr.bf16.gmra.mrb[0].mxu0 %v730
    %v1030 = vpop.f32.mrb[0].mxu0
    %v1031 = vadd.f32 %v769, %v1030
    %v1032 = vpop.f32.mrb[0].mxu0
    %v1033 = vadd.f32 %v773, %v1032
    %v1034 = vpop.f32.mrb[0].mxu0
    %v1035 = vadd.f32 %v769, %v1034
    %v1036 = vpop.f32.mrb[0].mxu0
    %v1037 = vadd.f32 %v773, %v1036
    %1038 = vmatprep.mubr.bf16.mxu0 0
    %1039 = vmatmul.mubr.bf16.gmra.mrb[0].mxu0 %v731
    %v1040 = vpop.f32.mrb[0].mxu0
    %v1041 = vadd.f32 %v769, %v1040
    %v1042 = vpop.f32.mrb[0].mxu0
    %v1043 = vadd.f32 %v773, %v1042
    %v1044 = vpop.f32.mrb[0].mxu0
    %v1045 = vadd.f32 %v769, %v1044
    %v1046 = vpop.f32.mrb[0].mxu0
    %v1047 = vadd.f32 %v773, %v1046
    %1048 = vmatprep.mubr.bf16.mxu0 0
    %1049 = vmatmul.mubr.bf16.gmra.mrb[0].mxu0 %v732
    %v1050 = vpop.f32.mrb[0].mxu0
    %v1051 = vadd.f32 %v769, %v1050
    %v1052 = vpop.f32.mrb[0].mxu0
    %v1053 = vadd.f32 %v773, %v1052
    %v1054 = vpop.f32.mrb[0].mxu0
    %v1055 = vadd.f32 %v769, %v1054
    %v1056 = vpop.f32.mrb[0].mxu0
    %v1057 = vadd.f32 %v773, %v1056
    %1058 = vmatprep.mubr.bf16.mxu0 0
    %1059 = vmatmul.mubr.bf16.gmra.mrb[0].mxu0 %v733
    %v1060 = vpop.f32.mrb[0].mxu0
    %v1061 = vadd.f32 %v769, %v1060
    %v1062 = vpop.f32.mrb[0].mxu0
    %v1063 = vadd.f32 %v773, %v1062
    %v1064 = vpop.f32.mrb[0].mxu0
    %v1065 = vadd.f32 %v769, %v1064
    %v1066 = vpop.f32.mrb[0].mxu0
    %v1067 = vadd.f32 %v773, %v1066
    %1068 = vmatprep.mubr.bf16.mxu0 0
    %1069 = vmatmul.mubr.bf16.gmra.mrb[0].mxu0 %v734
    %v1070 = vpop.f32.mrb[0].mxu0
    %v1071 = vadd.f32 %v769, %v1070
    %v1072 = vpop.f32.mrb[0].mxu0
    %v1073 = vadd.f32 %v773, %v1072
    %v1074 = vpop.f32.mrb[0].mxu0
    %v1075 = vadd.f32 %v769, %v1074
    %v1076 = vpop.f32.mrb[0].mxu0
    %v1077 = vadd.f32 %v773, %v1076
    %1078 = vmatprep.mubr.bf16.mxu0 0
    %1079 = vmatmul.mubr.bf16.gmra.mrb[0].mxu0 %v735
    %v1080 = vpop.f32.mrb[0].mxu0
    %v1081 = vadd.f32 %v769, %v1080
    %v1082 = vpop.f32.mrb[0].mxu0
    %v1083 = vadd.f32 %v773, %v1082
    %v1084 = vpop.f32.mrb[0].mxu0
    %v1085 = vadd.f32 %v769, %v1084
    %v1086 = vpop.f32.mrb[0].mxu0
    %v1087 = vadd.f32 %v773, %v1086
    %1088 = vmatprep.mubr.bf16.mxu0 0
    %1089 = vmatmul.mubr.bf16.gmra.mrb[0].mxu0 %v736
    %v1090 = vpop.f32.mrb[0].mxu0
    %v1091 = vadd.f32 %v769, %v1090
    %v1092 = vpop.f32.mrb[0].mxu0
    %v1093 = vadd.f32 %v773, %v1092
    %v1094 = vpop.f32.mrb[0].mxu0
    %v1095 = vadd.f32 %v769, %v1094
    %v1096 = vpop.f32.mrb[0].mxu0
    %v1097 = vadd.f32 %v773, %v1096
    %1098 = vmatprep.mubr.bf16.mxu0 0
    %1099 = vmatmul.mubr.bf16.gmra.mrb[0].mxu0 %v737
    %v1100 = vpop.f32.mrb[0].mxu0
    %v1101 = vadd.f32 %v769, %v1100
    %v1102 = vpop.f32.mrb[0].mxu0
    %v1103 = vadd.f32 %v773, %v1102
    %v1104 = vpop.f32.mrb[0].mxu0
    %v1105 = vadd.f32 %v769, %v1104
    %v1106 = vpop.f32.mrb[0].mxu0
    %v1107 = vadd.f32 %v773, %v1106
    %1108 = vmatprep.mubr.bf16.mxu0 0
    %1109 = vmatmul.mubr.bf16.gmra.mrb[0].mxu0 %v738
    %v1110 = vpop.f32.mrb[0].mxu0
    %v1111 = vadd.f32 %v769, %v1110
    %v1112 = vpop.f32.mrb[0].mxu0
    %v1113 = vadd.f32 %v773, %v1112
    %v1114 = vpop.f32.mrb[0].mxu0
    %v1115 = vadd.f32 %v769, %v1114
    %v1116 = vpop.f32.mrb[0].mxu0
    %v1117 = vadd.f32 %v773, %v1116
    %1118 = vmatprep.mubr.bf16.mxu0 0
    %1119 = vmatmul.mubr.bf16.gmra.mrb[0].mxu0 %v739
    %v1120 = vpop.f32.mrb[0].mxu0
    %v1121 = vadd.f32 %v769, %v1120
    %v1122 = vpop.f32.mrb[0].mxu0
    %v1123 = vadd.f32 %v773, %v1122
    %v1124 = vpop.f32.mrb[0].mxu0
    %v1125 = vadd.f32 %v769, %v1124
    %v1126 = vpop.f32.mrb[0].mxu0
    %v1127 = vadd.f32 %v773, %v1126
    %1128 = vmatprep.mubr.bf16.mxu0 0
    %1129 = vmatmul.mubr.bf16.gmra.mrb[0].mxu0 %v740
    %v1130 = vpop.f32.mrb[0].mxu0
    %v1131 = vadd.f32 %v769, %v1130
    %v1132 = vpop.f32.mrb[0].mxu0
    %v1133 = vadd.f32 %v773, %v1132
    %v1134 = vpop.f32.mrb[0].mxu0
    %v1135 = vadd.f32 %v769, %v1134
    %v1136 = vpop.f32.mrb[0].mxu0
    %v1137 = vadd.f32 %v773, %v1136
    %1138 = vmatprep.mubr.bf16.mxu0 0
    %1139 = vmatmul.mubr.bf16.gmra.mrb[0].mxu0 %v741
    %v1140 = vpop.f32.mrb[0].mxu0
    %v1141 = vadd.f32 %v769, %v1140
    %v1142 = vpop.f32.mrb[0].mxu0
    %v1143 = vadd.f32 %v773, %v1142
    %v1144 = vpop.f32.mrb[0].mxu0
    %v1145 = vadd.f32 %v769, %v1144
    %v1146 = vpop.f32.mrb[0].mxu0
    %v1147 = vadd.f32 %v773, %v1146
    %1148 = vmatprep.mubr.bf16.mxu0 0
    %1149 = vmatmul.mubr.bf16.gmra.mrb[0].mxu0 %v742
    %v1150 = vpop.f32.mrb[0].mxu0
    %v1151 = vadd.f32 %v769, %v1150
    %v1152 = vpop.f32.mrb[0].mxu0
    %v1153 = vadd.f32 %v773, %v1152
    %v1154 = vpop.f32.mrb[0].mxu0
    %v1155 = vadd.f32 %v769, %v1154
    %v1156 = vpop.f32.mrb[0].mxu0
    %v1157 = vadd.f32 %v773, %v1156
    %1158 = vmatprep.mubr.bf16.mxu0 0
    %1159 = vmatmul.mubr.bf16.gmra.mrb[0].mxu0 %v743
    %v1160 = vpop.f32.mrb[0].mxu0
    %v1161 = vadd.f32 %v769, %v1160
    %v1162 = vpop.f32.mrb[0].mxu0
    %v1163 = vadd.f32 %v773, %v1162
    %v1164 = vpop.f32.mrb[0].mxu0
    %v1165 = vadd.f32 %v769, %v1164
    %v1166 = vpop.f32.mrb[0].mxu0
    %v1167 = vadd.f32 %v773, %v1166
    %1168 = vmatprep.mubr.bf16.mxu0 0
    %1169 = vmatmul.mubr.bf16.gmra.mrb[0].mxu0 %v744
    %v1170 = vpop.f32.mrb[0].mxu0
    %v1171 = vadd.f32 %v769, %v1170
    %v1172 = vpop.f32.mrb[0].mxu0
    %v1173 = vadd.f32 %v773, %v1172
    %v1174 = vpop.f32.mrb[0].mxu0
    %v1175 = vadd.f32 %v769, %v1174
    %v1176 = vpop.f32.mrb[0].mxu0
    %v1177 = vadd.f32 %v773, %v1176
    %1178 = vmatprep.mubr.bf16.mxu0 0
    %1179 = vmatmul.mubr.bf16.gmra.mrb[0].mxu0 %v745
    %v1180 = vpop.f32.mrb[0].mxu0
    %v1181 = vadd.f32 %v769, %v1180
    %v1182 = vpop.f32.mrb[0].mxu0
    %v1183 = vadd.f32 %v773, %v1182
    %v1184 = vpop.f32.mrb[0].mxu0
    %v1185 = vadd.f32 %v769, %v1184
    %v1186 = vpop.f32.mrb[0].mxu0
    %v1187 = vadd.f32 %v773, %v1186
    %1188 = vmatprep.mubr.bf16.mxu0 0
    %1189 = vmatmul.mubr.bf16.gmra.mrb[0].mxu0 %v746
    %v1190 = vpop.f32.mrb[0].mxu0
    %v1191 = vadd.f32 %v769, %v1190
    %v1192 = vpop.f32.mrb[0].mxu0
    %v1193 = vadd.f32 %v773, %v1192
    %v1194 = vpop.f32.mrb[0].mxu0
    %v1195 = vadd.f32 %v769, %v1194
    %v1196 = vpop.f32.mrb[0].mxu0
    %v1197 = vadd.f32 %v773, %v1196
    %1198 = vmatprep.mubr.bf16.mxu0 0
    %1199 = vmatmul.mubr.bf16.gmra.mrb[0].mxu0 %v747
    %v1200 = vpop.f32.mrb[0].mxu0
    %v1201 = vadd.f32 %v769, %v1200
    %v1202 = vpop.f32.mrb[0].mxu0
    %v1203 = vadd.f32 %v773, %v1202
    %v1204 = vpop.f32.mrb[0].mxu0
    %v1205 = vadd.f32 %v769, %v1204
    %v1206 = vpop.f32.mrb[0].mxu0
    %v1207 = vadd.f32 %v773, %v1206
    %1208 = vdwg.mxu0
    %v1209 = vsub.f32 0.0, %v891
    %v1210 = vsub.f32 0.0, %v893
    %v1211 = vsub.f32 0.0, %v895
    %v1212 = vsub.f32 0.0, %v897
    %v1213 = vsub.f32 0.0, %v901
    %v1214 = vsub.f32 0.0, %v903
    %v1215 = vsub.f32 0.0, %v905
    %v1216 = vsub.f32 0.0, %v907
    %v1217 = vsub.f32 0.0, %v911
    %v1218 = vsub.f32 0.0, %v913
    %v1219 = vsub.f32 0.0, %v915
    %v1220 = vsub.f32 0.0, %v917
    %v1221 = vsub.f32 0.0, %v921
    %v1222 = vsub.f32 0.0, %v923
    %v1223 = vsub.f32 0.0, %v925
    %v1224 = vsub.f32 0.0, %v927
    %v1225 = vsub.f32 0.0, %v931
    %v1226 = vsub.f32 0.0, %v933
    %v1227 = vsub.f32 0.0, %v935
    %v1228 = vsub.f32 0.0, %v937
    %v1229 = vsub.f32 0.0, %v941
    %v1230 = vsub.f32 0.0, %v943
    %v1231 = vsub.f32 0.0, %v945
    %v1232 = vsub.f32 0.0, %v947
    %v1233 = vsub.f32 0.0, %v951
    %v1234 = vsub.f32 0.0, %v953
    %v1235 = vsub.f32 0.0, %v955
    %v1236 = vsub.f32 0.0, %v957
    %v1237 = vsub.f32 0.0, %v961
    %v1238 = vsub.f32 0.0, %v963
    %v1239 = vsub.f32 0.0, %v965
    %v1240 = vsub.f32 0.0, %v967
    %v1241 = vsub.f32 0.0, %v971
    %v1242 = vsub.f32 0.0, %v973
    %v1243 = vsub.f32 0.0, %v975
    %v1244 = vsub.f32 0.0, %v977
    %v1245 = vsub.f32 0.0, %v981
    %v1246 = vsub.f32 0.0, %v983
    %v1247 = vsub.f32 0.0, %v985
    %v1248 = vsub.f32 0.0, %v987
    %v1249 = vsub.f32 0.0, %v991
    %v1250 = vsub.f32 0.0, %v993
    %v1251 = vsub.f32 0.0, %v995
    %v1252 = vsub.f32 0.0, %v997
    %v1253 = vsub.f32 0.0, %v1001
    %v1254 = vsub.f32 0.0, %v1003
    %v1255 = vsub.f32 0.0, %v1005
    %v1256 = vsub.f32 0.0, %v1007
    %v1257 = vsub.f32 0.0, %v1011
    %v1258 = vsub.f32 0.0, %v1013
    %v1259 = vsub.f32 0.0, %v1015
    %v1260 = vsub.f32 0.0, %v1017
    %v1261 = vsub.f32 0.0, %v1021
    %v1262 = vsub.f32 0.0, %v1023
    %v1263 = vsub.f32 0.0, %v1025
    %v1264 = vsub.f32 0.0, %v1027
    %v1265 = vsub.f32 0.0, %v1031
    %v1266 = vsub.f32 0.0, %v1033
    %v1267 = vsub.f32 0.0, %v1035
    %v1268 = vsub.f32 0.0, %v1037
    %v1269 = vsub.f32 0.0, %v1041
    %v1270 = vsub.f32 0.0, %v1043
    %v1271 = vsub.f32 0.0, %v1045
    %v1272 = vsub.f32 0.0, %v1047
    %v1273 = vsub.f32 0.0, %v1051
    %v1274 = vsub.f32 0.0, %v1053
    %v1275 = vsub.f32 0.0, %v1055
    %v1276 = vsub.f32 0.0, %v1057
    %v1277 = vsub.f32 0.0, %v1061
    %v1278 = vsub.f32 0.0, %v1063
    %v1279 = vsub.f32 0.0, %v1065
    %v1280 = vsub.f32 0.0, %v1067
    %v1281 = vsub.f32 0.0, %v1071
    %v1282 = vsub.f32 0.0, %v1073
    %v1283 = vsub.f32 0.0, %v1075
    %v1284 = vsub.f32 0.0, %v1077
    %v1285 = vsub.f32 0.0, %v1081
    %v1286 = vsub.f32 0.0, %v1083
    %v1287 = vsub.f32 0.0, %v1085
    %v1288 = vsub.f32 0.0, %v1087
    %v1289 = vsub.f32 0.0, %v1091
    %v1290 = vsub.f32 0.0, %v1093
    %v1291 = vsub.f32 0.0, %v1095
    %v1292 = vsub.f32 0.0, %v1097
    %v1293 = vsub.f32 0.0, %v1101
    %v1294 = vsub.f32 0.0, %v1103
    %v1295 = vsub.f32 0.0, %v1105
    %v1296 = vsub.f32 0.0, %v1107
    %v1297 = vsub.f32 0.0, %v1111
    %v1298 = vsub.f32 0.0, %v1113
    %v1299 = vsub.f32 0.0, %v1115
    %v1300 = vsub.f32 0.0, %v1117
    %v1301 = vsub.f32 0.0, %v1121
    %v1302 = vsub.f32 0.0, %v1123
    %v1303 = vsub.f32 0.0, %v1125
    %v1304 = vsub.f32 0.0, %v1127
    %v1305 = vsub.f32 0.0, %v1131
    %v1306 = vsub.f32 0.0, %v1133
    %v1307 = vsub.f32 0.0, %v1135
    %v1308 = vsub.f32 0.0, %v1137
    %v1309 = vsub.f32 0.0, %v1141
    %v1310 = vsub.f32 0.0, %v1143
    %v1311 = vsub.f32 0.0, %v1145
    %v1312 = vsub.f32 0.0, %v1147
    %v1313 = vsub.f32 0.0, %v1151
    %v1314 = vsub.f32 0.0, %v1153
    %v1315 = vsub.f32 0.0, %v1155
    %v1316 = vsub.f32 0.0, %v1157
    %v1317 = vsub.f32 0.0, %v1161
    %v1318 = vsub.f32 0.0, %v1163
    %v1319 = vsub.f32 0.0, %v1165
    %v1320 = vsub.f32 0.0, %v1167
    %v1321 = vsub.f32 0.0, %v1171
    %v1322 = vsub.f32 0.0, %v1173
    %v1323 = vsub.f32 0.0, %v1175
    %v1324 = vsub.f32 0.0, %v1177
    %v1325 = vsub.f32 0.0, %v1181
    %v1326 = vsub.f32 0.0, %v1183
    %v1327 = vsub.f32 0.0, %v1185
    %v1328 = vsub.f32 0.0, %v1187
    %v1329 = vsub.f32 0.0, %v1191
    %v1330 = vsub.f32 0.0, %v1193
    %v1331 = vsub.f32 0.0, %v1195
    %v1332 = vsub.f32 0.0, %v1197
    %v1333 = vsub.f32 0.0, %v1201
    %v1334 = vsub.f32 0.0, %v1203
    %v1335 = vsub.f32 0.0, %v1205
    %v1336 = vsub.f32 0.0, %v1207
    %v1337 = vmul.f32 %v1209, 1.442695
    %v1338 = vpow.pop %v1337
    %v1339 = vmul.f32 %v1210, 1.442695
    %v1340 = vpow.pop %v1339
    %v1341 = vmul.f32 %v1211, 1.442695
    %v1342 = vpow.pop %v1341
    %v1343 = vmul.f32 %v1212, 1.442695
    %v1344 = vpow.pop %v1343
    %v1345 = vmul.f32 %v1213, 1.442695
    %v1346 = vpow.pop %v1345
    %v1347 = vmul.f32 %v1214, 1.442695
    %v1348 = vpow.pop %v1347
    %v1349 = vmul.f32 %v1215, 1.442695
    %v1350 = vpow.pop %v1349
    %v1351 = vmul.f32 %v1216, 1.442695
    %v1352 = vpow.pop %v1351
    %v1353 = vmul.f32 %v1217, 1.442695
    %v1354 = vpow.pop %v1353
    %v1355 = vmul.f32 %v1218, 1.442695
    %v1356 = vpow.pop %v1355
    %v1357 = vmul.f32 %v1219, 1.442695
    %v1358 = vpow.pop %v1357
    %v1359 = vmul.f32 %v1220, 1.442695
    %v1360 = vpow.pop %v1359
    %v1361 = vmul.f32 %v1221, 1.442695
    %v1362 = vpow.pop %v1361
    %v1363 = vmul.f32 %v1222, 1.442695
    %v1364 = vpow.pop %v1363
    %v1365 = vmul.f32 %v1223, 1.442695
    %v1366 = vpow.pop %v1365
    %v1367 = vmul.f32 %v1224, 1.442695
    %v1368 = vpow.pop %v1367
    %v1369 = vmul.f32 %v1225, 1.442695
    %v1370 = vpow.pop %v1369
    %v1371 = vmul.f32 %v1226, 1.442695
    %v1372 = vpow.pop %v1371
    %v1373 = vmul.f32 %v1227, 1.442695
    %v1374 = vpow.pop %v1373
    %v1375 = vmul.f32 %v1228, 1.442695
    %v1376 = vpow.pop %v1375
    %v1377 = vmul.f32 %v1229, 1.442695
    %v1378 = vpow.pop %v1377
    %v1379 = vmul.f32 %v1230, 1.442695
    %v1380 = vpow.pop %v1379
    %v1381 = vmul.f32 %v1231, 1.442695
    %v1382 = vpow.pop %v1381
    %v1383 = vmul.f32 %v1232, 1.442695
    %v1384 = vpow.pop %v1383
    %v1385 = vmul.f32 %v1233, 1.442695
    %v1386 = vpow.pop %v1385
    %v1387 = vmul.f32 %v1234, 1.442695
    %v1388 = vpow.pop %v1387
    %v1389 = vmul.f32 %v1235, 1.442695
    %v1390 = vpow.pop %v1389
    %v1391 = vmul.f32 %v1236, 1.442695
    %v1392 = vpow.pop %v1391
    %v1393 = vmul.f32 %v1237, 1.442695
    %v1394 = vpow.pop %v1393
    %v1395 = vmul.f32 %v1238, 1.442695
    %v1396 = vpow.pop %v1395
    %v1397 = vmul.f32 %v1239, 1.442695
    %v1398 = vpow.pop %v1397
    %v1399 = vmul.f32 %v1240, 1.442695
    %v1400 = vpow.pop %v1399
    %v1401 = vmul.f32 %v1241, 1.442695
    %v1402 = vpow.pop %v1401
    %v1403 = vmul.f32 %v1242, 1.442695
    %v1404 = vpow.pop %v1403
    %v1405 = vmul.f32 %v1243, 1.442695
    %v1406 = vpow.pop %v1405
    %v1407 = vmul.f32 %v1244, 1.442695
    %v1408 = vpow.pop %v1407
    %v1409 = vmul.f32 %v1245, 1.442695
    %v1410 = vpow.pop %v1409
    %v1411 = vmul.f32 %v1246, 1.442695
    %v1412 = vpow.pop %v1411
    %v1413 = vmul.f32 %v1247, 1.442695
    %v1414 = vpow.pop %v1413
    %v1415 = vmul.f32 %v1248, 1.442695
    %v1416 = vpow.pop %v1415
    %v1417 = vmul.f32 %v1249, 1.442695
    %v1418 = vpow.pop %v1417
    %v1419 = vmul.f32 %v1250, 1.442695
    %v1420 = vpow.pop %v1419
    %v1421 = vmul.f32 %v1251, 1.442695
    %v1422 = vpow.pop %v1421
    %v1423 = vmul.f32 %v1252, 1.442695
    %v1424 = vpow.pop %v1423
    %v1425 = vmul.f32 %v1253, 1.442695
    %v1426 = vpow.pop %v1425
    %v1427 = vmul.f32 %v1254, 1.442695
    %v1428 = vpow.pop %v1427
    %v1429 = vmul.f32 %v1255, 1.442695
    %v1430 = vpow.pop %v1429
    %v1431 = vmul.f32 %v1256, 1.442695
    %v1432 = vpow.pop %v1431
    %v1433 = vmul.f32 %v1257, 1.442695
    %v1434 = vpow.pop %v1433
    %v1435 = vmul.f32 %v1258, 1.442695
    %v1436 = vpow.pop %v1435
    %v1437 = vmul.f32 %v1259, 1.442695
    %v1438 = vpow.pop %v1437
    %v1439 = vmul.f32 %v1260, 1.442695
    %v1440 = vpow.pop %v1439
    %v1441 = vmul.f32 %v1261, 1.442695
    %v1442 = vpow.pop %v1441
    %v1443 = vmul.f32 %v1262, 1.442695
    %v1444 = vpow.pop %v1443
    %v1445 = vmul.f32 %v1263, 1.442695
    %v1446 = vpow.pop %v1445
    %v1447 = vmul.f32 %v1264, 1.442695
    %v1448 = vpow.pop %v1447
    %v1449 = vmul.f32 %v1265, 1.442695
    %v1450 = vpow.pop %v1449
    %v1451 = vmul.f32 %v1266, 1.442695
    %v1452 = vpow.pop %v1451
    %v1453 = vmul.f32 %v1267, 1.442695
    %v1454 = vpow.pop %v1453
    %v1455 = vmul.f32 %v1268, 1.442695
    %v1456 = vpow.pop %v1455
    %v1457 = vmul.f32 %v1269, 1.442695
    %v1458 = vpow.pop %v1457
    %v1459 = vmul.f32 %v1270, 1.442695
    %v1460 = vpow.pop %v1459
    %v1461 = vmul.f32 %v1271, 1.442695
    %v1462 = vpow.pop %v1461
    %v1463 = vmul.f32 %v1272, 1.442695
    %v1464 = vpow.pop %v1463
    %v1465 = vmul.f32 %v1273, 1.442695
    %v1466 = vpow.pop %v1465
    %v1467 = vmul.f32 %v1274, 1.442695
    %v1468 = vpow.pop %v1467
    %v1469 = vmul.f32 %v1275, 1.442695
    %v1470 = vpow.pop %v1469
    %v1471 = vmul.f32 %v1276, 1.442695
    %v1472 = vpow.pop %v1471
    %v1473 = vmul.f32 %v1277, 1.442695
    %v1474 = vpow.pop %v1473
    %v1475 = vmul.f32 %v1278, 1.442695
    %v1476 = vpow.pop %v1475
    %v1477 = vmul.f32 %v1279, 1.442695
    %v1478 = vpow.pop %v1477
    %v1479 = vmul.f32 %v1280, 1.442695
    %v1480 = vpow.pop %v1479
    %v1481 = vmul.f32 %v1281, 1.442695
    %v1482 = vpow.pop %v1481
    %v1483 = vmul.f32 %v1282, 1.442695
    %v1484 = vpow.pop %v1483
    %v1485 = vmul.f32 %v1283, 1.442695
    %v1486 = vpow.pop %v1485
    %v1487 = vmul.f32 %v1284, 1.442695
    %v1488 = vpow.pop %v1487
    %v1489 = vmul.f32 %v1285, 1.442695
    %v1490 = vpow.pop %v1489
    %v1491 = vmul.f32 %v1286, 1.442695
    %v1492 = vpow.pop %v1491
    %v1493 = vmul.f32 %v1287, 1.442695
    %v1494 = vpow.pop %v1493
    %v1495 = vmul.f32 %v1288, 1.442695
    %v1496 = vpow.pop %v1495
    %v1497 = vmul.f32 %v1289, 1.442695
    %v1498 = vpow.pop %v1497
    %v1499 = vmul.f32 %v1290, 1.442695
    %v1500 = vpow.pop %v1499
    %v1501 = vmul.f32 %v1291, 1.442695
    %v1502 = vpow.pop %v1501
    %v1503 = vmul.f32 %v1292, 1.442695
    %v1504 = vpow.pop %v1503
    %v1505 = vmul.f32 %v1293, 1.442695
    %v1506 = vpow.pop %v1505
    %v1507 = vmul.f32 %v1294, 1.442695
    %v1508 = vpow.pop %v1507
    %v1509 = vmul.f32 %v1295, 1.442695
    %v1510 = vpow.pop %v1509
    %v1511 = vmul.f32 %v1296, 1.442695
    %v1512 = vpow.pop %v1511
    %v1513 = vmul.f32 %v1297, 1.442695
    %v1514 = vpow.pop %v1513
    %v1515 = vmul.f32 %v1298, 1.442695
    %v1516 = vpow.pop %v1515
    %v1517 = vmul.f32 %v1299, 1.442695
    %v1518 = vpow.pop %v1517
    %v1519 = vmul.f32 %v1300, 1.442695
    %v1520 = vpow.pop %v1519
    %v1521 = vmul.f32 %v1301, 1.442695
    %v1522 = vpow.pop %v1521
    %v1523 = vmul.f32 %v1302, 1.442695
    %v1524 = vpow.pop %v1523
    %v1525 = vmul.f32 %v1303, 1.442695
    %v1526 = vpow.pop %v1525
    %v1527 = vmul.f32 %v1304, 1.442695
    %v1528 = vpow.pop %v1527
    %v1529 = vmul.f32 %v1305, 1.442695
    %v1530 = vpow.pop %v1529
    %v1531 = vmul.f32 %v1306, 1.442695
    %v1532 = vpow.pop %v1531
    %v1533 = vmul.f32 %v1307, 1.442695
    %v1534 = vpow.pop %v1533
    %v1535 = vmul.f32 %v1308, 1.442695
    %v1536 = vpow.pop %v1535
    %v1537 = vmul.f32 %v1309, 1.442695
    %v1538 = vpow.pop %v1537
    %v1539 = vmul.f32 %v1310, 1.442695
    %v1540 = vpow.pop %v1539
    %v1541 = vmul.f32 %v1311, 1.442695
    %v1542 = vpow.pop %v1541
    %v1543 = vmul.f32 %v1312, 1.442695
    %v1544 = vpow.pop %v1543
    %v1545 = vmul.f32 %v1313, 1.442695
    %v1546 = vpow.pop %v1545
    %v1547 = vmul.f32 %v1314, 1.442695
    %v1548 = vpow.pop %v1547
    %v1549 = vmul.f32 %v1315, 1.442695
    %v1550 = vpow.pop %v1549
    %v1551 = vmul.f32 %v1316, 1.442695
    %v1552 = vpow.pop %v1551
    %v1553 = vmul.f32 %v1317, 1.442695
    %v1554 = vpow.pop %v1553
    %v1555 = vmul.f32 %v1318, 1.442695
    %v1556 = vpow.pop %v1555
    %v1557 = vmul.f32 %v1319, 1.442695
    %v1558 = vpow.pop %v1557
    %v1559 = vmul.f32 %v1320, 1.442695
    %v1560 = vpow.pop %v1559
    %v1561 = vmul.f32 %v1321, 1.442695
    %v1562 = vpow.pop %v1561
    %v1563 = vmul.f32 %v1322, 1.442695
    %v1564 = vpow.pop %v1563
    %v1565 = vmul.f32 %v1323, 1.442695
    %v1566 = vpow.pop %v1565
    %v1567 = vmul.f32 %v1324, 1.442695
    %v1568 = vpow.pop %v1567
    %v1569 = vmul.f32 %v1325, 1.442695
    %v1570 = vpow.pop %v1569
    %v1571 = vmul.f32 %v1326, 1.442695
    %v1572 = vpow.pop %v1571
    %v1573 = vmul.f32 %v1327, 1.442695
    %v1574 = vpow.pop %v1573
    %v1575 = vmul.f32 %v1328, 1.442695
    %v1576 = vpow.pop %v1575
    %v1577 = vmul.f32 %v1329, 1.442695
    %v1578 = vpow.pop %v1577
    %v1579 = vmul.f32 %v1330, 1.442695
    %v1580 = vpow.pop %v1579
    %v1581 = vmul.f32 %v1331, 1.442695
    %v1582 = vpow.pop %v1581
    %v1583 = vmul.f32 %v1332, 1.442695
    %v1584 = vpow.pop %v1583
    %v1585 = vmul.f32 %v1333, 1.442695
    %v1586 = vpow.pop %v1585
    %v1587 = vmul.f32 %v1334, 1.442695
    %v1588 = vpow.pop %v1587
    %v1589 = vmul.f32 %v1335, 1.442695
    %v1590 = vpow.pop %v1589
    %v1591 = vmul.f32 %v1336, 1.442695
    %v1592 = vpow.pop %v1591
    %v1593 = vadd.f32 %v1338, 1.0
    %v1594 = vadd.f32 %v1340, 1.0
    %v1595 = vadd.f32 %v1342, 1.0
    %v1596 = vadd.f32 %v1344, 1.0
    %v1597 = vadd.f32 %v1346, 1.0
    %v1598 = vadd.f32 %v1348, 1.0
    %v1599 = vadd.f32 %v1350, 1.0
    %v1600 = vadd.f32 %v1352, 1.0
    %v1601 = vadd.f32 %v1354, 1.0
    %v1602 = vadd.f32 %v1356, 1.0
    %v1603 = vadd.f32 %v1358, 1.0
    %v1604 = vadd.f32 %v1360, 1.0
    %v1605 = vadd.f32 %v1362, 1.0
    %v1606 = vadd.f32 %v1364, 1.0
    %v1607 = vadd.f32 %v1366, 1.0
    %v1608 = vadd.f32 %v1368, 1.0
    %v1609 = vadd.f32 %v1370, 1.0
    %v1610 = vadd.f32 %v1372, 1.0
    %v1611 = vadd.f32 %v1374, 1.0
    %v1612 = vadd.f32 %v1376, 1.0
    %v1613 = vadd.f32 %v1378, 1.0
    %v1614 = vadd.f32 %v1380, 1.0
    %v1615 = vadd.f32 %v1382, 1.0
    %v1616 = vadd.f32 %v1384, 1.0
    %v1617 = vadd.f32 %v1386, 1.0
    %v1618 = vadd.f32 %v1388, 1.0
    %v1619 = vadd.f32 %v1390, 1.0
    %v1620 = vadd.f32 %v1392, 1.0
    %v1621 = vadd.f32 %v1394, 1.0
    %v1622 = vadd.f32 %v1396, 1.0
    %v1623 = vadd.f32 %v1398, 1.0
    %v1624 = vadd.f32 %v1400, 1.0
    %v1625 = vadd.f32 %v1402, 1.0
    %v1626 = vadd.f32 %v1404, 1.0
    %v1627 = vadd.f32 %v1406, 1.0
    %v1628 = vadd.f32 %v1408, 1.0
    %v1629 = vadd.f32 %v1410, 1.0
    %v1630 = vadd.f32 %v1412, 1.0
    %v1631 = vadd.f32 %v1414, 1.0
    %v1632 = vadd.f32 %v1416, 1.0
    %v1633 = vadd.f32 %v1418, 1.0
    %v1634 = vadd.f32 %v1420, 1.0
    %v1635 = vadd.f32 %v1422, 1.0
    %v1636 = vadd.f32 %v1424, 1.0
    %v1637 = vadd.f32 %v1426, 1.0
    %v1638 = vadd.f32 %v1428, 1.0
    %v1639 = vadd.f32 %v1430, 1.0
    %v1640 = vadd.f32 %v1432, 1.0
    %v1641 = vadd.f32 %v1434, 1.0
    %v1642 = vadd.f32 %v1436, 1.0
    %v1643 = vadd.f32 %v1438, 1.0
    %v1644 = vadd.f32 %v1440, 1.0
    %v1645 = vadd.f32 %v1442, 1.0
    %v1646 = vadd.f32 %v1444, 1.0
    %v1647 = vadd.f32 %v1446, 1.0
    %v1648 = vadd.f32 %v1448, 1.0
    %v1649 = vadd.f32 %v1450, 1.0
    %v1650 = vadd.f32 %v1452, 1.0
    %v1651 = vadd.f32 %v1454, 1.0
    %v1652 = vadd.f32 %v1456, 1.0
    %v1653 = vadd.f32 %v1458, 1.0
    %v1654 = vadd.f32 %v1460, 1.0
    %v1655 = vadd.f32 %v1462, 1.0
    %v1656 = vadd.f32 %v1464, 1.0
    %v1657 = vadd.f32 %v1466, 1.0
    %v1658 = vadd.f32 %v1468, 1.0
    %v1659 = vadd.f32 %v1470, 1.0
    %v1660 = vadd.f32 %v1472, 1.0
    %v1661 = vadd.f32 %v1474, 1.0
    %v1662 = vadd.f32 %v1476, 1.0
    %v1663 = vadd.f32 %v1478, 1.0
    %v1664 = vadd.f32 %v1480, 1.0
    %v1665 = vadd.f32 %v1482, 1.0
    %v1666 = vadd.f32 %v1484, 1.0
    %v1667 = vadd.f32 %v1486, 1.0
    %v1668 = vadd.f32 %v1488, 1.0
    %v1669 = vadd.f32 %v1490, 1.0
    %v1670 = vadd.f32 %v1492, 1.0
    %v1671 = vadd.f32 %v1494, 1.0
    %v1672 = vadd.f32 %v1496, 1.0
    %v1673 = vadd.f32 %v1498, 1.0
    %v1674 = vadd.f32 %v1500, 1.0
    %v1675 = vadd.f32 %v1502, 1.0
    %v1676 = vadd.f32 %v1504, 1.0
    %v1677 = vadd.f32 %v1506, 1.0
    %v1678 = vadd.f32 %v1508, 1.0
    %v1679 = vadd.f32 %v1510, 1.0
    %v1680 = vadd.f32 %v1512, 1.0
    %v1681 = vadd.f32 %v1514, 1.0
    %v1682 = vadd.f32 %v1516, 1.0
    %v1683 = vadd.f32 %v1518, 1.0
    %v1684 = vadd.f32 %v1520, 1.0
    %v1685 = vadd.f32 %v1522, 1.0
    %v1686 = vadd.f32 %v1524, 1.0
    %v1687 = vadd.f32 %v1526, 1.0
    %v1688 = vadd.f32 %v1528, 1.0
    %v1689 = vadd.f32 %v1530, 1.0
    %v1690 = vadd.f32 %v1532, 1.0
    %v1691 = vadd.f32 %v1534, 1.0
    %v1692 = vadd.f32 %v1536, 1.0
    %v1693 = vadd.f32 %v1538, 1.0
    %v1694 = vadd.f32 %v1540, 1.0
    %v1695 = vadd.f32 %v1542, 1.0
    %v1696 = vadd.f32 %v1544, 1.0
    %v1697 = vadd.f32 %v1546, 1.0
    %v1698 = vadd.f32 %v1548, 1.0
    %v1699 = vadd.f32 %v1550, 1.0
    %v1700 = vadd.f32 %v1552, 1.0
    %v1701 = vadd.f32 %v1554, 1.0
    %v1702 = vadd.f32 %v1556, 1.0
    %v1703 = vadd.f32 %v1558, 1.0
    %v1704 = vadd.f32 %v1560, 1.0
    %v1705 = vadd.f32 %v1562, 1.0
    %v1706 = vadd.f32 %v1564, 1.0
    %v1707 = vadd.f32 %v1566, 1.0
    %v1708 = vadd.f32 %v1568, 1.0
    %v1709 = vadd.f32 %v1570, 1.0
    %v1710 = vadd.f32 %v1572, 1.0
    %v1711 = vadd.f32 %v1574, 1.0
    %v1712 = vadd.f32 %v1576, 1.0
    %v1713 = vadd.f32 %v1578, 1.0
    %v1714 = vadd.f32 %v1580, 1.0
    %v1715 = vadd.f32 %v1582, 1.0
    %v1716 = vadd.f32 %v1584, 1.0
    %v1717 = vadd.f32 %v1586, 1.0
    %v1718 = vadd.f32 %v1588, 1.0
    %v1719 = vadd.f32 %v1590, 1.0
    %v1720 = vadd.f32 %v1592, 1.0
    %v1721 = vrcp.pop %v1593
    %v1722 = vrcp.pop %v1594
    %v1723 = vrcp.pop %v1595
    %v1724 = vrcp.pop %v1596
    %v1725 = vrcp.pop %v1597
    %v1726 = vrcp.pop %v1598
    %v1727 = vrcp.pop %v1599
    %v1728 = vrcp.pop %v1600
    %v1729 = vrcp.pop %v1601
    %v1730 = vrcp.pop %v1602
    %v1731 = vrcp.pop %v1603
    %v1732 = vrcp.pop %v1604
    %v1733 = vrcp.pop %v1605
    %v1734 = vrcp.pop %v1606
    %v1735 = vrcp.pop %v1607
    %v1736 = vrcp.pop %v1608
    %v1737 = vrcp.pop %v1609
    %v1738 = vrcp.pop %v1610
    %v1739 = vrcp.pop %v1611
    %v1740 = vrcp.pop %v1612
    %v1741 = vrcp.pop %v1613
    %v1742 = vrcp.pop %v1614
    %v1743 = vrcp.pop %v1615
    %v1744 = vrcp.pop %v1616
    %v1745 = vrcp.pop %v1617
    %v1746 = vrcp.pop %v1618
    %v1747 = vrcp.pop %v1619
    %v1748 = vrcp.pop %v1620
    %v1749 = vrcp.pop %v1621
    %v1750 = vrcp.pop %v1622
    %v1751 = vrcp.pop %v1623
    %v1752 = vrcp.pop %v1624
    %v1753 = vrcp.pop %v1625
    %v1754 = vrcp.pop %v1626
    %v1755 = vrcp.pop %v1627
    %v1756 = vrcp.pop %v1628
    %v1757 = vrcp.pop %v1629
    %v1758 = vrcp.pop %v1630
    %v1759 = vrcp.pop %v1631
    %v1760 = vrcp.pop %v1632
    %v1761 = vrcp.pop %v1633
    %v1762 = vrcp.pop %v1634
    %v1763 = vrcp.pop %v1635
    %v1764 = vrcp.pop %v1636
    %v1765 = vrcp.pop %v1637
    %v1766 = vrcp.pop %v1638
    %v1767 = vrcp.pop %v1639
    %v1768 = vrcp.pop %v1640
    %v1769 = vrcp.pop %v1641
    %v1770 = vrcp.pop %v1642
    %v1771 = vrcp.pop %v1643
    %v1772 = vrcp.pop %v1644
    %v1773 = vrcp.pop %v1645
    %v1774 = vrcp.pop %v1646
    %v1775 = vrcp.pop %v1647
    %v1776 = vrcp.pop %v1648
    %v1777 = vrcp.pop %v1649
    %v1778 = vrcp.pop %v1650
    %v1779 = vrcp.pop %v1651
    %v1780 = vrcp.pop %v1652
    %v1781 = vrcp.pop %v1653
    %v1782 = vrcp.pop %v1654
    %v1783 = vrcp.pop %v1655
    %v1784 = vrcp.pop %v1656
    %v1785 = vrcp.pop %v1657
    %v1786 = vrcp.pop %v1658
    %v1787 = vrcp.pop %v1659
    %v1788 = vrcp.pop %v1660
    %v1789 = vrcp.pop %v1661
    %v1790 = vrcp.pop %v1662
    %v1791 = vrcp.pop %v1663
    %v1792 = vrcp.pop %v1664
    %v1793 = vrcp.pop %v1665
    %v1794 = vrcp.pop %v1666
    %v1795 = vrcp.pop %v1667
    %v1796 = vrcp.pop %v1668
    %v1797 = vrcp.pop %v1669
    %v1798 = vrcp.pop %v1670
    %v1799 = vrcp.pop %v1671
    %v1800 = vrcp.pop %v1672
    %v1801 = vrcp.pop %v1673
    %v1802 = vrcp.pop %v1674
    %v1803 = vrcp.pop %v1675
    %v1804 = vrcp.pop %v1676
    %v1805 = vrcp.pop %v1677
    %v1806 = vrcp.pop %v1678
    %v1807 = vrcp.pop %v1679
    %v1808 = vrcp.pop %v1680
    %v1809 = vrcp.pop %v1681
    %v1810 = vrcp.pop %v1682
    %v1811 = vrcp.pop %v1683
    %v1812 = vrcp.pop %v1684
    %v1813 = vrcp.pop %v1685
    %v1814 = vrcp.pop %v1686
    %v1815 = vrcp.pop %v1687
    %v1816 = vrcp.pop %v1688
    %v1817 = vrcp.pop %v1689
    %v1818 = vrcp.pop %v1690
    %v1819 = vrcp.pop %v1691
    %v1820 = vrcp.pop %v1692
    %v1821 = vrcp.pop %v1693
    %v1822 = vrcp.pop %v1694
    %v1823 = vrcp.pop %v1695
    %v1824 = vrcp.pop %v1696
    %v1825 = vrcp.pop %v1697
    %v1826 = vrcp.pop %v1698
    %v1827 = vrcp.pop %v1699
    %v1828 = vrcp.pop %v1700
    %v1829 = vrcp.pop %v1701
    %v1830 = vrcp.pop %v1702
    %v1831 = vrcp.pop %v1703
    %v1832 = vrcp.pop %v1704
    %v1833 = vrcp.pop %v1705
    %v1834 = vrcp.pop %v1706
    %v1835 = vrcp.pop %v1707
    %v1836 = vrcp.pop %v1708
    %v1837 = vrcp.pop %v1709
    %v1838 = vrcp.pop %v1710
    %v1839 = vrcp.pop %v1711
    %v1840 = vrcp.pop %v1712
    %v1841 = vrcp.pop %v1713
    %v1842 = vrcp.pop %v1714
    %v1843 = vrcp.pop %v1715
    %v1844 = vrcp.pop %v1716
    %v1845 = vrcp.pop %v1717
    %v1846 = vrcp.pop %v1718
    %v1847 = vrcp.pop %v1719
    %v1848 = vrcp.pop %v1720
    %v1849 = vmul.f32 %v891, %v1721
    %v1850 = vmul.f32 %v893, %v1722
    %v1851 = vmul.f32 %v895, %v1723
    %v1852 = vmul.f32 %v897, %v1724
    %v1853 = vmul.f32 %v901, %v1725
    %v1854 = vmul.f32 %v903, %v1726
    %v1855 = vmul.f32 %v905, %v1727
    %v1856 = vmul.f32 %v907, %v1728
    %v1857 = vmul.f32 %v911, %v1729
    %v1858 = vmul.f32 %v913, %v1730
    %v1859 = vmul.f32 %v915, %v1731
    %v1860 = vmul.f32 %v917, %v1732
    %v1861 = vmul.f32 %v921, %v1733
    %v1862 = vmul.f32 %v923, %v1734
    %v1863 = vmul.f32 %v925, %v1735
    %v1864 = vmul.f32 %v927, %v1736
    %v1865 = vmul.f32 %v931, %v1737
    %v1866 = vmul.f32 %v933, %v1738
    %v1867 = vmul.f32 %v935, %v1739
    %v1868 = vmul.f32 %v937, %v1740
    %v1869 = vmul.f32 %v941, %v1741
    %v1870 = vmul.f32 %v943, %v1742
    %v1871 = vmul.f32 %v945, %v1743
    %v1872 = vmul.f32 %v947, %v1744
    %v1873 = vmul.f32 %v951, %v1745
    %v1874 = vmul.f32 %v953, %v1746
    %v1875 = vmul.f32 %v955, %v1747
    %v1876 = vmul.f32 %v957, %v1748
    %v1877 = vmul.f32 %v961, %v1749
    %v1878 = vmul.f32 %v963, %v1750
    %v1879 = vmul.f32 %v965, %v1751
    %v1880 = vmul.f32 %v967, %v1752
    %v1881 = vmul.f32 %v971, %v1753
    %v1882 = vmul.f32 %v973, %v1754
    %v1883 = vmul.f32 %v975, %v1755
    %v1884 = vmul.f32 %v977, %v1756
    %v1885 = vmul.f32 %v981, %v1757
    %v1886 = vmul.f32 %v983, %v1758
    %v1887 = vmul.f32 %v985, %v1759
    %v1888 = vmul.f32 %v987, %v1760
    %v1889 = vmul.f32 %v991, %v1761
    %v1890 = vmul.f32 %v993, %v1762
    %v1891 = vmul.f32 %v995, %v1763
    %v1892 = vmul.f32 %v997, %v1764
    %v1893 = vmul.f32 %v1001, %v1765
    %v1894 = vmul.f32 %v1003, %v1766
    %v1895 = vmul.f32 %v1005, %v1767
    %v1896 = vmul.f32 %v1007, %v1768
    %v1897 = vmul.f32 %v1011, %v1769
    %v1898 = vmul.f32 %v1013, %v1770
    %v1899 = vmul.f32 %v1015, %v1771
    %v1900 = vmul.f32 %v1017, %v1772
    %v1901 = vmul.f32 %v1021, %v1773
    %v1902 = vmul.f32 %v1023, %v1774
    %v1903 = vmul.f32 %v1025, %v1775
    %v1904 = vmul.f32 %v1027, %v1776
    %v1905 = vmul.f32 %v1031, %v1777
    %v1906 = vmul.f32 %v1033, %v1778
    %v1907 = vmul.f32 %v1035, %v1779
    %v1908 = vmul.f32 %v1037, %v1780
    %v1909 = vmul.f32 %v1041, %v1781
    %v1910 = vmul.f32 %v1043, %v1782
    %v1911 = vmul.f32 %v1045, %v1783
    %v1912 = vmul.f32 %v1047, %v1784
    %v1913 = vmul.f32 %v1051, %v1785
    %v1914 = vmul.f32 %v1053, %v1786
    %v1915 = vmul.f32 %v1055, %v1787
    %v1916 = vmul.f32 %v1057, %v1788
    %v1917 = vmul.f32 %v1061, %v1789
    %v1918 = vmul.f32 %v1063, %v1790
    %v1919 = vmul.f32 %v1065, %v1791
    %v1920 = vmul.f32 %v1067, %v1792
    %v1921 = vmul.f32 %v1071, %v1793
    %v1922 = vmul.f32 %v1073, %v1794
    %v1923 = vmul.f32 %v1075, %v1795
    %v1924 = vmul.f32 %v1077, %v1796
    %v1925 = vmul.f32 %v1081, %v1797
    %v1926 = vmul.f32 %v1083, %v1798
    %v1927 = vmul.f32 %v1085, %v1799
    %v1928 = vmul.f32 %v1087, %v1800
    %v1929 = vmul.f32 %v1091, %v1801
    %v1930 = vmul.f32 %v1093, %v1802
    %v1931 = vmul.f32 %v1095, %v1803
    %v1932 = vmul.f32 %v1097, %v1804
    %v1933 = vmul.f32 %v1101, %v1805
    %v1934 = vmul.f32 %v1103, %v1806
    %v1935 = vmul.f32 %v1105, %v1807
    %v1936 = vmul.f32 %v1107, %v1808
    %v1937 = vmul.f32 %v1111, %v1809
    %v1938 = vmul.f32 %v1113, %v1810
    %v1939 = vmul.f32 %v1115, %v1811
    %v1940 = vmul.f32 %v1117, %v1812
    %v1941 = vmul.f32 %v1121, %v1813
    %v1942 = vmul.f32 %v1123, %v1814
    %v1943 = vmul.f32 %v1125, %v1815
    %v1944 = vmul.f32 %v1127, %v1816
    %v1945 = vmul.f32 %v1131, %v1817
    %v1946 = vmul.f32 %v1133, %v1818
    %v1947 = vmul.f32 %v1135, %v1819
    %v1948 = vmul.f32 %v1137, %v1820
    %v1949 = vmul.f32 %v1141, %v1821
    %v1950 = vmul.f32 %v1143, %v1822
    %v1951 = vmul.f32 %v1145, %v1823
    %v1952 = vmul.f32 %v1147, %v1824
    %v1953 = vmul.f32 %v1151, %v1825
    %v1954 = vmul.f32 %v1153, %v1826
    %v1955 = vmul.f32 %v1155, %v1827
    %v1956 = vmul.f32 %v1157, %v1828
    %v1957 = vmul.f32 %v1161, %v1829
    %v1958 = vmul.f32 %v1163, %v1830
    %v1959 = vmul.f32 %v1165, %v1831
    %v1960 = vmul.f32 %v1167, %v1832
    %v1961 = vmul.f32 %v1171, %v1833
    %v1962 = vmul.f32 %v1173, %v1834
    %v1963 = vmul.f32 %v1175, %v1835
    %v1964 = vmul.f32 %v1177, %v1836
    %v1965 = vmul.f32 %v1181, %v1837
    %v1966 = vmul.f32 %v1183, %v1838
    %v1967 = vmul.f32 %v1185, %v1839
    %v1968 = vmul.f32 %v1187, %v1840
    %v1969 = vmul.f32 %v1191, %v1841
    %v1970 = vmul.f32 %v1193, %v1842
    %v1971 = vmul.f32 %v1195, %v1843
    %v1972 = vmul.f32 %v1197, %v1844
    %v1973 = vmul.f32 %v1201, %v1845
    %v1974 = vmul.f32 %v1203, %v1846
    %v1975 = vmul.f32 %v1205, %v1847
    %v1976 = vmul.f32 %v1207, %v1848
    %v1977 = vld [vmem:[#allocation10] sm:$0xff]
    %v1978 = vld [vmem:[#allocation10 + $0x8] sm:$0xff]
    %v1979 = vld [vmem:[#allocation10 + $0x10] sm:$0xff]
    %v1980 = vld [vmem:[#allocation10 + $0x18] sm:$0xff]
    %v1981 = vld [vmem:[#allocation10 + $0x20] sm:$0xff]
    %v1982 = vld [vmem:[#allocation10 + $0x28] sm:$0xff]
    %v1983 = vld [vmem:[#allocation10 + $0x30] sm:$0xff]
    %v1984 = vld [vmem:[#allocation10 + $0x38] sm:$0xff]
    %v1985 = vld [vmem:[#allocation10 + $0x40] sm:$0xff]
    %v1986 = vld [vmem:[#allocation10 + $0x48] sm:$0xff]
    %v1987 = vld [vmem:[#allocation10 + $0x50] sm:$0xff]
    %v1988 = vld [vmem:[#allocation10 + $0x58] sm:$0xff]
    %v1989 = vld [vmem:[#allocation10 + $0x60] sm:$0xff]
    %v1990 = vld [vmem:[#allocation10 + $0x68] sm:$0xff]
    %v1991 = vld [vmem:[#allocation10 + $0x70] sm:$0xff]
    %v1992 = vld [vmem:[#allocation10 + $0x78] sm:$0xff]
    %v1993 = vld [vmem:[#allocation11] sm:$0x3]
    %v1995 = vlaneseq
    %v1996 = vshrl.u32 %v1995, 7
    %v1997 = vsub.s32 0, %v1996
    %v1998 = vrot.slane %v1993, %v1997
    %v1999 = vlaneseq
    %v2000 = vshrl.u32 %v1999, 7
    %v2001 = vsub.s32 1, %v2000
    %v2002 = vrot.slane %v1993, %v2001
    %v2021 = vunpack.c.l.b16 %v1977
    %v2022 = vunpack.c.h.b16 %v1977
    %v2023 = vunpack.c.l.b16 %v1978
    %v2024 = vunpack.c.h.b16 %v1978
    %v2025 = vunpack.c.l.b16 %v1979
    %v2026 = vunpack.c.h.b16 %v1979
    %v2027 = vunpack.c.l.b16 %v1980
    %v2028 = vunpack.c.h.b16 %v1980
    %v2029 = vunpack.c.l.b16 %v1981
    %v2030 = vunpack.c.h.b16 %v1981
    %v2031 = vunpack.c.l.b16 %v1982
    %v2032 = vunpack.c.h.b16 %v1982
    %v2033 = vunpack.c.l.b16 %v1983
    %v2034 = vunpack.c.h.b16 %v1983
    %v2035 = vunpack.c.l.b16 %v1984
    %v2036 = vunpack.c.h.b16 %v1984
    %v2037 = vunpack.c.l.b16 %v1985
    %v2038 = vunpack.c.h.b16 %v1985
    %v2039 = vunpack.c.l.b16 %v1986
    %v2040 = vunpack.c.h.b16 %v1986
    %v2041 = vunpack.c.l.b16 %v1987
    %v2042 = vunpack.c.h.b16 %v1987
    %v2043 = vunpack.c.l.b16 %v1988
    %v2044 = vunpack.c.h.b16 %v1988
    %v2045 = vunpack.c.l.b16 %v1989
    %v2046 = vunpack.c.h.b16 %v1989
    %v2047 = vunpack.c.l.b16 %v1990
    %v2048 = vunpack.c.h.b16 %v1990
    %v2049 = vunpack.c.l.b16 %v1991
    %v2050 = vunpack.c.h.b16 %v1991
    %v2051 = vunpack.c.l.b16 %v1992
    %v2052 = vunpack.c.h.b16 %v1992
    %v2053 = vpack.c.b16 %v2023, %v2021
    %v2054 = vpack.c.b16 %v2024, %v2022
    %v2055 = vpack.c.b16 %v2027, %v2025
    %v2056 = vpack.c.b16 %v2028, %v2026
    %v2057 = vpack.c.b16 %v2031, %v2029
    %v2058 = vpack.c.b16 %v2032, %v2030
    %v2059 = vpack.c.b16 %v2035, %v2033
    %v2060 = vpack.c.b16 %v2036, %v2034
    %v2061 = vpack.c.b16 %v2039, %v2037
    %v2062 = vpack.c.b16 %v2040, %v2038
    %v2063 = vpack.c.b16 %v2043, %v2041
    %v2064 = vpack.c.b16 %v2044, %v2042
    %v2065 = vpack.c.b16 %v2047, %v2045
    %v2066 = vpack.c.b16 %v2048, %v2046
    %v2067 = vpack.c.b16 %v2051, %v2049
    %v2068 = vpack.c.b16 %v2052, %v2050
    %2085 = vmatprep.subr.bf16.mxu0 %v2054
    %2086 = vmatpush1.bf16.msra.mxu0 %v2053
    %2087 = vmatprep.subr.bf16.mxu0 %v2056
    %2088 = vmatpush1.bf16.msra.mxu0 %v2055
    %2089 = vmatprep.subr.bf16.mxu0 %v2058
    %2090 = vmatpush1.bf16.msra.mxu0 %v2057
    %2091 = vmatprep.subr.bf16.mxu0 %v2060
    %2092 = vmatpush1.bf16.msra.mxu0 %v2059
    %2093 = vmatprep.subr.bf16.mxu0 %v2062
    %2094 = vmatpush1.bf16.msra.mxu0 %v2061
    %2095 = vmatprep.subr.bf16.mxu0 %v2064
    %2096 = vmatpush1.bf16.msra.mxu0 %v2063
    %2097 = vmatprep.subr.bf16.mxu0 %v2066
    %2098 = vmatpush1.bf16.msra.mxu0 %v2065
    %2099 = vmatprep.subr.bf16.mxu0 %v2068
    %2100 = vmatpush1.bf16.msra.mxu0 %v2067
    %2101 = vmatprep.subr.bf16.mxu0 0
    %2102 = vmatpush1.bf16.msra.mxu0 0
    %2103 = vmatprep.subr.bf16.mxu0 0
    %2104 = vmatpush1.bf16.msra.mxu0 0
    %2105 = vmatprep.subr.bf16.mxu0 0
    %2106 = vmatpush1.bf16.msra.mxu0 0
    %2107 = vmatprep.subr.bf16.mxu0 0
    %2108 = vmatpush1.bf16.msra.mxu0 0
    %2109 = vmatprep.subr.bf16.mxu0 0
    %2110 = vmatpush1.bf16.msra.mxu0 0
    %2111 = vmatprep.subr.bf16.mxu0 0
    %2112 = vmatpush1.bf16.msra.mxu0 0
    %2113 = vmatprep.subr.bf16.mxu0 0
    %2114 = vmatpush1.bf16.msra.mxu0 0
    %2115 = vmatprep.subr.bf16.mxu0 0
    %2116 = vmatpush1.bf16.msra.mxu0 0
    %2117 = vmatprep.mubr.bf16.mxu0 0
    %2118 = vmatmul.mubr.bf16.gmra.mrb[0].mxu0 %v716
    %v2119 = vpop.f32.mrb[0].mxu0
    %v2120 = vadd.f32 %v1998, %v2119
    %v2121 = vpop.f32.mrb[0].mxu0
    %v2122 = vadd.f32 %v2002, %v2121
    %v2123 = vpop.f32.mrb[0].mxu0
    %v2124 = vadd.f32 %v1998, %v2123
    %v2125 = vpop.f32.mrb[0].mxu0
    %v2126 = vadd.f32 %v2002, %v2125
    %2127 = vmatprep.mubr.bf16.mxu0 0
    %2128 = vmatmul.mubr.bf16.gmra.mrb[0].mxu0 %v717
    %v2129 = vpop.f32.mrb[0].mxu0
    %v2130 = vadd.f32 %v1998, %v2129
    %v2131 = vpop.f32.mrb[0].mxu0
    %v2132 = vadd.f32 %v2002, %v2131
    %v2133 = vpop.f32.mrb[0].mxu0
    %v2134 = vadd.f32 %v1998, %v2133
    %v2135 = vpop.f32.mrb[0].mxu0
    %v2136 = vadd.f32 %v2002, %v2135
    %2137 = vmatprep.mubr.bf16.mxu0 0
    %2138 = vmatmul.mubr.bf16.gmra.mrb[0].mxu0 %v718
    %v2139 = vpop.f32.mrb[0].mxu0
    %v2140 = vadd.f32 %v1998, %v2139
    %v2141 = vpop.f32.mrb[0].mxu0
    %v2142 = vadd.f32 %v2002, %v2141
    %v2143 = vpop.f32.mrb[0].mxu0
    %v2144 = vadd.f32 %v1998, %v2143
    %v2145 = vpop.f32.mrb[0].mxu0
    %v2146 = vadd.f32 %v2002, %v2145
    %2147 = vmatprep.mubr.bf16.mxu0 0
    %2148 = vmatmul.mubr.bf16.gmra.mrb[0].mxu0 %v719
    %v2149 = vpop.f32.mrb[0].mxu0
    %v2150 = vadd.f32 %v1998, %v2149
    %v2151 = vpop.f32.mrb[0].mxu0
    %v2152 = vadd.f32 %v2002, %v2151
    %v2153 = vpop.f32.mrb[0].mxu0
    %v2154 = vadd.f32 %v1998, %v2153
    %v2155 = vpop.f32.mrb[0].mxu0
    %v2156 = vadd.f32 %v2002, %v2155
    %2157 = vmatprep.mubr.bf16.mxu0 0
    %2158 = vmatmul.mubr.bf16.gmra.mrb[0].mxu0 %v720
    %v2159 = vpop.f32.mrb[0].mxu0
    %v2160 = vadd.f32 %v1998, %v2159
    %v2161 = vpop.f32.mrb[0].mxu0
    %v2162 = vadd.f32 %v2002, %v2161
    %v2163 = vpop.f32.mrb[0].mxu0
    %v2164 = vadd.f32 %v1998, %v2163
    %v2165 = vpop.f32.mrb[0].mxu0
    %v2166 = vadd.f32 %v2002, %v2165
    %2167 = vmatprep.mubr.bf16.mxu0 0
    %2168 = vmatmul.mubr.bf16.gmra.mrb[0].mxu0 %v721
    %v2169 = vpop.f32.mrb[0].mxu0
    %v2170 = vadd.f32 %v1998, %v2169
    %v2171 = vpop.f32.mrb[0].mxu0
    %v2172 = vadd.f32 %v2002, %v2171
    %v2173 = vpop.f32.mrb[0].mxu0
    %v2174 = vadd.f32 %v1998, %v2173
    %v2175 = vpop.f32.mrb[0].mxu0
    %v2176 = vadd.f32 %v2002, %v2175
    %2177 = vmatprep.mubr.bf16.mxu0 0
    %2178 = vmatmul.mubr.bf16.gmra.mrb[0].mxu0 %v722
    %v2179 = vpop.f32.mrb[0].mxu0
    %v2180 = vadd.f32 %v1998, %v2179
    %v2181 = vpop.f32.mrb[0].mxu0
    %v2182 = vadd.f32 %v2002, %v2181
    %v2183 = vpop.f32.mrb[0].mxu0
    %v2184 = vadd.f32 %v1998, %v2183
    %v2185 = vpop.f32.mrb[0].mxu0
    %v2186 = vadd.f32 %v2002, %v2185
    %2187 = vmatprep.mubr.bf16.mxu0 0
    %2188 = vmatmul.mubr.bf16.gmra.mrb[0].mxu0 %v723
    %v2189 = vpop.f32.mrb[0].mxu0
    %v2190 = vadd.f32 %v1998, %v2189
    %v2191 = vpop.f32.mrb[0].mxu0
    %v2192 = vadd.f32 %v2002, %v2191
    %v2193 = vpop.f32.mrb[0].mxu0
    %v2194 = vadd.f32 %v1998, %v2193
    %v2195 = vpop.f32.mrb[0].mxu0
    %v2196 = vadd.f32 %v2002, %v2195
    %2197 = vmatprep.mubr.bf16.mxu0 0
    %2198 = vmatmul.mubr.bf16.gmra.mrb[0].mxu0 %v724
    %v2199 = vpop.f32.mrb[0].mxu0
    %v2200 = vadd.f32 %v1998, %v2199
    %v2201 = vpop.f32.mrb[0].mxu0
    %v2202 = vadd.f32 %v2002, %v2201
    %v2203 = vpop.f32.mrb[0].mxu0
    %v2204 = vadd.f32 %v1998, %v2203
    %v2205 = vpop.f32.mrb[0].mxu0
    %v2206 = vadd.f32 %v2002, %v2205
    %2207 = vmatprep.mubr.bf16.mxu0 0
    %2208 = vmatmul.mubr.bf16.gmra.mrb[0].mxu0 %v725
    %v2209 = vpop.f32.mrb[0].mxu0
    %v2210 = vadd.f32 %v1998, %v2209
    %v2211 = vpop.f32.mrb[0].mxu0
    %v2212 = vadd.f32 %v2002, %v2211
    %v2213 = vpop.f32.mrb[0].mxu0
    %v2214 = vadd.f32 %v1998, %v2213
    %v2215 = vpop.f32.mrb[0].mxu0
    %v2216 = vadd.f32 %v2002, %v2215
    %2217 = vmatprep.mubr.bf16.mxu0 0
    %2218 = vmatmul.mubr.bf16.gmra.mrb[0].mxu0 %v726
    %v2219 = vpop.f32.mrb[0].mxu0
    %v2220 = vadd.f32 %v1998, %v2219
    %v2221 = vpop.f32.mrb[0].mxu0
    %v2222 = vadd.f32 %v2002, %v2221
    %v2223 = vpop.f32.mrb[0].mxu0
    %v2224 = vadd.f32 %v1998, %v2223
    %v2225 = vpop.f32.mrb[0].mxu0
    %v2226 = vadd.f32 %v2002, %v2225
    %2227 = vmatprep.mubr.bf16.mxu0 0
    %2228 = vmatmul.mubr.bf16.gmra.mrb[0].mxu0 %v727
    %v2229 = vpop.f32.mrb[0].mxu0
    %v2230 = vadd.f32 %v1998, %v2229
    %v2231 = vpop.f32.mrb[0].mxu0
    %v2232 = vadd.f32 %v2002, %v2231
    %v2233 = vpop.f32.mrb[0].mxu0
    %v2234 = vadd.f32 %v1998, %v2233
    %v2235 = vpop.f32.mrb[0].mxu0
    %v2236 = vadd.f32 %v2002, %v2235
    %2237 = vmatprep.mubr.bf16.mxu0 0
    %2238 = vmatmul.mubr.bf16.gmra.mrb[0].mxu0 %v728
    %v2239 = vpop.f32.mrb[0].mxu0
    %v2240 = vadd.f32 %v1998, %v2239
    %v2241 = vpop.f32.mrb[0].mxu0
    %v2242 = vadd.f32 %v2002, %v2241
    %v2243 = vpop.f32.mrb[0].mxu0
    %v2244 = vadd.f32 %v1998, %v2243
    %v2245 = vpop.f32.mrb[0].mxu0
    %v2246 = vadd.f32 %v2002, %v2245
    %2247 = vmatprep.mubr.bf16.mxu0 0
    %2248 = vmatmul.mubr.bf16.gmra.mrb[0].mxu0 %v729
    %v2249 = vpop.f32.mrb[0].mxu0
    %v2250 = vadd.f32 %v1998, %v2249
    %v2251 = vpop.f32.mrb[0].mxu0
    %v2252 = vadd.f32 %v2002, %v2251
    %v2253 = vpop.f32.mrb[0].mxu0
    %v2254 = vadd.f32 %v1998, %v2253
    %v2255 = vpop.f32.mrb[0].mxu0
    %v2256 = vadd.f32 %v2002, %v2255
    %2257 = vmatprep.mubr.bf16.mxu0 0
    %2258 = vmatmul.mubr.bf16.gmra.mrb[0].mxu0 %v730
    %v2259 = vpop.f32.mrb[0].mxu0
    %v2260 = vadd.f32 %v1998, %v2259
    %v2261 = vpop.f32.mrb[0].mxu0
    %v2262 = vadd.f32 %v2002, %v2261
    %v2263 = vpop.f32.mrb[0].mxu0
    %v2264 = vadd.f32 %v1998, %v2263
    %v2265 = vpop.f32.mrb[0].mxu0
    %v2266 = vadd.f32 %v2002, %v2265
    %2267 = vmatprep.mubr.bf16.mxu0 0
    %2268 = vmatmul.mubr.bf16.gmra.mrb[0].mxu0 %v731
    %v2269 = vpop.f32.mrb[0].mxu0
    %v2270 = vadd.f32 %v1998, %v2269
    %v2271 = vpop.f32.mrb[0].mxu0
    %v2272 = vadd.f32 %v2002, %v2271
    %v2273 = vpop.f32.mrb[0].mxu0
    %v2274 = vadd.f32 %v1998, %v2273
    %v2275 = vpop.f32.mrb[0].mxu0
    %v2276 = vadd.f32 %v2002, %v2275
    %2277 = vmatprep.mubr.bf16.mxu0 0
    %2278 = vmatmul.mubr.bf16.gmra.mrb[0].mxu0 %v732
    %v2279 = vpop.f32.mrb[0].mxu0
    %v2280 = vadd.f32 %v1998, %v2279
    %v2281 = vpop.f32.mrb[0].mxu0
    %v2282 = vadd.f32 %v2002, %v2281
    %v2283 = vpop.f32.mrb[0].mxu0
    %v2284 = vadd.f32 %v1998, %v2283
    %v2285 = vpop.f32.mrb[0].mxu0
    %v2286 = vadd.f32 %v2002, %v2285
    %2287 = vmatprep.mubr.bf16.mxu0 0
    %2288 = vmatmul.mubr.bf16.gmra.mrb[0].mxu0 %v733
    %v2289 = vpop.f32.mrb[0].mxu0
    %v2290 = vadd.f32 %v1998, %v2289
    %v2291 = vpop.f32.mrb[0].mxu0
    %v2292 = vadd.f32 %v2002, %v2291
    %v2293 = vpop.f32.mrb[0].mxu0
    %v2294 = vadd.f32 %v1998, %v2293
    %v2295 = vpop.f32.mrb[0].mxu0
    %v2296 = vadd.f32 %v2002, %v2295
    %2297 = vmatprep.mubr.bf16.mxu0 0
    %2298 = vmatmul.mubr.bf16.gmra.mrb[0].mxu0 %v734
    %v2299 = vpop.f32.mrb[0].mxu0
    %v2300 = vadd.f32 %v1998, %v2299
    %v2301 = vpop.f32.mrb[0].mxu0
    %v2302 = vadd.f32 %v2002, %v2301
    %v2303 = vpop.f32.mrb[0].mxu0
    %v2304 = vadd.f32 %v1998, %v2303
    %v2305 = vpop.f32.mrb[0].mxu0
    %v2306 = vadd.f32 %v2002, %v2305
    %2307 = vmatprep.mubr.bf16.mxu0 0
    %2308 = vmatmul.mubr.bf16.gmra.mrb[0].mxu0 %v735
    %v2309 = vpop.f32.mrb[0].mxu0
    %v2310 = vadd.f32 %v1998, %v2309
    %v2311 = vpop.f32.mrb[0].mxu0
    %v2312 = vadd.f32 %v2002, %v2311
    %v2313 = vpop.f32.mrb[0].mxu0
    %v2314 = vadd.f32 %v1998, %v2313
    %v2315 = vpop.f32.mrb[0].mxu0
    %v2316 = vadd.f32 %v2002, %v2315
    %2317 = vmatprep.mubr.bf16.mxu0 0
    %2318 = vmatmul.mubr.bf16.gmra.mrb[0].mxu0 %v736
    %v2319 = vpop.f32.mrb[0].mxu0
    %v2320 = vadd.f32 %v1998, %v2319
    %v2321 = vpop.f32.mrb[0].mxu0
    %v2322 = vadd.f32 %v2002, %v2321
    %v2323 = vpop.f32.mrb[0].mxu0
    %v2324 = vadd.f32 %v1998, %v2323
    %v2325 = vpop.f32.mrb[0].mxu0
    %v2326 = vadd.f32 %v2002, %v2325
    %2327 = vmatprep.mubr.bf16.mxu0 0
    %2328 = vmatmul.mubr.bf16.gmra.mrb[0].mxu0 %v737
    %v2329 = vpop.f32.mrb[0].mxu0
    %v2330 = vadd.f32 %v1998, %v2329
    %v2331 = vpop.f32.mrb[0].mxu0
    %v2332 = vadd.f32 %v2002, %v2331
    %v2333 = vpop.f32.mrb[0].mxu0
    %v2334 = vadd.f32 %v1998, %v2333
    %v2335 = vpop.f32.mrb[0].mxu0
    %v2336 = vadd.f32 %v2002, %v2335
    %2337 = vmatprep.mubr.bf16.mxu0 0
    %2338 = vmatmul.mubr.bf16.gmra.mrb[0].mxu0 %v738
    %v2339 = vpop.f32.mrb[0].mxu0
    %v2340 = vadd.f32 %v1998, %v2339
    %v2341 = vpop.f32.mrb[0].mxu0
    %v2342 = vadd.f32 %v2002, %v2341
    %v2343 = vpop.f32.mrb[0].mxu0
    %v2344 = vadd.f32 %v1998, %v2343
    %v2345 = vpop.f32.mrb[0].mxu0
    %v2346 = vadd.f32 %v2002, %v2345
    %2347 = vmatprep.mubr.bf16.mxu0 0
    %2348 = vmatmul.mubr.bf16.gmra.mrb[0].mxu0 %v739
    %v2349 = vpop.f32.mrb[0].mxu0
    %v2350 = vadd.f32 %v1998, %v2349
    %v2351 = vpop.f32.mrb[0].mxu0
    %v2352 = vadd.f32 %v2002, %v2351
    %v2353 = vpop.f32.mrb[0].mxu0
    %v2354 = vadd.f32 %v1998, %v2353
    %v2355 = vpop.f32.mrb[0].mxu0
    %v2356 = vadd.f32 %v2002, %v2355
    %2357 = vmatprep.mubr.bf16.mxu0 0
    %2358 = vmatmul.mubr.bf16.gmra.mrb[0].mxu0 %v740
    %v2359 = vpop.f32.mrb[0].mxu0
    %v2360 = vadd.f32 %v1998, %v2359
    %v2361 = vpop.f32.mrb[0].mxu0
    %v2362 = vadd.f32 %v2002, %v2361
    %v2363 = vpop.f32.mrb[0].mxu0
    %v2364 = vadd.f32 %v1998, %v2363
    %v2365 = vpop.f32.mrb[0].mxu0
    %v2366 = vadd.f32 %v2002, %v2365
    %2367 = vmatprep.mubr.bf16.mxu0 0
    %2368 = vmatmul.mubr.bf16.gmra.mrb[0].mxu0 %v741
    %v2369 = vpop.f32.mrb[0].mxu0
    %v2370 = vadd.f32 %v1998, %v2369
    %v2371 = vpop.f32.mrb[0].mxu0
    %v2372 = vadd.f32 %v2002, %v2371
    %v2373 = vpop.f32.mrb[0].mxu0
    %v2374 = vadd.f32 %v1998, %v2373
    %v2375 = vpop.f32.mrb[0].mxu0
    %v2376 = vadd.f32 %v2002, %v2375
    %2377 = vmatprep.mubr.bf16.mxu0 0
    %2378 = vmatmul.mubr.bf16.gmra.mrb[0].mxu0 %v742
    %v2379 = vpop.f32.mrb[0].mxu0
    %v2380 = vadd.f32 %v1998, %v2379
    %v2381 = vpop.f32.mrb[0].mxu0
    %v2382 = vadd.f32 %v2002, %v2381
    %v2383 = vpop.f32.mrb[0].mxu0
    %v2384 = vadd.f32 %v1998, %v2383
    %v2385 = vpop.f32.mrb[0].mxu0
    %v2386 = vadd.f32 %v2002, %v2385
    %2387 = vmatprep.mubr.bf16.mxu0 0
    %2388 = vmatmul.mubr.bf16.gmra.mrb[0].mxu0 %v743
    %v2389 = vpop.f32.mrb[0].mxu0
    %v2390 = vadd.f32 %v1998, %v2389
    %v2391 = vpop.f32.mrb[0].mxu0
    %v2392 = vadd.f32 %v2002, %v2391
    %v2393 = vpop.f32.mrb[0].mxu0
    %v2394 = vadd.f32 %v1998, %v2393
    %v2395 = vpop.f32.mrb[0].mxu0
    %v2396 = vadd.f32 %v2002, %v2395
    %2397 = vmatprep.mubr.bf16.mxu0 0
    %2398 = vmatmul.mubr.bf16.gmra.mrb[0].mxu0 %v744
    %v2399 = vpop.f32.mrb[0].mxu0
    %v2400 = vadd.f32 %v1998, %v2399
    %v2401 = vpop.f32.mrb[0].mxu0
    %v2402 = vadd.f32 %v2002, %v2401
    %v2403 = vpop.f32.mrb[0].mxu0
    %v2404 = vadd.f32 %v1998, %v2403
    %v2405 = vpop.f32.mrb[0].mxu0
    %v2406 = vadd.f32 %v2002, %v2405
    %2407 = vmatprep.mubr.bf16.mxu0 0
    %2408 = vmatmul.mubr.bf16.gmra.mrb[0].mxu0 %v745
    %v2409 = vpop.f32.mrb[0].mxu0
    %v2410 = vadd.f32 %v1998, %v2409
    %v2411 = vpop.f32.mrb[0].mxu0
    %v2412 = vadd.f32 %v2002, %v2411
    %v2413 = vpop.f32.mrb[0].mxu0
    %v2414 = vadd.f32 %v1998, %v2413
    %v2415 = vpop.f32.mrb[0].mxu0
    %v2416 = vadd.f32 %v2002, %v2415
    %2417 = vmatprep.mubr.bf16.mxu0 0
    %2418 = vmatmul.mubr.bf16.gmra.mrb[0].mxu0 %v746
    %v2419 = vpop.f32.mrb[0].mxu0
    %v2420 = vadd.f32 %v1998, %v2419
    %v2421 = vpop.f32.mrb[0].mxu0
    %v2422 = vadd.f32 %v2002, %v2421
    %v2423 = vpop.f32.mrb[0].mxu0
    %v2424 = vadd.f32 %v1998, %v2423
    %v2425 = vpop.f32.mrb[0].mxu0
    %v2426 = vadd.f32 %v2002, %v2425
    %2427 = vmatprep.mubr.bf16.mxu0 0
    %2428 = vmatmul.mubr.bf16.gmra.mrb[0].mxu0 %v747
    %v2429 = vpop.f32.mrb[0].mxu0
    %v2430 = vadd.f32 %v1998, %v2429
    %v2431 = vpop.f32.mrb[0].mxu0
    %v2432 = vadd.f32 %v2002, %v2431
    %v2433 = vpop.f32.mrb[0].mxu0
    %v2434 = vadd.f32 %v1998, %v2433
    %v2435 = vpop.f32.mrb[0].mxu0
    %v2436 = vadd.f32 %v2002, %v2435
    %2437 = vdwg.mxu0
    %v2438 = vmul.f32 %v1849, %v2120
    %v2439 = vmul.f32 %v1850, %v2122
    %v2440 = vmul.f32 %v1851, %v2124
    %v2441 = vmul.f32 %v1852, %v2126
    %v2442 = vmul.f32 %v1853, %v2130
    %v2443 = vmul.f32 %v1854, %v2132
    %v2444 = vmul.f32 %v1855, %v2134
    %v2445 = vmul.f32 %v1856, %v2136
    %v2446 = vmul.f32 %v1857, %v2140
    %v2447 = vmul.f32 %v1858, %v2142
    %v2448 = vmul.f32 %v1859, %v2144
    %v2449 = vmul.f32 %v1860, %v2146
    %v2450 = vmul.f32 %v1861, %v2150
    %v2451 = vmul.f32 %v1862, %v2152
    %v2452 = vmul.f32 %v1863, %v2154
    %v2453 = vmul.f32 %v1864, %v2156
    %v2454 = vmul.f32 %v1865, %v2160
    %v2455 = vmul.f32 %v1866, %v2162
    %v2456 = vmul.f32 %v1867, %v2164
    %v2457 = vmul.f32 %v1868, %v2166
    %v2458 = vmul.f32 %v1869, %v2170
    %v2459 = vmul.f32 %v1870, %v2172
    %v2460 = vmul.f32 %v1871, %v2174
    %v2461 = vmul.f32 %v1872, %v2176
    %v2462 = vmul.f32 %v1873, %v2180
    %v2463 = vmul.f32 %v1874, %v2182
    %v2464 = vmul.f32 %v1875, %v2184
    %v2465 = vmul.f32 %v1876, %v2186
    %v2466 = vmul.f32 %v1877, %v2190
    %v2467 = vmul.f32 %v1878, %v2192
    %v2468 = vmul.f32 %v1879, %v2194
    %v2469 = vmul.f32 %v1880, %v2196
    %v2470 = vmul.f32 %v1881, %v2200
    %v2471 = vmul.f32 %v1882, %v2202
    %v2472 = vmul.f32 %v1883, %v2204
    %v2473 = vmul.f32 %v1884, %v2206
    %v2474 = vmul.f32 %v1885, %v2210
    %v2475 = vmul.f32 %v1886, %v2212
    %v2476 = vmul.f32 %v1887, %v2214
    %v2477 = vmul.f32 %v1888, %v2216
    %v2478 = vmul.f32 %v1889, %v2220
    %v2479 = vmul.f32 %v1890, %v2222
    %v2480 = vmul.f32 %v1891, %v2224
    %v2481 = vmul.f32 %v1892, %v2226
    %v2482 = vmul.f32 %v1893, %v2230
    %v2483 = vmul.f32 %v1894, %v2232
    %v2484 = vmul.f32 %v1895, %v2234
    %v2485 = vmul.f32 %v1896, %v2236
    %v2486 = vmul.f32 %v1897, %v2240
    %v2487 = vmul.f32 %v1898, %v2242
    %v2488 = vmul.f32 %v1899, %v2244
    %v2489 = vmul.f32 %v1900, %v2246
    %v2490 = vmul.f32 %v1901, %v2250
    %v2491 = vmul.f32 %v1902, %v2252
    %v2492 = vmul.f32 %v1903, %v2254
    %v2493 = vmul.f32 %v1904, %v2256
    %v2494 = vmul.f32 %v1905, %v2260
    %v2495 = vmul.f32 %v1906, %v2262
    %v2496 = vmul.f32 %v1907, %v2264
    %v2497 = vmul.f32 %v1908, %v2266
    %v2498 = vmul.f32 %v1909, %v2270
    %v2499 = vmul.f32 %v1910, %v2272
    %v2500 = vmul.f32 %v1911, %v2274
    %v2501 = vmul.f32 %v1912, %v2276
    %v2502 = vmul.f32 %v1913, %v2280
    %v2503 = vmul.f32 %v1914, %v2282
    %v2504 = vmul.f32 %v1915, %v2284
    %v2505 = vmul.f32 %v1916, %v2286
    %v2506 = vmul.f32 %v1917, %v2290
    %v2507 = vmul.f32 %v1918, %v2292
    %v2508 = vmul.f32 %v1919, %v2294
    %v2509 = vmul.f32 %v1920, %v2296
    %v2510 = vmul.f32 %v1921, %v2300
    %v2511 = vmul.f32 %v1922, %v2302
    %v2512 = vmul.f32 %v1923, %v2304
    %v2513 = vmul.f32 %v1924, %v2306
    %v2514 = vmul.f32 %v1925, %v2310
    %v2515 = vmul.f32 %v1926, %v2312
    %v2516 = vmul.f32 %v1927, %v2314
    %v2517 = vmul.f32 %v1928, %v2316
    %v2518 = vmul.f32 %v1929, %v2320
    %v2519 = vmul.f32 %v1930, %v2322
    %v2520 = vmul.f32 %v1931, %v2324
    %v2521 = vmul.f32 %v1932, %v2326
    %v2522 = vmul.f32 %v1933, %v2330
    %v2523 = vmul.f32 %v1934, %v2332
    %v2524 = vmul.f32 %v1935, %v2334
    %v2525 = vmul.f32 %v1936, %v2336
    %v2526 = vmul.f32 %v1937, %v2340
    %v2527 = vmul.f32 %v1938, %v2342
    %v2528 = vmul.f32 %v1939, %v2344
    %v2529 = vmul.f32 %v1940, %v2346
    %v2530 = vmul.f32 %v1941, %v2350
    %v2531 = vmul.f32 %v1942, %v2352
    %v2532 = vmul.f32 %v1943, %v2354
    %v2533 = vmul.f32 %v1944, %v2356
    %v2534 = vmul.f32 %v1945, %v2360
    %v2535 = vmul.f32 %v1946, %v2362
    %v2536 = vmul.f32 %v1947, %v2364
    %v2537 = vmul.f32 %v1948, %v2366
    %v2538 = vmul.f32 %v1949, %v2370
    %v2539 = vmul.f32 %v1950, %v2372
    %v2540 = vmul.f32 %v1951, %v2374
    %v2541 = vmul.f32 %v1952, %v2376
    %v2542 = vmul.f32 %v1953, %v2380
    %v2543 = vmul.f32 %v1954, %v2382
    %v2544 = vmul.f32 %v1955, %v2384
    %v2545 = vmul.f32 %v1956, %v2386
    %v2546 = vmul.f32 %v1957, %v2390
    %v2547 = vmul.f32 %v1958, %v2392
    %v2548 = vmul.f32 %v1959, %v2394
    %v2549 = vmul.f32 %v1960, %v2396
    %v2550 = vmul.f32 %v1961, %v2400
    %v2551 = vmul.f32 %v1962, %v2402
    %v2552 = vmul.f32 %v1963, %v2404
    %v2553 = vmul.f32 %v1964, %v2406
    %v2554 = vmul.f32 %v1965, %v2410
    %v2555 = vmul.f32 %v1966, %v2412
    %v2556 = vmul.f32 %v1967, %v2414
    %v2557 = vmul.f32 %v1968, %v2416
    %v2558 = vmul.f32 %v1969, %v2420
    %v2559 = vmul.f32 %v1970, %v2422
    %v2560 = vmul.f32 %v1971, %v2424
    %v2561 = vmul.f32 %v1972, %v2426
    %v2562 = vmul.f32 %v1973, %v2430
    %v2563 = vmul.f32 %v1974, %v2432
    %v2564 = vmul.f32 %v1975, %v2434
    %v2565 = vmul.f32 %v1976, %v2436
    %v2566 = vpack.c.bf16 %v2440, %v2438
    %v2567 = vpack.c.bf16 %v2441, %v2439
    %v2568 = vpack.c.bf16 %v2444, %v2442
    %v2569 = vpack.c.bf16 %v2445, %v2443
    %v2570 = vpack.c.bf16 %v2448, %v2446
    %v2571 = vpack.c.bf16 %v2449, %v2447
    %v2572 = vpack.c.bf16 %v2452, %v2450
    %v2573 = vpack.c.bf16 %v2453, %v2451
    %v2574 = vpack.c.bf16 %v2456, %v2454
    %v2575 = vpack.c.bf16 %v2457, %v2455
    %v2576 = vpack.c.bf16 %v2460, %v2458
    %v2577 = vpack.c.bf16 %v2461, %v2459
    %v2578 = vpack.c.bf16 %v2464, %v2462
    %v2579 = vpack.c.bf16 %v2465, %v2463
    %v2580 = vpack.c.bf16 %v2468, %v2466
    %v2581 = vpack.c.bf16 %v2469, %v2467
    %v2582 = vpack.c.bf16 %v2472, %v2470
    %v2583 = vpack.c.bf16 %v2473, %v2471
    %v2584 = vpack.c.bf16 %v2476, %v2474
    %v2585 = vpack.c.bf16 %v2477, %v2475
    %v2586 = vpack.c.bf16 %v2480, %v2478
    %v2587 = vpack.c.bf16 %v2481, %v2479
    %v2588 = vpack.c.bf16 %v2484, %v2482
    %v2589 = vpack.c.bf16 %v2485, %v2483
    %v2590 = vpack.c.bf16 %v2488, %v2486
    %v2591 = vpack.c.bf16 %v2489, %v2487
    %v2592 = vpack.c.bf16 %v2492, %v2490
    %v2593 = vpack.c.bf16 %v2493, %v2491
    %v2594 = vpack.c.bf16 %v2496, %v2494
    %v2595 = vpack.c.bf16 %v2497, %v2495
    %v2596 = vpack.c.bf16 %v2500, %v2498
    %v2597 = vpack.c.bf16 %v2501, %v2499
    %v2598 = vpack.c.bf16 %v2504, %v2502
    %v2599 = vpack.c.bf16 %v2505, %v2503
    %v2600 = vpack.c.bf16 %v2508, %v2506
    %v2601 = vpack.c.bf16 %v2509, %v2507
    %v2602 = vpack.c.bf16 %v2512, %v2510
    %v2603 = vpack.c.bf16 %v2513, %v2511
    %v2604 = vpack.c.bf16 %v2516, %v2514
    %v2605 = vpack.c.bf16 %v2517, %v2515
    %v2606 = vpack.c.bf16 %v2520, %v2518
    %v2607 = vpack.c.bf16 %v2521, %v2519
    %v2608 = vpack.c.bf16 %v2524, %v2522
    %v2609 = vpack.c.bf16 %v2525, %v2523
    %v2610 = vpack.c.bf16 %v2528, %v2526
    %v2611 = vpack.c.bf16 %v2529, %v2527
    %v2612 = vpack.c.bf16 %v2532, %v2530
    %v2613 = vpack.c.bf16 %v2533, %v2531
    %v2614 = vpack.c.bf16 %v2536, %v2534
    %v2615 = vpack.c.bf16 %v2537, %v2535
    %v2616 = vpack.c.bf16 %v2540, %v2538
    %v2617 = vpack.c.bf16 %v2541, %v2539
    %v2618 = vpack.c.bf16 %v2544, %v2542
    %v2619 = vpack.c.bf16 %v2545, %v2543
    %v2620 = vpack.c.bf16 %v2548, %v2546
    %v2621 = vpack.c.bf16 %v2549, %v2547
    %v2622 = vpack.c.bf16 %v2552, %v2550
    %v2623 = vpack.c.bf16 %v2553, %v2551
    %v2624 = vpack.c.bf16 %v2556, %v2554
    %v2625 = vpack.c.bf16 %v2557, %v2555
    %v2626 = vpack.c.bf16 %v2560, %v2558
    %v2627 = vpack.c.bf16 %v2561, %v2559
    %v2628 = vpack.c.bf16 %v2564, %v2562
    %v2629 = vpack.c.bf16 %v2565, %v2563
    %v2630 = vld [vmem:[#allocation13] sm:$0xf]
    %v2631 = vld [vmem:[#allocation13 + $0x4] sm:$0xf]
    %v2632 = vld [vmem:[#allocation13 + $0x8] sm:$0xf]
    %v2633 = vld [vmem:[#allocation13 + $0xc] sm:$0xf]
    %v2634 = vld [vmem:[#allocation13 + $0x10] sm:$0xf]
    %v2635 = vld [vmem:[#allocation13 + $0x14] sm:$0xf]
    %v2636 = vld [vmem:[#allocation13 + $0x18] sm:$0xf]
    %v2637 = vld [vmem:[#allocation13 + $0x1c] sm:$0xf]
    %v2638 = vld [vmem:[#allocation13 + $0x20] sm:$0xf]
    %v2639 = vld [vmem:[#allocation13 + $0x24] sm:$0xf]
    %v2640 = vld [vmem:[#allocation13 + $0x28] sm:$0xf]
    %v2641 = vld [vmem:[#allocation13 + $0x2c] sm:$0xf]
    %v2642 = vld [vmem:[#allocation13 + $0x30] sm:$0xf]
    %v2643 = vld [vmem:[#allocation13 + $0x34] sm:$0xf]
    %v2644 = vld [vmem:[#allocation13 + $0x38] sm:$0xf]
    %v2645 = vld [vmem:[#allocation13 + $0x3c] sm:$0xf]
    %v2646 = vld [vmem:[#allocation13 + $0x40] sm:$0xf]
    %v2647 = vld [vmem:[#allocation13 + $0x44] sm:$0xf]
    %v2648 = vld [vmem:[#allocation13 + $0x48] sm:$0xf]
    %v2649 = vld [vmem:[#allocation13 + $0x4c] sm:$0xf]
    %v2650 = vld [vmem:[#allocation13 + $0x50] sm:$0xf]
    %v2651 = vld [vmem:[#allocation13 + $0x54] sm:$0xf]
    %v2652 = vld [vmem:[#allocation13 + $0x58] sm:$0xf]
    %v2653 = vld [vmem:[#allocation13 + $0x5c] sm:$0xf]
    %v2654 = vld [vmem:[#allocation13 + $0x60] sm:$0xf]
    %v2655 = vld [vmem:[#allocation13 + $0x64] sm:$0xf]
    %v2656 = vld [vmem:[#allocation13 + $0x68] sm:$0xf]
    %v2657 = vld [vmem:[#allocation13 + $0x6c] sm:$0xf]
    %v2658 = vld [vmem:[#allocation13 + $0x70] sm:$0xf]
    %v2659 = vld [vmem:[#allocation13 + $0x74] sm:$0xf]
    %v2660 = vld [vmem:[#allocation13 + $0x78] sm:$0xf]
    %v2661 = vld [vmem:[#allocation13 + $0x7c] sm:$0xf]
    %v2662 = vld [vmem:[#allocation14] sm:$0x1]
    %v2664 = vlaneseq
    %v2665 = vshrl.u32 %v2664, 7
    %v2666 = vsub.s32 0, %v2665
    %v2667 = vrot.slane %v2662, %v2666
    %v2701 = vunpack.c.l.b16 %v2630
    %v2702 = vunpack.c.l.b16 %v2631
    %v2703 = vunpack.c.l.b16 %v2632
    %v2704 = vunpack.c.l.b16 %v2633
    %v2705 = vunpack.c.l.b16 %v2634
    %v2706 = vunpack.c.l.b16 %v2635
    %v2707 = vunpack.c.l.b16 %v2636
    %v2708 = vunpack.c.l.b16 %v2637
    %v2709 = vunpack.c.l.b16 %v2638
    %v2710 = vunpack.c.l.b16 %v2639
    %v2711 = vunpack.c.l.b16 %v2640
    %v2712 = vunpack.c.l.b16 %v2641
    %v2713 = vunpack.c.l.b16 %v2642
    %v2714 = vunpack.c.l.b16 %v2643
    %v2715 = vunpack.c.l.b16 %v2644
    %v2716 = vunpack.c.l.b16 %v2645
    %v2717 = vunpack.c.l.b16 %v2646
    %v2718 = vunpack.c.l.b16 %v2647
    %v2719 = vunpack.c.l.b16 %v2648
    %v2720 = vunpack.c.l.b16 %v2649
    %v2721 = vunpack.c.l.b16 %v2650
    %v2722 = vunpack.c.l.b16 %v2651
    %v2723 = vunpack.c.l.b16 %v2652
    %v2724 = vunpack.c.l.b16 %v2653
    %v2725 = vunpack.c.l.b16 %v2654
    %v2726 = vunpack.c.l.b16 %v2655
    %v2727 = vunpack.c.l.b16 %v2656
    %v2728 = vunpack.c.l.b16 %v2657
    %v2729 = vunpack.c.l.b16 %v2658
    %v2730 = vunpack.c.l.b16 %v2659
    %v2731 = vunpack.c.l.b16 %v2660
    %v2732 = vunpack.c.l.b16 %v2661
    %v2733 = vpack.c.b16 %v2702, %v2701
    %v2734 = vpack.c.b16 %v2704, %v2703
    %v2735 = vpack.c.b16 %v2706, %v2705
    %v2736 = vpack.c.b16 %v2708, %v2707
    %v2737 = vpack.c.b16 %v2710, %v2709
    %v2738 = vpack.c.b16 %v2712, %v2711
    %v2739 = vpack.c.b16 %v2714, %v2713
    %v2740 = vpack.c.b16 %v2716, %v2715
    %v2741 = vpack.c.b16 %v2718, %v2717
    %v2742 = vpack.c.b16 %v2720, %v2719
    %v2743 = vpack.c.b16 %v2722, %v2721
    %v2744 = vpack.c.b16 %v2724, %v2723
    %v2745 = vpack.c.b16 %v2726, %v2725
    %v2746 = vpack.c.b16 %v2728, %v2727
    %v2747 = vpack.c.b16 %v2730, %v2729
    %v2748 = vpack.c.b16 %v2732, %v2731
    %2765 = vmatprep.subr.bf16.mxu0 0
    %2766 = vmatpush1.bf16.msra.mxu0 %v2733
    %2767 = vmatprep.subr.bf16.mxu0 0
    %2768 = vmatpush1.bf16.msra.mxu0 %v2734
    %2769 = vmatprep.subr.bf16.mxu0 0
    %2770 = vmatpush1.bf16.msra.mxu0 %v2735
    %2771 = vmatprep.subr.bf16.mxu0 0
    %2772 = vmatpush1.bf16.msra.mxu0 %v2736
    %2773 = vmatprep.subr.bf16.mxu0 0
    %2774 = vmatpush1.bf16.msra.mxu0 %v2737
    %2775 = vmatprep.subr.bf16.mxu0 0
    %2776 = vmatpush1.bf16.msra.mxu0 %v2738
    %2777 = vmatprep.subr.bf16.mxu0 0
    %2778 = vmatpush1.bf16.msra.mxu0 %v2739
    %2779 = vmatprep.subr.bf16.mxu0 0
    %2780 = vmatpush1.bf16.msra.mxu0 %v2740
    %2781 = vmatprep.subr.bf16.mxu0 0
    %2782 = vmatpush1.bf16.msra.mxu0 %v2741
    %2783 = vmatprep.subr.bf16.mxu0 0
    %2784 = vmatpush1.bf16.msra.mxu0 %v2742
    %2785 = vmatprep.subr.bf16.mxu0 0
    %2786 = vmatpush1.bf16.msra.mxu0 %v2743
    %2787 = vmatprep.subr.bf16.mxu0 0
    %2788 = vmatpush1.bf16.msra.mxu0 %v2744
    %2789 = vmatprep.subr.bf16.mxu0 0
    %2790 = vmatpush1.bf16.msra.mxu0 %v2745
    %2791 = vmatprep.subr.bf16.mxu0 0
    %2792 = vmatpush1.bf16.msra.mxu0 %v2746
    %2793 = vmatprep.subr.bf16.mxu0 0
    %2794 = vmatpush1.bf16.msra.mxu0 %v2747
    %2795 = vmatprep.subr.bf16.mxu0 0
    %2796 = vmatpush1.bf16.msra.mxu0 %v2748
    %2797 = vmatprep.mubr.bf16.mxu0 %v2567
    %2798 = vmatmul.mubr.bf16.gmra.mrb[0].mxu0 %v2566
    %v2799 = vpop.f32.mrb[0].mxu0
    %v2800 = vadd.f32 %v2667, %v2799
    %v2801 = vpop.f32.mrb[0].mxu0
    %v2802 = vpop.f32.mrb[0].mxu0
    %v2803 = vadd.f32 %v2667, %v2802
    %v2804 = vpop.f32.mrb[0].mxu0
    %2805 = vmatprep.mubr.bf16.mxu0 %v2569
    %2806 = vmatmul.mubr.bf16.gmra.mrb[0].mxu0 %v2568
    %v2807 = vpop.f32.mrb[0].mxu0
    %v2808 = vadd.f32 %v2667, %v2807
    %v2809 = vpop.f32.mrb[0].mxu0
    %v2810 = vpop.f32.mrb[0].mxu0
    %v2811 = vadd.f32 %v2667, %v2810
    %v2812 = vpop.f32.mrb[0].mxu0
    %2813 = vmatprep.mubr.bf16.mxu0 %v2571
    %2814 = vmatmul.mubr.bf16.gmra.mrb[0].mxu0 %v2570
    %v2815 = vpop.f32.mrb[0].mxu0
    %v2816 = vadd.f32 %v2667, %v2815
    %v2817 = vpop.f32.mrb[0].mxu0
    %v2818 = vpop.f32.mrb[0].mxu0
    %v2819 = vadd.f32 %v2667, %v2818
    %v2820 = vpop.f32.mrb[0].mxu0
    %2821 = vmatprep.mubr.bf16.mxu0 %v2573
    %2822 = vmatmul.mubr.bf16.gmra.mrb[0].mxu0 %v2572
    %v2823 = vpop.f32.mrb[0].mxu0
    %v2824 = vadd.f32 %v2667, %v2823
    %v2825 = vpop.f32.mrb[0].mxu0
    %v2826 = vpop.f32.mrb[0].mxu0
    %v2827 = vadd.f32 %v2667, %v2826
    %v2828 = vpop.f32.mrb[0].mxu0
    %2829 = vmatprep.mubr.bf16.mxu0 %v2575
    %2830 = vmatmul.mubr.bf16.gmra.mrb[0].mxu0 %v2574
    %v2831 = vpop.f32.mrb[0].mxu0
    %v2832 = vadd.f32 %v2667, %v2831
    %v2833 = vpop.f32.mrb[0].mxu0
    %v2834 = vpop.f32.mrb[0].mxu0
    %v2835 = vadd.f32 %v2667, %v2834
    %v2836 = vpop.f32.mrb[0].mxu0
    %2837 = vmatprep.mubr.bf16.mxu0 %v2577
    %2838 = vmatmul.mubr.bf16.gmra.mrb[0].mxu0 %v2576
    %v2839 = vpop.f32.mrb[0].mxu0
    %v2840 = vadd.f32 %v2667, %v2839
    %v2841 = vpop.f32.mrb[0].mxu0
    %v2842 = vpop.f32.mrb[0].mxu0
    %v2843 = vadd.f32 %v2667, %v2842
    %v2844 = vpop.f32.mrb[0].mxu0
    %2845 = vmatprep.mubr.bf16.mxu0 %v2579
    %2846 = vmatmul.mubr.bf16.gmra.mrb[0].mxu0 %v2578
    %v2847 = vpop.f32.mrb[0].mxu0
    %v2848 = vadd.f32 %v2667, %v2847
    %v2849 = vpop.f32.mrb[0].mxu0
    %v2850 = vpop.f32.mrb[0].mxu0
    %v2851 = vadd.f32 %v2667, %v2850
    %v2852 = vpop.f32.mrb[0].mxu0
    %2853 = vmatprep.mubr.bf16.mxu0 %v2581
    %2854 = vmatmul.mubr.bf16.gmra.mrb[0].mxu0 %v2580
    %v2855 = vpop.f32.mrb[0].mxu0
    %v2856 = vadd.f32 %v2667, %v2855
    %v2857 = vpop.f32.mrb[0].mxu0
    %v2858 = vpop.f32.mrb[0].mxu0
    %v2859 = vadd.f32 %v2667, %v2858
    %v2860 = vpop.f32.mrb[0].mxu0
    %2861 = vmatprep.mubr.bf16.mxu0 %v2583
    %2862 = vmatmul.mubr.bf16.gmra.mrb[0].mxu0 %v2582
    %v2863 = vpop.f32.mrb[0].mxu0
    %v2864 = vadd.f32 %v2667, %v2863
    %v2865 = vpop.f32.mrb[0].mxu0
    %v2866 = vpop.f32.mrb[0].mxu0
    %v2867 = vadd.f32 %v2667, %v2866
    %v2868 = vpop.f32.mrb[0].mxu0
    %2869 = vmatprep.mubr.bf16.mxu0 %v2585
    %2870 = vmatmul.mubr.bf16.gmra.mrb[0].mxu0 %v2584
    %v2871 = vpop.f32.mrb[0].mxu0
    %v2872 = vadd.f32 %v2667, %v2871
    %v2873 = vpop.f32.mrb[0].mxu0
    %v2874 = vpop.f32.mrb[0].mxu0
    %v2875 = vadd.f32 %v2667, %v2874
    %v2876 = vpop.f32.mrb[0].mxu0
    %2877 = vmatprep.mubr.bf16.mxu0 %v2587
    %2878 = vmatmul.mubr.bf16.gmra.mrb[0].mxu0 %v2586
    %v2879 = vpop.f32.mrb[0].mxu0
    %v2880 = vadd.f32 %v2667, %v2879
    %v2881 = vpop.f32.mrb[0].mxu0
    %v2882 = vpop.f32.mrb[0].mxu0
    %v2883 = vadd.f32 %v2667, %v2882
    %v2884 = vpop.f32.mrb[0].mxu0
    %2885 = vmatprep.mubr.bf16.mxu0 %v2589
    %2886 = vmatmul.mubr.bf16.gmra.mrb[0].mxu0 %v2588
    %v2887 = vpop.f32.mrb[0].mxu0
    %v2888 = vadd.f32 %v2667, %v2887
    %v2889 = vpop.f32.mrb[0].mxu0
    %v2890 = vpop.f32.mrb[0].mxu0
    %v2891 = vadd.f32 %v2667, %v2890
    %v2892 = vpop.f32.mrb[0].mxu0
    %2893 = vmatprep.mubr.bf16.mxu0 %v2591
    %2894 = vmatmul.mubr.bf16.gmra.mrb[0].mxu0 %v2590
    %v2895 = vpop.f32.mrb[0].mxu0
    %v2896 = vadd.f32 %v2667, %v2895
    %v2897 = vpop.f32.mrb[0].mxu0
    %v2898 = vpop.f32.mrb[0].mxu0
    %v2899 = vadd.f32 %v2667, %v2898
    %v2900 = vpop.f32.mrb[0].mxu0
    %2901 = vmatprep.mubr.bf16.mxu0 %v2593
    %2902 = vmatmul.mubr.bf16.gmra.mrb[0].mxu0 %v2592
    %v2903 = vpop.f32.mrb[0].mxu0
    %v2904 = vadd.f32 %v2667, %v2903
    %v2905 = vpop.f32.mrb[0].mxu0
    %v2906 = vpop.f32.mrb[0].mxu0
    %v2907 = vadd.f32 %v2667, %v2906
    %v2908 = vpop.f32.mrb[0].mxu0
    %2909 = vmatprep.mubr.bf16.mxu0 %v2595
    %2910 = vmatmul.mubr.bf16.gmra.mrb[0].mxu0 %v2594
    %v2911 = vpop.f32.mrb[0].mxu0
    %v2912 = vadd.f32 %v2667, %v2911
    %v2913 = vpop.f32.mrb[0].mxu0
    %v2914 = vpop.f32.mrb[0].mxu0
    %v2915 = vadd.f32 %v2667, %v2914
    %v2916 = vpop.f32.mrb[0].mxu0
    %2917 = vmatprep.mubr.bf16.mxu0 %v2597
    %2918 = vmatmul.mubr.bf16.gmra.mrb[0].mxu0 %v2596
    %v2919 = vpop.f32.mrb[0].mxu0
    %v2920 = vadd.f32 %v2667, %v2919
    %v2921 = vpop.f32.mrb[0].mxu0
    %v2922 = vpop.f32.mrb[0].mxu0
    %v2923 = vadd.f32 %v2667, %v2922
    %v2924 = vpop.f32.mrb[0].mxu0
    %2925 = vmatprep.mubr.bf16.mxu0 %v2599
    %2926 = vmatmul.mubr.bf16.gmra.mrb[0].mxu0 %v2598
    %v2927 = vpop.f32.mrb[0].mxu0
    %v2928 = vadd.f32 %v2667, %v2927
    %v2929 = vpop.f32.mrb[0].mxu0
    %v2930 = vpop.f32.mrb[0].mxu0
    %v2931 = vadd.f32 %v2667, %v2930
    %v2932 = vpop.f32.mrb[0].mxu0
    %2933 = vmatprep.mubr.bf16.mxu0 %v2601
    %2934 = vmatmul.mubr.bf16.gmra.mrb[0].mxu0 %v2600
    %v2935 = vpop.f32.mrb[0].mxu0
    %v2936 = vadd.f32 %v2667, %v2935
    %v2937 = vpop.f32.mrb[0].mxu0
    %v2938 = vpop.f32.mrb[0].mxu0
    %v2939 = vadd.f32 %v2667, %v2938
    %v2940 = vpop.f32.mrb[0].mxu0
    %2941 = vmatprep.mubr.bf16.mxu0 %v2603
    %2942 = vmatmul.mubr.bf16.gmra.mrb[0].mxu0 %v2602
    %v2943 = vpop.f32.mrb[0].mxu0
    %v2944 = vadd.f32 %v2667, %v2943
    %v2945 = vpop.f32.mrb[0].mxu0
    %v2946 = vpop.f32.mrb[0].mxu0
    %v2947 = vadd.f32 %v2667, %v2946
    %v2948 = vpop.f32.mrb[0].mxu0
    %2949 = vmatprep.mubr.bf16.mxu0 %v2605
    %2950 = vmatmul.mubr.bf16.gmra.mrb[0].mxu0 %v2604
    %v2951 = vpop.f32.mrb[0].mxu0
    %v2952 = vadd.f32 %v2667, %v2951
    %v2953 = vpop.f32.mrb[0].mxu0
    %v2954 = vpop.f32.mrb[0].mxu0
    %v2955 = vadd.f32 %v2667, %v2954
    %v2956 = vpop.f32.mrb[0].mxu0
    %2957 = vmatprep.mubr.bf16.mxu0 %v2607
    %2958 = vmatmul.mubr.bf16.gmra.mrb[0].mxu0 %v2606
    %v2959 = vpop.f32.mrb[0].mxu0
    %v2960 = vadd.f32 %v2667, %v2959
    %v2961 = vpop.f32.mrb[0].mxu0
    %v2962 = vpop.f32.mrb[0].mxu0
    %v2963 = vadd.f32 %v2667, %v2962
    %v2964 = vpop.f32.mrb[0].mxu0
    %2965 = vmatprep.mubr.bf16.mxu0 %v2609
    %2966 = vmatmul.mubr.bf16.gmra.mrb[0].mxu0 %v2608
    %v2967 = vpop.f32.mrb[0].mxu0
    %v2968 = vadd.f32 %v2667, %v2967
    %v2969 = vpop.f32.mrb[0].mxu0
    %v2970 = vpop.f32.mrb[0].mxu0
    %v2971 = vadd.f32 %v2667, %v2970
    %v2972 = vpop.f32.mrb[0].mxu0
    %2973 = vmatprep.mubr.bf16.mxu0 %v2611
    %2974 = vmatmul.mubr.bf16.gmra.mrb[0].mxu0 %v2610
    %v2975 = vpop.f32.mrb[0].mxu0
    %v2976 = vadd.f32 %v2667, %v2975
    %v2977 = vpop.f32.mrb[0].mxu0
    %v2978 = vpop.f32.mrb[0].mxu0
    %v2979 = vadd.f32 %v2667, %v2978
    %v2980 = vpop.f32.mrb[0].mxu0
    %2981 = vmatprep.mubr.bf16.mxu0 %v2613
    %2982 = vmatmul.mubr.bf16.gmra.mrb[0].mxu0 %v2612
    %v2983 = vpop.f32.mrb[0].mxu0
    %v2984 = vadd.f32 %v2667, %v2983
    %v2985 = vpop.f32.mrb[0].mxu0
    %v2986 = vpop.f32.mrb[0].mxu0
    %v2987 = vadd.f32 %v2667, %v2986
    %v2988 = vpop.f32.mrb[0].mxu0
    %2989 = vmatprep.mubr.bf16.mxu0 %v2615
    %2990 = vmatmul.mubr.bf16.gmra.mrb[0].mxu0 %v2614
    %v2991 = vpop.f32.mrb[0].mxu0
    %v2992 = vadd.f32 %v2667, %v2991
    %v2993 = vpop.f32.mrb[0].mxu0
    %v2994 = vpop.f32.mrb[0].mxu0
    %v2995 = vadd.f32 %v2667, %v2994
    %v2996 = vpop.f32.mrb[0].mxu0
    %2997 = vmatprep.mubr.bf16.mxu0 %v2617
    %2998 = vmatmul.mubr.bf16.gmra.mrb[0].mxu0 %v2616
    %v2999 = vpop.f32.mrb[0].mxu0
    %v3000 = vadd.f32 %v2667, %v2999
    %v3001 = vpop.f32.mrb[0].mxu0
    %v3002 = vpop.f32.mrb[0].mxu0
    %v3003 = vadd.f32 %v2667, %v3002
    %v3004 = vpop.f32.mrb[0].mxu0
    %3005 = vmatprep.mubr.bf16.mxu0 %v2619
    %3006 = vmatmul.mubr.bf16.gmra.mrb[0].mxu0 %v2618
    %v3007 = vpop.f32.mrb[0].mxu0
    %v3008 = vadd.f32 %v2667, %v3007
    %v3009 = vpop.f32.mrb[0].mxu0
    %v3010 = vpop.f32.mrb[0].mxu0
    %v3011 = vadd.f32 %v2667, %v3010
    %v3012 = vpop.f32.mrb[0].mxu0
    %3013 = vmatprep.mubr.bf16.mxu0 %v2621
    %3014 = vmatmul.mubr.bf16.gmra.mrb[0].mxu0 %v2620
    %v3015 = vpop.f32.mrb[0].mxu0
    %v3016 = vadd.f32 %v2667, %v3015
    %v3017 = vpop.f32.mrb[0].mxu0
    %v3018 = vpop.f32.mrb[0].mxu0
    %v3019 = vadd.f32 %v2667, %v3018
    %v3020 = vpop.f32.mrb[0].mxu0
    %3021 = vmatprep.mubr.bf16.mxu0 %v2623
    %3022 = vmatmul.mubr.bf16.gmra.mrb[0].mxu0 %v2622
    %v3023 = vpop.f32.mrb[0].mxu0
    %v3024 = vadd.f32 %v2667, %v3023
    %v3025 = vpop.f32.mrb[0].mxu0
    %v3026 = vpop.f32.mrb[0].mxu0
    %v3027 = vadd.f32 %v2667, %v3026
    %v3028 = vpop.f32.mrb[0].mxu0
    %3029 = vmatprep.mubr.bf16.mxu0 %v2625
    %3030 = vmatmul.mubr.bf16.gmra.mrb[0].mxu0 %v2624
    %v3031 = vpop.f32.mrb[0].mxu0
    %v3032 = vadd.f32 %v2667, %v3031
    %v3033 = vpop.f32.mrb[0].mxu0
    %v3034 = vpop.f32.mrb[0].mxu0
    %v3035 = vadd.f32 %v2667, %v3034
    %v3036 = vpop.f32.mrb[0].mxu0
    %3037 = vmatprep.mubr.bf16.mxu0 %v2627
    %3038 = vmatmul.mubr.bf16.gmra.mrb[0].mxu0 %v2626
    %v3039 = vpop.f32.mrb[0].mxu0
    %v3040 = vadd.f32 %v2667, %v3039
    %v3041 = vpop.f32.mrb[0].mxu0
    %v3042 = vpop.f32.mrb[0].mxu0
    %v3043 = vadd.f32 %v2667, %v3042
    %v3044 = vpop.f32.mrb[0].mxu0
    %3045 = vmatprep.mubr.bf16.mxu0 %v2629
    %3046 = vmatmul.mubr.bf16.gmra.mrb[0].mxu0 %v2628
    %v3047 = vpop.f32.mrb[0].mxu0
    %v3048 = vadd.f32 %v2667, %v3047
    %v3049 = vpop.f32.mrb[0].mxu0
    %v3050 = vpop.f32.mrb[0].mxu0
    %v3051 = vadd.f32 %v2667, %v3050
    %v3052 = vpop.f32.mrb[0].mxu0
    %3053 = vdwg.mxu0
    %v3054 = vadd.f32 %v2800, %v132
    %v3055 = vadd.f32 %v2803, %v133
    %v3056 = vadd.f32 %v2808, %v134
    %v3057 = vadd.f32 %v2811, %v135
    %v3058 = vadd.f32 %v2816, %v136
    %v3059 = vadd.f32 %v2819, %v137
    %v3060 = vadd.f32 %v2824, %v138
    %v3061 = vadd.f32 %v2827, %v139
    %v3062 = vadd.f32 %v2832, %v140
    %v3063 = vadd.f32 %v2835, %v141
    %v3064 = vadd.f32 %v2840, %v142
    %v3065 = vadd.f32 %v2843, %v143
    %v3066 = vadd.f32 %v2848, %v144
    %v3067 = vadd.f32 %v2851, %v145
    %v3068 = vadd.f32 %v2856, %v146
    %v3069 = vadd.f32 %v2859, %v147
    %v3070 = vadd.f32 %v2864, %v148
    %v3071 = vadd.f32 %v2867, %v149
    %v3072 = vadd.f32 %v2872, %v150
    %v3073 = vadd.f32 %v2875, %v151
    %v3074 = vadd.f32 %v2880, %v152
    %v3075 = vadd.f32 %v2883, %v153
    %v3076 = vadd.f32 %v2888, %v154
    %v3077 = vadd.f32 %v2891, %v155
    %v3078 = vadd.f32 %v2896, %v156
    %v3079 = vadd.f32 %v2899, %v157
    %v3080 = vadd.f32 %v2904, %v158
    %v3081 = vadd.f32 %v2907, %v159
    %v3082 = vadd.f32 %v2912, %v160
    %v3083 = vadd.f32 %v2915, %v161
    %v3084 = vadd.f32 %v2920, %v162
    %v3085 = vadd.f32 %v2923, %v163
    %v3086 = vadd.f32 %v2928, %v164
    %v3087 = vadd.f32 %v2931, %v165
    %v3088 = vadd.f32 %v2936, %v166
    %v3089 = vadd.f32 %v2939, %v167
    %v3090 = vadd.f32 %v2944, %v168
    %v3091 = vadd.f32 %v2947, %v169
    %v3092 = vadd.f32 %v2952, %v170
    %v3093 = vadd.f32 %v2955, %v171
    %v3094 = vadd.f32 %v2960, %v172
    %v3095 = vadd.f32 %v2963, %v173
    %v3096 = vadd.f32 %v2968, %v174
    %v3097 = vadd.f32 %v2971, %v175
    %v3098 = vadd.f32 %v2976, %v176
    %v3099 = vadd.f32 %v2979, %v177
    %v3100 = vadd.f32 %v2984, %v178
    %v3101 = vadd.f32 %v2987, %v179
    %v3102 = vadd.f32 %v2992, %v180
    %v3103 = vadd.f32 %v2995, %v181
    %v3104 = vadd.f32 %v3000, %v182
    %v3105 = vadd.f32 %v3003, %v183
    %v3106 = vadd.f32 %v3008, %v184
    %v3107 = vadd.f32 %v3011, %v185
    %v3108 = vadd.f32 %v3016, %v186
    %v3109 = vadd.f32 %v3019, %v187
    %v3110 = vadd.f32 %v3024, %v188
    %v3111 = vadd.f32 %v3027, %v189
    %v3112 = vadd.f32 %v3032, %v190
    %v3113 = vadd.f32 %v3035, %v191
    %v3114 = vadd.f32 %v3040, %v192
    %v3115 = vadd.f32 %v3043, %v193
    %v3116 = vadd.f32 %v3048, %v194
    %v3117 = vadd.f32 %v3051, %v195
    %3118 = vst [vmem:[#allocation16] sm:$0xff] %v3054
    %3119 = vst [vmem:[#allocation16 + $0x8] sm:$0xff] %v3055
    %3120 = vst [vmem:[#allocation16 + $0x10] sm:$0xff] %v3056
    %3121 = vst [vmem:[#allocation16 + $0x18] sm:$0xff] %v3057
    %3122 = vst [vmem:[#allocation16 + $0x20] sm:$0xff] %v3058
    %3123 = vst [vmem:[#allocation16 + $0x28] sm:$0xff] %v3059
    %3124 = vst [vmem:[#allocation16 + $0x30] sm:$0xff] %v3060
    %3125 = vst [vmem:[#allocation16 + $0x38] sm:$0xff] %v3061
    %3126 = vst [vmem:[#allocation16 + $0x40] sm:$0xff] %v3062
    %3127 = vst [vmem:[#allocation16 + $0x48] sm:$0xff] %v3063
    %3128 = vst [vmem:[#allocation16 + $0x50] sm:$0xff] %v3064
    %3129 = vst [vmem:[#allocation16 + $0x58] sm:$0xff] %v3065
    %3130 = vst [vmem:[#allocation16 + $0x60] sm:$0xff] %v3066
    %3131 = vst [vmem:[#allocation16 + $0x68] sm:$0xff] %v3067
    %3132 = vst [vmem:[#allocation16 + $0x70] sm:$0xff] %v3068
    %3133 = vst [vmem:[#allocation16 + $0x78] sm:$0xff] %v3069
    %3134 = vst [vmem:[#allocation16 + $0x80] sm:$0xff] %v3070
    %3135 = vst [vmem:[#allocation16 + $0x88] sm:$0xff] %v3071
    %3136 = vst [vmem:[#allocation16 + $0x90] sm:$0xff] %v3072
    %3137 = vst [vmem:[#allocation16 + $0x98] sm:$0xff] %v3073
    %3138 = vst [vmem:[#allocation16 + $0xa0] sm:$0xff] %v3074
    %3139 = vst [vmem:[#allocation16 + $0xa8] sm:$0xff] %v3075
    %3140 = vst [vmem:[#allocation16 + $0xb0] sm:$0xff] %v3076
    %3141 = vst [vmem:[#allocation16 + $0xb8] sm:$0xff] %v3077
    %3142 = vst [vmem:[#allocation16 + $0xc0] sm:$0xff] %v3078
    %3143 = vst [vmem:[#allocation16 + $0xc8] sm:$0xff] %v3079
    %3144 = vst [vmem:[#allocation16 + $0xd0] sm:$0xff] %v3080
    %3145 = vst [vmem:[#allocation16 + $0xd8] sm:$0xff] %v3081
    %3146 = vst [vmem:[#allocation16 + $0xe0] sm:$0xff] %v3082
    %3147 = vst [vmem:[#allocation16 + $0xe8] sm:$0xff] %v3083
    %3148 = vst [vmem:[#allocation16 + $0xf0] sm:$0xff] %v3084
    %3149 = vst [vmem:[#allocation16 + $0xf8] sm:$0xff] %v3085
    %3150 = vst [vmem:[#allocation16 + $0x100] sm:$0xff] %v3086
    %3151 = vst [vmem:[#allocation16 + $0x108] sm:$0xff] %v3087
    %3152 = vst [vmem:[#allocation16 + $0x110] sm:$0xff] %v3088
    %3153 = vst [vmem:[#allocation16 + $0x118] sm:$0xff] %v3089
    %3154 = vst [vmem:[#allocation16 + $0x120] sm:$0xff] %v3090
    %3155 = vst [vmem:[#allocation16 + $0x128] sm:$0xff] %v3091
    %3156 = vst [vmem:[#allocation16 + $0x130] sm:$0xff] %v3092
    %3157 = vst [vmem:[#allocation16 + $0x138] sm:$0xff] %v3093
    %3158 = vst [vmem:[#allocation16 + $0x140] sm:$0xff] %v3094
    %3159 = vst [vmem:[#allocation16 + $0x148] sm:$0xff] %v3095
    %3160 = vst [vmem:[#allocation16 + $0x150] sm:$0xff] %v3096
    %3161 = vst [vmem:[#allocation16 + $0x158] sm:$0xff] %v3097
    %3162 = vst [vmem:[#allocation16 + $0x160] sm:$0xff] %v3098
    %3163 = vst [vmem:[#allocation16 + $0x168] sm:$0xff] %v3099
    %3164 = vst [vmem:[#allocation16 + $0x170] sm:$0xff] %v3100
    %3165 = vst [vmem:[#allocation16 + $0x178] sm:$0xff] %v3101
    %3166 = vst [vmem:[#allocation16 + $0x180] sm:$0xff] %v3102
    %3167 = vst [vmem:[#allocation16 + $0x188] sm:$0xff] %v3103
    %3168 = vst [vmem:[#allocation16 + $0x190] sm:$0xff] %v3104
    %3169 = vst [vmem:[#allocation16 + $0x198] sm:$0xff] %v3105
    %3170 = vst [vmem:[#allocation16 + $0x1a0] sm:$0xff] %v3106
    %3171 = vst [vmem:[#allocation16 + $0x1a8] sm:$0xff] %v3107
    %3172 = vst [vmem:[#allocation16 + $0x1b0] sm:$0xff] %v3108
    %3173 = vst [vmem:[#allocation16 + $0x1b8] sm:$0xff] %v3109
    %3174 = vst [vmem:[#allocation16 + $0x1c0] sm:$0xff] %v3110
    %3175 = vst [vmem:[#allocation16 + $0x1c8] sm:$0xff] %v3111
    %3176 = vst [vmem:[#allocation16 + $0x1d0] sm:$0xff] %v3112
    %3177 = vst [vmem:[#allocation16 + $0x1d8] sm:$0xff] %v3113
    %3178 = vst [vmem:[#allocation16 + $0x1e0] sm:$0xff] %v3114
    %3179 = vst [vmem:[#allocation16 + $0x1e8] sm:$0xff] %v3115
    %3180 = vst [vmem:[#allocation16 + $0x1f0] sm:$0xff] %v3116
    %3181 = vst [vmem:[#allocation16 + $0x1f8] sm:$0xff] %v3117
    // Predicated region
    $region66: #{diff_transformer_layer.3} parent=1 // pred_check
      _
    $region67: #{diff_transformer_layer.3} parent=1 // pred_check_branch
      %3183 = sbr.rel (0) target = $region69
    $region68: #{diff_transformer_layer.3} parent=1 // pred_region
      %s3185 = ssub.s32 8192, 8192
      %3186 = vsyncadd [#allocation4], %s3185
      %s3187 = sshll.u32 [#allocation16], 4
      %s3188 = int_to_ptr.vmem [resolvable:$true] %s3187
      %3193 = dma.vmem_to_hbm [thread:$0]  %s3188, 8192, %s8, [#allocation4], 128, 128, 8
    $region69: #{diff_transformer_layer.3} parent=1 // pred_fallthru
      _
    // Predicated region
    $region70: #{diff_transformer_layer.3} parent=1 // pred_check
      _
    $region71: #{diff_transformer_layer.3} parent=1 // pred_check_branch
      %3195 = sbr.rel (0) target = $region73
    $region72: #{diff_transformer_layer.3} parent=1 // pred_region
      %3196 = dma.done [#allocation4], 8192
    $region73: #{diff_transformer_layer.3} parent=1 // pred_fallthru
      _
    %3197 = vsyncpa [#allocation3], 1
    %3198 = vsyncpa [#allocation6], 1
    %3199 = vsyncpa [#allocation9], 1
    %3200 = vsyncpa [#allocation12], 1
    %3201 = vsyncpa [#allocation15], 1
    %3202 = vsyncpa [#allocation4], 1

// kernel: diff_transformer_layer.2
$region0: #{diff_transformer_layer.2}
  #allocation0 [shape = 'u32[]', space=smem, size = 0x4, offset = 0x4, fixed_abs, tag = 'smem constant byte address 0x4 - core index']
  #allocation1 [shape = 'u32[144,128]{1,0:T(1,128)}', space=vmem, size = 0x12000, scoped, tag = 'internal scratch']
  #allocation2 [shape = 'bf16[256,128]{1,0:T(16,128)(2,1)}', space=vmem, size = 0x10000, scoped, tag = 'scratch operand']
  %s0 = inlined_call_operand.hbm [shape: f32[2], index: 0, kind: input, shape index: {}]
  %s1 = inlined_call_operand.hbm [shape: f32[2,128,256], index: 1, kind: input, shape index: {}]
  %s2 = inlined_call_operand.hbm [shape: f32[2,256,128], index: 2, kind: input, shape index: {}]
  %s3 = inlined_call_operand.hbm [shape: f32[1,256], index: 3, kind: input, shape index: {}]
  %s4 = inlined_call_operand.hbm [shape: f32[256,256], index: 4, kind: input, shape index: {}]
  %s5 = inlined_call_operand.hbm [shape: bf16[2,128,128], index: 5, kind: input, shape index: {}]
  %s6 = inlined_call_operand.hbm [shape: bf16[2,128,128], index: 6, kind: input, shape index: {}]
  %s7 = inlined_call_operand.hbm [shape: bf16[2,128,128], index: 7, kind: input, shape index: {}]
  %s8 = inlined_call_operand.hbm [shape: bf16[2,128,128], index: 8, kind: input, shape index: {}]
  %s9 = inlined_call_operand.hbm [shape: f32[1,128], index: 9, kind: input, shape index: {}]
  %s10 = inlined_call_operand.hbm [shape: f32[2,256,128], index: 10, kind: output, shape index: {}]
  %s11 = sld [smem:[#allocation0]]
  $region117: #{diff_transformer_layer.2} parent=0
    _
  %s13 = ssub.s32 1, %s11
  %s14 = scalar_select 0, %s13, %s11
  $region1: #{diff_transformer_layer.2} parent=0
    #allocation3 [shape = 'u8[512]{0}', space=smem, size = 0x200, scoped, tag = 'input window, operand 0, single buffered']
    #allocation4 [shape = 's32[2]{0}', space=sflag, size = 0x8, scoped, tag = 'scoped memory for diff_transformer_layer.2']
    #allocation5 [shape = 's32[2]{0}', space=sflag, size = 0x8, scoped, tag = 'scoped memory for diff_transformer_layer.2']
    #allocation6 [shape = 's32[2]{0}', space=sflag, size = 0x8, scoped, tag = 'scoped memory for diff_transformer_layer.2']
    #allocation7 [shape = 'u8[262144]{0}', space=vmem, size = 0x40000, scoped, tag = 'input window, operand 1']
    #allocation8 [shape = 'u8[262144]{0}', space=vmem, size = 0x40000, scoped, tag = 'input window, operand 2']
    #allocation9 [shape = 's32[2]{0}', space=sflag, size = 0x8, scoped, tag = 'scoped memory for diff_transformer_layer.2']
    #allocation10 [shape = 'u8[1024]{0}', space=vmem, size = 0x400, scoped, tag = 'input window, operand 3, single buffered']
    #allocation11 [shape = 'u8[262144]{0}', space=vmem, size = 0x40000, scoped, tag = 'input window, operand 4, single buffered']
    #allocation12 [shape = 's32[1]{0}', space=sflag, size = 0x4, scoped, tag = 'scoped memory for diff_transformer_layer.2']
    #allocation13 [shape = 'u8[65536]{0}', space=vmem, size = 0x10000, scoped, tag = 'input window, operand 5']
    #allocation14 [shape = 'u8[65536]{0}', space=vmem, size = 0x10000, scoped, tag = 'input window, operand 6']
    #allocation15 [shape = 'u8[65536]{0}', space=vmem, size = 0x10000, scoped, tag = 'input window, operand 7']
    #allocation16 [shape = 'u8[65536]{0}', space=vmem, size = 0x10000, scoped, tag = 'input window, operand 8']
    #allocation17 [shape = 'u8[512]{0}', space=vmem, size = 0x400, scoped, tag = 'input window, operand 9, single buffered']
    #allocation18 [shape = 'u8[262144]{0}', space=vmem, size = 0x40000, scoped, tag = 'output window, operand 0']
    %15 = vsyncpa [#allocation6], 0
    %16 = vsyncpa [#allocation4], 0
    %s17 = scalar_lea.sflag [#allocation4], 1
    %18 = vsyncpa %s17, 0
    %19 = vsyncpa [#allocation9], 0
    %s20 = scalar_lea.sflag [#allocation9], 1
    %21 = vsyncpa %s20, 0
    %22 = vsyncpa [#allocation12], 0
    %23 = vsyncpa [#allocation5], 0
    %s24 = scalar_lea.sflag [#allocation5], 1
    %25 = vsyncpa %s24, 0
    loop: start=0, step=1, limit=6
    $region2: #{diff_transformer_layer.2} parent=1 // loop_pre_header
      _
    $region3: #{diff_transformer_layer.2} parent=1 // loop_header
      %s27 = sphi 0, %s31
      %p28 = scmp.ge.s32.totalorder %s27, 6
      %s34 = sphi 0, %s46
      %s35 = sphi 0, %s42
      %s36 = sphi 0, %s34
      %s37 = sphi 0, %s35
      %s38 = sphi 0, %s36
      %s39 = sphi 0, %s37
      %s47 = sphi 0, %s47
      %s49 = sphi 0, %s47
      %s50 = sphi 0, %s49
      %s64 = sphi 0, %s50
      %s70 = sphi 0, %s72
      %s73 = sphi 0, %s70
      %s74 = sphi 0, %s73
      %s90 = sphi 0, %s74
      %s96 = sphi 0, %s98
      %s99 = sphi 0, %s96
      %s100 = sphi 0, %s99
      %s116 = sphi 0, %s100
      %s120 = sphi 0, %s120
      %s122 = sphi 0, %s120
      %s123 = sphi 0, %s122
      %s137 = sphi 0, %s123
      %s141 = sphi 0, %s141
      %s143 = sphi 0, %s141
      %s144 = sphi 0, %s143
      %s158 = sphi 0, %s144
      %s164 = sphi 0, %s166
      %s167 = sphi 0, %s164
      %s168 = sphi 0, %s167
      %s184 = sphi 0, %s168
      %s190 = sphi 0, %s192
      %s193 = sphi 0, %s190
      %s194 = sphi 0, %s193
      %s210 = sphi 0, %s194
      %s216 = sphi 0, %s218
      %s219 = sphi 0, %s216
      %s220 = sphi 0, %s219
      %s236 = sphi 0, %s220
      %s242 = sphi 0, %s244
      %s245 = sphi 0, %s242
      %s246 = sphi 0, %s245
      %s262 = sphi 0, %s246
      %s266 = sphi 0, %s266
      %s268 = sphi 0, %s266
      %s269 = sphi 0, %s268
      %s283 = sphi 0, %s269
      %s289 = sphi 0, %s291
      %s292 = sphi 0, %s289
      %s293 = sphi 0, %s292
      %s309 = sphi 0, %s293
    $region4: #{diff_transformer_layer.2} parent=1 // loop_header_branch
      %30 = sbr.rel (%p28) target = $region8
    $region5: #{diff_transformer_layer.2} parent=1 // loop_body
      %s32 = ssub.s32 %s27, 1
      %s33 = ssub.s32 %s27, 2
      %s40 = sadd.s32 1, %s35
      %p41 = scmp.ge.s32.totalorder %s40, 2
      %s42 = scalar_select %p41, 0, %s40
      %s43 = sadd.s32 1, %s34
      %s44 = scalar_select %p41, %s43, %s34
      %p45 = scmp.ge.s32.totalorder %s44, 2
      %s46 = scalar_select %p45, 0, %s44
      %s48 = sadd.s32 %s47, 1
      %p51 = scmp.eq.s32.totalorder %s27, 3
      %p52 = scmp.ne.s32.totalorder %s47, %s49
      %p53 = scmp.eq.s32.totalorder %s27, 0
      %p54 = por %p52, %p53
      %p55 = scmp.ne.s32.totalorder %s47, %s49
      %p56 = scmp.eq.s32.totalorder %s32, 3
      %p57 = por %p55, %p56
      %p58 = scmp.ne.s32.totalorder %s49, %s50
      %p59 = scmp.eq.s32.totalorder %s32, 0
      %p60 = por %p58, %p59
      %p61 = scmp.ne.s32.totalorder %s49, %s50
      %p62 = scmp.eq.s32.totalorder %s33, 3
      %p63 = por %p61, %p62
      %p65 = scmp.ne.s32.totalorder %s50, %s64
      %p66 = scmp.eq.s32.totalorder %s33, 0
      %p67 = por %p65, %p66
      %s68 = ssub.s32 %s34, %s46
      %p69 = scmp.eq.s32.totalorder %s68, 0
      %s71 = sadd.s32 %s70, 1
      %s72 = scalar_select %p69, %s70, %s71
      %p75 = pneg %p69
      %p76 = scmp.eq.s32.totalorder %s27, 3
      %p77 = por %p75, %p76
      %p78 = scmp.ne.s32.totalorder %s70, %s73
      %p79 = scmp.eq.s32.totalorder %s27, 0
      %p80 = por %p78, %p79
      %p81 = scmp.ne.s32.totalorder %s70, %s73
      %p82 = scmp.eq.s32.totalorder %s32, 3
      %p83 = por %p81, %p82
      %p84 = scmp.ne.s32.totalorder %s73, %s74
      %p85 = scmp.eq.s32.totalorder %s32, 0
      %p86 = por %p84, %p85
      %p87 = scmp.ne.s32.totalorder %s73, %s74
      %p88 = scmp.eq.s32.totalorder %s33, 3
      %p89 = por %p87, %p88
      %p91 = scmp.ne.s32.totalorder %s74, %s90
      %p92 = scmp.eq.s32.totalorder %s33, 0
      %p93 = por %p91, %p92
      %s94 = ssub.s32 %s34, %s46
      %p95 = scmp.eq.s32.totalorder %s94, 0
      %s97 = sadd.s32 %s96, 1
      %s98 = scalar_select %p95, %s96, %s97
      %p101 = pneg %p95
      %p102 = scmp.eq.s32.totalorder %s27, 3
      %p103 = por %p101, %p102
      %p104 = scmp.ne.s32.totalorder %s96, %s99
      %p105 = scmp.eq.s32.totalorder %s27, 0
      %p106 = por %p104, %p105
      %p107 = scmp.ne.s32.totalorder %s96, %s99
      %p108 = scmp.eq.s32.totalorder %s32, 3
      %p109 = por %p107, %p108
      %p110 = scmp.ne.s32.totalorder %s99, %s100
      %p111 = scmp.eq.s32.totalorder %s32, 0
      %p112 = por %p110, %p111
      %p113 = scmp.ne.s32.totalorder %s99, %s100
      %p114 = scmp.eq.s32.totalorder %s33, 3
      %p115 = por %p113, %p114
      %p117 = scmp.ne.s32.totalorder %s100, %s116
      %p118 = scmp.eq.s32.totalorder %s33, 0
      %p119 = por %p117, %p118
      %s121 = sadd.s32 %s120, 1
      %p124 = scmp.eq.s32.totalorder %s27, 3
      %p125 = scmp.ne.s32.totalorder %s120, %s122
      %p126 = scmp.eq.s32.totalorder %s27, 0
      %p127 = por %p125, %p126
      %p128 = scmp.ne.s32.totalorder %s120, %s122
      %p129 = scmp.eq.s32.totalorder %s32, 3
      %p130 = por %p128, %p129
      %p131 = scmp.ne.s32.totalorder %s122, %s123
      %p132 = scmp.eq.s32.totalorder %s32, 0
      %p133 = por %p131, %p132
      %p134 = scmp.ne.s32.totalorder %s122, %s123
      %p135 = scmp.eq.s32.totalorder %s33, 3
      %p136 = por %p134, %p135
      %p138 = scmp.ne.s32.totalorder %s123, %s137
      %p139 = scmp.eq.s32.totalorder %s33, 0
      %p140 = por %p138, %p139
      %s142 = sadd.s32 %s141, 1
      %p145 = scmp.eq.s32.totalorder %s27, 3
      %p146 = scmp.ne.s32.totalorder %s141, %s143
      %p147 = scmp.eq.s32.totalorder %s27, 0
      %p148 = por %p146, %p147
      %p149 = scmp.ne.s32.totalorder %s141, %s143
      %p150 = scmp.eq.s32.totalorder %s32, 3
      %p151 = por %p149, %p150
      %p152 = scmp.ne.s32.totalorder %s143, %s144
      %p153 = scmp.eq.s32.totalorder %s32, 0
      %p154 = por %p152, %p153
      %p155 = scmp.ne.s32.totalorder %s143, %s144
      %p156 = scmp.eq.s32.totalorder %s33, 3
      %p157 = por %p155, %p156
      %p159 = scmp.ne.s32.totalorder %s144, %s158
      %p160 = scmp.eq.s32.totalorder %s33, 0
      %p161 = por %p159, %p160
      %s162 = ssub.s32 %s35, %s42
      %p163 = scmp.eq.s32.totalorder %s162, 0
      %s165 = sadd.s32 %s164, 1
      %s166 = scalar_select %p163, %s164, %s165
      %p169 = pneg %p163
      %p170 = scmp.eq.s32.totalorder %s27, 3
      %p171 = por %p169, %p170
      %p172 = scmp.ne.s32.totalorder %s164, %s167
      %p173 = scmp.eq.s32.totalorder %s27, 0
      %p174 = por %p172, %p173
      %p175 = scmp.ne.s32.totalorder %s164, %s167
      %p176 = scmp.eq.s32.totalorder %s32, 3
      %p177 = por %p175, %p176
      %p178 = scmp.ne.s32.totalorder %s167, %s168
      %p179 = scmp.eq.s32.totalorder %s32, 0
      %p180 = por %p178, %p179
      %p181 = scmp.ne.s32.totalorder %s167, %s168
      %p182 = scmp.eq.s32.totalorder %s33, 3
      %p183 = por %p181, %p182
      %p185 = scmp.ne.s32.totalorder %s168, %s184
      %p186 = scmp.eq.s32.totalorder %s33, 0
      %p187 = por %p185, %p186
      %s188 = ssub.s32 %s35, %s42
      %p189 = scmp.eq.s32.totalorder %s188, 0
      %s191 = sadd.s32 %s190, 1
      %s192 = scalar_select %p189, %s190, %s191
      %p195 = pneg %p189
      %p196 = scmp.eq.s32.totalorder %s27, 3
      %p197 = por %p195, %p196
      %p198 = scmp.ne.s32.totalorder %s190, %s193
      %p199 = scmp.eq.s32.totalorder %s27, 0
      %p200 = por %p198, %p199
      %p201 = scmp.ne.s32.totalorder %s190, %s193
      %p202 = scmp.eq.s32.totalorder %s32, 3
      %p203 = por %p201, %p202
      %p204 = scmp.ne.s32.totalorder %s193, %s194
      %p205 = scmp.eq.s32.totalorder %s32, 0
      %p206 = por %p204, %p205
      %p207 = scmp.ne.s32.totalorder %s193, %s194
      %p208 = scmp.eq.s32.totalorder %s33, 3
      %p209 = por %p207, %p208
      %p211 = scmp.ne.s32.totalorder %s194, %s210
      %p212 = scmp.eq.s32.totalorder %s33, 0
      %p213 = por %p211, %p212
      %s214 = ssub.s32 %s35, %s42
      %p215 = scmp.eq.s32.totalorder %s214, 0
      %s217 = sadd.s32 %s216, 1
      %s218 = scalar_select %p215, %s216, %s217
      %p221 = pneg %p215
      %p222 = scmp.eq.s32.totalorder %s27, 3
      %p223 = por %p221, %p222
      %p224 = scmp.ne.s32.totalorder %s216, %s219
      %p225 = scmp.eq.s32.totalorder %s27, 0
      %p226 = por %p224, %p225
      %p227 = scmp.ne.s32.totalorder %s216, %s219
      %p228 = scmp.eq.s32.totalorder %s32, 3
      %p229 = por %p227, %p228
      %p230 = scmp.ne.s32.totalorder %s219, %s220
      %p231 = scmp.eq.s32.totalorder %s32, 0
      %p232 = por %p230, %p231
      %p233 = scmp.ne.s32.totalorder %s219, %s220
      %p234 = scmp.eq.s32.totalorder %s33, 3
      %p235 = por %p233, %p234
      %p237 = scmp.ne.s32.totalorder %s220, %s236
      %p238 = scmp.eq.s32.totalorder %s33, 0
      %p239 = por %p237, %p238
      %s240 = ssub.s32 %s35, %s42
      %p241 = scmp.eq.s32.totalorder %s240, 0
      %s243 = sadd.s32 %s242, 1
      %s244 = scalar_select %p241, %s242, %s243
      %p247 = pneg %p241
      %p248 = scmp.eq.s32.totalorder %s27, 3
      %p249 = por %p247, %p248
      %p250 = scmp.ne.s32.totalorder %s242, %s245
      %p251 = scmp.eq.s32.totalorder %s27, 0
      %p252 = por %p250, %p251
      %p253 = scmp.ne.s32.totalorder %s242, %s245
      %p254 = scmp.eq.s32.totalorder %s32, 3
      %p255 = por %p253, %p254
      %p256 = scmp.ne.s32.totalorder %s245, %s246
      %p257 = scmp.eq.s32.totalorder %s32, 0
      %p258 = por %p256, %p257
      %p259 = scmp.ne.s32.totalorder %s245, %s246
      %p260 = scmp.eq.s32.totalorder %s33, 3
      %p261 = por %p259, %p260
      %p263 = scmp.ne.s32.totalorder %s246, %s262
      %p264 = scmp.eq.s32.totalorder %s33, 0
      %p265 = por %p263, %p264
      %s267 = sadd.s32 %s266, 1
      %p270 = scmp.eq.s32.totalorder %s27, 3
      %p271 = scmp.ne.s32.totalorder %s266, %s268
      %p272 = scmp.eq.s32.totalorder %s27, 0
      %p273 = por %p271, %p272
      %p274 = scmp.ne.s32.totalorder %s266, %s268
      %p275 = scmp.eq.s32.totalorder %s32, 3
      %p276 = por %p274, %p275
      %p277 = scmp.ne.s32.totalorder %s268, %s269
      %p278 = scmp.eq.s32.totalorder %s32, 0
      %p279 = por %p277, %p278
      %p280 = scmp.ne.s32.totalorder %s268, %s269
      %p281 = scmp.eq.s32.totalorder %s33, 3
      %p282 = por %p280, %p281
      %p284 = scmp.ne.s32.totalorder %s269, %s283
      %p285 = scmp.eq.s32.totalorder %s33, 0
      %p286 = por %p284, %p285
      %s287 = ssub.s32 %s34, %s46
      %p288 = scmp.eq.s32.totalorder %s287, 0
      %s290 = sadd.s32 %s289, 1
      %s291 = scalar_select %p288, %s289, %s290
      %p294 = pneg %p288
      %p295 = scmp.eq.s32.totalorder %s27, 3
      %p296 = por %p294, %p295
      %p297 = scmp.ne.s32.totalorder %s289, %s292
      %p298 = scmp.eq.s32.totalorder %s27, 0
      %p299 = por %p297, %p298
      %p300 = scmp.ne.s32.totalorder %s289, %s292
      %p301 = scmp.eq.s32.totalorder %s32, 3
      %p302 = por %p300, %p301
      %p303 = scmp.ne.s32.totalorder %s292, %s293
      %p304 = scmp.eq.s32.totalorder %s32, 0
      %p305 = por %p303, %p304
      %p306 = scmp.ne.s32.totalorder %s292, %s293
      %p307 = scmp.eq.s32.totalorder %s33, 3
      %p308 = por %p306, %p307
      %p310 = scmp.ne.s32.totalorder %s293, %s309
      %p311 = scmp.eq.s32.totalorder %s33, 0
      %p312 = por %p310, %p311
      %p313 = scmp.le.s32.totalorder 1, %s27
      %p314 = scmp.lt.s32.totalorder %s27, 5
      %p315 = pnand %p313, %p314
      %p316 = pneg %p315
      // Predicated region
      $region9: #{diff_transformer_layer.2} parent=5 // pred_check
        _
      $region10: #{diff_transformer_layer.2} parent=5 // pred_check_branch
        %318 = sbr.rel (%p315) target = $region12
      $region11: #{diff_transformer_layer.2} parent=5 // pred_region
        %s319 = ssub.s32 %s27, 1
        // Predicated region
        $region13: #{diff_transformer_layer.2} parent=11 // pred_check
          %p320 = pneg %p60
        $region14: #{diff_transformer_layer.2} parent=11 // pred_check_branch
          %322 = sbr.rel (%p320) target = $region16
        $region15: #{diff_transformer_layer.2} parent=11 // pred_region
          %s324 = ssub.s32 16, 16
          %325 = vsyncadd [#allocation6], %s324
          %328 = dma.hbm_to_smem %s0, 16, [#allocation3], [#allocation6]
        $region16: #{diff_transformer_layer.2} parent=11 // pred_fallthru
          _
        // Predicated region
        $region17: #{diff_transformer_layer.2} parent=11 // pred_check
          %p329 = pneg %p133
        $region18: #{diff_transformer_layer.2} parent=11 // pred_check_branch
          %331 = sbr.rel (%p329) target = $region20
        $region19: #{diff_transformer_layer.2} parent=11 // pred_region
          %s333 = ssub.s32 32, 32
          %334 = vsyncadd [#allocation9], %s333
          %s336 = sshll.u32 [#allocation10], 4
          %s337 = int_to_ptr.vmem [resolvable:$true] %s336
          %339 = dma.hbm_to_vmem [thread:$0]  %s3, 32, %s337, [#allocation9]
        $region20: #{diff_transformer_layer.2} parent=11 // pred_fallthru
          _
        // Predicated region
        $region21: #{diff_transformer_layer.2} parent=11 // pred_check
          %p340 = pneg %p154
        $region22: #{diff_transformer_layer.2} parent=11 // pred_check_branch
          %342 = sbr.rel (%p340) target = $region24
        $region23: #{diff_transformer_layer.2} parent=11 // pred_region
          %s344 = ssub.s32 8192, 8192
          %345 = vsyncadd [#allocation12], %s344
          %s346 = sshll.u32 [#allocation11], 4
          %s347 = int_to_ptr.vmem [resolvable:$true] %s346
          %352 = dma.hbm_to_vmem [thread:$0]  %s4, 8192, %s347, [#allocation12], 256, 256, 16
        $region24: #{diff_transformer_layer.2} parent=11 // pred_fallthru
          _
        // Predicated region
        $region25: #{diff_transformer_layer.2} parent=11 // pred_check
          %p353 = pneg %p279
        $region26: #{diff_transformer_layer.2} parent=11 // pred_check_branch
          %355 = sbr.rel (%p353) target = $region28
        $region27: #{diff_transformer_layer.2} parent=11 // pred_region
          %s357 = ssub.s32 16, 16
          %358 = vsyncadd [#allocation12], %s357
          %s360 = sshll.u32 [#allocation17], 4
          %s361 = int_to_ptr.vmem [resolvable:$true] %s360
          %363 = dma.hbm_to_vmem [thread:$0]  %s9, 16, %s361, [#allocation12]
        $region28: #{diff_transformer_layer.2} parent=11 // pred_fallthru
          _
      $region12: #{diff_transformer_layer.2} parent=5 // pred_fallthru
        _
      %p364 = scmp.lt.s32.totalorder %s27, 4
      // Predicated region
      $region29: #{diff_transformer_layer.2} parent=5 // pred_check
        %p365 = pneg %p364
      $region30: #{diff_transformer_layer.2} parent=5 // pred_check_branch
        %367 = sbr.rel (%p365) target = $region32
      $region31: #{diff_transformer_layer.2} parent=5 // pred_region
        // Predicated region
        $region33: #{diff_transformer_layer.2} parent=31 // pred_check
          %p368 = pneg %p80
        $region34: #{diff_transformer_layer.2} parent=31 // pred_check_branch
          %370 = sbr.rel (%p368) target = $region36
        $region35: #{diff_transformer_layer.2} parent=31 // pred_region
          %s371 = sand.u32 %s27, 1
          %s372 = scalar_lea.sflag [#allocation4], %s371
          %s373 = sand.u32 %s70, 1
          %s374 = smul.addr %s373, 256
          %s375 = scalar_lea.vmem [#allocation7], %s374
          %s377 = ssub.s32 4096, 4096
          %378 = vsyncadd %s372, %s377
          %s379 = smul.addr %s34, 32
          %s380 = smul.addr %s379, 128
          %s381 = scalar_lea.hbm %s1, %s380
          %s382 = sshll.u32 %s375, 4
          %s383 = int_to_ptr.vmem [resolvable:$true] %s382
          %388 = dma.hbm_to_vmem [thread:$0]  %s381, 4096, %s383, %s372, 256, 256, 16
        $region36: #{diff_transformer_layer.2} parent=31 // pred_fallthru
          _
        // Predicated region
        $region37: #{diff_transformer_layer.2} parent=31 // pred_check
          %p389 = pneg %p106
        $region38: #{diff_transformer_layer.2} parent=31 // pred_check_branch
          %391 = sbr.rel (%p389) target = $region40
        $region39: #{diff_transformer_layer.2} parent=31 // pred_region
          %s392 = sand.u32 %s27, 1
          %s393 = scalar_lea.sflag [#allocation9], %s392
          %s394 = sand.u32 %s96, 1
          %s395 = smul.addr %s394, 256
          %s396 = scalar_lea.vmem [#allocation8], %s395
          %s398 = ssub.s32 4096, 4096
          %399 = vsyncadd %s393, %s398
          %s400 = smul.addr %s34, 32
          %s401 = smul.addr %s400, 128
          %s402 = scalar_lea.hbm %s2, %s401
          %s403 = sshll.u32 %s396, 4
          %s404 = int_to_ptr.vmem [resolvable:$true] %s403
          %409 = dma.hbm_to_vmem [thread:$0]  %s402, 4096, %s404, %s393, 128, 128, 8
        $region40: #{diff_transformer_layer.2} parent=31 // pred_fallthru
          _
        // Predicated region
        $region41: #{diff_transformer_layer.2} parent=31 // pred_check
          %p410 = pneg %p174
        $region42: #{diff_transformer_layer.2} parent=31 // pred_check_branch
          %412 = sbr.rel (%p410) target = $region44
        $region43: #{diff_transformer_layer.2} parent=31 // pred_region
          %s413 = sand.u32 %s27, 1
          %s414 = scalar_lea.sflag [#allocation4], %s413
          %s415 = sand.u32 %s164, 1
          %s416 = smul.addr %s415, 64
          %s417 = scalar_lea.vmem [#allocation13], %s416
          %s419 = ssub.s32 1024, 1024
          %420 = vsyncadd %s414, %s419
          %s421 = smul.addr %s35, 16
          %s422 = smul.addr %s421, 64
          %s423 = scalar_lea.hbm %s5, %s422
          %s424 = sshll.u32 %s417, 4
          %s425 = int_to_ptr.vmem [resolvable:$true] %s424
          %430 = dma.hbm_to_vmem [thread:$0]  %s423, 1024, %s425, %s414, 64, 64, 4
        $region44: #{diff_transformer_layer.2} parent=31 // pred_fallthru
          _
        // Predicated region
        $region45: #{diff_transformer_layer.2} parent=31 // pred_check
          %p431 = pneg %p200
        $region46: #{diff_transformer_layer.2} parent=31 // pred_check_branch
          %433 = sbr.rel (%p431) target = $region48
        $region47: #{diff_transformer_layer.2} parent=31 // pred_region
          %s434 = sand.u32 %s27, 1
          %s435 = scalar_lea.sflag [#allocation9], %s434
          %s436 = sand.u32 %s190, 1
          %s437 = smul.addr %s436, 64
          %s438 = scalar_lea.vmem [#allocation14], %s437
          %s440 = ssub.s32 1024, 1024
          %441 = vsyncadd %s435, %s440
          %s442 = smul.addr %s35, 16
          %s443 = smul.addr %s442, 64
          %s444 = scalar_lea.hbm %s6, %s443
          %s445 = sshll.u32 %s438, 4
          %s446 = int_to_ptr.vmem [resolvable:$true] %s445
          %451 = dma.hbm_to_vmem [thread:$0]  %s444, 1024, %s446, %s435, 64, 64, 4
        $region48: #{diff_transformer_layer.2} parent=31 // pred_fallthru
          _
        // Predicated region
        $region49: #{diff_transformer_layer.2} parent=31 // pred_check
          %p452 = pneg %p226
        $region50: #{diff_transformer_layer.2} parent=31 // pred_check_branch
          %454 = sbr.rel (%p452) target = $region52
        $region51: #{diff_transformer_layer.2} parent=31 // pred_region
          %s455 = sand.u32 %s27, 1
          %s456 = scalar_lea.sflag [#allocation4], %s455
          %s457 = sand.u32 %s216, 1
          %s458 = smul.addr %s457, 64
          %s459 = scalar_lea.vmem [#allocation15], %s458
          %s461 = ssub.s32 1024, 1024
          %462 = vsyncadd %s456, %s461
          %s463 = smul.addr %s35, 16
          %s464 = smul.addr %s463, 64
          %s465 = scalar_lea.hbm %s7, %s464
          %s466 = sshll.u32 %s459, 4
          %s467 = int_to_ptr.vmem [resolvable:$true] %s466
          %472 = dma.hbm_to_vmem [thread:$0]  %s465, 1024, %s467, %s456, 64, 64, 4
        $region52: #{diff_transformer_layer.2} parent=31 // pred_fallthru
          _
        // Predicated region
        $region53: #{diff_transformer_layer.2} parent=31 // pred_check
          %p473 = pneg %p252
        $region54: #{diff_transformer_layer.2} parent=31 // pred_check_branch
          %475 = sbr.rel (%p473) target = $region56
        $region55: #{diff_transformer_layer.2} parent=31 // pred_region
          %s476 = sand.u32 %s27, 1
          %s477 = scalar_lea.sflag [#allocation9], %s476
          %s478 = sand.u32 %s242, 1
          %s479 = smul.addr %s478, 64
          %s480 = scalar_lea.vmem [#allocation16], %s479
          %s482 = ssub.s32 1024, 1024
          %483 = vsyncadd %s477, %s482
          %s484 = smul.addr %s35, 16
          %s485 = smul.addr %s484, 64
          %s486 = scalar_lea.hbm %s8, %s485
          %s487 = sshll.u32 %s480, 4
          %s488 = int_to_ptr.vmem [resolvable:$true] %s487
          %493 = dma.hbm_to_vmem [thread:$0]  %s486, 1024, %s488, %s477, 64, 64, 4
        $region56: #{diff_transformer_layer.2} parent=31 // pred_fallthru
          _
      $region32: #{diff_transformer_layer.2} parent=5 // pred_fallthru
        _
      %p494 = scmp.le.s32.totalorder 1, %s27
      %p495 = scmp.lt.s32.totalorder %s27, 5
      %p496 = pnand %p494, %p495
      %p497 = pneg %p496
      // Predicated region
      $region57: #{diff_transformer_layer.2} parent=5 // pred_check
        _
      $region58: #{diff_transformer_layer.2} parent=5 // pred_check_branch
        %499 = sbr.rel (%p496) target = $region60
      $region59: #{diff_transformer_layer.2} parent=5 // pred_region
        %s500 = ssub.s32 %s27, 1
        // Predicated region
        $region61: #{diff_transformer_layer.2} parent=59 // pred_check
          %p501 = pneg %p60
        $region62: #{diff_transformer_layer.2} parent=59 // pred_check_branch
          %503 = sbr.rel (%p501) target = $region64
        $region63: #{diff_transformer_layer.2} parent=59 // pred_region
          %504 = dma.done [#allocation6], 16
        $region64: #{diff_transformer_layer.2} parent=59 // pred_fallthru
          _
        %s505 = sand.u32 %s32, 1
        %s506 = scalar_lea.sflag [#allocation4], %s505
        %s507 = sand.u32 %s73, 1
        %s508 = smul.addr %s507, 256
        %s509 = scalar_lea.vmem [#allocation7], %s508
        // Predicated region
        $region65: #{diff_transformer_layer.2} parent=59 // pred_check
          %p510 = pneg %p86
        $region66: #{diff_transformer_layer.2} parent=59 // pred_check_branch
          %512 = sbr.rel (%p510) target = $region68
        $region67: #{diff_transformer_layer.2} parent=59 // pred_region
          %513 = dma.done %s506, 4096
        $region68: #{diff_transformer_layer.2} parent=59 // pred_fallthru
          _
        %s514 = sand.u32 %s32, 1
        %s515 = scalar_lea.sflag [#allocation9], %s514
        %s516 = sand.u32 %s99, 1
        %s517 = smul.addr %s516, 256
        %s518 = scalar_lea.vmem [#allocation8], %s517
        // Predicated region
        $region69: #{diff_transformer_layer.2} parent=59 // pred_check
          %p519 = pneg %p112
        $region70: #{diff_transformer_layer.2} parent=59 // pred_check_branch
          %521 = sbr.rel (%p519) target = $region72
        $region71: #{diff_transformer_layer.2} parent=59 // pred_region
          %522 = dma.done %s515, 4096
        $region72: #{diff_transformer_layer.2} parent=59 // pred_fallthru
          _
        // Predicated region
        $region73: #{diff_transformer_layer.2} parent=59 // pred_check
          %p523 = pneg %p133
        $region74: #{diff_transformer_layer.2} parent=59 // pred_check_branch
          %525 = sbr.rel (%p523) target = $region76
        $region75: #{diff_transformer_layer.2} parent=59 // pred_region
          %526 = dma.done [#allocation9], 32
        $region76: #{diff_transformer_layer.2} parent=59 // pred_fallthru
          _
        // Predicated region
        $region77: #{diff_transformer_layer.2} parent=59 // pred_check
          %p527 = pneg %p154
        $region78: #{diff_transformer_layer.2} parent=59 // pred_check_branch
          %529 = sbr.rel (%p527) target = $region80
        $region79: #{diff_transformer_layer.2} parent=59 // pred_region
          %530 = dma.done [#allocation12], 8192
        $region80: #{diff_transformer_layer.2} parent=59 // pred_fallthru
          _
        %s531 = sand.u32 %s32, 1
        %s532 = scalar_lea.sflag [#allocation4], %s531
        %s533 = sand.u32 %s167, 1
        %s534 = smul.addr %s533, 64
        %s535 = scalar_lea.vmem [#allocation13], %s534
        // Predicated region
        $region81: #{diff_transformer_layer.2} parent=59 // pred_check
          %p536 = pneg %p180
        $region82: #{diff_transformer_layer.2} parent=59 // pred_check_branch
          %538 = sbr.rel (%p536) target = $region84
        $region83: #{diff_transformer_layer.2} parent=59 // pred_region
          %539 = dma.done %s532, 1024
        $region84: #{diff_transformer_layer.2} parent=59 // pred_fallthru
          _
        %s540 = sand.u32 %s32, 1
        %s541 = scalar_lea.sflag [#allocation9], %s540
        %s542 = sand.u32 %s193, 1
        %s543 = smul.addr %s542, 64
        %s544 = scalar_lea.vmem [#allocation14], %s543
        // Predicated region
        $region85: #{diff_transformer_layer.2} parent=59 // pred_check
          %p545 = pneg %p206
        $region86: #{diff_transformer_layer.2} parent=59 // pred_check_branch
          %547 = sbr.rel (%p545) target = $region88
        $region87: #{diff_transformer_layer.2} parent=59 // pred_region
          %548 = dma.done %s541, 1024
        $region88: #{diff_transformer_layer.2} parent=59 // pred_fallthru
          _
        %s549 = sand.u32 %s32, 1
        %s550 = scalar_lea.sflag [#allocation4], %s549
        %s551 = sand.u32 %s219, 1
        %s552 = smul.addr %s551, 64
        %s553 = scalar_lea.vmem [#allocation15], %s552
        // Predicated region
        $region89: #{diff_transformer_layer.2} parent=59 // pred_check
          %p554 = pneg %p232
        $region90: #{diff_transformer_layer.2} parent=59 // pred_check_branch
          %556 = sbr.rel (%p554) target = $region92
        $region91: #{diff_transformer_layer.2} parent=59 // pred_region
          %557 = dma.done %s550, 1024
        $region92: #{diff_transformer_layer.2} parent=59 // pred_fallthru
          _
        %s558 = sand.u32 %s32, 1
        %s559 = scalar_lea.sflag [#allocation9], %s558
        %s560 = sand.u32 %s245, 1
        %s561 = smul.addr %s560, 64
        %s562 = scalar_lea.vmem [#allocation16], %s561
        // Predicated region
        $region93: #{diff_transformer_layer.2} parent=59 // pred_check
          %p563 = pneg %p258
        $region94: #{diff_transformer_layer.2} parent=59 // pred_check_branch
          %565 = sbr.rel (%p563) target = $region96
        $region95: #{diff_transformer_layer.2} parent=59 // pred_region
          %566 = dma.done %s559, 1024
        $region96: #{diff_transformer_layer.2} parent=59 // pred_fallthru
          _
        // Predicated region
        $region97: #{diff_transformer_layer.2} parent=59 // pred_check
          %p567 = pneg %p279
        $region98: #{diff_transformer_layer.2} parent=59 // pred_check_branch
          %569 = sbr.rel (%p567) target = $region100
        $region99: #{diff_transformer_layer.2} parent=59 // pred_region
          %570 = dma.done [#allocation12], 16
        $region100: #{diff_transformer_layer.2} parent=59 // pred_fallthru
          _
        %571 = sfence
        %p572 = pneg %p60
        %p573 = pneg %p57
        %s574 = sand.u32 %s32, 1
        %s575 = scalar_lea.sflag [#allocation4], %s574
        %s576 = sand.u32 %s73, 1
        %s577 = smul.addr %s576, 256
        %s578 = scalar_lea.vmem [#allocation7], %s577
        %p579 = pneg %p86
        %p580 = pneg %p83
        %s581 = sand.u32 %s32, 1
        %s582 = scalar_lea.sflag [#allocation9], %s581
        %s583 = sand.u32 %s99, 1
        %s584 = smul.addr %s583, 256
        %s585 = scalar_lea.vmem [#allocation8], %s584
        %p586 = pneg %p112
        %p587 = pneg %p109
        %p588 = pneg %p133
        %p589 = pneg %p130
        %p590 = pneg %p154
        %p591 = pneg %p151
        %s592 = sand.u32 %s32, 1
        %s593 = scalar_lea.sflag [#allocation4], %s592
        %s594 = sand.u32 %s167, 1
        %s595 = smul.addr %s594, 64
        %s596 = scalar_lea.vmem [#allocation13], %s595
        %p597 = pneg %p180
        %p598 = pneg %p177
        %s599 = sand.u32 %s32, 1
        %s600 = scalar_lea.sflag [#allocation9], %s599
        %s601 = sand.u32 %s193, 1
        %s602 = smul.addr %s601, 64
        %s603 = scalar_lea.vmem [#allocation14], %s602
        %p604 = pneg %p206
        %p605 = pneg %p203
        %s606 = sand.u32 %s32, 1
        %s607 = scalar_lea.sflag [#allocation4], %s606
        %s608 = sand.u32 %s219, 1
        %s609 = smul.addr %s608, 64
        %s610 = scalar_lea.vmem [#allocation15], %s609
        %p611 = pneg %p232
        %p612 = pneg %p229
        %s613 = sand.u32 %s32, 1
        %s614 = scalar_lea.sflag [#allocation9], %s613
        %s615 = sand.u32 %s245, 1
        %s616 = smul.addr %s615, 64
        %s617 = scalar_lea.vmem [#allocation16], %s616
        %p618 = pneg %p258
        %p619 = pneg %p255
        %p620 = pneg %p279
        %p621 = pneg %p276
        %p622 = pneg %p305
        %p623 = pneg %p302
        %s624 = sand.u32 %s292, 1
        %s625 = scalar_lea.sflag [#allocation5], %s624
        %s626 = sand.u32 %s292, 1
        %s627 = smul.addr %s626, 256
        %s628 = scalar_lea.vmem [#allocation18], %s627
        %p630 = scmp.eq.s32.totalorder %s37, 0
        // Predicated region
        $region101: #{diff_transformer_layer.2} parent=59 // pred_check
          %p631 = pneg %p630
        $region102: #{diff_transformer_layer.2} parent=59 // pred_check_branch
          %633 = sbr.rel (%p631) target = $region104
        $region103: #{diff_transformer_layer.2} parent=59 // pred_region
          %v634 = vld [vmem:[%s509] sm:$0xff]
          %v635 = vld [vmem:[%s509 + $0x8] sm:$0xff]
          %v636 = vld [vmem:[%s509 + $0x10] sm:$0xff]
          %v637 = vld [vmem:[%s509 + $0x18] sm:$0xff]
          %v638 = vld [vmem:[%s509 + $0x20] sm:$0xff]
          %v639 = vld [vmem:[%s509 + $0x28] sm:$0xff]
          %v640 = vld [vmem:[%s509 + $0x30] sm:$0xff]
          %v641 = vld [vmem:[%s509 + $0x38] sm:$0xff]
          %v642 = vld [vmem:[%s509 + $0x40] sm:$0xff]
          %v643 = vld [vmem:[%s509 + $0x48] sm:$0xff]
          %v644 = vld [vmem:[%s509 + $0x50] sm:$0xff]
          %v645 = vld [vmem:[%s509 + $0x58] sm:$0xff]
          %v646 = vld [vmem:[%s509 + $0x60] sm:$0xff]
          %v647 = vld [vmem:[%s509 + $0x68] sm:$0xff]
          %v648 = vld [vmem:[%s509 + $0x70] sm:$0xff]
          %v649 = vld [vmem:[%s509 + $0x78] sm:$0xff]
          %v650 = vld [vmem:[%s509 + $0x80] sm:$0xff]
          %v651 = vld [vmem:[%s509 + $0x88] sm:$0xff]
          %v652 = vld [vmem:[%s509 + $0x90] sm:$0xff]
          %v653 = vld [vmem:[%s509 + $0x98] sm:$0xff]
          %v654 = vld [vmem:[%s509 + $0xa0] sm:$0xff]
          %v655 = vld [vmem:[%s509 + $0xa8] sm:$0xff]
          %v656 = vld [vmem:[%s509 + $0xb0] sm:$0xff]
          %v657 = vld [vmem:[%s509 + $0xb8] sm:$0xff]
          %v658 = vld [vmem:[%s509 + $0xc0] sm:$0xff]
          %v659 = vld [vmem:[%s509 + $0xc8] sm:$0xff]
          %v660 = vld [vmem:[%s509 + $0xd0] sm:$0xff]
          %v661 = vld [vmem:[%s509 + $0xd8] sm:$0xff]
          %v662 = vld [vmem:[%s509 + $0xe0] sm:$0xff]
          %v663 = vld [vmem:[%s509 + $0xe8] sm:$0xff]
          %v664 = vld [vmem:[%s509 + $0xf0] sm:$0xff]
          %v665 = vld [vmem:[%s509 + $0xf8] sm:$0xff]
          %v666 = vmul.f32 %v634, %v634
          %v667 = vmul.f32 %v635, %v635
          %v668 = vmul.f32 %v636, %v636
          %v669 = vmul.f32 %v637, %v637
          %v670 = vmul.f32 %v638, %v638
          %v671 = vmul.f32 %v639, %v639
          %v672 = vmul.f32 %v640, %v640
          %v673 = vmul.f32 %v641, %v641
          %v674 = vmul.f32 %v642, %v642
          %v675 = vmul.f32 %v643, %v643
          %v676 = vmul.f32 %v644, %v644
          %v677 = vmul.f32 %v645, %v645
          %v678 = vmul.f32 %v646, %v646
          %v679 = vmul.f32 %v647, %v647
          %v680 = vmul.f32 %v648, %v648
          %v681 = vmul.f32 %v649, %v649
          %v682 = vmul.f32 %v650, %v650
          %v683 = vmul.f32 %v651, %v651
          %v684 = vmul.f32 %v652, %v652
          %v685 = vmul.f32 %v653, %v653
          %v686 = vmul.f32 %v654, %v654
          %v687 = vmul.f32 %v655, %v655
          %v688 = vmul.f32 %v656, %v656
          %v689 = vmul.f32 %v657, %v657
          %v690 = vmul.f32 %v658, %v658
          %v691 = vmul.f32 %v659, %v659
          %v692 = vmul.f32 %v660, %v660
          %v693 = vmul.f32 %v661, %v661
          %v694 = vmul.f32 %v662, %v662
          %v695 = vmul.f32 %v663, %v663
          %v696 = vmul.f32 %v664, %v664
          %v697 = vmul.f32 %v665, %v665
          %v698 = vld [vmem:[#allocation11] sm:$0xff]
          %v699 = vld [vmem:[#allocation11 + $0x8] sm:$0xff]
          %v700 = vld [vmem:[#allocation11 + $0x10] sm:$0xff]
          %v701 = vld [vmem:[#allocation11 + $0x18] sm:$0xff]
          %v702 = vld [vmem:[#allocation11 + $0x20] sm:$0xff]
          %v703 = vld [vmem:[#allocation11 + $0x28] sm:$0xff]
          %v704 = vld [vmem:[#allocation11 + $0x30] sm:$0xff]
          %v705 = vld [vmem:[#allocation11 + $0x38] sm:$0xff]
          %v706 = vld [vmem:[#allocation11 + $0x40] sm:$0xff]
          %v707 = vld [vmem:[#allocation11 + $0x48] sm:$0xff]
          %v708 = vld [vmem:[#allocation11 + $0x50] sm:$0xff]
          %v709 = vld [vmem:[#allocation11 + $0x58] sm:$0xff]
          %v710 = vld [vmem:[#allocation11 + $0x60] sm:$0xff]
          %v711 = vld [vmem:[#allocation11 + $0x68] sm:$0xff]
          %v712 = vld [vmem:[#allocation11 + $0x70] sm:$0xff]
          %v713 = vld [vmem:[#allocation11 + $0x78] sm:$0xff]
          %v714 = vld [vmem:[#allocation11 + $0x80] sm:$0xff]
          %v715 = vld [vmem:[#allocation11 + $0x88] sm:$0xff]
          %v716 = vld [vmem:[#allocation11 + $0x90] sm:$0xff]
          %v717 = vld [vmem:[#allocation11 + $0x98] sm:$0xff]
          %v718 = vld [vmem:[#allocation11 + $0xa0] sm:$0xff]
          %v719 = vld [vmem:[#allocation11 + $0xa8] sm:$0xff]
          %v720 = vld [vmem:[#allocation11 + $0xb0] sm:$0xff]
          %v721 = vld [vmem:[#allocation11 + $0xb8] sm:$0xff]
          %v722 = vld [vmem:[#allocation11 + $0xc0] sm:$0xff]
          %v723 = vld [vmem:[#allocation11 + $0xc8] sm:$0xff]
          %v724 = vld [vmem:[#allocation11 + $0xd0] sm:$0xff]
          %v725 = vld [vmem:[#allocation11 + $0xd8] sm:$0xff]
          %v726 = vld [vmem:[#allocation11 + $0xe0] sm:$0xff]
          %v727 = vld [vmem:[#allocation11 + $0xe8] sm:$0xff]
          %v728 = vld [vmem:[#allocation11 + $0xf0] sm:$0xff]
          %v729 = vld [vmem:[#allocation11 + $0xf8] sm:$0xff]
          %v730 = vld [vmem:[#allocation11 + $0x100] sm:$0xff]
          %v731 = vld [vmem:[#allocation11 + $0x108] sm:$0xff]
          %v732 = vld [vmem:[#allocation11 + $0x110] sm:$0xff]
          %v733 = vld [vmem:[#allocation11 + $0x118] sm:$0xff]
          %v734 = vld [vmem:[#allocation11 + $0x120] sm:$0xff]
          %v735 = vld [vmem:[#allocation11 + $0x128] sm:$0xff]
          %v736 = vld [vmem:[#allocation11 + $0x130] sm:$0xff]
          %v737 = vld [vmem:[#allocation11 + $0x138] sm:$0xff]
          %v738 = vld [vmem:[#allocation11 + $0x140] sm:$0xff]
          %v739 = vld [vmem:[#allocation11 + $0x148] sm:$0xff]
          %v740 = vld [vmem:[#allocation11 + $0x150] sm:$0xff]
          %v741 = vld [vmem:[#allocation11 + $0x158] sm:$0xff]
          %v742 = vld [vmem:[#allocation11 + $0x160] sm:$0xff]
          %v743 = vld [vmem:[#allocation11 + $0x168] sm:$0xff]
          %v744 = vld [vmem:[#allocation11 + $0x170] sm:$0xff]
          %v745 = vld [vmem:[#allocation11 + $0x178] sm:$0xff]
          %v746 = vld [vmem:[#allocation11 + $0x180] sm:$0xff]
          %v747 = vld [vmem:[#allocation11 + $0x188] sm:$0xff]
          %v748 = vld [vmem:[#allocation11 + $0x190] sm:$0xff]
          %v749 = vld [vmem:[#allocation11 + $0x198] sm:$0xff]
          %v750 = vld [vmem:[#allocation11 + $0x1a0] sm:$0xff]
          %v751 = vld [vmem:[#allocation11 + $0x1a8] sm:$0xff]
          %v752 = vld [vmem:[#allocation11 + $0x1b0] sm:$0xff]
          %v753 = vld [vmem:[#allocation11 + $0x1b8] sm:$0xff]
          %v754 = vld [vmem:[#allocation11 + $0x1c0] sm:$0xff]
          %v755 = vld [vmem:[#allocation11 + $0x1c8] sm:$0xff]
          %v756 = vld [vmem:[#allocation11 + $0x1d0] sm:$0xff]
          %v757 = vld [vmem:[#allocation11 + $0x1d8] sm:$0xff]
          %v758 = vld [vmem:[#allocation11 + $0x1e0] sm:$0xff]
          %v759 = vld [vmem:[#allocation11 + $0x1e8] sm:$0xff]
          %v760 = vld [vmem:[#allocation11 + $0x1f0] sm:$0xff]
          %v761 = vld [vmem:[#allocation11 + $0x1f8] sm:$0xff]
          %762 = vmatprep.subr.mxu0 %v699
          %763 = vmatpush1.msra.mxu0 %v698
          %764 = vmatprep.subr.mxu0 %v701
          %765 = vmatpush1.msra.mxu0 %v700
          %766 = vmatprep.subr.mxu0 %v703
          %767 = vmatpush1.msra.mxu0 %v702
          %768 = vmatprep.subr.mxu0 %v705
          %769 = vmatpush1.msra.mxu0 %v704
          %770 = vmatprep.subr.mxu0 %v707
          %771 = vmatpush1.msra.mxu0 %v706
          %772 = vmatprep.subr.mxu0 %v709
          %773 = vmatpush1.msra.mxu0 %v708
          %774 = vmatprep.subr.mxu0 %v711
          %775 = vmatpush1.msra.mxu0 %v710
          %776 = vmatprep.subr.mxu0 %v713
          %777 = vmatpush1.msra.mxu0 %v712
          %778 = vmatprep.subr.mxu0 %v715
          %779 = vmatpush1.msra.mxu0 %v714
          %780 = vmatprep.subr.mxu0 %v717
          %781 = vmatpush1.msra.mxu0 %v716
          %782 = vmatprep.subr.mxu0 %v719
          %783 = vmatpush1.msra.mxu0 %v718
          %784 = vmatprep.subr.mxu0 %v721
          %785 = vmatpush1.msra.mxu0 %v720
          %786 = vmatprep.subr.mxu0 %v723
          %787 = vmatpush1.msra.mxu0 %v722
          %788 = vmatprep.subr.mxu0 %v725
          %789 = vmatpush1.msra.mxu0 %v724
          %790 = vmatprep.subr.mxu0 %v727
          %791 = vmatpush1.msra.mxu0 %v726
          %792 = vmatprep.subr.mxu0 %v729
          %793 = vmatpush1.msra.mxu0 %v728
          %794 = vmatprep.subr.mxu0 %v731
          %795 = vmatpush1.msra.mxu0 %v730
          %796 = vmatprep.subr.mxu0 %v733
          %797 = vmatpush1.msra.mxu0 %v732
          %798 = vmatprep.subr.mxu0 %v735
          %799 = vmatpush1.msra.mxu0 %v734
          %800 = vmatprep.subr.mxu0 %v737
          %801 = vmatpush1.msra.mxu0 %v736
          %802 = vmatprep.subr.mxu0 %v739
          %803 = vmatpush1.msra.mxu0 %v738
          %804 = vmatprep.subr.mxu0 %v741
          %805 = vmatpush1.msra.mxu0 %v740
          %806 = vmatprep.subr.mxu0 %v743
          %807 = vmatpush1.msra.mxu0 %v742
          %808 = vmatprep.subr.mxu0 %v745
          %809 = vmatpush1.msra.mxu0 %v744
          %810 = vmatprep.subr.mxu0 %v747
          %811 = vmatpush1.msra.mxu0 %v746
          %812 = vmatprep.subr.mxu0 %v749
          %813 = vmatpush1.msra.mxu0 %v748
          %814 = vmatprep.subr.mxu0 %v751
          %815 = vmatpush1.msra.mxu0 %v750
          %816 = vmatprep.subr.mxu0 %v753
          %817 = vmatpush1.msra.mxu0 %v752
          %818 = vmatprep.subr.mxu0 %v755
          %819 = vmatpush1.msra.mxu0 %v754
          %820 = vmatprep.subr.mxu0 %v757
          %821 = vmatpush1.msra.mxu0 %v756
          %822 = vmatprep.subr.mxu0 %v759
          %823 = vmatpush1.msra.mxu0 %v758
          %824 = vmatprep.subr.mxu0 %v761
          %825 = vmatpush1.msra.mxu0 %v760
          %826 = vmatprep.mubr.f32.mxu0 %v667
          %827 = vmatmul.mubr.f32.gmra.mrb[0].mxu0 %v666
          %v828 = vpop.f32.mrb[0].mxu0
          %v829 = vadd.f32 0.0, %v828
          %v830 = vpop.f32.mrb[0].mxu0
          %v831 = vadd.f32 0.0, %v830
          %832 = vmatprep.mubr.f32.mxu0 %v669
          %833 = vmatmul.mubr.f32.gmra.mrb[0].mxu0 %v668
          %v834 = vpop.f32.mrb[0].mxu0
          %v835 = vadd.f32 0.0, %v834
          %v836 = vpop.f32.mrb[0].mxu0
          %v837 = vadd.f32 0.0, %v836
          %838 = vmatprep.mubr.f32.mxu0 %v671
          %839 = vmatmul.mubr.f32.gmra.mrb[0].mxu0 %v670
          %v840 = vpop.f32.mrb[0].mxu0
          %v841 = vadd.f32 0.0, %v840
          %v842 = vpop.f32.mrb[0].mxu0
          %v843 = vadd.f32 0.0, %v842
          %844 = vmatprep.mubr.f32.mxu0 %v673
          %845 = vmatmul.mubr.f32.gmra.mrb[0].mxu0 %v672
          %v846 = vpop.f32.mrb[0].mxu0
          %v847 = vadd.f32 0.0, %v846
          %v848 = vpop.f32.mrb[0].mxu0
          %v849 = vadd.f32 0.0, %v848
          %850 = vmatprep.mubr.f32.mxu0 %v675
          %851 = vmatmul.mubr.f32.gmra.mrb[0].mxu0 %v674
          %v852 = vpop.f32.mrb[0].mxu0
          %v853 = vadd.f32 0.0, %v852
          %v854 = vpop.f32.mrb[0].mxu0
          %v855 = vadd.f32 0.0, %v854
          %856 = vmatprep.mubr.f32.mxu0 %v677
          %857 = vmatmul.mubr.f32.gmra.mrb[0].mxu0 %v676
          %v858 = vpop.f32.mrb[0].mxu0
          %v859 = vadd.f32 0.0, %v858
          %v860 = vpop.f32.mrb[0].mxu0
          %v861 = vadd.f32 0.0, %v860
          %862 = vmatprep.mubr.f32.mxu0 %v679
          %863 = vmatmul.mubr.f32.gmra.mrb[0].mxu0 %v678
          %v864 = vpop.f32.mrb[0].mxu0
          %v865 = vadd.f32 0.0, %v864
          %v866 = vpop.f32.mrb[0].mxu0
          %v867 = vadd.f32 0.0, %v866
          %868 = vmatprep.mubr.f32.mxu0 %v681
          %869 = vmatmul.mubr.f32.gmra.mrb[0].mxu0 %v680
          %v870 = vpop.f32.mrb[0].mxu0
          %v871 = vadd.f32 0.0, %v870
          %v872 = vpop.f32.mrb[0].mxu0
          %v873 = vadd.f32 0.0, %v872
          %874 = vmatprep.mubr.f32.mxu0 %v683
          %875 = vmatmul.mubr.f32.gmra.mrb[0].mxu0 %v682
          %v876 = vpop.f32.mrb[0].mxu0
          %v877 = vadd.f32 0.0, %v876
          %v878 = vpop.f32.mrb[0].mxu0
          %v879 = vadd.f32 0.0, %v878
          %880 = vmatprep.mubr.f32.mxu0 %v685
          %881 = vmatmul.mubr.f32.gmra.mrb[0].mxu0 %v684
          %v882 = vpop.f32.mrb[0].mxu0
          %v883 = vadd.f32 0.0, %v882
          %v884 = vpop.f32.mrb[0].mxu0
          %v885 = vadd.f32 0.0, %v884
          %886 = vmatprep.mubr.f32.mxu0 %v687
          %887 = vmatmul.mubr.f32.gmra.mrb[0].mxu0 %v686
          %v888 = vpop.f32.mrb[0].mxu0
          %v889 = vadd.f32 0.0, %v888
          %v890 = vpop.f32.mrb[0].mxu0
          %v891 = vadd.f32 0.0, %v890
          %892 = vmatprep.mubr.f32.mxu0 %v689
          %893 = vmatmul.mubr.f32.gmra.mrb[0].mxu0 %v688
          %v894 = vpop.f32.mrb[0].mxu0
          %v895 = vadd.f32 0.0, %v894
          %v896 = vpop.f32.mrb[0].mxu0
          %v897 = vadd.f32 0.0, %v896
          %898 = vmatprep.mubr.f32.mxu0 %v691
          %899 = vmatmul.mubr.f32.gmra.mrb[0].mxu0 %v690
          %v900 = vpop.f32.mrb[0].mxu0
          %v901 = vadd.f32 0.0, %v900
          %v902 = vpop.f32.mrb[0].mxu0
          %v903 = vadd.f32 0.0, %v902
          %904 = vmatprep.mubr.f32.mxu0 %v693
          %905 = vmatmul.mubr.f32.gmra.mrb[0].mxu0 %v692
          %v906 = vpop.f32.mrb[0].mxu0
          %v907 = vadd.f32 0.0, %v906
          %v908 = vpop.f32.mrb[0].mxu0
          %v909 = vadd.f32 0.0, %v908
          %910 = vmatprep.mubr.f32.mxu0 %v695
          %911 = vmatmul.mubr.f32.gmra.mrb[0].mxu0 %v694
          %v912 = vpop.f32.mrb[0].mxu0
          %v913 = vadd.f32 0.0, %v912
          %v914 = vpop.f32.mrb[0].mxu0
          %v915 = vadd.f32 0.0, %v914
          %916 = vmatprep.mubr.f32.mxu0 %v697
          %917 = vmatmul.mubr.f32.gmra.mrb[0].mxu0 %v696
          %v918 = vpop.f32.mrb[0].mxu0
          %v919 = vadd.f32 0.0, %v918
          %v920 = vpop.f32.mrb[0].mxu0
          %v921 = vadd.f32 0.0, %v920
          %922 = vdwg.mxu0
          %v923 = vmul.f32 %v829, 0.0078125
          %v924 = vmul.f32 %v831, 0.0078125
          %v925 = vmul.f32 %v835, 0.0078125
          %v926 = vmul.f32 %v837, 0.0078125
          %v927 = vmul.f32 %v841, 0.0078125
          %v928 = vmul.f32 %v843, 0.0078125
          %v929 = vmul.f32 %v847, 0.0078125
          %v930 = vmul.f32 %v849, 0.0078125
          %v931 = vmul.f32 %v853, 0.0078125
          %v932 = vmul.f32 %v855, 0.0078125
          %v933 = vmul.f32 %v859, 0.0078125
          %v934 = vmul.f32 %v861, 0.0078125
          %v935 = vmul.f32 %v865, 0.0078125
          %v936 = vmul.f32 %v867, 0.0078125
          %v937 = vmul.f32 %v871, 0.0078125
          %v938 = vmul.f32 %v873, 0.0078125
          %v939 = vmul.f32 %v877, 0.0078125
          %v940 = vmul.f32 %v879, 0.0078125
          %v941 = vmul.f32 %v883, 0.0078125
          %v942 = vmul.f32 %v885, 0.0078125
          %v943 = vmul.f32 %v889, 0.0078125
          %v944 = vmul.f32 %v891, 0.0078125
          %v945 = vmul.f32 %v895, 0.0078125
          %v946 = vmul.f32 %v897, 0.0078125
          %v947 = vmul.f32 %v901, 0.0078125
          %v948 = vmul.f32 %v903, 0.0078125
          %v949 = vmul.f32 %v907, 0.0078125
          %v950 = vmul.f32 %v909, 0.0078125
          %v951 = vmul.f32 %v913, 0.0078125
          %v952 = vmul.f32 %v915, 0.0078125
          %v953 = vmul.f32 %v919, 0.0078125
          %v954 = vmul.f32 %v921, 0.0078125
          %v955 = vadd.f32 %v923, 1e-05
          %v956 = vadd.f32 %v924, 1e-05
          %v957 = vadd.f32 %v925, 1e-05
          %v958 = vadd.f32 %v926, 1e-05
          %v959 = vadd.f32 %v927, 1e-05
          %v960 = vadd.f32 %v928, 1e-05
          %v961 = vadd.f32 %v929, 1e-05
          %v962 = vadd.f32 %v930, 1e-05
          %v963 = vadd.f32 %v931, 1e-05
          %v964 = vadd.f32 %v932, 1e-05
          %v965 = vadd.f32 %v933, 1e-05
          %v966 = vadd.f32 %v934, 1e-05
          %v967 = vadd.f32 %v935, 1e-05
          %v968 = vadd.f32 %v936, 1e-05
          %v969 = vadd.f32 %v937, 1e-05
          %v970 = vadd.f32 %v938, 1e-05
          %v971 = vadd.f32 %v939, 1e-05
          %v972 = vadd.f32 %v940, 1e-05
          %v973 = vadd.f32 %v941, 1e-05
          %v974 = vadd.f32 %v942, 1e-05
          %v975 = vadd.f32 %v943, 1e-05
          %v976 = vadd.f32 %v944, 1e-05
          %v977 = vadd.f32 %v945, 1e-05
          %v978 = vadd.f32 %v946, 1e-05
          %v979 = vadd.f32 %v947, 1e-05
          %v980 = vadd.f32 %v948, 1e-05
          %v981 = vadd.f32 %v949, 1e-05
          %v982 = vadd.f32 %v950, 1e-05
          %v983 = vadd.f32 %v951, 1e-05
          %v984 = vadd.f32 %v952, 1e-05
          %v985 = vadd.f32 %v953, 1e-05
          %v986 = vadd.f32 %v954, 1e-05
          %v987 = vrsqrt.pop %v955
          %v988 = vrsqrt.pop %v956
          %v989 = vrsqrt.pop %v957
          %v990 = vrsqrt.pop %v958
          %v991 = vrsqrt.pop %v959
          %v992 = vrsqrt.pop %v960
          %v993 = vrsqrt.pop %v961
          %v994 = vrsqrt.pop %v962
          %v995 = vrsqrt.pop %v963
          %v996 = vrsqrt.pop %v964
          %v997 = vrsqrt.pop %v965
          %v998 = vrsqrt.pop %v966
          %v999 = vrsqrt.pop %v967
          %v1000 = vrsqrt.pop %v968
          %v1001 = vrsqrt.pop %v969
          %v1002 = vrsqrt.pop %v970
          %v1003 = vrsqrt.pop %v971
          %v1004 = vrsqrt.pop %v972
          %v1005 = vrsqrt.pop %v973
          %v1006 = vrsqrt.pop %v974
          %v1007 = vrsqrt.pop %v975
          %v1008 = vrsqrt.pop %v976
          %v1009 = vrsqrt.pop %v977
          %v1010 = vrsqrt.pop %v978
          %v1011 = vrsqrt.pop %v979
          %v1012 = vrsqrt.pop %v980
          %v1013 = vrsqrt.pop %v981
          %v1014 = vrsqrt.pop %v982
          %v1015 = vrsqrt.pop %v983
          %v1016 = vrsqrt.pop %v984
          %v1017 = vrsqrt.pop %v985
          %v1018 = vrsqrt.pop %v986
          %v1019 = vmul.f32 %v634, %v987
          %v1020 = vmul.f32 %v635, %v988
          %v1021 = vmul.f32 %v636, %v989
          %v1022 = vmul.f32 %v637, %v990
          %v1023 = vmul.f32 %v638, %v991
          %v1024 = vmul.f32 %v639, %v992
          %v1025 = vmul.f32 %v640, %v993
          %v1026 = vmul.f32 %v641, %v994
          %v1027 = vmul.f32 %v642, %v995
          %v1028 = vmul.f32 %v643, %v996
          %v1029 = vmul.f32 %v644, %v997
          %v1030 = vmul.f32 %v645, %v998
          %v1031 = vmul.f32 %v646, %v999
          %v1032 = vmul.f32 %v647, %v1000
          %v1033 = vmul.f32 %v648, %v1001
          %v1034 = vmul.f32 %v649, %v1002
          %v1035 = vmul.f32 %v650, %v1003
          %v1036 = vmul.f32 %v651, %v1004
          %v1037 = vmul.f32 %v652, %v1005
          %v1038 = vmul.f32 %v653, %v1006
          %v1039 = vmul.f32 %v654, %v1007
          %v1040 = vmul.f32 %v655, %v1008
          %v1041 = vmul.f32 %v656, %v1009
          %v1042 = vmul.f32 %v657, %v1010
          %v1043 = vmul.f32 %v658, %v1011
          %v1044 = vmul.f32 %v659, %v1012
          %v1045 = vmul.f32 %v660, %v1013
          %v1046 = vmul.f32 %v661, %v1014
          %v1047 = vmul.f32 %v662, %v1015
          %v1048 = vmul.f32 %v663, %v1016
          %v1049 = vmul.f32 %v664, %v1017
          %v1050 = vmul.f32 %v665, %v1018
          %v1051 = vld [vmem:[#allocation10] sm:$0x3]
          %v1053 = vlaneseq
          %v1054 = vshrl.u32 %v1053, 7
          %v1055 = vsub.s32 0, %v1054
          %v1056 = vrot.slane %v1051, %v1055
          %v1057 = vlaneseq
          %v1058 = vshrl.u32 %v1057, 7
          %v1059 = vsub.s32 1, %v1058
          %v1060 = vrot.slane %v1051, %v1059
          %v1063 = vmul.f32 %v1019, %v1056
          %v1064 = vmul.f32 %v1020, %v1060
          %v1065 = vmul.f32 %v1021, %v1056
          %v1066 = vmul.f32 %v1022, %v1060
          %v1067 = vmul.f32 %v1023, %v1056
          %v1068 = vmul.f32 %v1024, %v1060
          %v1069 = vmul.f32 %v1025, %v1056
          %v1070 = vmul.f32 %v1026, %v1060
          %v1071 = vmul.f32 %v1027, %v1056
          %v1072 = vmul.f32 %v1028, %v1060
          %v1073 = vmul.f32 %v1029, %v1056
          %v1074 = vmul.f32 %v1030, %v1060
          %v1075 = vmul.f32 %v1031, %v1056
          %v1076 = vmul.f32 %v1032, %v1060
          %v1077 = vmul.f32 %v1033, %v1056
          %v1078 = vmul.f32 %v1034, %v1060
          %v1079 = vmul.f32 %v1035, %v1056
          %v1080 = vmul.f32 %v1036, %v1060
          %v1081 = vmul.f32 %v1037, %v1056
          %v1082 = vmul.f32 %v1038, %v1060
          %v1083 = vmul.f32 %v1039, %v1056
          %v1084 = vmul.f32 %v1040, %v1060
          %v1085 = vmul.f32 %v1041, %v1056
          %v1086 = vmul.f32 %v1042, %v1060
          %v1087 = vmul.f32 %v1043, %v1056
          %v1088 = vmul.f32 %v1044, %v1060
          %v1089 = vmul.f32 %v1045, %v1056
          %v1090 = vmul.f32 %v1046, %v1060
          %v1091 = vmul.f32 %v1047, %v1056
          %v1092 = vmul.f32 %v1048, %v1060
          %v1093 = vmul.f32 %v1049, %v1056
          %v1094 = vmul.f32 %v1050, %v1060
          %1095 = vxpose.xlu0.b32.start [1/16] %v1063, 128
          %1096 = vxpose.xlu0.b32.cont [2/16] %v1065, 128
          %1097 = vxpose.xlu0.b32.cont [3/16] %v1067, 128
          %1098 = vxpose.xlu0.b32.cont [4/16] %v1069, 128
          %1099 = vxpose.xlu0.b32.cont [5/16] %v1071, 128
          %1100 = vxpose.xlu0.b32.cont [6/16] %v1073, 128
          %1101 = vxpose.xlu0.b32.cont [7/16] %v1075, 128
          %1102 = vxpose.xlu0.b32.cont [8/16] %v1077, 128
          %1103 = vxpose.xlu0.b32.cont [9/16] %v1079, 128
          %1104 = vxpose.xlu0.b32.cont [10/16] %v1081, 128
          %1105 = vxpose.xlu0.b32.cont [11/16] %v1083, 128
          %1106 = vxpose.xlu0.b32.cont [12/16] %v1085, 128
          %1107 = vxpose.xlu0.b32.cont [13/16] %v1087, 128
          %1108 = vxpose.xlu0.b32.cont [14/16] %v1089, 128
          %1109 = vxpose.xlu0.b32.cont [15/16] %v1091, 128
          %1110 = vxpose.xlu0.b32.end [16/16] %v1093, 128
          %v1111 = vpop.trf.xlu0
          %v1112 = vpop.trf.xlu0
          %v1113 = vpop.trf.xlu0
          %v1114 = vpop.trf.xlu0
          %v1115 = vpop.trf.xlu0
          %v1116 = vpop.trf.xlu0
          %v1117 = vpop.trf.xlu0
          %v1118 = vpop.trf.xlu0
          %v1119 = vpop.trf.xlu0
          %v1120 = vpop.trf.xlu0
          %v1121 = vpop.trf.xlu0
          %v1122 = vpop.trf.xlu0
          %v1123 = vpop.trf.xlu0
          %v1124 = vpop.trf.xlu0
          %v1125 = vpop.trf.xlu0
          %v1126 = vpop.trf.xlu0
          %1127 = vxpose.xlu0.b32.start [1/16] %v1064, 128
          %1128 = vxpose.xlu0.b32.cont [2/16] %v1066, 128
          %1129 = vxpose.xlu0.b32.cont [3/16] %v1068, 128
          %1130 = vxpose.xlu0.b32.cont [4/16] %v1070, 128
          %1131 = vxpose.xlu0.b32.cont [5/16] %v1072, 128
          %1132 = vxpose.xlu0.b32.cont [6/16] %v1074, 128
          %1133 = vxpose.xlu0.b32.cont [7/16] %v1076, 128
          %1134 = vxpose.xlu0.b32.cont [8/16] %v1078, 128
          %1135 = vxpose.xlu0.b32.cont [9/16] %v1080, 128
          %1136 = vxpose.xlu0.b32.cont [10/16] %v1082, 128
          %1137 = vxpose.xlu0.b32.cont [11/16] %v1084, 128
          %1138 = vxpose.xlu0.b32.cont [12/16] %v1086, 128
          %1139 = vxpose.xlu0.b32.cont [13/16] %v1088, 128
          %1140 = vxpose.xlu0.b32.cont [14/16] %v1090, 128
          %1141 = vxpose.xlu0.b32.cont [15/16] %v1092, 128
          %1142 = vxpose.xlu0.b32.end [16/16] %v1094, 128
          %v1143 = vpop.trf.xlu0
          %v1144 = vpop.trf.xlu0
          %v1145 = vpop.trf.xlu0
          %v1146 = vpop.trf.xlu0
          %v1147 = vpop.trf.xlu0
          %v1148 = vpop.trf.xlu0
          %v1149 = vpop.trf.xlu0
          %v1150 = vpop.trf.xlu0
          %v1151 = vpop.trf.xlu0
          %v1152 = vpop.trf.xlu0
          %v1153 = vpop.trf.xlu0
          %v1154 = vpop.trf.xlu0
          %v1155 = vpop.trf.xlu0
          %v1156 = vpop.trf.xlu0
          %v1157 = vpop.trf.xlu0
          %v1158 = vpop.trf.xlu0
          %v1159 = vpack.c.bf16 %v1112, %v1111
          %v1160 = vpack.c.bf16 %v1114, %v1113
          %v1161 = vpack.c.bf16 %v1116, %v1115
          %v1162 = vpack.c.bf16 %v1118, %v1117
          %v1163 = vpack.c.bf16 %v1120, %v1119
          %v1164 = vpack.c.bf16 %v1122, %v1121
          %v1165 = vpack.c.bf16 %v1124, %v1123
          %v1166 = vpack.c.bf16 %v1126, %v1125
          %v1167 = vpack.c.bf16 %v1144, %v1143
          %v1168 = vpack.c.bf16 %v1146, %v1145
          %v1169 = vpack.c.bf16 %v1148, %v1147
          %v1170 = vpack.c.bf16 %v1150, %v1149
          %v1171 = vpack.c.bf16 %v1152, %v1151
          %v1172 = vpack.c.bf16 %v1154, %v1153
          %v1173 = vpack.c.bf16 %v1156, %v1155
          %v1174 = vpack.c.bf16 %v1158, %v1157
          %1175 = vst [vmem:[#allocation2] sm:$0xff] %v1159
          %1176 = vst [vmem:[#allocation2 + $0x8] sm:$0xff] %v1160
          %1177 = vst [vmem:[#allocation2 + $0x10] sm:$0xff] %v1161
          %1178 = vst [vmem:[#allocation2 + $0x18] sm:$0xff] %v1162
          %1179 = vst [vmem:[#allocation2 + $0x20] sm:$0xff] %v1163
          %1180 = vst [vmem:[#allocation2 + $0x28] sm:$0xff] %v1164
          %1181 = vst [vmem:[#allocation2 + $0x30] sm:$0xff] %v1165
          %1182 = vst [vmem:[#allocation2 + $0x38] sm:$0xff] %v1166
          %1183 = vst [vmem:[#allocation2 + $0x40] sm:$0xff] %v1167
          %1184 = vst [vmem:[#allocation2 + $0x48] sm:$0xff] %v1168
          %1185 = vst [vmem:[#allocation2 + $0x50] sm:$0xff] %v1169
          %1186 = vst [vmem:[#allocation2 + $0x58] sm:$0xff] %v1170
          %1187 = vst [vmem:[#allocation2 + $0x60] sm:$0xff] %v1171
          %1188 = vst [vmem:[#allocation2 + $0x68] sm:$0xff] %v1172
          %1189 = vst [vmem:[#allocation2 + $0x70] sm:$0xff] %v1173
          %1190 = vst [vmem:[#allocation2 + $0x78] sm:$0xff] %v1174
          %v1191 = vld [vmem:[%s518] sm:$0xff]
          %v1192 = vld [vmem:[%s518 + $0x8] sm:$0xff]
          %v1193 = vld [vmem:[%s518 + $0x10] sm:$0xff]
          %v1194 = vld [vmem:[%s518 + $0x18] sm:$0xff]
          %v1195 = vld [vmem:[%s518 + $0x20] sm:$0xff]
          %v1196 = vld [vmem:[%s518 + $0x28] sm:$0xff]
          %v1197 = vld [vmem:[%s518 + $0x30] sm:$0xff]
          %v1198 = vld [vmem:[%s518 + $0x38] sm:$0xff]
          %v1199 = vld [vmem:[%s518 + $0x40] sm:$0xff]
          %v1200 = vld [vmem:[%s518 + $0x48] sm:$0xff]
          %v1201 = vld [vmem:[%s518 + $0x50] sm:$0xff]
          %v1202 = vld [vmem:[%s518 + $0x58] sm:$0xff]
          %v1203 = vld [vmem:[%s518 + $0x60] sm:$0xff]
          %v1204 = vld [vmem:[%s518 + $0x68] sm:$0xff]
          %v1205 = vld [vmem:[%s518 + $0x70] sm:$0xff]
          %v1206 = vld [vmem:[%s518 + $0x78] sm:$0xff]
          %v1207 = vld [vmem:[%s518 + $0x80] sm:$0xff]
          %v1208 = vld [vmem:[%s518 + $0x88] sm:$0xff]
          %v1209 = vld [vmem:[%s518 + $0x90] sm:$0xff]
          %v1210 = vld [vmem:[%s518 + $0x98] sm:$0xff]
          %v1211 = vld [vmem:[%s518 + $0xa0] sm:$0xff]
          %v1212 = vld [vmem:[%s518 + $0xa8] sm:$0xff]
          %v1213 = vld [vmem:[%s518 + $0xb0] sm:$0xff]
          %v1214 = vld [vmem:[%s518 + $0xb8] sm:$0xff]
          %v1215 = vld [vmem:[%s518 + $0xc0] sm:$0xff]
          %v1216 = vld [vmem:[%s518 + $0xc8] sm:$0xff]
          %v1217 = vld [vmem:[%s518 + $0xd0] sm:$0xff]
          %v1218 = vld [vmem:[%s518 + $0xd8] sm:$0xff]
          %v1219 = vld [vmem:[%s518 + $0xe0] sm:$0xff]
          %v1220 = vld [vmem:[%s518 + $0xe8] sm:$0xff]
          %v1221 = vld [vmem:[%s518 + $0xf0] sm:$0xff]
          %v1222 = vld [vmem:[%s518 + $0xf8] sm:$0xff]
          %1223 = vst [vmem:[%s628] sm:$0xff] %v1191
          %1224 = vst [vmem:[%s628 + $0x8] sm:$0xff] %v1192
          %1225 = vst [vmem:[%s628 + $0x10] sm:$0xff] %v1193
          %1226 = vst [vmem:[%s628 + $0x18] sm:$0xff] %v1194
          %1227 = vst [vmem:[%s628 + $0x20] sm:$0xff] %v1195
          %1228 = vst [vmem:[%s628 + $0x28] sm:$0xff] %v1196
          %1229 = vst [vmem:[%s628 + $0x30] sm:$0xff] %v1197
          %1230 = vst [vmem:[%s628 + $0x38] sm:$0xff] %v1198
          %1231 = vst [vmem:[%s628 + $0x40] sm:$0xff] %v1199
          %1232 = vst [vmem:[%s628 + $0x48] sm:$0xff] %v1200
          %1233 = vst [vmem:[%s628 + $0x50] sm:$0xff] %v1201
          %1234 = vst [vmem:[%s628 + $0x58] sm:$0xff] %v1202
          %1235 = vst [vmem:[%s628 + $0x60] sm:$0xff] %v1203
          %1236 = vst [vmem:[%s628 + $0x68] sm:$0xff] %v1204
          %1237 = vst [vmem:[%s628 + $0x70] sm:$0xff] %v1205
          %1238 = vst [vmem:[%s628 + $0x78] sm:$0xff] %v1206
          %1239 = vst [vmem:[%s628 + $0x80] sm:$0xff] %v1207
          %1240 = vst [vmem:[%s628 + $0x88] sm:$0xff] %v1208
          %1241 = vst [vmem:[%s628 + $0x90] sm:$0xff] %v1209
          %1242 = vst [vmem:[%s628 + $0x98] sm:$0xff] %v1210
          %1243 = vst [vmem:[%s628 + $0xa0] sm:$0xff] %v1211
          %1244 = vst [vmem:[%s628 + $0xa8] sm:$0xff] %v1212
          %1245 = vst [vmem:[%s628 + $0xb0] sm:$0xff] %v1213
          %1246 = vst [vmem:[%s628 + $0xb8] sm:$0xff] %v1214
          %1247 = vst [vmem:[%s628 + $0xc0] sm:$0xff] %v1215
          %1248 = vst [vmem:[%s628 + $0xc8] sm:$0xff] %v1216
          %1249 = vst [vmem:[%s628 + $0xd0] sm:$0xff] %v1217
          %1250 = vst [vmem:[%s628 + $0xd8] sm:$0xff] %v1218
          %1251 = vst [vmem:[%s628 + $0xe0] sm:$0xff] %v1219
          %1252 = vst [vmem:[%s628 + $0xe8] sm:$0xff] %v1220
          %1253 = vst [vmem:[%s628 + $0xf0] sm:$0xff] %v1221
          %1254 = vst [vmem:[%s628 + $0xf8] sm:$0xff] %v1222
        $region104: #{diff_transformer_layer.2} parent=59 // pred_fallthru
          _
        %v1255 = vld [vmem:[#allocation2] sm:$0xff]
        %v1256 = vld [vmem:[#allocation2 + $0x8] sm:$0xff]
        %v1257 = vld [vmem:[#allocation2 + $0x10] sm:$0xff]
        %v1258 = vld [vmem:[#allocation2 + $0x18] sm:$0xff]
        %v1259 = vld [vmem:[#allocation2 + $0x20] sm:$0xff]
        %v1260 = vld [vmem:[#allocation2 + $0x28] sm:$0xff]
        %v1261 = vld [vmem:[#allocation2 + $0x30] sm:$0xff]
        %v1262 = vld [vmem:[#allocation2 + $0x38] sm:$0xff]
        %v1263 = vld [vmem:[#allocation2 + $0x40] sm:$0xff]
        %v1264 = vld [vmem:[#allocation2 + $0x48] sm:$0xff]
        %v1265 = vld [vmem:[#allocation2 + $0x50] sm:$0xff]
        %v1266 = vld [vmem:[#allocation2 + $0x58] sm:$0xff]
        %v1267 = vld [vmem:[#allocation2 + $0x60] sm:$0xff]
        %v1268 = vld [vmem:[#allocation2 + $0x68] sm:$0xff]
        %v1269 = vld [vmem:[#allocation2 + $0x70] sm:$0xff]
        %v1270 = vld [vmem:[#allocation2 + $0x78] sm:$0xff]
        %v1271 = vld [vmem:[%s535] sm:$0xf]
        %v1272 = vld [vmem:[%s535 + $0x4] sm:$0xf]
        %v1273 = vld [vmem:[%s535 + $0x8] sm:$0xf]
        %v1274 = vld [vmem:[%s535 + $0xc] sm:$0xf]
        %v1275 = vld [vmem:[%s535 + $0x10] sm:$0xf]
        %v1276 = vld [vmem:[%s535 + $0x14] sm:$0xf]
        %v1277 = vld [vmem:[%s535 + $0x18] sm:$0xf]
        %v1278 = vld [vmem:[%s535 + $0x1c] sm:$0xf]
        %v1279 = vld [vmem:[%s535 + $0x20] sm:$0xf]
        %v1280 = vld [vmem:[%s535 + $0x24] sm:$0xf]
        %v1281 = vld [vmem:[%s535 + $0x28] sm:$0xf]
        %v1282 = vld [vmem:[%s535 + $0x2c] sm:$0xf]
        %v1283 = vld [vmem:[%s535 + $0x30] sm:$0xf]
        %v1284 = vld [vmem:[%s535 + $0x34] sm:$0xf]
        %v1285 = vld [vmem:[%s535 + $0x38] sm:$0xf]
        %v1286 = vld [vmem:[%s535 + $0x3c] sm:$0xf]
        %v1287 = vld [vmem:[%s544] sm:$0xf]
        %v1288 = vld [vmem:[%s544 + $0x4] sm:$0xf]
        %v1289 = vld [vmem:[%s544 + $0x8] sm:$0xf]
        %v1290 = vld [vmem:[%s544 + $0xc] sm:$0xf]
        %v1291 = vld [vmem:[%s544 + $0x10] sm:$0xf]
        %v1292 = vld [vmem:[%s544 + $0x14] sm:$0xf]
        %v1293 = vld [vmem:[%s544 + $0x18] sm:$0xf]
        %v1294 = vld [vmem:[%s544 + $0x1c] sm:$0xf]
        %v1295 = vld [vmem:[%s544 + $0x20] sm:$0xf]
        %v1296 = vld [vmem:[%s544 + $0x24] sm:$0xf]
        %v1297 = vld [vmem:[%s544 + $0x28] sm:$0xf]
        %v1298 = vld [vmem:[%s544 + $0x2c] sm:$0xf]
        %v1299 = vld [vmem:[%s544 + $0x30] sm:$0xf]
        %v1300 = vld [vmem:[%s544 + $0x34] sm:$0xf]
        %v1301 = vld [vmem:[%s544 + $0x38] sm:$0xf]
        %v1302 = vld [vmem:[%s544 + $0x3c] sm:$0xf]
        %v1303 = vld [vmem:[%s553] sm:$0xf]
        %v1304 = vld [vmem:[%s553 + $0x4] sm:$0xf]
        %v1305 = vld [vmem:[%s553 + $0x8] sm:$0xf]
        %v1306 = vld [vmem:[%s553 + $0xc] sm:$0xf]
        %v1307 = vld [vmem:[%s553 + $0x10] sm:$0xf]
        %v1308 = vld [vmem:[%s553 + $0x14] sm:$0xf]
        %v1309 = vld [vmem:[%s553 + $0x18] sm:$0xf]
        %v1310 = vld [vmem:[%s553 + $0x1c] sm:$0xf]
        %v1311 = vld [vmem:[%s553 + $0x20] sm:$0xf]
        %v1312 = vld [vmem:[%s553 + $0x24] sm:$0xf]
        %v1313 = vld [vmem:[%s553 + $0x28] sm:$0xf]
        %v1314 = vld [vmem:[%s553 + $0x2c] sm:$0xf]
        %v1315 = vld [vmem:[%s553 + $0x30] sm:$0xf]
        %v1316 = vld [vmem:[%s553 + $0x34] sm:$0xf]
        %v1317 = vld [vmem:[%s553 + $0x38] sm:$0xf]
        %v1318 = vld [vmem:[%s553 + $0x3c] sm:$0xf]
        %v1319 = vld [vmem:[%s562] sm:$0xf]
        %v1320 = vld [vmem:[%s562 + $0x4] sm:$0xf]
        %v1321 = vld [vmem:[%s562 + $0x8] sm:$0xf]
        %v1322 = vld [vmem:[%s562 + $0xc] sm:$0xf]
        %v1323 = vld [vmem:[%s562 + $0x10] sm:$0xf]
        %v1324 = vld [vmem:[%s562 + $0x14] sm:$0xf]
        %v1325 = vld [vmem:[%s562 + $0x18] sm:$0xf]
        %v1326 = vld [vmem:[%s562 + $0x1c] sm:$0xf]
        %v1327 = vld [vmem:[%s562 + $0x20] sm:$0xf]
        %v1328 = vld [vmem:[%s562 + $0x24] sm:$0xf]
        %v1329 = vld [vmem:[%s562 + $0x28] sm:$0xf]
        %v1330 = vld [vmem:[%s562 + $0x2c] sm:$0xf]
        %v1331 = vld [vmem:[%s562 + $0x30] sm:$0xf]
        %v1332 = vld [vmem:[%s562 + $0x34] sm:$0xf]
        %v1333 = vld [vmem:[%s562 + $0x38] sm:$0xf]
        %v1334 = vld [vmem:[%s562 + $0x3c] sm:$0xf]
        %v1351 = vunpack.c.l.b16 %v1271
        %v1352 = vunpack.c.l.b16 %v1272
        %v1353 = vunpack.c.l.b16 %v1273
        %v1354 = vunpack.c.l.b16 %v1274
        %v1355 = vunpack.c.l.b16 %v1275
        %v1356 = vunpack.c.l.b16 %v1276
        %v1357 = vunpack.c.l.b16 %v1277
        %v1358 = vunpack.c.l.b16 %v1278
        %v1359 = vunpack.c.l.b16 %v1279
        %v1360 = vunpack.c.l.b16 %v1280
        %v1361 = vunpack.c.l.b16 %v1281
        %v1362 = vunpack.c.l.b16 %v1282
        %v1363 = vunpack.c.l.b16 %v1283
        %v1364 = vunpack.c.l.b16 %v1284
        %v1365 = vunpack.c.l.b16 %v1285
        %v1366 = vunpack.c.l.b16 %v1286
        %v1367 = vpack.c.b16 %v1352, %v1351
        %v1368 = vpack.c.b16 %v1354, %v1353
        %v1369 = vpack.c.b16 %v1356, %v1355
        %v1370 = vpack.c.b16 %v1358, %v1357
        %v1371 = vpack.c.b16 %v1360, %v1359
        %v1372 = vpack.c.b16 %v1362, %v1361
        %v1373 = vpack.c.b16 %v1364, %v1363
        %v1374 = vpack.c.b16 %v1366, %v1365
        %1383 = vmatprep.subr.bf16.mxu0 0
        %1384 = vmatpush1.bf16.msra.mxu0 %v1367
        %1385 = vmatprep.subr.bf16.mxu0 0
        %1386 = vmatpush1.bf16.msra.mxu0 %v1368
        %1387 = vmatprep.subr.bf16.mxu0 0
        %1388 = vmatpush1.bf16.msra.mxu0 %v1369
        %1389 = vmatprep.subr.bf16.mxu0 0
        %1390 = vmatpush1.bf16.msra.mxu0 %v1370
        %1391 = vmatprep.subr.bf16.mxu0 0
        %1392 = vmatpush1.bf16.msra.mxu0 %v1371
        %1393 = vmatprep.subr.bf16.mxu0 0
        %1394 = vmatpush1.bf16.msra.mxu0 %v1372
        %1395 = vmatprep.subr.bf16.mxu0 0
        %1396 = vmatpush1.bf16.msra.mxu0 %v1373
        %1397 = vmatprep.subr.bf16.mxu0 0
        %1398 = vmatpush1.bf16.msra.mxu0 %v1374
        %1399 = vmatprep.subr.bf16.mxu0 0
        %1400 = vmatpush1.bf16.msra.mxu0 0
        %1401 = vmatprep.subr.bf16.mxu0 0
        %1402 = vmatpush1.bf16.msra.mxu0 0
        %1403 = vmatprep.subr.bf16.mxu0 0
        %1404 = vmatpush1.bf16.msra.mxu0 0
        %1405 = vmatprep.subr.bf16.mxu0 0
        %1406 = vmatpush1.bf16.msra.mxu0 0
        %1407 = vmatprep.subr.bf16.mxu0 0
        %1408 = vmatpush1.bf16.msra.mxu0 0
        %1409 = vmatprep.subr.bf16.mxu0 0
        %1410 = vmatpush1.bf16.msra.mxu0 0
        %1411 = vmatprep.subr.bf16.mxu0 0
        %1412 = vmatpush1.bf16.msra.mxu0 0
        %1413 = vmatprep.subr.bf16.mxu0 0
        %1414 = vmatpush1.bf16.msra.mxu0 0
        %1415 = vmatprep.mubr.bf16.mxu0 0
        %1416 = vmatmul.mubr.bf16.gmra.mrb[0].mxu0 %v1255
        %v1417 = vpop.f32.mrb[0].mxu0
        %v1418 = vadd.f32 0.0, %v1417
        %v1419 = vpop.f32.mrb[0].mxu0
        %v1420 = vpop.f32.mrb[0].mxu0
        %v1421 = vadd.f32 0.0, %v1420
        %v1422 = vpop.f32.mrb[0].mxu0
        %1423 = vmatprep.mubr.bf16.mxu0 0
        %1424 = vmatmul.mubr.bf16.gmra.mrb[0].mxu0 %v1256
        %v1425 = vpop.f32.mrb[0].mxu0
        %v1426 = vadd.f32 0.0, %v1425
        %v1427 = vpop.f32.mrb[0].mxu0
        %v1428 = vpop.f32.mrb[0].mxu0
        %v1429 = vadd.f32 0.0, %v1428
        %v1430 = vpop.f32.mrb[0].mxu0
        %1431 = vmatprep.mubr.bf16.mxu0 0
        %1432 = vmatmul.mubr.bf16.gmra.mrb[0].mxu0 %v1257
        %v1433 = vpop.f32.mrb[0].mxu0
        %v1434 = vadd.f32 0.0, %v1433
        %v1435 = vpop.f32.mrb[0].mxu0
        %v1436 = vpop.f32.mrb[0].mxu0
        %v1437 = vadd.f32 0.0, %v1436
        %v1438 = vpop.f32.mrb[0].mxu0
        %1439 = vmatprep.mubr.bf16.mxu0 0
        %1440 = vmatmul.mubr.bf16.gmra.mrb[0].mxu0 %v1258
        %v1441 = vpop.f32.mrb[0].mxu0
        %v1442 = vadd.f32 0.0, %v1441
        %v1443 = vpop.f32.mrb[0].mxu0
        %v1444 = vpop.f32.mrb[0].mxu0
        %v1445 = vadd.f32 0.0, %v1444
        %v1446 = vpop.f32.mrb[0].mxu0
        %1447 = vmatprep.mubr.bf16.mxu0 0
        %1448 = vmatmul.mubr.bf16.gmra.mrb[0].mxu0 %v1259
        %v1449 = vpop.f32.mrb[0].mxu0
        %v1450 = vadd.f32 0.0, %v1449
        %v1451 = vpop.f32.mrb[0].mxu0
        %v1452 = vpop.f32.mrb[0].mxu0
        %v1453 = vadd.f32 0.0, %v1452
        %v1454 = vpop.f32.mrb[0].mxu0
        %1455 = vmatprep.mubr.bf16.mxu0 0
        %1456 = vmatmul.mubr.bf16.gmra.mrb[0].mxu0 %v1260
        %v1457 = vpop.f32.mrb[0].mxu0
        %v1458 = vadd.f32 0.0, %v1457
        %v1459 = vpop.f32.mrb[0].mxu0
        %v1460 = vpop.f32.mrb[0].mxu0
        %v1461 = vadd.f32 0.0, %v1460
        %v1462 = vpop.f32.mrb[0].mxu0
        %1463 = vmatprep.mubr.bf16.mxu0 0
        %1464 = vmatmul.mubr.bf16.gmra.mrb[0].mxu0 %v1261
        %v1465 = vpop.f32.mrb[0].mxu0
        %v1466 = vadd.f32 0.0, %v1465
        %v1467 = vpop.f32.mrb[0].mxu0
        %v1468 = vpop.f32.mrb[0].mxu0
        %v1469 = vadd.f32 0.0, %v1468
        %v1470 = vpop.f32.mrb[0].mxu0
        %1471 = vmatprep.mubr.bf16.mxu0 0
        %1472 = vmatmul.mubr.bf16.gmra.mrb[0].mxu0 %v1262
        %v1473 = vpop.f32.mrb[0].mxu0
        %v1474 = vadd.f32 0.0, %v1473
        %v1475 = vpop.f32.mrb[0].mxu0
        %v1476 = vpop.f32.mrb[0].mxu0
        %v1477 = vadd.f32 0.0, %v1476
        %v1478 = vpop.f32.mrb[0].mxu0
        %1479 = vmatprep.mubr.bf16.mxu0 0
        %1480 = vmatmul.mubr.bf16.gmra.mrb[0].mxu0 %v1263
        %v1481 = vpop.f32.mrb[0].mxu0
        %v1482 = vadd.f32 0.0, %v1481
        %v1483 = vpop.f32.mrb[0].mxu0
        %v1484 = vpop.f32.mrb[0].mxu0
        %v1485 = vadd.f32 0.0, %v1484
        %v1486 = vpop.f32.mrb[0].mxu0
        %1487 = vmatprep.mubr.bf16.mxu0 0
        %1488 = vmatmul.mubr.bf16.gmra.mrb[0].mxu0 %v1264
        %v1489 = vpop.f32.mrb[0].mxu0
        %v1490 = vadd.f32 0.0, %v1489
        %v1491 = vpop.f32.mrb[0].mxu0
        %v1492 = vpop.f32.mrb[0].mxu0
        %v1493 = vadd.f32 0.0, %v1492
        %v1494 = vpop.f32.mrb[0].mxu0
        %1495 = vmatprep.mubr.bf16.mxu0 0
        %1496 = vmatmul.mubr.bf16.gmra.mrb[0].mxu0 %v1265
        %v1497 = vpop.f32.mrb[0].mxu0
        %v1498 = vadd.f32 0.0, %v1497
        %v1499 = vpop.f32.mrb[0].mxu0
        %v1500 = vpop.f32.mrb[0].mxu0
        %v1501 = vadd.f32 0.0, %v1500
        %v1502 = vpop.f32.mrb[0].mxu0
        %1503 = vmatprep.mubr.bf16.mxu0 0
        %1504 = vmatmul.mubr.bf16.gmra.mrb[0].mxu0 %v1266
        %v1505 = vpop.f32.mrb[0].mxu0
        %v1506 = vadd.f32 0.0, %v1505
        %v1507 = vpop.f32.mrb[0].mxu0
        %v1508 = vpop.f32.mrb[0].mxu0
        %v1509 = vadd.f32 0.0, %v1508
        %v1510 = vpop.f32.mrb[0].mxu0
        %1511 = vmatprep.mubr.bf16.mxu0 0
        %1512 = vmatmul.mubr.bf16.gmra.mrb[0].mxu0 %v1267
        %v1513 = vpop.f32.mrb[0].mxu0
        %v1514 = vadd.f32 0.0, %v1513
        %v1515 = vpop.f32.mrb[0].mxu0
        %v1516 = vpop.f32.mrb[0].mxu0
        %v1517 = vadd.f32 0.0, %v1516
        %v1518 = vpop.f32.mrb[0].mxu0
        %1519 = vmatprep.mubr.bf16.mxu0 0
        %1520 = vmatmul.mubr.bf16.gmra.mrb[0].mxu0 %v1268
        %v1521 = vpop.f32.mrb[0].mxu0
        %v1522 = vadd.f32 0.0, %v1521
        %v1523 = vpop.f32.mrb[0].mxu0
        %v1524 = vpop.f32.mrb[0].mxu0
        %v1525 = vadd.f32 0.0, %v1524
        %v1526 = vpop.f32.mrb[0].mxu0
        %1527 = vmatprep.mubr.bf16.mxu0 0
        %1528 = vmatmul.mubr.bf16.gmra.mrb[0].mxu0 %v1269
        %v1529 = vpop.f32.mrb[0].mxu0
        %v1530 = vadd.f32 0.0, %v1529
        %v1531 = vpop.f32.mrb[0].mxu0
        %v1532 = vpop.f32.mrb[0].mxu0
        %v1533 = vadd.f32 0.0, %v1532
        %v1534 = vpop.f32.mrb[0].mxu0
        %1535 = vmatprep.mubr.bf16.mxu0 0
        %1536 = vmatmul.mubr.bf16.gmra.mrb[0].mxu0 %v1270
        %v1537 = vpop.f32.mrb[0].mxu0
        %v1538 = vadd.f32 0.0, %v1537
        %v1539 = vpop.f32.mrb[0].mxu0
        %v1540 = vpop.f32.mrb[0].mxu0
        %v1541 = vadd.f32 0.0, %v1540
        %v1542 = vpop.f32.mrb[0].mxu0
        %1543 = vdwg.mxu0
        %v1560 = vunpack.c.l.b16 %v1287
        %v1561 = vunpack.c.l.b16 %v1288
        %v1562 = vunpack.c.l.b16 %v1289
        %v1563 = vunpack.c.l.b16 %v1290
        %v1564 = vunpack.c.l.b16 %v1291
        %v1565 = vunpack.c.l.b16 %v1292
        %v1566 = vunpack.c.l.b16 %v1293
        %v1567 = vunpack.c.l.b16 %v1294
        %v1568 = vunpack.c.l.b16 %v1295
        %v1569 = vunpack.c.l.b16 %v1296
        %v1570 = vunpack.c.l.b16 %v1297
        %v1571 = vunpack.c.l.b16 %v1298
        %v1572 = vunpack.c.l.b16 %v1299
        %v1573 = vunpack.c.l.b16 %v1300
        %v1574 = vunpack.c.l.b16 %v1301
        %v1575 = vunpack.c.l.b16 %v1302
        %v1576 = vpack.c.b16 %v1561, %v1560
        %v1577 = vpack.c.b16 %v1563, %v1562
        %v1578 = vpack.c.b16 %v1565, %v1564
        %v1579 = vpack.c.b16 %v1567, %v1566
        %v1580 = vpack.c.b16 %v1569, %v1568
        %v1581 = vpack.c.b16 %v1571, %v1570
        %v1582 = vpack.c.b16 %v1573, %v1572
        %v1583 = vpack.c.b16 %v1575, %v1574
        %1592 = vmatprep.subr.bf16.mxu0 0
        %1593 = vmatpush1.bf16.msra.mxu0 %v1576
        %1594 = vmatprep.subr.bf16.mxu0 0
        %1595 = vmatpush1.bf16.msra.mxu0 %v1577
        %1596 = vmatprep.subr.bf16.mxu0 0
        %1597 = vmatpush1.bf16.msra.mxu0 %v1578
        %1598 = vmatprep.subr.bf16.mxu0 0
        %1599 = vmatpush1.bf16.msra.mxu0 %v1579
        %1600 = vmatprep.subr.bf16.mxu0 0
        %1601 = vmatpush1.bf16.msra.mxu0 %v1580
        %1602 = vmatprep.subr.bf16.mxu0 0
        %1603 = vmatpush1.bf16.msra.mxu0 %v1581
        %1604 = vmatprep.subr.bf16.mxu0 0
        %1605 = vmatpush1.bf16.msra.mxu0 %v1582
        %1606 = vmatprep.subr.bf16.mxu0 0
        %1607 = vmatpush1.bf16.msra.mxu0 %v1583
        %1608 = vmatprep.subr.bf16.mxu0 0
        %1609 = vmatpush1.bf16.msra.mxu0 0
        %1610 = vmatprep.subr.bf16.mxu0 0
        %1611 = vmatpush1.bf16.msra.mxu0 0
        %1612 = vmatprep.subr.bf16.mxu0 0
        %1613 = vmatpush1.bf16.msra.mxu0 0
        %1614 = vmatprep.subr.bf16.mxu0 0
        %1615 = vmatpush1.bf16.msra.mxu0 0
        %1616 = vmatprep.subr.bf16.mxu0 0
        %1617 = vmatpush1.bf16.msra.mxu0 0
        %1618 = vmatprep.subr.bf16.mxu0 0
        %1619 = vmatpush1.bf16.msra.mxu0 0
        %1620 = vmatprep.subr.bf16.mxu0 0
        %1621 = vmatpush1.bf16.msra.mxu0 0
        %1622 = vmatprep.subr.bf16.mxu0 0
        %1623 = vmatpush1.bf16.msra.mxu0 0
        %1624 = vmatprep.mubr.bf16.mxu0 0
        %1625 = vmatmul.mubr.bf16.gmra.mrb[0].mxu0 %v1255
        %v1626 = vpop.f32.mrb[0].mxu0
        %v1627 = vadd.f32 0.0, %v1626
        %v1628 = vpop.f32.mrb[0].mxu0
        %v1629 = vpop.f32.mrb[0].mxu0
        %v1630 = vadd.f32 0.0, %v1629
        %v1631 = vpop.f32.mrb[0].mxu0
        %1632 = vmatprep.mubr.bf16.mxu0 0
        %1633 = vmatmul.mubr.bf16.gmra.mrb[0].mxu0 %v1256
        %v1634 = vpop.f32.mrb[0].mxu0
        %v1635 = vadd.f32 0.0, %v1634
        %v1636 = vpop.f32.mrb[0].mxu0
        %v1637 = vpop.f32.mrb[0].mxu0
        %v1638 = vadd.f32 0.0, %v1637
        %v1639 = vpop.f32.mrb[0].mxu0
        %1640 = vmatprep.mubr.bf16.mxu0 0
        %1641 = vmatmul.mubr.bf16.gmra.mrb[0].mxu0 %v1257
        %v1642 = vpop.f32.mrb[0].mxu0
        %v1643 = vadd.f32 0.0, %v1642
        %v1644 = vpop.f32.mrb[0].mxu0
        %v1645 = vpop.f32.mrb[0].mxu0
        %v1646 = vadd.f32 0.0, %v1645
        %v1647 = vpop.f32.mrb[0].mxu0
        %1648 = vmatprep.mubr.bf16.mxu0 0
        %1649 = vmatmul.mubr.bf16.gmra.mrb[0].mxu0 %v1258
        %v1650 = vpop.f32.mrb[0].mxu0
        %v1651 = vadd.f32 0.0, %v1650
        %v1652 = vpop.f32.mrb[0].mxu0
        %v1653 = vpop.f32.mrb[0].mxu0
        %v1654 = vadd.f32 0.0, %v1653
        %v1655 = vpop.f32.mrb[0].mxu0
        %1656 = vmatprep.mubr.bf16.mxu0 0
        %1657 = vmatmul.mubr.bf16.gmra.mrb[0].mxu0 %v1259
        %v1658 = vpop.f32.mrb[0].mxu0
        %v1659 = vadd.f32 0.0, %v1658
        %v1660 = vpop.f32.mrb[0].mxu0
        %v1661 = vpop.f32.mrb[0].mxu0
        %v1662 = vadd.f32 0.0, %v1661
        %v1663 = vpop.f32.mrb[0].mxu0
        %1664 = vmatprep.mubr.bf16.mxu0 0
        %1665 = vmatmul.mubr.bf16.gmra.mrb[0].mxu0 %v1260
        %v1666 = vpop.f32.mrb[0].mxu0
        %v1667 = vadd.f32 0.0, %v1666
        %v1668 = vpop.f32.mrb[0].mxu0
        %v1669 = vpop.f32.mrb[0].mxu0
        %v1670 = vadd.f32 0.0, %v1669
        %v1671 = vpop.f32.mrb[0].mxu0
        %1672 = vmatprep.mubr.bf16.mxu0 0
        %1673 = vmatmul.mubr.bf16.gmra.mrb[0].mxu0 %v1261
        %v1674 = vpop.f32.mrb[0].mxu0
        %v1675 = vadd.f32 0.0, %v1674
        %v1676 = vpop.f32.mrb[0].mxu0
        %v1677 = vpop.f32.mrb[0].mxu0
        %v1678 = vadd.f32 0.0, %v1677
        %v1679 = vpop.f32.mrb[0].mxu0
        %1680 = vmatprep.mubr.bf16.mxu0 0
        %1681 = vmatmul.mubr.bf16.gmra.mrb[0].mxu0 %v1262
        %v1682 = vpop.f32.mrb[0].mxu0
        %v1683 = vadd.f32 0.0, %v1682
        %v1684 = vpop.f32.mrb[0].mxu0
        %v1685 = vpop.f32.mrb[0].mxu0
        %v1686 = vadd.f32 0.0, %v1685
        %v1687 = vpop.f32.mrb[0].mxu0
        %1688 = vmatprep.mubr.bf16.mxu0 0
        %1689 = vmatmul.mubr.bf16.gmra.mrb[0].mxu0 %v1263
        %v1690 = vpop.f32.mrb[0].mxu0
        %v1691 = vadd.f32 0.0, %v1690
        %v1692 = vpop.f32.mrb[0].mxu0
        %v1693 = vpop.f32.mrb[0].mxu0
        %v1694 = vadd.f32 0.0, %v1693
        %v1695 = vpop.f32.mrb[0].mxu0
        %1696 = vmatprep.mubr.bf16.mxu0 0
        %1697 = vmatmul.mubr.bf16.gmra.mrb[0].mxu0 %v1264
        %v1698 = vpop.f32.mrb[0].mxu0
        %v1699 = vadd.f32 0.0, %v1698
        %v1700 = vpop.f32.mrb[0].mxu0
        %v1701 = vpop.f32.mrb[0].mxu0
        %v1702 = vadd.f32 0.0, %v1701
        %v1703 = vpop.f32.mrb[0].mxu0
        %1704 = vmatprep.mubr.bf16.mxu0 0
        %1705 = vmatmul.mubr.bf16.gmra.mrb[0].mxu0 %v1265
        %v1706 = vpop.f32.mrb[0].mxu0
        %v1707 = vadd.f32 0.0, %v1706
        %v1708 = vpop.f32.mrb[0].mxu0
        %v1709 = vpop.f32.mrb[0].mxu0
        %v1710 = vadd.f32 0.0, %v1709
        %v1711 = vpop.f32.mrb[0].mxu0
        %1712 = vmatprep.mubr.bf16.mxu0 0
        %1713 = vmatmul.mubr.bf16.gmra.mrb[0].mxu0 %v1266
        %v1714 = vpop.f32.mrb[0].mxu0
        %v1715 = vadd.f32 0.0, %v1714
        %v1716 = vpop.f32.mrb[0].mxu0
        %v1717 = vpop.f32.mrb[0].mxu0
        %v1718 = vadd.f32 0.0, %v1717
        %v1719 = vpop.f32.mrb[0].mxu0
        %1720 = vmatprep.mubr.bf16.mxu0 0
        %1721 = vmatmul.mubr.bf16.gmra.mrb[0].mxu0 %v1267
        %v1722 = vpop.f32.mrb[0].mxu0
        %v1723 = vadd.f32 0.0, %v1722
        %v1724 = vpop.f32.mrb[0].mxu0
        %v1725 = vpop.f32.mrb[0].mxu0
        %v1726 = vadd.f32 0.0, %v1725
        %v1727 = vpop.f32.mrb[0].mxu0
        %1728 = vmatprep.mubr.bf16.mxu0 0
        %1729 = vmatmul.mubr.bf16.gmra.mrb[0].mxu0 %v1268
        %v1730 = vpop.f32.mrb[0].mxu0
        %v1731 = vadd.f32 0.0, %v1730
        %v1732 = vpop.f32.mrb[0].mxu0
        %v1733 = vpop.f32.mrb[0].mxu0
        %v1734 = vadd.f32 0.0, %v1733
        %v1735 = vpop.f32.mrb[0].mxu0
        %1736 = vmatprep.mubr.bf16.mxu0 0
        %1737 = vmatmul.mubr.bf16.gmra.mrb[0].mxu0 %v1269
        %v1738 = vpop.f32.mrb[0].mxu0
        %v1739 = vadd.f32 0.0, %v1738
        %v1740 = vpop.f32.mrb[0].mxu0
        %v1741 = vpop.f32.mrb[0].mxu0
        %v1742 = vadd.f32 0.0, %v1741
        %v1743 = vpop.f32.mrb[0].mxu0
        %1744 = vmatprep.mubr.bf16.mxu0 0
        %1745 = vmatmul.mubr.bf16.gmra.mrb[0].mxu0 %v1270
        %v1746 = vpop.f32.mrb[0].mxu0
        %v1747 = vadd.f32 0.0, %v1746
        %v1748 = vpop.f32.mrb[0].mxu0
        %v1749 = vpop.f32.mrb[0].mxu0
        %v1750 = vadd.f32 0.0, %v1749
        %v1751 = vpop.f32.mrb[0].mxu0
        %1752 = vdwg.mxu0
        %v1769 = vunpack.c.l.b16 %v1303
        %v1770 = vunpack.c.l.b16 %v1304
        %v1771 = vunpack.c.l.b16 %v1305
        %v1772 = vunpack.c.l.b16 %v1306
        %v1773 = vunpack.c.l.b16 %v1307
        %v1774 = vunpack.c.l.b16 %v1308
        %v1775 = vunpack.c.l.b16 %v1309
        %v1776 = vunpack.c.l.b16 %v1310
        %v1777 = vunpack.c.l.b16 %v1311
        %v1778 = vunpack.c.l.b16 %v1312
        %v1779 = vunpack.c.l.b16 %v1313
        %v1780 = vunpack.c.l.b16 %v1314
        %v1781 = vunpack.c.l.b16 %v1315
        %v1782 = vunpack.c.l.b16 %v1316
        %v1783 = vunpack.c.l.b16 %v1317
        %v1784 = vunpack.c.l.b16 %v1318
        %v1785 = vpack.c.b16 %v1770, %v1769
        %v1786 = vpack.c.b16 %v1772, %v1771
        %v1787 = vpack.c.b16 %v1774, %v1773
        %v1788 = vpack.c.b16 %v1776, %v1775
        %v1789 = vpack.c.b16 %v1778, %v1777
        %v1790 = vpack.c.b16 %v1780, %v1779
        %v1791 = vpack.c.b16 %v1782, %v1781
        %v1792 = vpack.c.b16 %v1784, %v1783
        %1801 = vmatprep.subr.bf16.mxu0 0
        %1802 = vmatpush1.bf16.msra.mxu0 %v1785
        %1803 = vmatprep.subr.bf16.mxu0 0
        %1804 = vmatpush1.bf16.msra.mxu0 %v1786
        %1805 = vmatprep.subr.bf16.mxu0 0
        %1806 = vmatpush1.bf16.msra.mxu0 %v1787
        %1807 = vmatprep.subr.bf16.mxu0 0
        %1808 = vmatpush1.bf16.msra.mxu0 %v1788
        %1809 = vmatprep.subr.bf16.mxu0 0
        %1810 = vmatpush1.bf16.msra.mxu0 %v1789
        %1811 = vmatprep.subr.bf16.mxu0 0
        %1812 = vmatpush1.bf16.msra.mxu0 %v1790
        %1813 = vmatprep.subr.bf16.mxu0 0
        %1814 = vmatpush1.bf16.msra.mxu0 %v1791
        %1815 = vmatprep.subr.bf16.mxu0 0
        %1816 = vmatpush1.bf16.msra.mxu0 %v1792
        %1817 = vmatprep.subr.bf16.mxu0 0
        %1818 = vmatpush1.bf16.msra.mxu0 0
        %1819 = vmatprep.subr.bf16.mxu0 0
        %1820 = vmatpush1.bf16.msra.mxu0 0
        %1821 = vmatprep.subr.bf16.mxu0 0
        %1822 = vmatpush1.bf16.msra.mxu0 0
        %1823 = vmatprep.subr.bf16.mxu0 0
        %1824 = vmatpush1.bf16.msra.mxu0 0
        %1825 = vmatprep.subr.bf16.mxu0 0
        %1826 = vmatpush1.bf16.msra.mxu0 0
        %1827 = vmatprep.subr.bf16.mxu0 0
        %1828 = vmatpush1.bf16.msra.mxu0 0
        %1829 = vmatprep.subr.bf16.mxu0 0
        %1830 = vmatpush1.bf16.msra.mxu0 0
        %1831 = vmatprep.subr.bf16.mxu0 0
        %1832 = vmatpush1.bf16.msra.mxu0 0
        %1833 = vmatprep.mubr.bf16.mxu0 0
        %1834 = vmatmul.mubr.bf16.gmra.mrb[0].mxu0 %v1255
        %v1835 = vpop.f32.mrb[0].mxu0
        %v1836 = vadd.f32 0.0, %v1835
        %v1837 = vpop.f32.mrb[0].mxu0
        %v1838 = vpop.f32.mrb[0].mxu0
        %v1839 = vadd.f32 0.0, %v1838
        %v1840 = vpop.f32.mrb[0].mxu0
        %1841 = vmatprep.mubr.bf16.mxu0 0
        %1842 = vmatmul.mubr.bf16.gmra.mrb[0].mxu0 %v1256
        %v1843 = vpop.f32.mrb[0].mxu0
        %v1844 = vadd.f32 0.0, %v1843
        %v1845 = vpop.f32.mrb[0].mxu0
        %v1846 = vpop.f32.mrb[0].mxu0
        %v1847 = vadd.f32 0.0, %v1846
        %v1848 = vpop.f32.mrb[0].mxu0
        %1849 = vmatprep.mubr.bf16.mxu0 0
        %1850 = vmatmul.mubr.bf16.gmra.mrb[0].mxu0 %v1257
        %v1851 = vpop.f32.mrb[0].mxu0
        %v1852 = vadd.f32 0.0, %v1851
        %v1853 = vpop.f32.mrb[0].mxu0
        %v1854 = vpop.f32.mrb[0].mxu0
        %v1855 = vadd.f32 0.0, %v1854
        %v1856 = vpop.f32.mrb[0].mxu0
        %1857 = vmatprep.mubr.bf16.mxu0 0
        %1858 = vmatmul.mubr.bf16.gmra.mrb[0].mxu0 %v1258
        %v1859 = vpop.f32.mrb[0].mxu0
        %v1860 = vadd.f32 0.0, %v1859
        %v1861 = vpop.f32.mrb[0].mxu0
        %v1862 = vpop.f32.mrb[0].mxu0
        %v1863 = vadd.f32 0.0, %v1862
        %v1864 = vpop.f32.mrb[0].mxu0
        %1865 = vmatprep.mubr.bf16.mxu0 0
        %1866 = vmatmul.mubr.bf16.gmra.mrb[0].mxu0 %v1259
        %v1867 = vpop.f32.mrb[0].mxu0
        %v1868 = vadd.f32 0.0, %v1867
        %v1869 = vpop.f32.mrb[0].mxu0
        %v1870 = vpop.f32.mrb[0].mxu0
        %v1871 = vadd.f32 0.0, %v1870
        %v1872 = vpop.f32.mrb[0].mxu0
        %1873 = vmatprep.mubr.bf16.mxu0 0
        %1874 = vmatmul.mubr.bf16.gmra.mrb[0].mxu0 %v1260
        %v1875 = vpop.f32.mrb[0].mxu0
        %v1876 = vadd.f32 0.0, %v1875
        %v1877 = vpop.f32.mrb[0].mxu0
        %v1878 = vpop.f32.mrb[0].mxu0
        %v1879 = vadd.f32 0.0, %v1878
        %v1880 = vpop.f32.mrb[0].mxu0
        %1881 = vmatprep.mubr.bf16.mxu0 0
        %1882 = vmatmul.mubr.bf16.gmra.mrb[0].mxu0 %v1261
        %v1883 = vpop.f32.mrb[0].mxu0
        %v1884 = vadd.f32 0.0, %v1883
        %v1885 = vpop.f32.mrb[0].mxu0
        %v1886 = vpop.f32.mrb[0].mxu0
        %v1887 = vadd.f32 0.0, %v1886
        %v1888 = vpop.f32.mrb[0].mxu0
        %1889 = vmatprep.mubr.bf16.mxu0 0
        %1890 = vmatmul.mubr.bf16.gmra.mrb[0].mxu0 %v1262
        %v1891 = vpop.f32.mrb[0].mxu0
        %v1892 = vadd.f32 0.0, %v1891
        %v1893 = vpop.f32.mrb[0].mxu0
        %v1894 = vpop.f32.mrb[0].mxu0
        %v1895 = vadd.f32 0.0, %v1894
        %v1896 = vpop.f32.mrb[0].mxu0
        %1897 = vmatprep.mubr.bf16.mxu0 0
        %1898 = vmatmul.mubr.bf16.gmra.mrb[0].mxu0 %v1263
        %v1899 = vpop.f32.mrb[0].mxu0
        %v1900 = vadd.f32 0.0, %v1899
        %v1901 = vpop.f32.mrb[0].mxu0
        %v1902 = vpop.f32.mrb[0].mxu0
        %v1903 = vadd.f32 0.0, %v1902
        %v1904 = vpop.f32.mrb[0].mxu0
        %1905 = vmatprep.mubr.bf16.mxu0 0
        %1906 = vmatmul.mubr.bf16.gmra.mrb[0].mxu0 %v1264
        %v1907 = vpop.f32.mrb[0].mxu0
        %v1908 = vadd.f32 0.0, %v1907
        %v1909 = vpop.f32.mrb[0].mxu0
        %v1910 = vpop.f32.mrb[0].mxu0
        %v1911 = vadd.f32 0.0, %v1910
        %v1912 = vpop.f32.mrb[0].mxu0
        %1913 = vmatprep.mubr.bf16.mxu0 0
        %1914 = vmatmul.mubr.bf16.gmra.mrb[0].mxu0 %v1265
        %v1915 = vpop.f32.mrb[0].mxu0
        %v1916 = vadd.f32 0.0, %v1915
        %v1917 = vpop.f32.mrb[0].mxu0
        %v1918 = vpop.f32.mrb[0].mxu0
        %v1919 = vadd.f32 0.0, %v1918
        %v1920 = vpop.f32.mrb[0].mxu0
        %1921 = vmatprep.mubr.bf16.mxu0 0
        %1922 = vmatmul.mubr.bf16.gmra.mrb[0].mxu0 %v1266
        %v1923 = vpop.f32.mrb[0].mxu0
        %v1924 = vadd.f32 0.0, %v1923
        %v1925 = vpop.f32.mrb[0].mxu0
        %v1926 = vpop.f32.mrb[0].mxu0
        %v1927 = vadd.f32 0.0, %v1926
        %v1928 = vpop.f32.mrb[0].mxu0
        %1929 = vmatprep.mubr.bf16.mxu0 0
        %1930 = vmatmul.mubr.bf16.gmra.mrb[0].mxu0 %v1267
        %v1931 = vpop.f32.mrb[0].mxu0
        %v1932 = vadd.f32 0.0, %v1931
        %v1933 = vpop.f32.mrb[0].mxu0
        %v1934 = vpop.f32.mrb[0].mxu0
        %v1935 = vadd.f32 0.0, %v1934
        %v1936 = vpop.f32.mrb[0].mxu0
        %1937 = vmatprep.mubr.bf16.mxu0 0
        %1938 = vmatmul.mubr.bf16.gmra.mrb[0].mxu0 %v1268
        %v1939 = vpop.f32.mrb[0].mxu0
        %v1940 = vadd.f32 0.0, %v1939
        %v1941 = vpop.f32.mrb[0].mxu0
        %v1942 = vpop.f32.mrb[0].mxu0
        %v1943 = vadd.f32 0.0, %v1942
        %v1944 = vpop.f32.mrb[0].mxu0
        %1945 = vmatprep.mubr.bf16.mxu0 0
        %1946 = vmatmul.mubr.bf16.gmra.mrb[0].mxu0 %v1269
        %v1947 = vpop.f32.mrb[0].mxu0
        %v1948 = vadd.f32 0.0, %v1947
        %v1949 = vpop.f32.mrb[0].mxu0
        %v1950 = vpop.f32.mrb[0].mxu0
        %v1951 = vadd.f32 0.0, %v1950
        %v1952 = vpop.f32.mrb[0].mxu0
        %1953 = vmatprep.mubr.bf16.mxu0 0
        %1954 = vmatmul.mubr.bf16.gmra.mrb[0].mxu0 %v1270
        %v1955 = vpop.f32.mrb[0].mxu0
        %v1956 = vadd.f32 0.0, %v1955
        %v1957 = vpop.f32.mrb[0].mxu0
        %v1958 = vpop.f32.mrb[0].mxu0
        %v1959 = vadd.f32 0.0, %v1958
        %v1960 = vpop.f32.mrb[0].mxu0
        %1961 = vdwg.mxu0
        %v1962 = vpack.c.bf16 %v1421, %v1418
        %v1963 = vpack.c.bf16 %v1429, %v1426
        %v1964 = vpack.c.bf16 %v1437, %v1434
        %v1965 = vpack.c.bf16 %v1445, %v1442
        %v1966 = vpack.c.bf16 %v1453, %v1450
        %v1967 = vpack.c.bf16 %v1461, %v1458
        %v1968 = vpack.c.bf16 %v1469, %v1466
        %v1969 = vpack.c.bf16 %v1477, %v1474
        %v1970 = vpack.c.bf16 %v1485, %v1482
        %v1971 = vpack.c.bf16 %v1493, %v1490
        %v1972 = vpack.c.bf16 %v1501, %v1498
        %v1973 = vpack.c.bf16 %v1509, %v1506
        %v1974 = vpack.c.bf16 %v1517, %v1514
        %v1975 = vpack.c.bf16 %v1525, %v1522
        %v1976 = vpack.c.bf16 %v1533, %v1530
        %v1977 = vpack.c.bf16 %v1541, %v1538
        %v1978 = vpack.c.bf16 %v1630, %v1627
        %v1979 = vpack.c.bf16 %v1638, %v1635
        %v1980 = vpack.c.bf16 %v1646, %v1643
        %v1981 = vpack.c.bf16 %v1654, %v1651
        %v1982 = vpack.c.bf16 %v1662, %v1659
        %v1983 = vpack.c.bf16 %v1670, %v1667
        %v1984 = vpack.c.bf16 %v1678, %v1675
        %v1985 = vpack.c.bf16 %v1686, %v1683
        %v1986 = vpack.c.bf16 %v1694, %v1691
        %v1987 = vpack.c.bf16 %v1702, %v1699
        %v1988 = vpack.c.bf16 %v1710, %v1707
        %v1989 = vpack.c.bf16 %v1718, %v1715
        %v1990 = vpack.c.bf16 %v1726, %v1723
        %v1991 = vpack.c.bf16 %v1734, %v1731
        %v1992 = vpack.c.bf16 %v1742, %v1739
        %v1993 = vpack.c.bf16 %v1750, %v1747
        %v1994 = vlaneseq
        %v1995 = vshrl.u32 %v1994, 7
        %v1996 = vadd.s32 %v1995, 8
        %v1997 = vadd.s32 %v1995, 16
        %v1998 = vadd.s32 %v1995, 24
        %v1999 = vadd.s32 %v1995, 32
        %v2000 = vadd.s32 %v1995, 40
        %v2001 = vadd.s32 %v1995, 48
        %v2002 = vadd.s32 %v1995, 56
        %v2003 = vadd.s32 %v1995, 64
        %v2004 = vadd.s32 %v1995, 72
        %v2005 = vadd.s32 %v1995, 80
        %v2006 = vadd.s32 %v1995, 88
        %v2007 = vadd.s32 %v1995, 96
        %v2008 = vadd.s32 %v1995, 104
        %v2009 = vadd.s32 %v1995, 112
        %v2010 = vadd.s32 %v1995, 120
        %v2011 = vadd.s32 %v1995, 128
        %v2012 = vadd.s32 %v1995, 136
        %v2013 = vadd.s32 %v1995, 144
        %v2014 = vadd.s32 %v1995, 152
        %v2015 = vadd.s32 %v1995, 160
        %v2016 = vadd.s32 %v1995, 168
        %v2017 = vadd.s32 %v1995, 176
        %v2018 = vadd.s32 %v1995, 184
        %v2019 = vadd.s32 %v1995, 192
        %v2020 = vadd.s32 %v1995, 200
        %v2021 = vadd.s32 %v1995, 208
        %v2022 = vadd.s32 %v1995, 216
        %v2023 = vadd.s32 %v1995, 224
        %v2024 = vadd.s32 %v1995, 232
        %v2025 = vadd.s32 %v1995, 240
        %v2026 = vadd.s32 %v1995, 248
        %v2027 = vlaneseq
        %v2028 = vand.u32 %v2027, 127
        %v2029 = vadd.s32 %v2028, 128
        %vm2030 = vcmp.ge.s32.totalorder %v1995, %v2028
        %vm2031 = vcmp.ge.s32.totalorder %v1995, %v2029
        %vm2032 = vcmp.ge.s32.totalorder %v1996, %v2028
        %vm2033 = vcmp.ge.s32.totalorder %v1996, %v2029
        %vm2034 = vcmp.ge.s32.totalorder %v1997, %v2028
        %vm2035 = vcmp.ge.s32.totalorder %v1997, %v2029
        %vm2036 = vcmp.ge.s32.totalorder %v1998, %v2028
        %vm2037 = vcmp.ge.s32.totalorder %v1998, %v2029
        %vm2038 = vcmp.ge.s32.totalorder %v1999, %v2028
        %vm2039 = vcmp.ge.s32.totalorder %v1999, %v2029
        %vm2040 = vcmp.ge.s32.totalorder %v2000, %v2028
        %vm2041 = vcmp.ge.s32.totalorder %v2000, %v2029
        %vm2042 = vcmp.ge.s32.totalorder %v2001, %v2028
        %vm2043 = vcmp.ge.s32.totalorder %v2001, %v2029
        %vm2044 = vcmp.ge.s32.totalorder %v2002, %v2028
        %vm2045 = vcmp.ge.s32.totalorder %v2002, %v2029
        %vm2046 = vcmp.ge.s32.totalorder %v2003, %v2028
        %vm2047 = vcmp.ge.s32.totalorder %v2003, %v2029
        %vm2048 = vcmp.ge.s32.totalorder %v2004, %v2028
        %vm2049 = vcmp.ge.s32.totalorder %v2004, %v2029
        %vm2050 = vcmp.ge.s32.totalorder %v2005, %v2028
        %vm2051 = vcmp.ge.s32.totalorder %v2005, %v2029
        %vm2052 = vcmp.ge.s32.totalorder %v2006, %v2028
        %vm2053 = vcmp.ge.s32.totalorder %v2006, %v2029
        %vm2054 = vcmp.ge.s32.totalorder %v2007, %v2028
        %vm2055 = vcmp.ge.s32.totalorder %v2007, %v2029
        %vm2056 = vcmp.ge.s32.totalorder %v2008, %v2028
        %vm2057 = vcmp.ge.s32.totalorder %v2008, %v2029
        %vm2058 = vcmp.ge.s32.totalorder %v2009, %v2028
        %vm2059 = vcmp.ge.s32.totalorder %v2009, %v2029
        %vm2060 = vcmp.ge.s32.totalorder %v2010, %v2028
        %vm2061 = vcmp.ge.s32.totalorder %v2010, %v2029
        %vm2062 = vcmp.ge.s32.totalorder %v2011, %v2028
        %vm2063 = vcmp.ge.s32.totalorder %v2011, %v2029
        %vm2064 = vcmp.ge.s32.totalorder %v2012, %v2028
        %vm2065 = vcmp.ge.s32.totalorder %v2012, %v2029
        %vm2066 = vcmp.ge.s32.totalorder %v2013, %v2028
        %vm2067 = vcmp.ge.s32.totalorder %v2013, %v2029
        %vm2068 = vcmp.ge.s32.totalorder %v2014, %v2028
        %vm2069 = vcmp.ge.s32.totalorder %v2014, %v2029
        %vm2070 = vcmp.ge.s32.totalorder %v2015, %v2028
        %vm2071 = vcmp.ge.s32.totalorder %v2015, %v2029
        %vm2072 = vcmp.ge.s32.totalorder %v2016, %v2028
        %vm2073 = vcmp.ge.s32.totalorder %v2016, %v2029
        %vm2074 = vcmp.ge.s32.totalorder %v2017, %v2028
        %vm2075 = vcmp.ge.s32.totalorder %v2017, %v2029
        %vm2076 = vcmp.ge.s32.totalorder %v2018, %v2028
        %vm2077 = vcmp.ge.s32.totalorder %v2018, %v2029
        %vm2078 = vcmp.ge.s32.totalorder %v2019, %v2028
        %vm2079 = vcmp.ge.s32.totalorder %v2019, %v2029
        %vm2080 = vcmp.ge.s32.totalorder %v2020, %v2028
        %vm2081 = vcmp.ge.s32.totalorder %v2020, %v2029
        %vm2082 = vcmp.ge.s32.totalorder %v2021, %v2028
        %vm2083 = vcmp.ge.s32.totalorder %v2021, %v2029
        %vm2084 = vcmp.ge.s32.totalorder %v2022, %v2028
        %vm2085 = vcmp.ge.s32.totalorder %v2022, %v2029
        %vm2086 = vcmp.ge.s32.totalorder %v2023, %v2028
        %vm2087 = vcmp.ge.s32.totalorder %v2023, %v2029
        %vm2088 = vcmp.ge.s32.totalorder %v2024, %v2028
        %vm2089 = vcmp.ge.s32.totalorder %v2024, %v2029
        %vm2090 = vcmp.ge.s32.totalorder %v2025, %v2028
        %vm2091 = vcmp.ge.s32.totalorder %v2025, %v2029
        %vm2092 = vcmp.ge.s32.totalorder %v2026, %v2028
        %vm2093 = vcmp.ge.s32.totalorder %v2026, %v2029
        %v2094 = vsel %vm2030, 0.0, -1e+30
        %v2095 = vsel %vm2031, 0.0, -1e+30
        %v2096 = vsel %vm2032, 0.0, -1e+30
        %v2097 = vsel %vm2033, 0.0, -1e+30
        %v2098 = vsel %vm2034, 0.0, -1e+30
        %v2099 = vsel %vm2035, 0.0, -1e+30
        %v2100 = vsel %vm2036, 0.0, -1e+30
        %v2101 = vsel %vm2037, 0.0, -1e+30
        %v2102 = vsel %vm2038, 0.0, -1e+30
        %v2103 = vsel %vm2039, 0.0, -1e+30
        %v2104 = vsel %vm2040, 0.0, -1e+30
        %v2105 = vsel %vm2041, 0.0, -1e+30
        %v2106 = vsel %vm2042, 0.0, -1e+30
        %v2107 = vsel %vm2043, 0.0, -1e+30
        %v2108 = vsel %vm2044, 0.0, -1e+30
        %v2109 = vsel %vm2045, 0.0, -1e+30
        %v2110 = vsel %vm2046, 0.0, -1e+30
        %v2111 = vsel %vm2047, 0.0, -1e+30
        %v2112 = vsel %vm2048, 0.0, -1e+30
        %v2113 = vsel %vm2049, 0.0, -1e+30
        %v2114 = vsel %vm2050, 0.0, -1e+30
        %v2115 = vsel %vm2051, 0.0, -1e+30
        %v2116 = vsel %vm2052, 0.0, -1e+30
        %v2117 = vsel %vm2053, 0.0, -1e+30
        %v2118 = vsel %vm2054, 0.0, -1e+30
        %v2119 = vsel %vm2055, 0.0, -1e+30
        %v2120 = vsel %vm2056, 0.0, -1e+30
        %v2121 = vsel %vm2057, 0.0, -1e+30
        %v2122 = vsel %vm2058, 0.0, -1e+30
        %v2123 = vsel %vm2059, 0.0, -1e+30
        %v2124 = vsel %vm2060, 0.0, -1e+30
        %v2125 = vsel %vm2061, 0.0, -1e+30
        %v2126 = vsel %vm2062, 0.0, -1e+30
        %v2127 = vsel %vm2063, 0.0, -1e+30
        %v2128 = vsel %vm2064, 0.0, -1e+30
        %v2129 = vsel %vm2065, 0.0, -1e+30
        %v2130 = vsel %vm2066, 0.0, -1e+30
        %v2131 = vsel %vm2067, 0.0, -1e+30
        %v2132 = vsel %vm2068, 0.0, -1e+30
        %v2133 = vsel %vm2069, 0.0, -1e+30
        %v2134 = vsel %vm2070, 0.0, -1e+30
        %v2135 = vsel %vm2071, 0.0, -1e+30
        %v2136 = vsel %vm2072, 0.0, -1e+30
        %v2137 = vsel %vm2073, 0.0, -1e+30
        %v2138 = vsel %vm2074, 0.0, -1e+30
        %v2139 = vsel %vm2075, 0.0, -1e+30
        %v2140 = vsel %vm2076, 0.0, -1e+30
        %v2141 = vsel %vm2077, 0.0, -1e+30
        %v2142 = vsel %vm2078, 0.0, -1e+30
        %v2143 = vsel %vm2079, 0.0, -1e+30
        %v2144 = vsel %vm2080, 0.0, -1e+30
        %v2145 = vsel %vm2081, 0.0, -1e+30
        %v2146 = vsel %vm2082, 0.0, -1e+30
        %v2147 = vsel %vm2083, 0.0, -1e+30
        %v2148 = vsel %vm2084, 0.0, -1e+30
        %v2149 = vsel %vm2085, 0.0, -1e+30
        %v2150 = vsel %vm2086, 0.0, -1e+30
        %v2151 = vsel %vm2087, 0.0, -1e+30
        %v2152 = vsel %vm2088, 0.0, -1e+30
        %v2153 = vsel %vm2089, 0.0, -1e+30
        %v2154 = vsel %vm2090, 0.0, -1e+30
        %v2155 = vsel %vm2091, 0.0, -1e+30
        %v2156 = vsel %vm2092, 0.0, -1e+30
        %v2157 = vsel %vm2093, 0.0, -1e+30
        %vm2158 = vcmask 523264
        %v2160 = vsel %vm2158, %v1962, 0
        %v2163 = vsel %vm2158, %v1963, 0
        %v2166 = vsel %vm2158, %v1964, 0
        %v2169 = vsel %vm2158, %v1965, 0
        %v2172 = vsel %vm2158, %v1966, 0
        %v2175 = vsel %vm2158, %v1967, 0
        %v2178 = vsel %vm2158, %v1968, 0
        %v2181 = vsel %vm2158, %v1969, 0
        %v2184 = vsel %vm2158, %v1970, 0
        %v2187 = vsel %vm2158, %v1971, 0
        %v2190 = vsel %vm2158, %v1972, 0
        %v2193 = vsel %vm2158, %v1973, 0
        %v2196 = vsel %vm2158, %v1974, 0
        %v2199 = vsel %vm2158, %v1975, 0
        %v2202 = vsel %vm2158, %v1976, 0
        %v2205 = vsel %vm2158, %v1977, 0
        %v2208 = vsel %vm2158, %v1978, 0
        %v2211 = vsel %vm2158, %v1979, 0
        %v2214 = vsel %vm2158, %v1980, 0
        %v2217 = vsel %vm2158, %v1981, 0
        %v2220 = vsel %vm2158, %v1982, 0
        %v2223 = vsel %vm2158, %v1983, 0
        %v2226 = vsel %vm2158, %v1984, 0
        %v2229 = vsel %vm2158, %v1985, 0
        %v2232 = vsel %vm2158, %v1986, 0
        %v2235 = vsel %vm2158, %v1987, 0
        %v2238 = vsel %vm2158, %v1988, 0
        %v2241 = vsel %vm2158, %v1989, 0
        %v2244 = vsel %vm2158, %v1990, 0
        %v2247 = vsel %vm2158, %v1991, 0
        %v2250 = vsel %vm2158, %v1992, 0
        %v2253 = vsel %vm2158, %v1993, 0
        %2255 = vmatprep.subr.bf16.mxu0 0
        %2256 = vmatpush1.bf16.xpose.msra.mxu0 %v2208
        %2257 = vmatprep.subr.bf16.mxu0 0
        %2258 = vmatpush1.bf16.xpose.msra.mxu0 %v2211
        %2259 = vmatprep.subr.bf16.mxu0 0
        %2260 = vmatpush1.bf16.xpose.msra.mxu0 %v2214
        %2261 = vmatprep.subr.bf16.mxu0 0
        %2262 = vmatpush1.bf16.xpose.msra.mxu0 %v2217
        %2263 = vmatprep.subr.bf16.mxu0 0
        %2264 = vmatpush1.bf16.xpose.msra.mxu0 %v2220
        %2265 = vmatprep.subr.bf16.mxu0 0
        %2266 = vmatpush1.bf16.xpose.msra.mxu0 %v2223
        %2267 = vmatprep.subr.bf16.mxu0 0
        %2268 = vmatpush1.bf16.xpose.msra.mxu0 %v2226
        %2269 = vmatprep.subr.bf16.mxu0 0
        %2270 = vmatpush1.bf16.xpose.msra.mxu0 %v2229
        %2271 = vmatprep.subr.bf16.mxu0 0
        %2272 = vmatpush1.bf16.xpose.msra.mxu0 %v2232
        %2273 = vmatprep.subr.bf16.mxu0 0
        %2274 = vmatpush1.bf16.xpose.msra.mxu0 %v2235
        %2275 = vmatprep.subr.bf16.mxu0 0
        %2276 = vmatpush1.bf16.xpose.msra.mxu0 %v2238
        %2277 = vmatprep.subr.bf16.mxu0 0
        %2278 = vmatpush1.bf16.xpose.msra.mxu0 %v2241
        %2279 = vmatprep.subr.bf16.mxu0 0
        %2280 = vmatpush1.bf16.xpose.msra.mxu0 %v2244
        %2281 = vmatprep.subr.bf16.mxu0 0
        %2282 = vmatpush1.bf16.xpose.msra.mxu0 %v2247
        %2283 = vmatprep.subr.bf16.mxu0 0
        %2284 = vmatpush1.bf16.xpose.msra.mxu0 %v2250
        %2285 = vmatprep.subr.bf16.mxu0 0
        %2286 = vmatpush1.bf16.xpose.msra.mxu0 %v2253
        %2287 = vmatprep.mubr.bf16.mxu0 0
        %2288 = vmatmul.mubr.bf16.gmra.mrb[0].mxu0 %v2160
        %v2289 = vpop.f32.mrb[0].mxu0
        %v2290 = vadd.f32 0.0, %v2289
        %v2291 = vpop.f32.mrb[0].mxu0
        %v2292 = vadd.f32 0.0, %v2291
        %v2293 = vpop.f32.mrb[0].mxu0
        %v2294 = vadd.f32 0.0, %v2293
        %v2295 = vpop.f32.mrb[0].mxu0
        %v2296 = vadd.f32 0.0, %v2295
        %2297 = vmatprep.mubr.bf16.mxu0 0
        %2298 = vmatmul.mubr.bf16.gmra.mrb[0].mxu0 %v2163
        %v2299 = vpop.f32.mrb[0].mxu0
        %v2300 = vadd.f32 0.0, %v2299
        %v2301 = vpop.f32.mrb[0].mxu0
        %v2302 = vadd.f32 0.0, %v2301
        %v2303 = vpop.f32.mrb[0].mxu0
        %v2304 = vadd.f32 0.0, %v2303
        %v2305 = vpop.f32.mrb[0].mxu0
        %v2306 = vadd.f32 0.0, %v2305
        %2307 = vmatprep.mubr.bf16.mxu0 0
        %2308 = vmatmul.mubr.bf16.gmra.mrb[0].mxu0 %v2166
        %v2309 = vpop.f32.mrb[0].mxu0
        %v2310 = vadd.f32 0.0, %v2309
        %v2311 = vpop.f32.mrb[0].mxu0
        %v2312 = vadd.f32 0.0, %v2311
        %v2313 = vpop.f32.mrb[0].mxu0
        %v2314 = vadd.f32 0.0, %v2313
        %v2315 = vpop.f32.mrb[0].mxu0
        %v2316 = vadd.f32 0.0, %v2315
        %2317 = vmatprep.mubr.bf16.mxu0 0
        %2318 = vmatmul.mubr.bf16.gmra.mrb[0].mxu0 %v2169
        %v2319 = vpop.f32.mrb[0].mxu0
        %v2320 = vadd.f32 0.0, %v2319
        %v2321 = vpop.f32.mrb[0].mxu0
        %v2322 = vadd.f32 0.0, %v2321
        %v2323 = vpop.f32.mrb[0].mxu0
        %v2324 = vadd.f32 0.0, %v2323
        %v2325 = vpop.f32.mrb[0].mxu0
        %v2326 = vadd.f32 0.0, %v2325
        %2327 = vmatprep.mubr.bf16.mxu0 0
        %2328 = vmatmul.mubr.bf16.gmra.mrb[0].mxu0 %v2172
        %v2329 = vpop.f32.mrb[0].mxu0
        %v2330 = vadd.f32 0.0, %v2329
        %v2331 = vpop.f32.mrb[0].mxu0
        %v2332 = vadd.f32 0.0, %v2331
        %v2333 = vpop.f32.mrb[0].mxu0
        %v2334 = vadd.f32 0.0, %v2333
        %v2335 = vpop.f32.mrb[0].mxu0
        %v2336 = vadd.f32 0.0, %v2335
        %2337 = vmatprep.mubr.bf16.mxu0 0
        %2338 = vmatmul.mubr.bf16.gmra.mrb[0].mxu0 %v2175
        %v2339 = vpop.f32.mrb[0].mxu0
        %v2340 = vadd.f32 0.0, %v2339
        %v2341 = vpop.f32.mrb[0].mxu0
        %v2342 = vadd.f32 0.0, %v2341
        %v2343 = vpop.f32.mrb[0].mxu0
        %v2344 = vadd.f32 0.0, %v2343
        %v2345 = vpop.f32.mrb[0].mxu0
        %v2346 = vadd.f32 0.0, %v2345
        %2347 = vmatprep.mubr.bf16.mxu0 0
        %2348 = vmatmul.mubr.bf16.gmra.mrb[0].mxu0 %v2178
        %v2349 = vpop.f32.mrb[0].mxu0
        %v2350 = vadd.f32 0.0, %v2349
        %v2351 = vpop.f32.mrb[0].mxu0
        %v2352 = vadd.f32 0.0, %v2351
        %v2353 = vpop.f32.mrb[0].mxu0
        %v2354 = vadd.f32 0.0, %v2353
        %v2355 = vpop.f32.mrb[0].mxu0
        %v2356 = vadd.f32 0.0, %v2355
        %2357 = vmatprep.mubr.bf16.mxu0 0
        %2358 = vmatmul.mubr.bf16.gmra.mrb[0].mxu0 %v2181
        %v2359 = vpop.f32.mrb[0].mxu0
        %v2360 = vadd.f32 0.0, %v2359
        %v2361 = vpop.f32.mrb[0].mxu0
        %v2362 = vadd.f32 0.0, %v2361
        %v2363 = vpop.f32.mrb[0].mxu0
        %v2364 = vadd.f32 0.0, %v2363
        %v2365 = vpop.f32.mrb[0].mxu0
        %v2366 = vadd.f32 0.0, %v2365
        %2367 = vmatprep.mubr.bf16.mxu0 0
        %2368 = vmatmul.mubr.bf16.gmra.mrb[0].mxu0 %v2184
        %v2369 = vpop.f32.mrb[0].mxu0
        %v2370 = vadd.f32 0.0, %v2369
        %v2371 = vpop.f32.mrb[0].mxu0
        %v2372 = vadd.f32 0.0, %v2371
        %v2373 = vpop.f32.mrb[0].mxu0
        %v2374 = vadd.f32 0.0, %v2373
        %v2375 = vpop.f32.mrb[0].mxu0
        %v2376 = vadd.f32 0.0, %v2375
        %2377 = vmatprep.mubr.bf16.mxu0 0
        %2378 = vmatmul.mubr.bf16.gmra.mrb[0].mxu0 %v2187
        %v2379 = vpop.f32.mrb[0].mxu0
        %v2380 = vadd.f32 0.0, %v2379
        %v2381 = vpop.f32.mrb[0].mxu0
        %v2382 = vadd.f32 0.0, %v2381
        %v2383 = vpop.f32.mrb[0].mxu0
        %v2384 = vadd.f32 0.0, %v2383
        %v2385 = vpop.f32.mrb[0].mxu0
        %v2386 = vadd.f32 0.0, %v2385
        %2387 = vmatprep.mubr.bf16.mxu0 0
        %2388 = vmatmul.mubr.bf16.gmra.mrb[0].mxu0 %v2190
        %v2389 = vpop.f32.mrb[0].mxu0
        %v2390 = vadd.f32 0.0, %v2389
        %v2391 = vpop.f32.mrb[0].mxu0
        %v2392 = vadd.f32 0.0, %v2391
        %v2393 = vpop.f32.mrb[0].mxu0
        %v2394 = vadd.f32 0.0, %v2393
        %v2395 = vpop.f32.mrb[0].mxu0
        %v2396 = vadd.f32 0.0, %v2395
        %2397 = vmatprep.mubr.bf16.mxu0 0
        %2398 = vmatmul.mubr.bf16.gmra.mrb[0].mxu0 %v2193
        %v2399 = vpop.f32.mrb[0].mxu0
        %v2400 = vadd.f32 0.0, %v2399
        %v2401 = vpop.f32.mrb[0].mxu0
        %v2402 = vadd.f32 0.0, %v2401
        %v2403 = vpop.f32.mrb[0].mxu0
        %v2404 = vadd.f32 0.0, %v2403
        %v2405 = vpop.f32.mrb[0].mxu0
        %v2406 = vadd.f32 0.0, %v2405
        %2407 = vmatprep.mubr.bf16.mxu0 0
        %2408 = vmatmul.mubr.bf16.gmra.mrb[0].mxu0 %v2196
        %v2409 = vpop.f32.mrb[0].mxu0
        %v2410 = vadd.f32 0.0, %v2409
        %v2411 = vpop.f32.mrb[0].mxu0
        %v2412 = vadd.f32 0.0, %v2411
        %v2413 = vpop.f32.mrb[0].mxu0
        %v2414 = vadd.f32 0.0, %v2413
        %v2415 = vpop.f32.mrb[0].mxu0
        %v2416 = vadd.f32 0.0, %v2415
        %2417 = vmatprep.mubr.bf16.mxu0 0
        %2418 = vmatmul.mubr.bf16.gmra.mrb[0].mxu0 %v2199
        %v2419 = vpop.f32.mrb[0].mxu0
        %v2420 = vadd.f32 0.0, %v2419
        %v2421 = vpop.f32.mrb[0].mxu0
        %v2422 = vadd.f32 0.0, %v2421
        %v2423 = vpop.f32.mrb[0].mxu0
        %v2424 = vadd.f32 0.0, %v2423
        %v2425 = vpop.f32.mrb[0].mxu0
        %v2426 = vadd.f32 0.0, %v2425
        %2427 = vmatprep.mubr.bf16.mxu0 0
        %2428 = vmatmul.mubr.bf16.gmra.mrb[0].mxu0 %v2202
        %v2429 = vpop.f32.mrb[0].mxu0
        %v2430 = vadd.f32 0.0, %v2429
        %v2431 = vpop.f32.mrb[0].mxu0
        %v2432 = vadd.f32 0.0, %v2431
        %v2433 = vpop.f32.mrb[0].mxu0
        %v2434 = vadd.f32 0.0, %v2433
        %v2435 = vpop.f32.mrb[0].mxu0
        %v2436 = vadd.f32 0.0, %v2435
        %2437 = vmatprep.mubr.bf16.mxu0 0
        %2438 = vmatmul.mubr.bf16.gmra.mrb[0].mxu0 %v2205
        %v2439 = vpop.f32.mrb[0].mxu0
        %v2440 = vadd.f32 0.0, %v2439
        %v2441 = vpop.f32.mrb[0].mxu0
        %v2442 = vadd.f32 0.0, %v2441
        %v2443 = vpop.f32.mrb[0].mxu0
        %v2444 = vadd.f32 0.0, %v2443
        %v2445 = vpop.f32.mrb[0].mxu0
        %v2446 = vadd.f32 0.0, %v2445
        %2447 = vdwg.mxu0
        %v2448 = vmul.f32 %v2290, 0.125
        %v2449 = vmul.f32 %v2292, 0.125
        %v2450 = vmul.f32 %v2294, 0.125
        %v2451 = vmul.f32 %v2296, 0.125
        %v2452 = vmul.f32 %v2300, 0.125
        %v2453 = vmul.f32 %v2302, 0.125
        %v2454 = vmul.f32 %v2304, 0.125
        %v2455 = vmul.f32 %v2306, 0.125
        %v2456 = vmul.f32 %v2310, 0.125
        %v2457 = vmul.f32 %v2312, 0.125
        %v2458 = vmul.f32 %v2314, 0.125
        %v2459 = vmul.f32 %v2316, 0.125
        %v2460 = vmul.f32 %v2320, 0.125
        %v2461 = vmul.f32 %v2322, 0.125
        %v2462 = vmul.f32 %v2324, 0.125
        %v2463 = vmul.f32 %v2326, 0.125
        %v2464 = vmul.f32 %v2330, 0.125
        %v2465 = vmul.f32 %v2332, 0.125
        %v2466 = vmul.f32 %v2334, 0.125
        %v2467 = vmul.f32 %v2336, 0.125
        %v2468 = vmul.f32 %v2340, 0.125
        %v2469 = vmul.f32 %v2342, 0.125
        %v2470 = vmul.f32 %v2344, 0.125
        %v2471 = vmul.f32 %v2346, 0.125
        %v2472 = vmul.f32 %v2350, 0.125
        %v2473 = vmul.f32 %v2352, 0.125
        %v2474 = vmul.f32 %v2354, 0.125
        %v2475 = vmul.f32 %v2356, 0.125
        %v2476 = vmul.f32 %v2360, 0.125
        %v2477 = vmul.f32 %v2362, 0.125
        %v2478 = vmul.f32 %v2364, 0.125
        %v2479 = vmul.f32 %v2366, 0.125
        %v2480 = vmul.f32 %v2370, 0.125
        %v2481 = vmul.f32 %v2372, 0.125
        %v2482 = vmul.f32 %v2374, 0.125
        %v2483 = vmul.f32 %v2376, 0.125
        %v2484 = vmul.f32 %v2380, 0.125
        %v2485 = vmul.f32 %v2382, 0.125
        %v2486 = vmul.f32 %v2384, 0.125
        %v2487 = vmul.f32 %v2386, 0.125
        %v2488 = vmul.f32 %v2390, 0.125
        %v2489 = vmul.f32 %v2392, 0.125
        %v2490 = vmul.f32 %v2394, 0.125
        %v2491 = vmul.f32 %v2396, 0.125
        %v2492 = vmul.f32 %v2400, 0.125
        %v2493 = vmul.f32 %v2402, 0.125
        %v2494 = vmul.f32 %v2404, 0.125
        %v2495 = vmul.f32 %v2406, 0.125
        %v2496 = vmul.f32 %v2410, 0.125
        %v2497 = vmul.f32 %v2412, 0.125
        %v2498 = vmul.f32 %v2414, 0.125
        %v2499 = vmul.f32 %v2416, 0.125
        %v2500 = vmul.f32 %v2420, 0.125
        %v2501 = vmul.f32 %v2422, 0.125
        %v2502 = vmul.f32 %v2424, 0.125
        %v2503 = vmul.f32 %v2426, 0.125
        %v2504 = vmul.f32 %v2430, 0.125
        %v2505 = vmul.f32 %v2432, 0.125
        %v2506 = vmul.f32 %v2434, 0.125
        %v2507 = vmul.f32 %v2436, 0.125
        %v2508 = vmul.f32 %v2440, 0.125
        %v2509 = vmul.f32 %v2442, 0.125
        %v2510 = vmul.f32 %v2444, 0.125
        %v2511 = vmul.f32 %v2446, 0.125
        %v2512 = vadd.f32 %v2448, %v2094
        %v2513 = vadd.f32 %v2449, %v2095
        %v2514 = vadd.f32 %v2450, %v2096
        %v2515 = vadd.f32 %v2451, %v2097
        %v2516 = vadd.f32 %v2452, %v2098
        %v2517 = vadd.f32 %v2453, %v2099
        %v2518 = vadd.f32 %v2454, %v2100
        %v2519 = vadd.f32 %v2455, %v2101
        %v2520 = vadd.f32 %v2456, %v2102
        %v2521 = vadd.f32 %v2457, %v2103
        %v2522 = vadd.f32 %v2458, %v2104
        %v2523 = vadd.f32 %v2459, %v2105
        %v2524 = vadd.f32 %v2460, %v2106
        %v2525 = vadd.f32 %v2461, %v2107
        %v2526 = vadd.f32 %v2462, %v2108
        %v2527 = vadd.f32 %v2463, %v2109
        %v2528 = vadd.f32 %v2464, %v2110
        %v2529 = vadd.f32 %v2465, %v2111
        %v2530 = vadd.f32 %v2466, %v2112
        %v2531 = vadd.f32 %v2467, %v2113
        %v2532 = vadd.f32 %v2468, %v2114
        %v2533 = vadd.f32 %v2469, %v2115
        %v2534 = vadd.f32 %v2470, %v2116
        %v2535 = vadd.f32 %v2471, %v2117
        %v2536 = vadd.f32 %v2472, %v2118
        %v2537 = vadd.f32 %v2473, %v2119
        %v2538 = vadd.f32 %v2474, %v2120
        %v2539 = vadd.f32 %v2475, %v2121
        %v2540 = vadd.f32 %v2476, %v2122
        %v2541 = vadd.f32 %v2477, %v2123
        %v2542 = vadd.f32 %v2478, %v2124
        %v2543 = vadd.f32 %v2479, %v2125
        %v2544 = vadd.f32 %v2480, %v2126
        %v2545 = vadd.f32 %v2481, %v2127
        %v2546 = vadd.f32 %v2482, %v2128
        %v2547 = vadd.f32 %v2483, %v2129
        %v2548 = vadd.f32 %v2484, %v2130
        %v2549 = vadd.f32 %v2485, %v2131
        %v2550 = vadd.f32 %v2486, %v2132
        %v2551 = vadd.f32 %v2487, %v2133
        %v2552 = vadd.f32 %v2488, %v2134
        %v2553 = vadd.f32 %v2489, %v2135
        %v2554 = vadd.f32 %v2490, %v2136
        %v2555 = vadd.f32 %v2491, %v2137
        %v2556 = vadd.f32 %v2492, %v2138
        %v2557 = vadd.f32 %v2493, %v2139
        %v2558 = vadd.f32 %v2494, %v2140
        %v2559 = vadd.f32 %v2495, %v2141
        %v2560 = vadd.f32 %v2496, %v2142
        %v2561 = vadd.f32 %v2497, %v2143
        %v2562 = vadd.f32 %v2498, %v2144
        %v2563 = vadd.f32 %v2499, %v2145
        %v2564 = vadd.f32 %v2500, %v2146
        %v2565 = vadd.f32 %v2501, %v2147
        %v2566 = vadd.f32 %v2502, %v2148
        %v2567 = vadd.f32 %v2503, %v2149
        %v2568 = vadd.f32 %v2504, %v2150
        %v2569 = vadd.f32 %v2505, %v2151
        %v2570 = vadd.f32 %v2506, %v2152
        %v2571 = vadd.f32 %v2507, %v2153
        %v2572 = vadd.f32 %v2508, %v2154
        %v2573 = vadd.f32 %v2509, %v2155
        %v2574 = vadd.f32 %v2510, %v2156
        %v2575 = vadd.f32 %v2511, %v2157
        %2592 = vrot.lane.b32.xlu0 %v1962, 64
        %v2593 = vpop.permute.xlu0 %2592
        %2594 = vrot.lane.b32.xlu0 %v1963, 64
        %v2595 = vpop.permute.xlu0 %2594
        %2596 = vrot.lane.b32.xlu0 %v1964, 64
        %v2597 = vpop.permute.xlu0 %2596
        %2598 = vrot.lane.b32.xlu0 %v1965, 64
        %v2599 = vpop.permute.xlu0 %2598
        %2600 = vrot.lane.b32.xlu0 %v1966, 64
        %v2601 = vpop.permute.xlu0 %2600
        %2602 = vrot.lane.b32.xlu0 %v1967, 64
        %v2603 = vpop.permute.xlu0 %2602
        %2604 = vrot.lane.b32.xlu0 %v1968, 64
        %v2605 = vpop.permute.xlu0 %2604
        %2606 = vrot.lane.b32.xlu0 %v1969, 64
        %v2607 = vpop.permute.xlu0 %2606
        %2608 = vrot.lane.b32.xlu0 %v1970, 64
        %v2609 = vpop.permute.xlu0 %2608
        %2610 = vrot.lane.b32.xlu0 %v1971, 64
        %v2611 = vpop.permute.xlu0 %2610
        %2612 = vrot.lane.b32.xlu0 %v1972, 64
        %v2613 = vpop.permute.xlu0 %2612
        %2614 = vrot.lane.b32.xlu0 %v1973, 64
        %v2615 = vpop.permute.xlu0 %2614
        %2616 = vrot.lane.b32.xlu0 %v1974, 64
        %v2617 = vpop.permute.xlu0 %2616
        %2618 = vrot.lane.b32.xlu0 %v1975, 64
        %v2619 = vpop.permute.xlu0 %2618
        %2620 = vrot.lane.b32.xlu0 %v1976, 64
        %v2621 = vpop.permute.xlu0 %2620
        %2622 = vrot.lane.b32.xlu0 %v1977, 64
        %v2623 = vpop.permute.xlu0 %2622
        %2640 = vrot.lane.b32.xlu0 %v1978, 64
        %v2641 = vpop.permute.xlu0 %2640
        %2642 = vrot.lane.b32.xlu0 %v1979, 64
        %v2643 = vpop.permute.xlu0 %2642
        %2644 = vrot.lane.b32.xlu0 %v1980, 64
        %v2645 = vpop.permute.xlu0 %2644
        %2646 = vrot.lane.b32.xlu0 %v1981, 64
        %v2647 = vpop.permute.xlu0 %2646
        %2648 = vrot.lane.b32.xlu0 %v1982, 64
        %v2649 = vpop.permute.xlu0 %2648
        %2650 = vrot.lane.b32.xlu0 %v1983, 64
        %v2651 = vpop.permute.xlu0 %2650
        %2652 = vrot.lane.b32.xlu0 %v1984, 64
        %v2653 = vpop.permute.xlu0 %2652
        %2654 = vrot.lane.b32.xlu0 %v1985, 64
        %v2655 = vpop.permute.xlu0 %2654
        %2656 = vrot.lane.b32.xlu0 %v1986, 64
        %v2657 = vpop.permute.xlu0 %2656
        %2658 = vrot.lane.b32.xlu0 %v1987, 64
        %v2659 = vpop.permute.xlu0 %2658
        %2660 = vrot.lane.b32.xlu0 %v1988, 64
        %v2661 = vpop.permute.xlu0 %2660
        %2662 = vrot.lane.b32.xlu0 %v1989, 64
        %v2663 = vpop.permute.xlu0 %2662
        %2664 = vrot.lane.b32.xlu0 %v1990, 64
        %v2665 = vpop.permute.xlu0 %2664
        %2666 = vrot.lane.b32.xlu0 %v1991, 64
        %v2667 = vpop.permute.xlu0 %2666
        %2668 = vrot.lane.b32.xlu0 %v1992, 64
        %v2669 = vpop.permute.xlu0 %2668
        %2670 = vrot.lane.b32.xlu0 %v1993, 64
        %v2671 = vpop.permute.xlu0 %2670
        %v2673 = vsel %vm2158, %v2593, 0
        %v2676 = vsel %vm2158, %v2595, 0
        %v2679 = vsel %vm2158, %v2597, 0
        %v2682 = vsel %vm2158, %v2599, 0
        %v2685 = vsel %vm2158, %v2601, 0
        %v2688 = vsel %vm2158, %v2603, 0
        %v2691 = vsel %vm2158, %v2605, 0
        %v2694 = vsel %vm2158, %v2607, 0
        %v2697 = vsel %vm2158, %v2609, 0
        %v2700 = vsel %vm2158, %v2611, 0
        %v2703 = vsel %vm2158, %v2613, 0
        %v2706 = vsel %vm2158, %v2615, 0
        %v2709 = vsel %vm2158, %v2617, 0
        %v2712 = vsel %vm2158, %v2619, 0
        %v2715 = vsel %vm2158, %v2621, 0
        %v2718 = vsel %vm2158, %v2623, 0
        %v2721 = vsel %vm2158, %v2641, 0
        %v2724 = vsel %vm2158, %v2643, 0
        %v2727 = vsel %vm2158, %v2645, 0
        %v2730 = vsel %vm2158, %v2647, 0
        %v2733 = vsel %vm2158, %v2649, 0
        %v2736 = vsel %vm2158, %v2651, 0
        %v2739 = vsel %vm2158, %v2653, 0
        %v2742 = vsel %vm2158, %v2655, 0
        %v2745 = vsel %vm2158, %v2657, 0
        %v2748 = vsel %vm2158, %v2659, 0
        %v2751 = vsel %vm2158, %v2661, 0
        %v2754 = vsel %vm2158, %v2663, 0
        %v2757 = vsel %vm2158, %v2665, 0
        %v2760 = vsel %vm2158, %v2667, 0
        %v2763 = vsel %vm2158, %v2669, 0
        %v2766 = vsel %vm2158, %v2671, 0
        %2768 = vmatprep.subr.bf16.mxu0 0
        %2769 = vmatpush1.bf16.xpose.msra.mxu0 %v2721
        %2770 = vmatprep.subr.bf16.mxu0 0
        %2771 = vmatpush1.bf16.xpose.msra.mxu0 %v2724
        %2772 = vmatprep.subr.bf16.mxu0 0
        %2773 = vmatpush1.bf16.xpose.msra.mxu0 %v2727
        %2774 = vmatprep.subr.bf16.mxu0 0
        %2775 = vmatpush1.bf16.xpose.msra.mxu0 %v2730
        %2776 = vmatprep.subr.bf16.mxu0 0
        %2777 = vmatpush1.bf16.xpose.msra.mxu0 %v2733
        %2778 = vmatprep.subr.bf16.mxu0 0
        %2779 = vmatpush1.bf16.xpose.msra.mxu0 %v2736
        %2780 = vmatprep.subr.bf16.mxu0 0
        %2781 = vmatpush1.bf16.xpose.msra.mxu0 %v2739
        %2782 = vmatprep.subr.bf16.mxu0 0
        %2783 = vmatpush1.bf16.xpose.msra.mxu0 %v2742
        %2784 = vmatprep.subr.bf16.mxu0 0
        %2785 = vmatpush1.bf16.xpose.msra.mxu0 %v2745
        %2786 = vmatprep.subr.bf16.mxu0 0
        %2787 = vmatpush1.bf16.xpose.msra.mxu0 %v2748
        %2788 = vmatprep.subr.bf16.mxu0 0
        %2789 = vmatpush1.bf16.xpose.msra.mxu0 %v2751
        %2790 = vmatprep.subr.bf16.mxu0 0
        %2791 = vmatpush1.bf16.xpose.msra.mxu0 %v2754
        %2792 = vmatprep.subr.bf16.mxu0 0
        %2793 = vmatpush1.bf16.xpose.msra.mxu0 %v2757
        %2794 = vmatprep.subr.bf16.mxu0 0
        %2795 = vmatpush1.bf16.xpose.msra.mxu0 %v2760
        %2796 = vmatprep.subr.bf16.mxu0 0
        %2797 = vmatpush1.bf16.xpose.msra.mxu0 %v2763
        %2798 = vmatprep.subr.bf16.mxu0 0
        %2799 = vmatpush1.bf16.xpose.msra.mxu0 %v2766
        %2800 = vmatprep.mubr.bf16.mxu0 0
        %2801 = vmatmul.mubr.bf16.gmra.mrb[0].mxu0 %v2673
        %v2802 = vpop.f32.mrb[0].mxu0
        %v2803 = vadd.f32 0.0, %v2802
        %v2804 = vpop.f32.mrb[0].mxu0
        %v2805 = vadd.f32 0.0, %v2804
        %v2806 = vpop.f32.mrb[0].mxu0
        %v2807 = vadd.f32 0.0, %v2806
        %v2808 = vpop.f32.mrb[0].mxu0
        %v2809 = vadd.f32 0.0, %v2808
        %2810 = vmatprep.mubr.bf16.mxu0 0
        %2811 = vmatmul.mubr.bf16.gmra.mrb[0].mxu0 %v2676
        %v2812 = vpop.f32.mrb[0].mxu0
        %v2813 = vadd.f32 0.0, %v2812
        %v2814 = vpop.f32.mrb[0].mxu0
        %v2815 = vadd.f32 0.0, %v2814
        %v2816 = vpop.f32.mrb[0].mxu0
        %v2817 = vadd.f32 0.0, %v2816
        %v2818 = vpop.f32.mrb[0].mxu0
        %v2819 = vadd.f32 0.0, %v2818
        %2820 = vmatprep.mubr.bf16.mxu0 0
        %2821 = vmatmul.mubr.bf16.gmra.mrb[0].mxu0 %v2679
        %v2822 = vpop.f32.mrb[0].mxu0
        %v2823 = vadd.f32 0.0, %v2822
        %v2824 = vpop.f32.mrb[0].mxu0
        %v2825 = vadd.f32 0.0, %v2824
        %v2826 = vpop.f32.mrb[0].mxu0
        %v2827 = vadd.f32 0.0, %v2826
        %v2828 = vpop.f32.mrb[0].mxu0
        %v2829 = vadd.f32 0.0, %v2828
        %2830 = vmatprep.mubr.bf16.mxu0 0
        %2831 = vmatmul.mubr.bf16.gmra.mrb[0].mxu0 %v2682
        %v2832 = vpop.f32.mrb[0].mxu0
        %v2833 = vadd.f32 0.0, %v2832
        %v2834 = vpop.f32.mrb[0].mxu0
        %v2835 = vadd.f32 0.0, %v2834
        %v2836 = vpop.f32.mrb[0].mxu0
        %v2837 = vadd.f32 0.0, %v2836
        %v2838 = vpop.f32.mrb[0].mxu0
        %v2839 = vadd.f32 0.0, %v2838
        %2840 = vmatprep.mubr.bf16.mxu0 0
        %2841 = vmatmul.mubr.bf16.gmra.mrb[0].mxu0 %v2685
        %v2842 = vpop.f32.mrb[0].mxu0
        %v2843 = vadd.f32 0.0, %v2842
        %v2844 = vpop.f32.mrb[0].mxu0
        %v2845 = vadd.f32 0.0, %v2844
        %v2846 = vpop.f32.mrb[0].mxu0
        %v2847 = vadd.f32 0.0, %v2846
        %v2848 = vpop.f32.mrb[0].mxu0
        %v2849 = vadd.f32 0.0, %v2848
        %2850 = vmatprep.mubr.bf16.mxu0 0
        %2851 = vmatmul.mubr.bf16.gmra.mrb[0].mxu0 %v2688
        %v2852 = vpop.f32.mrb[0].mxu0
        %v2853 = vadd.f32 0.0, %v2852
        %v2854 = vpop.f32.mrb[0].mxu0
        %v2855 = vadd.f32 0.0, %v2854
        %v2856 = vpop.f32.mrb[0].mxu0
        %v2857 = vadd.f32 0.0, %v2856
        %v2858 = vpop.f32.mrb[0].mxu0
        %v2859 = vadd.f32 0.0, %v2858
        %2860 = vmatprep.mubr.bf16.mxu0 0
        %2861 = vmatmul.mubr.bf16.gmra.mrb[0].mxu0 %v2691
        %v2862 = vpop.f32.mrb[0].mxu0
        %v2863 = vadd.f32 0.0, %v2862
        %v2864 = vpop.f32.mrb[0].mxu0
        %v2865 = vadd.f32 0.0, %v2864
        %v2866 = vpop.f32.mrb[0].mxu0
        %v2867 = vadd.f32 0.0, %v2866
        %v2868 = vpop.f32.mrb[0].mxu0
        %v2869 = vadd.f32 0.0, %v2868
        %2870 = vmatprep.mubr.bf16.mxu0 0
        %2871 = vmatmul.mubr.bf16.gmra.mrb[0].mxu0 %v2694
        %v2872 = vpop.f32.mrb[0].mxu0
        %v2873 = vadd.f32 0.0, %v2872
        %v2874 = vpop.f32.mrb[0].mxu0
        %v2875 = vadd.f32 0.0, %v2874
        %v2876 = vpop.f32.mrb[0].mxu0
        %v2877 = vadd.f32 0.0, %v2876
        %v2878 = vpop.f32.mrb[0].mxu0
        %v2879 = vadd.f32 0.0, %v2878
        %2880 = vmatprep.mubr.bf16.mxu0 0
        %2881 = vmatmul.mubr.bf16.gmra.mrb[0].mxu0 %v2697
        %v2882 = vpop.f32.mrb[0].mxu0
        %v2883 = vadd.f32 0.0, %v2882
        %v2884 = vpop.f32.mrb[0].mxu0
        %v2885 = vadd.f32 0.0, %v2884
        %v2886 = vpop.f32.mrb[0].mxu0
        %v2887 = vadd.f32 0.0, %v2886
        %v2888 = vpop.f32.mrb[0].mxu0
        %v2889 = vadd.f32 0.0, %v2888
        %2890 = vmatprep.mubr.bf16.mxu0 0
        %2891 = vmatmul.mubr.bf16.gmra.mrb[0].mxu0 %v2700
        %v2892 = vpop.f32.mrb[0].mxu0
        %v2893 = vadd.f32 0.0, %v2892
        %v2894 = vpop.f32.mrb[0].mxu0
        %v2895 = vadd.f32 0.0, %v2894
        %v2896 = vpop.f32.mrb[0].mxu0
        %v2897 = vadd.f32 0.0, %v2896
        %v2898 = vpop.f32.mrb[0].mxu0
        %v2899 = vadd.f32 0.0, %v2898
        %2900 = vmatprep.mubr.bf16.mxu0 0
        %2901 = vmatmul.mubr.bf16.gmra.mrb[0].mxu0 %v2703
        %v2902 = vpop.f32.mrb[0].mxu0
        %v2903 = vadd.f32 0.0, %v2902
        %v2904 = vpop.f32.mrb[0].mxu0
        %v2905 = vadd.f32 0.0, %v2904
        %v2906 = vpop.f32.mrb[0].mxu0
        %v2907 = vadd.f32 0.0, %v2906
        %v2908 = vpop.f32.mrb[0].mxu0
        %v2909 = vadd.f32 0.0, %v2908
        %2910 = vmatprep.mubr.bf16.mxu0 0
        %2911 = vmatmul.mubr.bf16.gmra.mrb[0].mxu0 %v2706
        %v2912 = vpop.f32.mrb[0].mxu0
        %v2913 = vadd.f32 0.0, %v2912
        %v2914 = vpop.f32.mrb[0].mxu0
        %v2915 = vadd.f32 0.0, %v2914
        %v2916 = vpop.f32.mrb[0].mxu0
        %v2917 = vadd.f32 0.0, %v2916
        %v2918 = vpop.f32.mrb[0].mxu0
        %v2919 = vadd.f32 0.0, %v2918
        %2920 = vmatprep.mubr.bf16.mxu0 0
        %2921 = vmatmul.mubr.bf16.gmra.mrb[0].mxu0 %v2709
        %v2922 = vpop.f32.mrb[0].mxu0
        %v2923 = vadd.f32 0.0, %v2922
        %v2924 = vpop.f32.mrb[0].mxu0
        %v2925 = vadd.f32 0.0, %v2924
        %v2926 = vpop.f32.mrb[0].mxu0
        %v2927 = vadd.f32 0.0, %v2926
        %v2928 = vpop.f32.mrb[0].mxu0
        %v2929 = vadd.f32 0.0, %v2928
        %2930 = vmatprep.mubr.bf16.mxu0 0
        %2931 = vmatmul.mubr.bf16.gmra.mrb[0].mxu0 %v2712
        %v2932 = vpop.f32.mrb[0].mxu0
        %v2933 = vadd.f32 0.0, %v2932
        %v2934 = vpop.f32.mrb[0].mxu0
        %v2935 = vadd.f32 0.0, %v2934
        %v2936 = vpop.f32.mrb[0].mxu0
        %v2937 = vadd.f32 0.0, %v2936
        %v2938 = vpop.f32.mrb[0].mxu0
        %v2939 = vadd.f32 0.0, %v2938
        %2940 = vmatprep.mubr.bf16.mxu0 0
        %2941 = vmatmul.mubr.bf16.gmra.mrb[0].mxu0 %v2715
        %v2942 = vpop.f32.mrb[0].mxu0
        %v2943 = vadd.f32 0.0, %v2942
        %v2944 = vpop.f32.mrb[0].mxu0
        %v2945 = vadd.f32 0.0, %v2944
        %v2946 = vpop.f32.mrb[0].mxu0
        %v2947 = vadd.f32 0.0, %v2946
        %v2948 = vpop.f32.mrb[0].mxu0
        %v2949 = vadd.f32 0.0, %v2948
        %2950 = vmatprep.mubr.bf16.mxu0 0
        %2951 = vmatmul.mubr.bf16.gmra.mrb[0].mxu0 %v2718
        %v2952 = vpop.f32.mrb[0].mxu0
        %v2953 = vadd.f32 0.0, %v2952
        %v2954 = vpop.f32.mrb[0].mxu0
        %v2955 = vadd.f32 0.0, %v2954
        %v2956 = vpop.f32.mrb[0].mxu0
        %v2957 = vadd.f32 0.0, %v2956
        %v2958 = vpop.f32.mrb[0].mxu0
        %v2959 = vadd.f32 0.0, %v2958
        %2960 = vdwg.mxu0
        %v2961 = vmul.f32 %v2803, 0.125
        %v2962 = vmul.f32 %v2805, 0.125
        %v2963 = vmul.f32 %v2807, 0.125
        %v2964 = vmul.f32 %v2809, 0.125
        %v2965 = vmul.f32 %v2813, 0.125
        %v2966 = vmul.f32 %v2815, 0.125
        %v2967 = vmul.f32 %v2817, 0.125
        %v2968 = vmul.f32 %v2819, 0.125
        %v2969 = vmul.f32 %v2823, 0.125
        %v2970 = vmul.f32 %v2825, 0.125
        %v2971 = vmul.f32 %v2827, 0.125
        %v2972 = vmul.f32 %v2829, 0.125
        %v2973 = vmul.f32 %v2833, 0.125
        %v2974 = vmul.f32 %v2835, 0.125
        %v2975 = vmul.f32 %v2837, 0.125
        %v2976 = vmul.f32 %v2839, 0.125
        %v2977 = vmul.f32 %v2843, 0.125
        %v2978 = vmul.f32 %v2845, 0.125
        %v2979 = vmul.f32 %v2847, 0.125
        %v2980 = vmul.f32 %v2849, 0.125
        %v2981 = vmul.f32 %v2853, 0.125
        %v2982 = vmul.f32 %v2855, 0.125
        %v2983 = vmul.f32 %v2857, 0.125
        %v2984 = vmul.f32 %v2859, 0.125
        %v2985 = vmul.f32 %v2863, 0.125
        %v2986 = vmul.f32 %v2865, 0.125
        %v2987 = vmul.f32 %v2867, 0.125
        %v2988 = vmul.f32 %v2869, 0.125
        %v2989 = vmul.f32 %v2873, 0.125
        %v2990 = vmul.f32 %v2875, 0.125
        %v2991 = vmul.f32 %v2877, 0.125
        %v2992 = vmul.f32 %v2879, 0.125
        %v2993 = vmul.f32 %v2883, 0.125
        %v2994 = vmul.f32 %v2885, 0.125
        %v2995 = vmul.f32 %v2887, 0.125
        %v2996 = vmul.f32 %v2889, 0.125
        %v2997 = vmul.f32 %v2893, 0.125
        %v2998 = vmul.f32 %v2895, 0.125
        %v2999 = vmul.f32 %v2897, 0.125
        %v3000 = vmul.f32 %v2899, 0.125
        %v3001 = vmul.f32 %v2903, 0.125
        %v3002 = vmul.f32 %v2905, 0.125
        %v3003 = vmul.f32 %v2907, 0.125
        %v3004 = vmul.f32 %v2909, 0.125
        %v3005 = vmul.f32 %v2913, 0.125
        %v3006 = vmul.f32 %v2915, 0.125
        %v3007 = vmul.f32 %v2917, 0.125
        %v3008 = vmul.f32 %v2919, 0.125
        %v3009 = vmul.f32 %v2923, 0.125
        %v3010 = vmul.f32 %v2925, 0.125
        %v3011 = vmul.f32 %v2927, 0.125
        %v3012 = vmul.f32 %v2929, 0.125
        %v3013 = vmul.f32 %v2933, 0.125
        %v3014 = vmul.f32 %v2935, 0.125
        %v3015 = vmul.f32 %v2937, 0.125
        %v3016 = vmul.f32 %v2939, 0.125
        %v3017 = vmul.f32 %v2943, 0.125
        %v3018 = vmul.f32 %v2945, 0.125
        %v3019 = vmul.f32 %v2947, 0.125
        %v3020 = vmul.f32 %v2949, 0.125
        %v3021 = vmul.f32 %v2953, 0.125
        %v3022 = vmul.f32 %v2955, 0.125
        %v3023 = vmul.f32 %v2957, 0.125
        %v3024 = vmul.f32 %v2959, 0.125
        %v3025 = vadd.f32 %v2961, %v2094
        %v3026 = vadd.f32 %v2962, %v2095
        %v3027 = vadd.f32 %v2963, %v2096
        %v3028 = vadd.f32 %v2964, %v2097
        %v3029 = vadd.f32 %v2965, %v2098
        %v3030 = vadd.f32 %v2966, %v2099
        %v3031 = vadd.f32 %v2967, %v2100
        %v3032 = vadd.f32 %v2968, %v2101
        %v3033 = vadd.f32 %v2969, %v2102
        %v3034 = vadd.f32 %v2970, %v2103
        %v3035 = vadd.f32 %v2971, %v2104
        %v3036 = vadd.f32 %v2972, %v2105
        %v3037 = vadd.f32 %v2973, %v2106
        %v3038 = vadd.f32 %v2974, %v2107
        %v3039 = vadd.f32 %v2975, %v2108
        %v3040 = vadd.f32 %v2976, %v2109
        %v3041 = vadd.f32 %v2977, %v2110
        %v3042 = vadd.f32 %v2978, %v2111
        %v3043 = vadd.f32 %v2979, %v2112
        %v3044 = vadd.f32 %v2980, %v2113
        %v3045 = vadd.f32 %v2981, %v2114
        %v3046 = vadd.f32 %v2982, %v2115
        %v3047 = vadd.f32 %v2983, %v2116
        %v3048 = vadd.f32 %v2984, %v2117
        %v3049 = vadd.f32 %v2985, %v2118
        %v3050 = vadd.f32 %v2986, %v2119
        %v3051 = vadd.f32 %v2987, %v2120
        %v3052 = vadd.f32 %v2988, %v2121
        %v3053 = vadd.f32 %v2989, %v2122
        %v3054 = vadd.f32 %v2990, %v2123
        %v3055 = vadd.f32 %v2991, %v2124
        %v3056 = vadd.f32 %v2992, %v2125
        %v3057 = vadd.f32 %v2993, %v2126
        %v3058 = vadd.f32 %v2994, %v2127
        %v3059 = vadd.f32 %v2995, %v2128
        %v3060 = vadd.f32 %v2996, %v2129
        %v3061 = vadd.f32 %v2997, %v2130
        %v3062 = vadd.f32 %v2998, %v2131
        %v3063 = vadd.f32 %v2999, %v2132
        %v3064 = vadd.f32 %v3000, %v2133
        %v3065 = vadd.f32 %v3001, %v2134
        %v3066 = vadd.f32 %v3002, %v2135
        %v3067 = vadd.f32 %v3003, %v2136
        %v3068 = vadd.f32 %v3004, %v2137
        %v3069 = vadd.f32 %v3005, %v2138
        %v3070 = vadd.f32 %v3006, %v2139
        %v3071 = vadd.f32 %v3007, %v2140
        %v3072 = vadd.f32 %v3008, %v2141
        %v3073 = vadd.f32 %v3009, %v2142
        %v3074 = vadd.f32 %v3010, %v2143
        %v3075 = vadd.f32 %v3011, %v2144
        %v3076 = vadd.f32 %v3012, %v2145
        %v3077 = vadd.f32 %v3013, %v2146
        %v3078 = vadd.f32 %v3014, %v2147
        %v3079 = vadd.f32 %v3015, %v2148
        %v3080 = vadd.f32 %v3016, %v2149
        %v3081 = vadd.f32 %v3017, %v2150
        %v3082 = vadd.f32 %v3018, %v2151
        %v3083 = vadd.f32 %v3019, %v2152
        %v3084 = vadd.f32 %v3020, %v2153
        %v3085 = vadd.f32 %v3021, %v2154
        %v3086 = vadd.f32 %v3022, %v2155
        %v3087 = vadd.f32 %v3023, %v2156
        %v3088 = vadd.f32 %v3024, %v2157
        %s3089 = sld [smem:[#allocation3 + %s37]]
        %v3090 = vmax.f32 %v2512, %v2513
        %3091 = vmax.xlane.f32.xlu0 %v3090
        %v3092 = vpop.xlane.xlu0 %3091
        %v3093 = vmax.f32 %v2514, %v2515
        %3094 = vmax.xlane.f32.xlu0 %v3093
        %v3095 = vpop.xlane.xlu0 %3094
        %v3096 = vmax.f32 %v2516, %v2517
        %3097 = vmax.xlane.f32.xlu0 %v3096
        %v3098 = vpop.xlane.xlu0 %3097
        %v3099 = vmax.f32 %v2518, %v2519
        %3100 = vmax.xlane.f32.xlu0 %v3099
        %v3101 = vpop.xlane.xlu0 %3100
        %v3102 = vmax.f32 %v2520, %v2521
        %3103 = vmax.xlane.f32.xlu0 %v3102
        %v3104 = vpop.xlane.xlu0 %3103
        %v3105 = vmax.f32 %v2522, %v2523
        %3106 = vmax.xlane.f32.xlu0 %v3105
        %v3107 = vpop.xlane.xlu0 %3106
        %v3108 = vmax.f32 %v2524, %v2525
        %3109 = vmax.xlane.f32.xlu0 %v3108
        %v3110 = vpop.xlane.xlu0 %3109
        %v3111 = vmax.f32 %v2526, %v2527
        %3112 = vmax.xlane.f32.xlu0 %v3111
        %v3113 = vpop.xlane.xlu0 %3112
        %v3114 = vmax.f32 %v2528, %v2529
        %3115 = vmax.xlane.f32.xlu0 %v3114
        %v3116 = vpop.xlane.xlu0 %3115
        %v3117 = vmax.f32 %v2530, %v2531
        %3118 = vmax.xlane.f32.xlu0 %v3117
        %v3119 = vpop.xlane.xlu0 %3118
        %v3120 = vmax.f32 %v2532, %v2533
        %3121 = vmax.xlane.f32.xlu0 %v3120
        %v3122 = vpop.xlane.xlu0 %3121
        %v3123 = vmax.f32 %v2534, %v2535
        %3124 = vmax.xlane.f32.xlu0 %v3123
        %v3125 = vpop.xlane.xlu0 %3124
        %v3126 = vmax.f32 %v2536, %v2537
        %3127 = vmax.xlane.f32.xlu0 %v3126
        %v3128 = vpop.xlane.xlu0 %3127
        %v3129 = vmax.f32 %v2538, %v2539
        %3130 = vmax.xlane.f32.xlu0 %v3129
        %v3131 = vpop.xlane.xlu0 %3130
        %v3132 = vmax.f32 %v2540, %v2541
        %3133 = vmax.xlane.f32.xlu0 %v3132
        %v3134 = vpop.xlane.xlu0 %3133
        %v3135 = vmax.f32 %v2542, %v2543
        %3136 = vmax.xlane.f32.xlu0 %v3135
        %v3137 = vpop.xlane.xlu0 %3136
        %v3138 = vmax.f32 %v2544, %v2545
        %3139 = vmax.xlane.f32.xlu0 %v3138
        %v3140 = vpop.xlane.xlu0 %3139
        %v3141 = vmax.f32 %v2546, %v2547
        %3142 = vmax.xlane.f32.xlu0 %v3141
        %v3143 = vpop.xlane.xlu0 %3142
        %v3144 = vmax.f32 %v2548, %v2549
        %3145 = vmax.xlane.f32.xlu0 %v3144
        %v3146 = vpop.xlane.xlu0 %3145
        %v3147 = vmax.f32 %v2550, %v2551
        %3148 = vmax.xlane.f32.xlu0 %v3147
        %v3149 = vpop.xlane.xlu0 %3148
        %v3150 = vmax.f32 %v2552, %v2553
        %3151 = vmax.xlane.f32.xlu0 %v3150
        %v3152 = vpop.xlane.xlu0 %3151
        %v3153 = vmax.f32 %v2554, %v2555
        %3154 = vmax.xlane.f32.xlu0 %v3153
        %v3155 = vpop.xlane.xlu0 %3154
        %v3156 = vmax.f32 %v2556, %v2557
        %3157 = vmax.xlane.f32.xlu0 %v3156
        %v3158 = vpop.xlane.xlu0 %3157
        %v3159 = vmax.f32 %v2558, %v2559
        %3160 = vmax.xlane.f32.xlu0 %v3159
        %v3161 = vpop.xlane.xlu0 %3160
        %v3162 = vmax.f32 %v2560, %v2561
        %3163 = vmax.xlane.f32.xlu0 %v3162
        %v3164 = vpop.xlane.xlu0 %3163
        %v3165 = vmax.f32 %v2562, %v2563
        %3166 = vmax.xlane.f32.xlu0 %v3165
        %v3167 = vpop.xlane.xlu0 %3166
        %v3168 = vmax.f32 %v2564, %v2565
        %3169 = vmax.xlane.f32.xlu0 %v3168
        %v3170 = vpop.xlane.xlu0 %3169
        %v3171 = vmax.f32 %v2566, %v2567
        %3172 = vmax.xlane.f32.xlu0 %v3171
        %v3173 = vpop.xlane.xlu0 %3172
        %v3174 = vmax.f32 %v2568, %v2569
        %3175 = vmax.xlane.f32.xlu0 %v3174
        %v3176 = vpop.xlane.xlu0 %3175
        %v3177 = vmax.f32 %v2570, %v2571
        %3178 = vmax.xlane.f32.xlu0 %v3177
        %v3179 = vpop.xlane.xlu0 %3178
        %v3180 = vmax.f32 %v2572, %v2573
        %3181 = vmax.xlane.f32.xlu0 %v3180
        %v3182 = vpop.xlane.xlu0 %3181
        %v3183 = vmax.f32 %v2574, %v2575
        %3184 = vmax.xlane.f32.xlu0 %v3183
        %v3185 = vpop.xlane.xlu0 %3184
        %v3186 = vsub.f32 %v2512, %v3092
        %v3187 = vsub.f32 %v2513, %v3092
        %v3188 = vsub.f32 %v2514, %v3095
        %v3189 = vsub.f32 %v2515, %v3095
        %v3190 = vsub.f32 %v2516, %v3098
        %v3191 = vsub.f32 %v2517, %v3098
        %v3192 = vsub.f32 %v2518, %v3101
        %v3193 = vsub.f32 %v2519, %v3101
        %v3194 = vsub.f32 %v2520, %v3104
        %v3195 = vsub.f32 %v2521, %v3104
        %v3196 = vsub.f32 %v2522, %v3107
        %v3197 = vsub.f32 %v2523, %v3107
        %v3198 = vsub.f32 %v2524, %v3110
        %v3199 = vsub.f32 %v2525, %v3110
        %v3200 = vsub.f32 %v2526, %v3113
        %v3201 = vsub.f32 %v2527, %v3113
        %v3202 = vsub.f32 %v2528, %v3116
        %v3203 = vsub.f32 %v2529, %v3116
        %v3204 = vsub.f32 %v2530, %v3119
        %v3205 = vsub.f32 %v2531, %v3119
        %v3206 = vsub.f32 %v2532, %v3122
        %v3207 = vsub.f32 %v2533, %v3122
        %v3208 = vsub.f32 %v2534, %v3125
        %v3209 = vsub.f32 %v2535, %v3125
        %v3210 = vsub.f32 %v2536, %v3128
        %v3211 = vsub.f32 %v2537, %v3128
        %v3212 = vsub.f32 %v2538, %v3131
        %v3213 = vsub.f32 %v2539, %v3131
        %v3214 = vsub.f32 %v2540, %v3134
        %v3215 = vsub.f32 %v2541, %v3134
        %v3216 = vsub.f32 %v2542, %v3137
        %v3217 = vsub.f32 %v2543, %v3137
        %v3218 = vsub.f32 %v2544, %v3140
        %v3219 = vsub.f32 %v2545, %v3140
        %v3220 = vsub.f32 %v2546, %v3143
        %v3221 = vsub.f32 %v2547, %v3143
        %v3222 = vsub.f32 %v2548, %v3146
        %v3223 = vsub.f32 %v2549, %v3146
        %v3224 = vsub.f32 %v2550, %v3149
        %v3225 = vsub.f32 %v2551, %v3149
        %v3226 = vsub.f32 %v2552, %v3152
        %v3227 = vsub.f32 %v2553, %v3152
        %v3228 = vsub.f32 %v2554, %v3155
        %v3229 = vsub.f32 %v2555, %v3155
        %v3230 = vsub.f32 %v2556, %v3158
        %v3231 = vsub.f32 %v2557, %v3158
        %v3232 = vsub.f32 %v2558, %v3161
        %v3233 = vsub.f32 %v2559, %v3161
        %v3234 = vsub.f32 %v2560, %v3164
        %v3235 = vsub.f32 %v2561, %v3164
        %v3236 = vsub.f32 %v2562, %v3167
        %v3237 = vsub.f32 %v2563, %v3167
        %v3238 = vsub.f32 %v2564, %v3170
        %v3239 = vsub.f32 %v2565, %v3170
        %v3240 = vsub.f32 %v2566, %v3173
        %v3241 = vsub.f32 %v2567, %v3173
        %v3242 = vsub.f32 %v2568, %v3176
        %v3243 = vsub.f32 %v2569, %v3176
        %v3244 = vsub.f32 %v2570, %v3179
        %v3245 = vsub.f32 %v2571, %v3179
        %v3246 = vsub.f32 %v2572, %v3182
        %v3247 = vsub.f32 %v2573, %v3182
        %v3248 = vsub.f32 %v2574, %v3185
        %v3249 = vsub.f32 %v2575, %v3185
        %v3250 = vmul.f32 %v3186, 1.442695
        %v3251 = vpow.pop %v3250
        %v3252 = vmul.f32 %v3187, 1.442695
        %v3253 = vpow.pop %v3252
        %v3254 = vmul.f32 %v3188, 1.442695
        %v3255 = vpow.pop %v3254
        %v3256 = vmul.f32 %v3189, 1.442695
        %v3257 = vpow.pop %v3256
        %v3258 = vmul.f32 %v3190, 1.442695
        %v3259 = vpow.pop %v3258
        %v3260 = vmul.f32 %v3191, 1.442695
        %v3261 = vpow.pop %v3260
        %v3262 = vmul.f32 %v3192, 1.442695
        %v3263 = vpow.pop %v3262
        %v3264 = vmul.f32 %v3193, 1.442695
        %v3265 = vpow.pop %v3264
        %v3266 = vmul.f32 %v3194, 1.442695
        %v3267 = vpow.pop %v3266
        %v3268 = vmul.f32 %v3195, 1.442695
        %v3269 = vpow.pop %v3268
        %v3270 = vmul.f32 %v3196, 1.442695
        %v3271 = vpow.pop %v3270
        %v3272 = vmul.f32 %v3197, 1.442695
        %v3273 = vpow.pop %v3272
        %v3274 = vmul.f32 %v3198, 1.442695
        %v3275 = vpow.pop %v3274
        %v3276 = vmul.f32 %v3199, 1.442695
        %v3277 = vpow.pop %v3276
        %v3278 = vmul.f32 %v3200, 1.442695
        %v3279 = vpow.pop %v3278
        %v3280 = vmul.f32 %v3201, 1.442695
        %v3281 = vpow.pop %v3280
        %v3282 = vmul.f32 %v3202, 1.442695
        %v3283 = vpow.pop %v3282
        %v3284 = vmul.f32 %v3203, 1.442695
        %v3285 = vpow.pop %v3284
        %v3286 = vmul.f32 %v3204, 1.442695
        %v3287 = vpow.pop %v3286
        %v3288 = vmul.f32 %v3205, 1.442695
        %v3289 = vpow.pop %v3288
        %v3290 = vmul.f32 %v3206, 1.442695
        %v3291 = vpow.pop %v3290
        %v3292 = vmul.f32 %v3207, 1.442695
        %v3293 = vpow.pop %v3292
        %v3294 = vmul.f32 %v3208, 1.442695
        %v3295 = vpow.pop %v3294
        %v3296 = vmul.f32 %v3209, 1.442695
        %v3297 = vpow.pop %v3296
        %v3298 = vmul.f32 %v3210, 1.442695
        %v3299 = vpow.pop %v3298
        %v3300 = vmul.f32 %v3211, 1.442695
        %v3301 = vpow.pop %v3300
        %v3302 = vmul.f32 %v3212, 1.442695
        %v3303 = vpow.pop %v3302
        %v3304 = vmul.f32 %v3213, 1.442695
        %v3305 = vpow.pop %v3304
        %v3306 = vmul.f32 %v3214, 1.442695
        %v3307 = vpow.pop %v3306
        %v3308 = vmul.f32 %v3215, 1.442695
        %v3309 = vpow.pop %v3308
        %v3310 = vmul.f32 %v3216, 1.442695
        %v3311 = vpow.pop %v3310
        %v3312 = vmul.f32 %v3217, 1.442695
        %v3313 = vpow.pop %v3312
        %v3314 = vmul.f32 %v3218, 1.442695
        %v3315 = vpow.pop %v3314
        %v3316 = vmul.f32 %v3219, 1.442695
        %v3317 = vpow.pop %v3316
        %v3318 = vmul.f32 %v3220, 1.442695
        %v3319 = vpow.pop %v3318
        %v3320 = vmul.f32 %v3221, 1.442695
        %v3321 = vpow.pop %v3320
        %v3322 = vmul.f32 %v3222, 1.442695
        %v3323 = vpow.pop %v3322
        %v3324 = vmul.f32 %v3223, 1.442695
        %v3325 = vpow.pop %v3324
        %v3326 = vmul.f32 %v3224, 1.442695
        %v3327 = vpow.pop %v3326
        %v3328 = vmul.f32 %v3225, 1.442695
        %v3329 = vpow.pop %v3328
        %v3330 = vmul.f32 %v3226, 1.442695
        %v3331 = vpow.pop %v3330
        %v3332 = vmul.f32 %v3227, 1.442695
        %v3333 = vpow.pop %v3332
        %v3334 = vmul.f32 %v3228, 1.442695
        %v3335 = vpow.pop %v3334
        %v3336 = vmul.f32 %v3229, 1.442695
        %v3337 = vpow.pop %v3336
        %v3338 = vmul.f32 %v3230, 1.442695
        %v3339 = vpow.pop %v3338
        %v3340 = vmul.f32 %v3231, 1.442695
        %v3341 = vpow.pop %v3340
        %v3342 = vmul.f32 %v3232, 1.442695
        %v3343 = vpow.pop %v3342
        %v3344 = vmul.f32 %v3233, 1.442695
        %v3345 = vpow.pop %v3344
        %v3346 = vmul.f32 %v3234, 1.442695
        %v3347 = vpow.pop %v3346
        %v3348 = vmul.f32 %v3235, 1.442695
        %v3349 = vpow.pop %v3348
        %v3350 = vmul.f32 %v3236, 1.442695
        %v3351 = vpow.pop %v3350
        %v3352 = vmul.f32 %v3237, 1.442695
        %v3353 = vpow.pop %v3352
        %v3354 = vmul.f32 %v3238, 1.442695
        %v3355 = vpow.pop %v3354
        %v3356 = vmul.f32 %v3239, 1.442695
        %v3357 = vpow.pop %v3356
        %v3358 = vmul.f32 %v3240, 1.442695
        %v3359 = vpow.pop %v3358
        %v3360 = vmul.f32 %v3241, 1.442695
        %v3361 = vpow.pop %v3360
        %v3362 = vmul.f32 %v3242, 1.442695
        %v3363 = vpow.pop %v3362
        %v3364 = vmul.f32 %v3243, 1.442695
        %v3365 = vpow.pop %v3364
        %v3366 = vmul.f32 %v3244, 1.442695
        %v3367 = vpow.pop %v3366
        %v3368 = vmul.f32 %v3245, 1.442695
        %v3369 = vpow.pop %v3368
        %v3370 = vmul.f32 %v3246, 1.442695
        %v3371 = vpow.pop %v3370
        %v3372 = vmul.f32 %v3247, 1.442695
        %v3373 = vpow.pop %v3372
        %v3374 = vmul.f32 %v3248, 1.442695
        %v3375 = vpow.pop %v3374
        %v3376 = vmul.f32 %v3249, 1.442695
        %v3377 = vpow.pop %v3376
        %v3378 = vadd.f32 %v3251, %v3253
        %3379 = vadd.xlane.f32.xlu0 %v3378
        %v3380 = vpop.xlane.xlu0 %3379
        %v3381 = vadd.f32 %v3255, %v3257
        %3382 = vadd.xlane.f32.xlu0 %v3381
        %v3383 = vpop.xlane.xlu0 %3382
        %v3384 = vadd.f32 %v3259, %v3261
        %3385 = vadd.xlane.f32.xlu0 %v3384
        %v3386 = vpop.xlane.xlu0 %3385
        %v3387 = vadd.f32 %v3263, %v3265
        %3388 = vadd.xlane.f32.xlu0 %v3387
        %v3389 = vpop.xlane.xlu0 %3388
        %v3390 = vadd.f32 %v3267, %v3269
        %3391 = vadd.xlane.f32.xlu0 %v3390
        %v3392 = vpop.xlane.xlu0 %3391
        %v3393 = vadd.f32 %v3271, %v3273
        %3394 = vadd.xlane.f32.xlu0 %v3393
        %v3395 = vpop.xlane.xlu0 %3394
        %v3396 = vadd.f32 %v3275, %v3277
        %3397 = vadd.xlane.f32.xlu0 %v3396
        %v3398 = vpop.xlane.xlu0 %3397
        %v3399 = vadd.f32 %v3279, %v3281
        %3400 = vadd.xlane.f32.xlu0 %v3399
        %v3401 = vpop.xlane.xlu0 %3400
        %v3402 = vadd.f32 %v3283, %v3285
        %3403 = vadd.xlane.f32.xlu0 %v3402
        %v3404 = vpop.xlane.xlu0 %3403
        %v3405 = vadd.f32 %v3287, %v3289
        %3406 = vadd.xlane.f32.xlu0 %v3405
        %v3407 = vpop.xlane.xlu0 %3406
        %v3408 = vadd.f32 %v3291, %v3293
        %3409 = vadd.xlane.f32.xlu0 %v3408
        %v3410 = vpop.xlane.xlu0 %3409
        %v3411 = vadd.f32 %v3295, %v3297
        %3412 = vadd.xlane.f32.xlu0 %v3411
        %v3413 = vpop.xlane.xlu0 %3412
        %v3414 = vadd.f32 %v3299, %v3301
        %3415 = vadd.xlane.f32.xlu0 %v3414
        %v3416 = vpop.xlane.xlu0 %3415
        %v3417 = vadd.f32 %v3303, %v3305
        %3418 = vadd.xlane.f32.xlu0 %v3417
        %v3419 = vpop.xlane.xlu0 %3418
        %v3420 = vadd.f32 %v3307, %v3309
        %3421 = vadd.xlane.f32.xlu0 %v3420
        %v3422 = vpop.xlane.xlu0 %3421
        %v3423 = vadd.f32 %v3311, %v3313
        %3424 = vadd.xlane.f32.xlu0 %v3423
        %v3425 = vpop.xlane.xlu0 %3424
        %v3426 = vadd.f32 %v3315, %v3317
        %3427 = vadd.xlane.f32.xlu0 %v3426
        %v3428 = vpop.xlane.xlu0 %3427
        %v3429 = vadd.f32 %v3319, %v3321
        %3430 = vadd.xlane.f32.xlu0 %v3429
        %v3431 = vpop.xlane.xlu0 %3430
        %v3432 = vadd.f32 %v3323, %v3325
        %3433 = vadd.xlane.f32.xlu0 %v3432
        %v3434 = vpop.xlane.xlu0 %3433
        %v3435 = vadd.f32 %v3327, %v3329
        %3436 = vadd.xlane.f32.xlu0 %v3435
        %v3437 = vpop.xlane.xlu0 %3436
        %v3438 = vadd.f32 %v3331, %v3333
        %3439 = vadd.xlane.f32.xlu0 %v3438
        %v3440 = vpop.xlane.xlu0 %3439
        %v3441 = vadd.f32 %v3335, %v3337
        %3442 = vadd.xlane.f32.xlu0 %v3441
        %v3443 = vpop.xlane.xlu0 %3442
        %v3444 = vadd.f32 %v3339, %v3341
        %3445 = vadd.xlane.f32.xlu0 %v3444
        %v3446 = vpop.xlane.xlu0 %3445
        %v3447 = vadd.f32 %v3343, %v3345
        %3448 = vadd.xlane.f32.xlu0 %v3447
        %v3449 = vpop.xlane.xlu0 %3448
        %v3450 = vadd.f32 %v3347, %v3349
        %3451 = vadd.xlane.f32.xlu0 %v3450
        %v3452 = vpop.xlane.xlu0 %3451
        %v3453 = vadd.f32 %v3351, %v3353
        %3454 = vadd.xlane.f32.xlu0 %v3453
        %v3455 = vpop.xlane.xlu0 %3454
        %v3456 = vadd.f32 %v3355, %v3357
        %3457 = vadd.xlane.f32.xlu0 %v3456
        %v3458 = vpop.xlane.xlu0 %3457
        %v3459 = vadd.f32 %v3359, %v3361
        %3460 = vadd.xlane.f32.xlu0 %v3459
        %v3461 = vpop.xlane.xlu0 %3460
        %v3462 = vadd.f32 %v3363, %v3365
        %3463 = vadd.xlane.f32.xlu0 %v3462
        %v3464 = vpop.xlane.xlu0 %3463
        %v3465 = vadd.f32 %v3367, %v3369
        %3466 = vadd.xlane.f32.xlu0 %v3465
        %v3467 = vpop.xlane.xlu0 %3466
        %v3468 = vadd.f32 %v3371, %v3373
        %3469 = vadd.xlane.f32.xlu0 %v3468
        %v3470 = vpop.xlane.xlu0 %3469
        %v3471 = vadd.f32 %v3375, %v3377
        %3472 = vadd.xlane.f32.xlu0 %v3471
        %v3473 = vpop.xlane.xlu0 %3472
        %v3474 = vrcp.pop %v3380
        %v3475 = vrcp.pop %v3383
        %v3476 = vrcp.pop %v3386
        %v3477 = vrcp.pop %v3389
        %v3478 = vrcp.pop %v3392
        %v3479 = vrcp.pop %v3395
        %v3480 = vrcp.pop %v3398
        %v3481 = vrcp.pop %v3401
        %v3482 = vrcp.pop %v3404
        %v3483 = vrcp.pop %v3407
        %v3484 = vrcp.pop %v3410
        %v3485 = vrcp.pop %v3413
        %v3486 = vrcp.pop %v3416
        %v3487 = vrcp.pop %v3419
        %v3488 = vrcp.pop %v3422
        %v3489 = vrcp.pop %v3425
        %v3490 = vrcp.pop %v3428
        %v3491 = vrcp.pop %v3431
        %v3492 = vrcp.pop %v3434
        %v3493 = vrcp.pop %v3437
        %v3494 = vrcp.pop %v3440
        %v3495 = vrcp.pop %v3443
        %v3496 = vrcp.pop %v3446
        %v3497 = vrcp.pop %v3449
        %v3498 = vrcp.pop %v3452
        %v3499 = vrcp.pop %v3455
        %v3500 = vrcp.pop %v3458
        %v3501 = vrcp.pop %v3461
        %v3502 = vrcp.pop %v3464
        %v3503 = vrcp.pop %v3467
        %v3504 = vrcp.pop %v3470
        %v3505 = vrcp.pop %v3473
        %v3506 = vmul.f32 %v3251, %v3474
        %v3507 = vmul.f32 %v3253, %v3474
        %v3508 = vmul.f32 %v3255, %v3475
        %v3509 = vmul.f32 %v3257, %v3475
        %v3510 = vmul.f32 %v3259, %v3476
        %v3511 = vmul.f32 %v3261, %v3476
        %v3512 = vmul.f32 %v3263, %v3477
        %v3513 = vmul.f32 %v3265, %v3477
        %v3514 = vmul.f32 %v3267, %v3478
        %v3515 = vmul.f32 %v3269, %v3478
        %v3516 = vmul.f32 %v3271, %v3479
        %v3517 = vmul.f32 %v3273, %v3479
        %v3518 = vmul.f32 %v3275, %v3480
        %v3519 = vmul.f32 %v3277, %v3480
        %v3520 = vmul.f32 %v3279, %v3481
        %v3521 = vmul.f32 %v3281, %v3481
        %v3522 = vmul.f32 %v3283, %v3482
        %v3523 = vmul.f32 %v3285, %v3482
        %v3524 = vmul.f32 %v3287, %v3483
        %v3525 = vmul.f32 %v3289, %v3483
        %v3526 = vmul.f32 %v3291, %v3484
        %v3527 = vmul.f32 %v3293, %v3484
        %v3528 = vmul.f32 %v3295, %v3485
        %v3529 = vmul.f32 %v3297, %v3485
        %v3530 = vmul.f32 %v3299, %v3486
        %v3531 = vmul.f32 %v3301, %v3486
        %v3532 = vmul.f32 %v3303, %v3487
        %v3533 = vmul.f32 %v3305, %v3487
        %v3534 = vmul.f32 %v3307, %v3488
        %v3535 = vmul.f32 %v3309, %v3488
        %v3536 = vmul.f32 %v3311, %v3489
        %v3537 = vmul.f32 %v3313, %v3489
        %v3538 = vmul.f32 %v3315, %v3490
        %v3539 = vmul.f32 %v3317, %v3490
        %v3540 = vmul.f32 %v3319, %v3491
        %v3541 = vmul.f32 %v3321, %v3491
        %v3542 = vmul.f32 %v3323, %v3492
        %v3543 = vmul.f32 %v3325, %v3492
        %v3544 = vmul.f32 %v3327, %v3493
        %v3545 = vmul.f32 %v3329, %v3493
        %v3546 = vmul.f32 %v3331, %v3494
        %v3547 = vmul.f32 %v3333, %v3494
        %v3548 = vmul.f32 %v3335, %v3495
        %v3549 = vmul.f32 %v3337, %v3495
        %v3550 = vmul.f32 %v3339, %v3496
        %v3551 = vmul.f32 %v3341, %v3496
        %v3552 = vmul.f32 %v3343, %v3497
        %v3553 = vmul.f32 %v3345, %v3497
        %v3554 = vmul.f32 %v3347, %v3498
        %v3555 = vmul.f32 %v3349, %v3498
        %v3556 = vmul.f32 %v3351, %v3499
        %v3557 = vmul.f32 %v3353, %v3499
        %v3558 = vmul.f32 %v3355, %v3500
        %v3559 = vmul.f32 %v3357, %v3500
        %v3560 = vmul.f32 %v3359, %v3501
        %v3561 = vmul.f32 %v3361, %v3501
        %v3562 = vmul.f32 %v3363, %v3502
        %v3563 = vmul.f32 %v3365, %v3502
        %v3564 = vmul.f32 %v3367, %v3503
        %v3565 = vmul.f32 %v3369, %v3503
        %v3566 = vmul.f32 %v3371, %v3504
        %v3567 = vmul.f32 %v3373, %v3504
        %v3568 = vmul.f32 %v3375, %v3505
        %v3569 = vmul.f32 %v3377, %v3505
        %v3570 = vmax.f32 %v3025, %v3026
        %3571 = vmax.xlane.f32.xlu0 %v3570
        %v3572 = vpop.xlane.xlu0 %3571
        %v3573 = vmax.f32 %v3027, %v3028
        %3574 = vmax.xlane.f32.xlu0 %v3573
        %v3575 = vpop.xlane.xlu0 %3574
        %v3576 = vmax.f32 %v3029, %v3030
        %3577 = vmax.xlane.f32.xlu0 %v3576
        %v3578 = vpop.xlane.xlu0 %3577
        %v3579 = vmax.f32 %v3031, %v3032
        %3580 = vmax.xlane.f32.xlu0 %v3579
        %v3581 = vpop.xlane.xlu0 %3580
        %v3582 = vmax.f32 %v3033, %v3034
        %3583 = vmax.xlane.f32.xlu0 %v3582
        %v3584 = vpop.xlane.xlu0 %3583
        %v3585 = vmax.f32 %v3035, %v3036
        %3586 = vmax.xlane.f32.xlu0 %v3585
        %v3587 = vpop.xlane.xlu0 %3586
        %v3588 = vmax.f32 %v3037, %v3038
        %3589 = vmax.xlane.f32.xlu0 %v3588
        %v3590 = vpop.xlane.xlu0 %3589
        %v3591 = vmax.f32 %v3039, %v3040
        %3592 = vmax.xlane.f32.xlu0 %v3591
        %v3593 = vpop.xlane.xlu0 %3592
        %v3594 = vmax.f32 %v3041, %v3042
        %3595 = vmax.xlane.f32.xlu0 %v3594
        %v3596 = vpop.xlane.xlu0 %3595
        %v3597 = vmax.f32 %v3043, %v3044
        %3598 = vmax.xlane.f32.xlu0 %v3597
        %v3599 = vpop.xlane.xlu0 %3598
        %v3600 = vmax.f32 %v3045, %v3046
        %3601 = vmax.xlane.f32.xlu0 %v3600
        %v3602 = vpop.xlane.xlu0 %3601
        %v3603 = vmax.f32 %v3047, %v3048
        %3604 = vmax.xlane.f32.xlu0 %v3603
        %v3605 = vpop.xlane.xlu0 %3604
        %v3606 = vmax.f32 %v3049, %v3050
        %3607 = vmax.xlane.f32.xlu0 %v3606
        %v3608 = vpop.xlane.xlu0 %3607
        %v3609 = vmax.f32 %v3051, %v3052
        %3610 = vmax.xlane.f32.xlu0 %v3609
        %v3611 = vpop.xlane.xlu0 %3610
        %v3612 = vmax.f32 %v3053, %v3054
        %3613 = vmax.xlane.f32.xlu0 %v3612
        %v3614 = vpop.xlane.xlu0 %3613
        %v3615 = vmax.f32 %v3055, %v3056
        %3616 = vmax.xlane.f32.xlu0 %v3615
        %v3617 = vpop.xlane.xlu0 %3616
        %v3618 = vmax.f32 %v3057, %v3058
        %3619 = vmax.xlane.f32.xlu0 %v3618
        %v3620 = vpop.xlane.xlu0 %3619
        %v3621 = vmax.f32 %v3059, %v3060
        %3622 = vmax.xlane.f32.xlu0 %v3621
        %v3623 = vpop.xlane.xlu0 %3622
        %v3624 = vmax.f32 %v3061, %v3062
        %3625 = vmax.xlane.f32.xlu0 %v3624
        %v3626 = vpop.xlane.xlu0 %3625
        %v3627 = vmax.f32 %v3063, %v3064
        %3628 = vmax.xlane.f32.xlu0 %v3627
        %v3629 = vpop.xlane.xlu0 %3628
        %v3630 = vmax.f32 %v3065, %v3066
        %3631 = vmax.xlane.f32.xlu0 %v3630
        %v3632 = vpop.xlane.xlu0 %3631
        %v3633 = vmax.f32 %v3067, %v3068
        %3634 = vmax.xlane.f32.xlu0 %v3633
        %v3635 = vpop.xlane.xlu0 %3634
        %v3636 = vmax.f32 %v3069, %v3070
        %3637 = vmax.xlane.f32.xlu0 %v3636
        %v3638 = vpop.xlane.xlu0 %3637
        %v3639 = vmax.f32 %v3071, %v3072
        %3640 = vmax.xlane.f32.xlu0 %v3639
        %v3641 = vpop.xlane.xlu0 %3640
        %v3642 = vmax.f32 %v3073, %v3074
        %3643 = vmax.xlane.f32.xlu0 %v3642
        %v3644 = vpop.xlane.xlu0 %3643
        %v3645 = vmax.f32 %v3075, %v3076
        %3646 = vmax.xlane.f32.xlu0 %v3645
        %v3647 = vpop.xlane.xlu0 %3646
        %v3648 = vmax.f32 %v3077, %v3078
        %3649 = vmax.xlane.f32.xlu0 %v3648
        %v3650 = vpop.xlane.xlu0 %3649
        %v3651 = vmax.f32 %v3079, %v3080
        %3652 = vmax.xlane.f32.xlu0 %v3651
        %v3653 = vpop.xlane.xlu0 %3652
        %v3654 = vmax.f32 %v3081, %v3082
        %3655 = vmax.xlane.f32.xlu0 %v3654
        %v3656 = vpop.xlane.xlu0 %3655
        %v3657 = vmax.f32 %v3083, %v3084
        %3658 = vmax.xlane.f32.xlu0 %v3657
        %v3659 = vpop.xlane.xlu0 %3658
        %v3660 = vmax.f32 %v3085, %v3086
        %3661 = vmax.xlane.f32.xlu0 %v3660
        %v3662 = vpop.xlane.xlu0 %3661
        %v3663 = vmax.f32 %v3087, %v3088
        %3664 = vmax.xlane.f32.xlu0 %v3663
        %v3665 = vpop.xlane.xlu0 %3664
        %v3666 = vsub.f32 %v3025, %v3572
        %v3667 = vsub.f32 %v3026, %v3572
        %v3668 = vsub.f32 %v3027, %v3575
        %v3669 = vsub.f32 %v3028, %v3575
        %v3670 = vsub.f32 %v3029, %v3578
        %v3671 = vsub.f32 %v3030, %v3578
        %v3672 = vsub.f32 %v3031, %v3581
        %v3673 = vsub.f32 %v3032, %v3581
        %v3674 = vsub.f32 %v3033, %v3584
        %v3675 = vsub.f32 %v3034, %v3584
        %v3676 = vsub.f32 %v3035, %v3587
        %v3677 = vsub.f32 %v3036, %v3587
        %v3678 = vsub.f32 %v3037, %v3590
        %v3679 = vsub.f32 %v3038, %v3590
        %v3680 = vsub.f32 %v3039, %v3593
        %v3681 = vsub.f32 %v3040, %v3593
        %v3682 = vsub.f32 %v3041, %v3596
        %v3683 = vsub.f32 %v3042, %v3596
        %v3684 = vsub.f32 %v3043, %v3599
        %v3685 = vsub.f32 %v3044, %v3599
        %v3686 = vsub.f32 %v3045, %v3602
        %v3687 = vsub.f32 %v3046, %v3602
        %v3688 = vsub.f32 %v3047, %v3605
        %v3689 = vsub.f32 %v3048, %v3605
        %v3690 = vsub.f32 %v3049, %v3608
        %v3691 = vsub.f32 %v3050, %v3608
        %v3692 = vsub.f32 %v3051, %v3611
        %v3693 = vsub.f32 %v3052, %v3611
        %v3694 = vsub.f32 %v3053, %v3614
        %v3695 = vsub.f32 %v3054, %v3614
        %v3696 = vsub.f32 %v3055, %v3617
        %v3697 = vsub.f32 %v3056, %v3617
        %v3698 = vsub.f32 %v3057, %v3620
        %v3699 = vsub.f32 %v3058, %v3620
        %v3700 = vsub.f32 %v3059, %v3623
        %v3701 = vsub.f32 %v3060, %v3623
        %v3702 = vsub.f32 %v3061, %v3626
        %v3703 = vsub.f32 %v3062, %v3626
        %v3704 = vsub.f32 %v3063, %v3629
        %v3705 = vsub.f32 %v3064, %v3629
        %v3706 = vsub.f32 %v3065, %v3632
        %v3707 = vsub.f32 %v3066, %v3632
        %v3708 = vsub.f32 %v3067, %v3635
        %v3709 = vsub.f32 %v3068, %v3635
        %v3710 = vsub.f32 %v3069, %v3638
        %v3711 = vsub.f32 %v3070, %v3638
        %v3712 = vsub.f32 %v3071, %v3641
        %v3713 = vsub.f32 %v3072, %v3641
        %v3714 = vsub.f32 %v3073, %v3644
        %v3715 = vsub.f32 %v3074, %v3644
        %v3716 = vsub.f32 %v3075, %v3647
        %v3717 = vsub.f32 %v3076, %v3647
        %v3718 = vsub.f32 %v3077, %v3650
        %v3719 = vsub.f32 %v3078, %v3650
        %v3720 = vsub.f32 %v3079, %v3653
        %v3721 = vsub.f32 %v3080, %v3653
        %v3722 = vsub.f32 %v3081, %v3656
        %v3723 = vsub.f32 %v3082, %v3656
        %v3724 = vsub.f32 %v3083, %v3659
        %v3725 = vsub.f32 %v3084, %v3659
        %v3726 = vsub.f32 %v3085, %v3662
        %v3727 = vsub.f32 %v3086, %v3662
        %v3728 = vsub.f32 %v3087, %v3665
        %v3729 = vsub.f32 %v3088, %v3665
        %v3730 = vmul.f32 %v3666, 1.442695
        %v3731 = vpow.pop %v3730
        %v3732 = vmul.f32 %v3667, 1.442695
        %v3733 = vpow.pop %v3732
        %v3734 = vmul.f32 %v3668, 1.442695
        %v3735 = vpow.pop %v3734
        %v3736 = vmul.f32 %v3669, 1.442695
        %v3737 = vpow.pop %v3736
        %v3738 = vmul.f32 %v3670, 1.442695
        %v3739 = vpow.pop %v3738
        %v3740 = vmul.f32 %v3671, 1.442695
        %v3741 = vpow.pop %v3740
        %v3742 = vmul.f32 %v3672, 1.442695
        %v3743 = vpow.pop %v3742
        %v3744 = vmul.f32 %v3673, 1.442695
        %v3745 = vpow.pop %v3744
        %v3746 = vmul.f32 %v3674, 1.442695
        %v3747 = vpow.pop %v3746
        %v3748 = vmul.f32 %v3675, 1.442695
        %v3749 = vpow.pop %v3748
        %v3750 = vmul.f32 %v3676, 1.442695
        %v3751 = vpow.pop %v3750
        %v3752 = vmul.f32 %v3677, 1.442695
        %v3753 = vpow.pop %v3752
        %v3754 = vmul.f32 %v3678, 1.442695
        %v3755 = vpow.pop %v3754
        %v3756 = vmul.f32 %v3679, 1.442695
        %v3757 = vpow.pop %v3756
        %v3758 = vmul.f32 %v3680, 1.442695
        %v3759 = vpow.pop %v3758
        %v3760 = vmul.f32 %v3681, 1.442695
        %v3761 = vpow.pop %v3760
        %v3762 = vmul.f32 %v3682, 1.442695
        %v3763 = vpow.pop %v3762
        %v3764 = vmul.f32 %v3683, 1.442695
        %v3765 = vpow.pop %v3764
        %v3766 = vmul.f32 %v3684, 1.442695
        %v3767 = vpow.pop %v3766
        %v3768 = vmul.f32 %v3685, 1.442695
        %v3769 = vpow.pop %v3768
        %v3770 = vmul.f32 %v3686, 1.442695
        %v3771 = vpow.pop %v3770
        %v3772 = vmul.f32 %v3687, 1.442695
        %v3773 = vpow.pop %v3772
        %v3774 = vmul.f32 %v3688, 1.442695
        %v3775 = vpow.pop %v3774
        %v3776 = vmul.f32 %v3689, 1.442695
        %v3777 = vpow.pop %v3776
        %v3778 = vmul.f32 %v3690, 1.442695
        %v3779 = vpow.pop %v3778
        %v3780 = vmul.f32 %v3691, 1.442695
        %v3781 = vpow.pop %v3780
        %v3782 = vmul.f32 %v3692, 1.442695
        %v3783 = vpow.pop %v3782
        %v3784 = vmul.f32 %v3693, 1.442695
        %v3785 = vpow.pop %v3784
        %v3786 = vmul.f32 %v3694, 1.442695
        %v3787 = vpow.pop %v3786
        %v3788 = vmul.f32 %v3695, 1.442695
        %v3789 = vpow.pop %v3788
        %v3790 = vmul.f32 %v3696, 1.442695
        %v3791 = vpow.pop %v3790
        %v3792 = vmul.f32 %v3697, 1.442695
        %v3793 = vpow.pop %v3792
        %v3794 = vmul.f32 %v3698, 1.442695
        %v3795 = vpow.pop %v3794
        %v3796 = vmul.f32 %v3699, 1.442695
        %v3797 = vpow.pop %v3796
        %v3798 = vmul.f32 %v3700, 1.442695
        %v3799 = vpow.pop %v3798
        %v3800 = vmul.f32 %v3701, 1.442695
        %v3801 = vpow.pop %v3800
        %v3802 = vmul.f32 %v3702, 1.442695
        %v3803 = vpow.pop %v3802
        %v3804 = vmul.f32 %v3703, 1.442695
        %v3805 = vpow.pop %v3804
        %v3806 = vmul.f32 %v3704, 1.442695
        %v3807 = vpow.pop %v3806
        %v3808 = vmul.f32 %v3705, 1.442695
        %v3809 = vpow.pop %v3808
        %v3810 = vmul.f32 %v3706, 1.442695
        %v3811 = vpow.pop %v3810
        %v3812 = vmul.f32 %v3707, 1.442695
        %v3813 = vpow.pop %v3812
        %v3814 = vmul.f32 %v3708, 1.442695
        %v3815 = vpow.pop %v3814
        %v3816 = vmul.f32 %v3709, 1.442695
        %v3817 = vpow.pop %v3816
        %v3818 = vmul.f32 %v3710, 1.442695
        %v3819 = vpow.pop %v3818
        %v3820 = vmul.f32 %v3711, 1.442695
        %v3821 = vpow.pop %v3820
        %v3822 = vmul.f32 %v3712, 1.442695
        %v3823 = vpow.pop %v3822
        %v3824 = vmul.f32 %v3713, 1.442695
        %v3825 = vpow.pop %v3824
        %v3826 = vmul.f32 %v3714, 1.442695
        %v3827 = vpow.pop %v3826
        %v3828 = vmul.f32 %v3715, 1.442695
        %v3829 = vpow.pop %v3828
        %v3830 = vmul.f32 %v3716, 1.442695
        %v3831 = vpow.pop %v3830
        %v3832 = vmul.f32 %v3717, 1.442695
        %v3833 = vpow.pop %v3832
        %v3834 = vmul.f32 %v3718, 1.442695
        %v3835 = vpow.pop %v3834
        %v3836 = vmul.f32 %v3719, 1.442695
        %v3837 = vpow.pop %v3836
        %v3838 = vmul.f32 %v3720, 1.442695
        %v3839 = vpow.pop %v3838
        %v3840 = vmul.f32 %v3721, 1.442695
        %v3841 = vpow.pop %v3840
        %v3842 = vmul.f32 %v3722, 1.442695
        %v3843 = vpow.pop %v3842
        %v3844 = vmul.f32 %v3723, 1.442695
        %v3845 = vpow.pop %v3844
        %v3846 = vmul.f32 %v3724, 1.442695
        %v3847 = vpow.pop %v3846
        %v3848 = vmul.f32 %v3725, 1.442695
        %v3849 = vpow.pop %v3848
        %v3850 = vmul.f32 %v3726, 1.442695
        %v3851 = vpow.pop %v3850
        %v3852 = vmul.f32 %v3727, 1.442695
        %v3853 = vpow.pop %v3852
        %v3854 = vmul.f32 %v3728, 1.442695
        %v3855 = vpow.pop %v3854
        %v3856 = vmul.f32 %v3729, 1.442695
        %v3857 = vpow.pop %v3856
        %v3858 = vadd.f32 %v3731, %v3733
        %3859 = vadd.xlane.f32.xlu0 %v3858
        %v3860 = vpop.xlane.xlu0 %3859
        %v3861 = vadd.f32 %v3735, %v3737
        %3862 = vadd.xlane.f32.xlu0 %v3861
        %v3863 = vpop.xlane.xlu0 %3862
        %v3864 = vadd.f32 %v3739, %v3741
        %3865 = vadd.xlane.f32.xlu0 %v3864
        %v3866 = vpop.xlane.xlu0 %3865
        %v3867 = vadd.f32 %v3743, %v3745
        %3868 = vadd.xlane.f32.xlu0 %v3867
        %v3869 = vpop.xlane.xlu0 %3868
        %v3870 = vadd.f32 %v3747, %v3749
        %3871 = vadd.xlane.f32.xlu0 %v3870
        %v3872 = vpop.xlane.xlu0 %3871
        %v3873 = vadd.f32 %v3751, %v3753
        %3874 = vadd.xlane.f32.xlu0 %v3873
        %v3875 = vpop.xlane.xlu0 %3874
        %v3876 = vadd.f32 %v3755, %v3757
        %3877 = vadd.xlane.f32.xlu0 %v3876
        %v3878 = vpop.xlane.xlu0 %3877
        %v3879 = vadd.f32 %v3759, %v3761
        %3880 = vadd.xlane.f32.xlu0 %v3879
        %v3881 = vpop.xlane.xlu0 %3880
        %v3882 = vadd.f32 %v3763, %v3765
        %3883 = vadd.xlane.f32.xlu0 %v3882
        %v3884 = vpop.xlane.xlu0 %3883
        %v3885 = vadd.f32 %v3767, %v3769
        %3886 = vadd.xlane.f32.xlu0 %v3885
        %v3887 = vpop.xlane.xlu0 %3886
        %v3888 = vadd.f32 %v3771, %v3773
        %3889 = vadd.xlane.f32.xlu0 %v3888
        %v3890 = vpop.xlane.xlu0 %3889
        %v3891 = vadd.f32 %v3775, %v3777
        %3892 = vadd.xlane.f32.xlu0 %v3891
        %v3893 = vpop.xlane.xlu0 %3892
        %v3894 = vadd.f32 %v3779, %v3781
        %3895 = vadd.xlane.f32.xlu0 %v3894
        %v3896 = vpop.xlane.xlu0 %3895
        %v3897 = vadd.f32 %v3783, %v3785
        %3898 = vadd.xlane.f32.xlu0 %v3897
        %v3899 = vpop.xlane.xlu0 %3898
        %v3900 = vadd.f32 %v3787, %v3789
        %3901 = vadd.xlane.f32.xlu0 %v3900
        %v3902 = vpop.xlane.xlu0 %3901
        %v3903 = vadd.f32 %v3791, %v3793
        %3904 = vadd.xlane.f32.xlu0 %v3903
        %v3905 = vpop.xlane.xlu0 %3904
        %v3906 = vadd.f32 %v3795, %v3797
        %3907 = vadd.xlane.f32.xlu0 %v3906
        %v3908 = vpop.xlane.xlu0 %3907
        %v3909 = vadd.f32 %v3799, %v3801
        %3910 = vadd.xlane.f32.xlu0 %v3909
        %v3911 = vpop.xlane.xlu0 %3910
        %v3912 = vadd.f32 %v3803, %v3805
        %3913 = vadd.xlane.f32.xlu0 %v3912
        %v3914 = vpop.xlane.xlu0 %3913
        %v3915 = vadd.f32 %v3807, %v3809
        %3916 = vadd.xlane.f32.xlu0 %v3915
        %v3917 = vpop.xlane.xlu0 %3916
        %v3918 = vadd.f32 %v3811, %v3813
        %3919 = vadd.xlane.f32.xlu0 %v3918
        %v3920 = vpop.xlane.xlu0 %3919
        %v3921 = vadd.f32 %v3815, %v3817
        %3922 = vadd.xlane.f32.xlu0 %v3921
        %v3923 = vpop.xlane.xlu0 %3922
        %v3924 = vadd.f32 %v3819, %v3821
        %3925 = vadd.xlane.f32.xlu0 %v3924
        %v3926 = vpop.xlane.xlu0 %3925
        %v3927 = vadd.f32 %v3823, %v3825
        %3928 = vadd.xlane.f32.xlu0 %v3927
        %v3929 = vpop.xlane.xlu0 %3928
        %v3930 = vadd.f32 %v3827, %v3829
        %3931 = vadd.xlane.f32.xlu0 %v3930
        %v3932 = vpop.xlane.xlu0 %3931
        %v3933 = vadd.f32 %v3831, %v3833
        %3934 = vadd.xlane.f32.xlu0 %v3933
        %v3935 = vpop.xlane.xlu0 %3934
        %v3936 = vadd.f32 %v3835, %v3837
        %3937 = vadd.xlane.f32.xlu0 %v3936
        %v3938 = vpop.xlane.xlu0 %3937
        %v3939 = vadd.f32 %v3839, %v3841
        %3940 = vadd.xlane.f32.xlu0 %v3939
        %v3941 = vpop.xlane.xlu0 %3940
        %v3942 = vadd.f32 %v3843, %v3845
        %3943 = vadd.xlane.f32.xlu0 %v3942
        %v3944 = vpop.xlane.xlu0 %3943
        %v3945 = vadd.f32 %v3847, %v3849
        %3946 = vadd.xlane.f32.xlu0 %v3945
        %v3947 = vpop.xlane.xlu0 %3946
        %v3948 = vadd.f32 %v3851, %v3853
        %3949 = vadd.xlane.f32.xlu0 %v3948
        %v3950 = vpop.xlane.xlu0 %3949
        %v3951 = vadd.f32 %v3855, %v3857
        %3952 = vadd.xlane.f32.xlu0 %v3951
        %v3953 = vpop.xlane.xlu0 %3952
        %v3954 = vrcp.pop %v3860
        %v3955 = vrcp.pop %v3863
        %v3956 = vrcp.pop %v3866
        %v3957 = vrcp.pop %v3869
        %v3958 = vrcp.pop %v3872
        %v3959 = vrcp.pop %v3875
        %v3960 = vrcp.pop %v3878
        %v3961 = vrcp.pop %v3881
        %v3962 = vrcp.pop %v3884
        %v3963 = vrcp.pop %v3887
        %v3964 = vrcp.pop %v3890
        %v3965 = vrcp.pop %v3893
        %v3966 = vrcp.pop %v3896
        %v3967 = vrcp.pop %v3899
        %v3968 = vrcp.pop %v3902
        %v3969 = vrcp.pop %v3905
        %v3970 = vrcp.pop %v3908
        %v3971 = vrcp.pop %v3911
        %v3972 = vrcp.pop %v3914
        %v3973 = vrcp.pop %v3917
        %v3974 = vrcp.pop %v3920
        %v3975 = vrcp.pop %v3923
        %v3976 = vrcp.pop %v3926
        %v3977 = vrcp.pop %v3929
        %v3978 = vrcp.pop %v3932
        %v3979 = vrcp.pop %v3935
        %v3980 = vrcp.pop %v3938
        %v3981 = vrcp.pop %v3941
        %v3982 = vrcp.pop %v3944
        %v3983 = vrcp.pop %v3947
        %v3984 = vrcp.pop %v3950
        %v3985 = vrcp.pop %v3953
        %v3986 = vmul.f32 %v3731, %v3954
        %v3987 = vmul.f32 %v3733, %v3954
        %v3988 = vmul.f32 %v3735, %v3955
        %v3989 = vmul.f32 %v3737, %v3955
        %v3990 = vmul.f32 %v3739, %v3956
        %v3991 = vmul.f32 %v3741, %v3956
        %v3992 = vmul.f32 %v3743, %v3957
        %v3993 = vmul.f32 %v3745, %v3957
        %v3994 = vmul.f32 %v3747, %v3958
        %v3995 = vmul.f32 %v3749, %v3958
        %v3996 = vmul.f32 %v3751, %v3959
        %v3997 = vmul.f32 %v3753, %v3959
        %v3998 = vmul.f32 %v3755, %v3960
        %v3999 = vmul.f32 %v3757, %v3960
        %v4000 = vmul.f32 %v3759, %v3961
        %v4001 = vmul.f32 %v3761, %v3961
        %v4002 = vmul.f32 %v3763, %v3962
        %v4003 = vmul.f32 %v3765, %v3962
        %v4004 = vmul.f32 %v3767, %v3963
        %v4005 = vmul.f32 %v3769, %v3963
        %v4006 = vmul.f32 %v3771, %v3964
        %v4007 = vmul.f32 %v3773, %v3964
        %v4008 = vmul.f32 %v3775, %v3965
        %v4009 = vmul.f32 %v3777, %v3965
        %v4010 = vmul.f32 %v3779, %v3966
        %v4011 = vmul.f32 %v3781, %v3966
        %v4012 = vmul.f32 %v3783, %v3967
        %v4013 = vmul.f32 %v3785, %v3967
        %v4014 = vmul.f32 %v3787, %v3968
        %v4015 = vmul.f32 %v3789, %v3968
        %v4016 = vmul.f32 %v3791, %v3969
        %v4017 = vmul.f32 %v3793, %v3969
        %v4018 = vmul.f32 %v3795, %v3970
        %v4019 = vmul.f32 %v3797, %v3970
        %v4020 = vmul.f32 %v3799, %v3971
        %v4021 = vmul.f32 %v3801, %v3971
        %v4022 = vmul.f32 %v3803, %v3972
        %v4023 = vmul.f32 %v3805, %v3972
        %v4024 = vmul.f32 %v3807, %v3973
        %v4025 = vmul.f32 %v3809, %v3973
        %v4026 = vmul.f32 %v3811, %v3974
        %v4027 = vmul.f32 %v3813, %v3974
        %v4028 = vmul.f32 %v3815, %v3975
        %v4029 = vmul.f32 %v3817, %v3975
        %v4030 = vmul.f32 %v3819, %v3976
        %v4031 = vmul.f32 %v3821, %v3976
        %v4032 = vmul.f32 %v3823, %v3977
        %v4033 = vmul.f32 %v3825, %v3977
        %v4034 = vmul.f32 %v3827, %v3978
        %v4035 = vmul.f32 %v3829, %v3978
        %v4036 = vmul.f32 %v3831, %v3979
        %v4037 = vmul.f32 %v3833, %v3979
        %v4038 = vmul.f32 %v3835, %v3980
        %v4039 = vmul.f32 %v3837, %v3980
        %v4040 = vmul.f32 %v3839, %v3981
        %v4041 = vmul.f32 %v3841, %v3981
        %v4042 = vmul.f32 %v3843, %v3982
        %v4043 = vmul.f32 %v3845, %v3982
        %v4044 = vmul.f32 %v3847, %v3983
        %v4045 = vmul.f32 %v3849, %v3983
        %v4046 = vmul.f32 %v3851, %v3984
        %v4047 = vmul.f32 %v3853, %v3984
        %v4048 = vmul.f32 %v3855, %v3985
        %v4049 = vmul.f32 %v3857, %v3985
        %v4050 = vstv %s3089
        %v4051 = vmul.f32 %v4050, %v3986
        %v4052 = vmul.f32 %v4050, %v3987
        %v4053 = vmul.f32 %v4050, %v3988
        %v4054 = vmul.f32 %v4050, %v3989
        %v4055 = vmul.f32 %v4050, %v3990
        %v4056 = vmul.f32 %v4050, %v3991
        %v4057 = vmul.f32 %v4050, %v3992
        %v4058 = vmul.f32 %v4050, %v3993
        %v4059 = vmul.f32 %v4050, %v3994
        %v4060 = vmul.f32 %v4050, %v3995
        %v4061 = vmul.f32 %v4050, %v3996
        %v4062 = vmul.f32 %v4050, %v3997
        %v4063 = vmul.f32 %v4050, %v3998
        %v4064 = vmul.f32 %v4050, %v3999
        %v4065 = vmul.f32 %v4050, %v4000
        %v4066 = vmul.f32 %v4050, %v4001
        %v4067 = vmul.f32 %v4050, %v4002
        %v4068 = vmul.f32 %v4050, %v4003
        %v4069 = vmul.f32 %v4050, %v4004
        %v4070 = vmul.f32 %v4050, %v4005
        %v4071 = vmul.f32 %v4050, %v4006
        %v4072 = vmul.f32 %v4050, %v4007
        %v4073 = vmul.f32 %v4050, %v4008
        %v4074 = vmul.f32 %v4050, %v4009
        %v4075 = vmul.f32 %v4050, %v4010
        %v4076 = vmul.f32 %v4050, %v4011
        %v4077 = vmul.f32 %v4050, %v4012
        %v4078 = vmul.f32 %v4050, %v4013
        %v4079 = vmul.f32 %v4050, %v4014
        %v4080 = vmul.f32 %v4050, %v4015
        %v4081 = vmul.f32 %v4050, %v4016
        %v4082 = vmul.f32 %v4050, %v4017
        %v4083 = vmul.f32 %v4050, %v4018
        %v4084 = vmul.f32 %v4050, %v4019
        %v4085 = vmul.f32 %v4050, %v4020
        %v4086 = vmul.f32 %v4050, %v4021
        %v4087 = vmul.f32 %v4050, %v4022
        %v4088 = vmul.f32 %v4050, %v4023
        %v4089 = vmul.f32 %v4050, %v4024
        %v4090 = vmul.f32 %v4050, %v4025
        %v4091 = vmul.f32 %v4050, %v4026
        %v4092 = vmul.f32 %v4050, %v4027
        %v4093 = vmul.f32 %v4050, %v4028
        %v4094 = vmul.f32 %v4050, %v4029
        %v4095 = vmul.f32 %v4050, %v4030
        %v4096 = vmul.f32 %v4050, %v4031
        %v4097 = vmul.f32 %v4050, %v4032
        %v4098 = vmul.f32 %v4050, %v4033
        %v4099 = vmul.f32 %v4050, %v4034
        %v4100 = vmul.f32 %v4050, %v4035
        %v4101 = vmul.f32 %v4050, %v4036
        %v4102 = vmul.f32 %v4050, %v4037
        %v4103 = vmul.f32 %v4050, %v4038
        %v4104 = vmul.f32 %v4050, %v4039
        %v4105 = vmul.f32 %v4050, %v4040
        %v4106 = vmul.f32 %v4050, %v4041
        %v4107 = vmul.f32 %v4050, %v4042
        %v4108 = vmul.f32 %v4050, %v4043
        %v4109 = vmul.f32 %v4050, %v4044
        %v4110 = vmul.f32 %v4050, %v4045
        %v4111 = vmul.f32 %v4050, %v4046
        %v4112 = vmul.f32 %v4050, %v4047
        %v4113 = vmul.f32 %v4050, %v4048
        %v4114 = vmul.f32 %v4050, %v4049
        %v4115 = vsub.f32 %v3506, %v4051
        %v4116 = vsub.f32 %v3507, %v4052
        %v4117 = vsub.f32 %v3508, %v4053
        %v4118 = vsub.f32 %v3509, %v4054
        %v4119 = vsub.f32 %v3510, %v4055
        %v4120 = vsub.f32 %v3511, %v4056
        %v4121 = vsub.f32 %v3512, %v4057
        %v4122 = vsub.f32 %v3513, %v4058
        %v4123 = vsub.f32 %v3514, %v4059
        %v4124 = vsub.f32 %v3515, %v4060
        %v4125 = vsub.f32 %v3516, %v4061
        %v4126 = vsub.f32 %v3517, %v4062
        %v4127 = vsub.f32 %v3518, %v4063
        %v4128 = vsub.f32 %v3519, %v4064
        %v4129 = vsub.f32 %v3520, %v4065
        %v4130 = vsub.f32 %v3521, %v4066
        %v4131 = vsub.f32 %v3522, %v4067
        %v4132 = vsub.f32 %v3523, %v4068
        %v4133 = vsub.f32 %v3524, %v4069
        %v4134 = vsub.f32 %v3525, %v4070
        %v4135 = vsub.f32 %v3526, %v4071
        %v4136 = vsub.f32 %v3527, %v4072
        %v4137 = vsub.f32 %v3528, %v4073
        %v4138 = vsub.f32 %v3529, %v4074
        %v4139 = vsub.f32 %v3530, %v4075
        %v4140 = vsub.f32 %v3531, %v4076
        %v4141 = vsub.f32 %v3532, %v4077
        %v4142 = vsub.f32 %v3533, %v4078
        %v4143 = vsub.f32 %v3534, %v4079
        %v4144 = vsub.f32 %v3535, %v4080
        %v4145 = vsub.f32 %v3536, %v4081
        %v4146 = vsub.f32 %v3537, %v4082
        %v4147 = vsub.f32 %v3538, %v4083
        %v4148 = vsub.f32 %v3539, %v4084
        %v4149 = vsub.f32 %v3540, %v4085
        %v4150 = vsub.f32 %v3541, %v4086
        %v4151 = vsub.f32 %v3542, %v4087
        %v4152 = vsub.f32 %v3543, %v4088
        %v4153 = vsub.f32 %v3544, %v4089
        %v4154 = vsub.f32 %v3545, %v4090
        %v4155 = vsub.f32 %v3546, %v4091
        %v4156 = vsub.f32 %v3547, %v4092
        %v4157 = vsub.f32 %v3548, %v4093
        %v4158 = vsub.f32 %v3549, %v4094
        %v4159 = vsub.f32 %v3550, %v4095
        %v4160 = vsub.f32 %v3551, %v4096
        %v4161 = vsub.f32 %v3552, %v4097
        %v4162 = vsub.f32 %v3553, %v4098
        %v4163 = vsub.f32 %v3554, %v4099
        %v4164 = vsub.f32 %v3555, %v4100
        %v4165 = vsub.f32 %v3556, %v4101
        %v4166 = vsub.f32 %v3557, %v4102
        %v4167 = vsub.f32 %v3558, %v4103
        %v4168 = vsub.f32 %v3559, %v4104
        %v4169 = vsub.f32 %v3560, %v4105
        %v4170 = vsub.f32 %v3561, %v4106
        %v4171 = vsub.f32 %v3562, %v4107
        %v4172 = vsub.f32 %v3563, %v4108
        %v4173 = vsub.f32 %v3564, %v4109
        %v4174 = vsub.f32 %v3565, %v4110
        %v4175 = vsub.f32 %v3566, %v4111
        %v4176 = vsub.f32 %v3567, %v4112
        %v4177 = vsub.f32 %v3568, %v4113
        %v4178 = vsub.f32 %v3569, %v4114
        %v4179 = vpack.c.bf16 %v4117, %v4115
        %v4180 = vpack.c.bf16 %v4118, %v4116
        %v4181 = vpack.c.bf16 %v4121, %v4119
        %v4182 = vpack.c.bf16 %v4122, %v4120
        %v4183 = vpack.c.bf16 %v4125, %v4123
        %v4184 = vpack.c.bf16 %v4126, %v4124
        %v4185 = vpack.c.bf16 %v4129, %v4127
        %v4186 = vpack.c.bf16 %v4130, %v4128
        %v4187 = vpack.c.bf16 %v4133, %v4131
        %v4188 = vpack.c.bf16 %v4134, %v4132
        %v4189 = vpack.c.bf16 %v4137, %v4135
        %v4190 = vpack.c.bf16 %v4138, %v4136
        %v4191 = vpack.c.bf16 %v4141, %v4139
        %v4192 = vpack.c.bf16 %v4142, %v4140
        %v4193 = vpack.c.bf16 %v4145, %v4143
        %v4194 = vpack.c.bf16 %v4146, %v4144
        %v4195 = vpack.c.bf16 %v4149, %v4147
        %v4196 = vpack.c.bf16 %v4150, %v4148
        %v4197 = vpack.c.bf16 %v4153, %v4151
        %v4198 = vpack.c.bf16 %v4154, %v4152
        %v4199 = vpack.c.bf16 %v4157, %v4155
        %v4200 = vpack.c.bf16 %v4158, %v4156
        %v4201 = vpack.c.bf16 %v4161, %v4159
        %v4202 = vpack.c.bf16 %v4162, %v4160
        %v4203 = vpack.c.bf16 %v4165, %v4163
        %v4204 = vpack.c.bf16 %v4166, %v4164
        %v4205 = vpack.c.bf16 %v4169, %v4167
        %v4206 = vpack.c.bf16 %v4170, %v4168
        %v4207 = vpack.c.bf16 %v4173, %v4171
        %v4208 = vpack.c.bf16 %v4174, %v4172
        %v4209 = vpack.c.bf16 %v4177, %v4175
        %v4210 = vpack.c.bf16 %v4178, %v4176
        %v4211 = vpack.c.bf16 %v1839, %v1836
        %v4212 = vpack.c.bf16 %v1847, %v1844
        %v4213 = vpack.c.bf16 %v1855, %v1852
        %v4214 = vpack.c.bf16 %v1863, %v1860
        %v4215 = vpack.c.bf16 %v1871, %v1868
        %v4216 = vpack.c.bf16 %v1879, %v1876
        %v4217 = vpack.c.bf16 %v1887, %v1884
        %v4218 = vpack.c.bf16 %v1895, %v1892
        %v4219 = vpack.c.bf16 %v1903, %v1900
        %v4220 = vpack.c.bf16 %v1911, %v1908
        %v4221 = vpack.c.bf16 %v1919, %v1916
        %v4222 = vpack.c.bf16 %v1927, %v1924
        %v4223 = vpack.c.bf16 %v1935, %v1932
        %v4224 = vpack.c.bf16 %v1943, %v1940
        %v4225 = vpack.c.bf16 %v1951, %v1948
        %v4226 = vpack.c.bf16 %v1959, %v1956
        %4227 = vmatprep.subr.bf16.mxu0 0
        %4228 = vmatpush1.bf16.msra.mxu0 %v4211
        %4229 = vmatprep.subr.bf16.mxu0 0
        %4230 = vmatpush1.bf16.msra.mxu0 %v4212
        %4231 = vmatprep.subr.bf16.mxu0 0
        %4232 = vmatpush1.bf16.msra.mxu0 %v4213
        %4233 = vmatprep.subr.bf16.mxu0 0
        %4234 = vmatpush1.bf16.msra.mxu0 %v4214
        %4235 = vmatprep.subr.bf16.mxu0 0
        %4236 = vmatpush1.bf16.msra.mxu0 %v4215
        %4237 = vmatprep.subr.bf16.mxu0 0
        %4238 = vmatpush1.bf16.msra.mxu0 %v4216
        %4239 = vmatprep.subr.bf16.mxu0 0
        %4240 = vmatpush1.bf16.msra.mxu0 %v4217
        %4241 = vmatprep.subr.bf16.mxu0 0
        %4242 = vmatpush1.bf16.msra.mxu0 %v4218
        %4243 = vmatprep.subr.bf16.mxu0 0
        %4244 = vmatpush1.bf16.msra.mxu0 %v4219
        %4245 = vmatprep.subr.bf16.mxu0 0
        %4246 = vmatpush1.bf16.msra.mxu0 %v4220
        %4247 = vmatprep.subr.bf16.mxu0 0
        %4248 = vmatpush1.bf16.msra.mxu0 %v4221
        %4249 = vmatprep.subr.bf16.mxu0 0
        %4250 = vmatpush1.bf16.msra.mxu0 %v4222
        %4251 = vmatprep.subr.bf16.mxu0 0
        %4252 = vmatpush1.bf16.msra.mxu0 %v4223
        %4253 = vmatprep.subr.bf16.mxu0 0
        %4254 = vmatpush1.bf16.msra.mxu0 %v4224
        %4255 = vmatprep.subr.bf16.mxu0 0
        %4256 = vmatpush1.bf16.msra.mxu0 %v4225
        %4257 = vmatprep.subr.bf16.mxu0 0
        %4258 = vmatpush1.bf16.msra.mxu0 %v4226
        %4259 = vmatprep.mubr.bf16.mxu0 %v4180
        %4260 = vmatmul.mubr.bf16.gmra.mrb[0].mxu0 %v4179
        %v4261 = vpop.f32.mrb[0].mxu0
        %v4262 = vadd.f32 0.0, %v4261
        %v4263 = vpop.f32.mrb[0].mxu0
        %v4264 = vpop.f32.mrb[0].mxu0
        %v4265 = vadd.f32 0.0, %v4264
        %v4266 = vpop.f32.mrb[0].mxu0
        %4267 = vmatprep.mubr.bf16.mxu0 %v4182
        %4268 = vmatmul.mubr.bf16.gmra.mrb[0].mxu0 %v4181
        %v4269 = vpop.f32.mrb[0].mxu0
        %v4270 = vadd.f32 0.0, %v4269
        %v4271 = vpop.f32.mrb[0].mxu0
        %v4272 = vpop.f32.mrb[0].mxu0
        %v4273 = vadd.f32 0.0, %v4272
        %v4274 = vpop.f32.mrb[0].mxu0
        %4275 = vmatprep.mubr.bf16.mxu0 %v4184
        %4276 = vmatmul.mubr.bf16.gmra.mrb[0].mxu0 %v4183
        %v4277 = vpop.f32.mrb[0].mxu0
        %v4278 = vadd.f32 0.0, %v4277
        %v4279 = vpop.f32.mrb[0].mxu0
        %v4280 = vpop.f32.mrb[0].mxu0
        %v4281 = vadd.f32 0.0, %v4280
        %v4282 = vpop.f32.mrb[0].mxu0
        %4283 = vmatprep.mubr.bf16.mxu0 %v4186
        %4284 = vmatmul.mubr.bf16.gmra.mrb[0].mxu0 %v4185
        %v4285 = vpop.f32.mrb[0].mxu0
        %v4286 = vadd.f32 0.0, %v4285
        %v4287 = vpop.f32.mrb[0].mxu0
        %v4288 = vpop.f32.mrb[0].mxu0
        %v4289 = vadd.f32 0.0, %v4288
        %v4290 = vpop.f32.mrb[0].mxu0
        %4291 = vmatprep.mubr.bf16.mxu0 %v4188
        %4292 = vmatmul.mubr.bf16.gmra.mrb[0].mxu0 %v4187
        %v4293 = vpop.f32.mrb[0].mxu0
        %v4294 = vadd.f32 0.0, %v4293
        %v4295 = vpop.f32.mrb[0].mxu0
        %v4296 = vpop.f32.mrb[0].mxu0
        %v4297 = vadd.f32 0.0, %v4296
        %v4298 = vpop.f32.mrb[0].mxu0
        %4299 = vmatprep.mubr.bf16.mxu0 %v4190
        %4300 = vmatmul.mubr.bf16.gmra.mrb[0].mxu0 %v4189
        %v4301 = vpop.f32.mrb[0].mxu0
        %v4302 = vadd.f32 0.0, %v4301
        %v4303 = vpop.f32.mrb[0].mxu0
        %v4304 = vpop.f32.mrb[0].mxu0
        %v4305 = vadd.f32 0.0, %v4304
        %v4306 = vpop.f32.mrb[0].mxu0
        %4307 = vmatprep.mubr.bf16.mxu0 %v4192
        %4308 = vmatmul.mubr.bf16.gmra.mrb[0].mxu0 %v4191
        %v4309 = vpop.f32.mrb[0].mxu0
        %v4310 = vadd.f32 0.0, %v4309
        %v4311 = vpop.f32.mrb[0].mxu0
        %v4312 = vpop.f32.mrb[0].mxu0
        %v4313 = vadd.f32 0.0, %v4312
        %v4314 = vpop.f32.mrb[0].mxu0
        %4315 = vmatprep.mubr.bf16.mxu0 %v4194
        %4316 = vmatmul.mubr.bf16.gmra.mrb[0].mxu0 %v4193
        %v4317 = vpop.f32.mrb[0].mxu0
        %v4318 = vadd.f32 0.0, %v4317
        %v4319 = vpop.f32.mrb[0].mxu0
        %v4320 = vpop.f32.mrb[0].mxu0
        %v4321 = vadd.f32 0.0, %v4320
        %v4322 = vpop.f32.mrb[0].mxu0
        %4323 = vmatprep.mubr.bf16.mxu0 %v4196
        %4324 = vmatmul.mubr.bf16.gmra.mrb[0].mxu0 %v4195
        %v4325 = vpop.f32.mrb[0].mxu0
        %v4326 = vadd.f32 0.0, %v4325
        %v4327 = vpop.f32.mrb[0].mxu0
        %v4328 = vpop.f32.mrb[0].mxu0
        %v4329 = vadd.f32 0.0, %v4328
        %v4330 = vpop.f32.mrb[0].mxu0
        %4331 = vmatprep.mubr.bf16.mxu0 %v4198
        %4332 = vmatmul.mubr.bf16.gmra.mrb[0].mxu0 %v4197
        %v4333 = vpop.f32.mrb[0].mxu0
        %v4334 = vadd.f32 0.0, %v4333
        %v4335 = vpop.f32.mrb[0].mxu0
        %v4336 = vpop.f32.mrb[0].mxu0
        %v4337 = vadd.f32 0.0, %v4336
        %v4338 = vpop.f32.mrb[0].mxu0
        %4339 = vmatprep.mubr.bf16.mxu0 %v4200
        %4340 = vmatmul.mubr.bf16.gmra.mrb[0].mxu0 %v4199
        %v4341 = vpop.f32.mrb[0].mxu0
        %v4342 = vadd.f32 0.0, %v4341
        %v4343 = vpop.f32.mrb[0].mxu0
        %v4344 = vpop.f32.mrb[0].mxu0
        %v4345 = vadd.f32 0.0, %v4344
        %v4346 = vpop.f32.mrb[0].mxu0
        %4347 = vmatprep.mubr.bf16.mxu0 %v4202
        %4348 = vmatmul.mubr.bf16.gmra.mrb[0].mxu0 %v4201
        %v4349 = vpop.f32.mrb[0].mxu0
        %v4350 = vadd.f32 0.0, %v4349
        %v4351 = vpop.f32.mrb[0].mxu0
        %v4352 = vpop.f32.mrb[0].mxu0
        %v4353 = vadd.f32 0.0, %v4352
        %v4354 = vpop.f32.mrb[0].mxu0
        %4355 = vmatprep.mubr.bf16.mxu0 %v4204
        %4356 = vmatmul.mubr.bf16.gmra.mrb[0].mxu0 %v4203
        %v4357 = vpop.f32.mrb[0].mxu0
        %v4358 = vadd.f32 0.0, %v4357
        %v4359 = vpop.f32.mrb[0].mxu0
        %v4360 = vpop.f32.mrb[0].mxu0
        %v4361 = vadd.f32 0.0, %v4360
        %v4362 = vpop.f32.mrb[0].mxu0
        %4363 = vmatprep.mubr.bf16.mxu0 %v4206
        %4364 = vmatmul.mubr.bf16.gmra.mrb[0].mxu0 %v4205
        %v4365 = vpop.f32.mrb[0].mxu0
        %v4366 = vadd.f32 0.0, %v4365
        %v4367 = vpop.f32.mrb[0].mxu0
        %v4368 = vpop.f32.mrb[0].mxu0
        %v4369 = vadd.f32 0.0, %v4368
        %v4370 = vpop.f32.mrb[0].mxu0
        %4371 = vmatprep.mubr.bf16.mxu0 %v4208
        %4372 = vmatmul.mubr.bf16.gmra.mrb[0].mxu0 %v4207
        %v4373 = vpop.f32.mrb[0].mxu0
        %v4374 = vadd.f32 0.0, %v4373
        %v4375 = vpop.f32.mrb[0].mxu0
        %v4376 = vpop.f32.mrb[0].mxu0
        %v4377 = vadd.f32 0.0, %v4376
        %v4378 = vpop.f32.mrb[0].mxu0
        %4379 = vmatprep.mubr.bf16.mxu0 %v4210
        %4380 = vmatmul.mubr.bf16.gmra.mrb[0].mxu0 %v4209
        %v4381 = vpop.f32.mrb[0].mxu0
        %v4382 = vadd.f32 0.0, %v4381
        %v4383 = vpop.f32.mrb[0].mxu0
        %v4384 = vpop.f32.mrb[0].mxu0
        %v4385 = vadd.f32 0.0, %v4384
        %v4386 = vpop.f32.mrb[0].mxu0
        %4387 = vdwg.mxu0
        %v4388 = vmul.f32 %v4262, %v4262
        %v4389 = vmul.f32 %v4265, %v4265
        %v4390 = vmul.f32 %v4270, %v4270
        %v4391 = vmul.f32 %v4273, %v4273
        %v4392 = vmul.f32 %v4278, %v4278
        %v4393 = vmul.f32 %v4281, %v4281
        %v4394 = vmul.f32 %v4286, %v4286
        %v4395 = vmul.f32 %v4289, %v4289
        %v4396 = vmul.f32 %v4294, %v4294
        %v4397 = vmul.f32 %v4297, %v4297
        %v4398 = vmul.f32 %v4302, %v4302
        %v4399 = vmul.f32 %v4305, %v4305
        %v4400 = vmul.f32 %v4310, %v4310
        %v4401 = vmul.f32 %v4313, %v4313
        %v4402 = vmul.f32 %v4318, %v4318
        %v4403 = vmul.f32 %v4321, %v4321
        %v4404 = vmul.f32 %v4326, %v4326
        %v4405 = vmul.f32 %v4329, %v4329
        %v4406 = vmul.f32 %v4334, %v4334
        %v4407 = vmul.f32 %v4337, %v4337
        %v4408 = vmul.f32 %v4342, %v4342
        %v4409 = vmul.f32 %v4345, %v4345
        %v4410 = vmul.f32 %v4350, %v4350
        %v4411 = vmul.f32 %v4353, %v4353
        %v4412 = vmul.f32 %v4358, %v4358
        %v4413 = vmul.f32 %v4361, %v4361
        %v4414 = vmul.f32 %v4366, %v4366
        %v4415 = vmul.f32 %v4369, %v4369
        %v4416 = vmul.f32 %v4374, %v4374
        %v4417 = vmul.f32 %v4377, %v4377
        %v4418 = vmul.f32 %v4382, %v4382
        %v4419 = vmul.f32 %v4385, %v4385
        %4420 = vadd.xlane.f32.xlu0 %v4388
        %v4421 = vpop.xlane.xlu0 %4420
        %4422 = vadd.xlane.f32.xlu0 %v4389
        %v4423 = vpop.xlane.xlu0 %4422
        %4424 = vadd.xlane.f32.xlu0 %v4390
        %v4425 = vpop.xlane.xlu0 %4424
        %4426 = vadd.xlane.f32.xlu0 %v4391
        %v4427 = vpop.xlane.xlu0 %4426
        %4428 = vadd.xlane.f32.xlu0 %v4392
        %v4429 = vpop.xlane.xlu0 %4428
        %4430 = vadd.xlane.f32.xlu0 %v4393
        %v4431 = vpop.xlane.xlu0 %4430
        %4432 = vadd.xlane.f32.xlu0 %v4394
        %v4433 = vpop.xlane.xlu0 %4432
        %4434 = vadd.xlane.f32.xlu0 %v4395
        %v4435 = vpop.xlane.xlu0 %4434
        %4436 = vadd.xlane.f32.xlu0 %v4396
        %v4437 = vpop.xlane.xlu0 %4436
        %4438 = vadd.xlane.f32.xlu0 %v4397
        %v4439 = vpop.xlane.xlu0 %4438
        %4440 = vadd.xlane.f32.xlu0 %v4398
        %v4441 = vpop.xlane.xlu0 %4440
        %4442 = vadd.xlane.f32.xlu0 %v4399
        %v4443 = vpop.xlane.xlu0 %4442
        %4444 = vadd.xlane.f32.xlu0 %v4400
        %v4445 = vpop.xlane.xlu0 %4444
        %4446 = vadd.xlane.f32.xlu0 %v4401
        %v4447 = vpop.xlane.xlu0 %4446
        %4448 = vadd.xlane.f32.xlu0 %v4402
        %v4449 = vpop.xlane.xlu0 %4448
        %4450 = vadd.xlane.f32.xlu0 %v4403
        %v4451 = vpop.xlane.xlu0 %4450
        %4452 = vadd.xlane.f32.xlu0 %v4404
        %v4453 = vpop.xlane.xlu0 %4452
        %4454 = vadd.xlane.f32.xlu0 %v4405
        %v4455 = vpop.xlane.xlu0 %4454
        %4456 = vadd.xlane.f32.xlu0 %v4406
        %v4457 = vpop.xlane.xlu0 %4456
        %4458 = vadd.xlane.f32.xlu0 %v4407
        %v4459 = vpop.xlane.xlu0 %4458
        %4460 = vadd.xlane.f32.xlu0 %v4408
        %v4461 = vpop.xlane.xlu0 %4460
        %4462 = vadd.xlane.f32.xlu0 %v4409
        %v4463 = vpop.xlane.xlu0 %4462
        %4464 = vadd.xlane.f32.xlu0 %v4410
        %v4465 = vpop.xlane.xlu0 %4464
        %4466 = vadd.xlane.f32.xlu0 %v4411
        %v4467 = vpop.xlane.xlu0 %4466
        %4468 = vadd.xlane.f32.xlu0 %v4412
        %v4469 = vpop.xlane.xlu0 %4468
        %4470 = vadd.xlane.f32.xlu0 %v4413
        %v4471 = vpop.xlane.xlu0 %4470
        %4472 = vadd.xlane.f32.xlu0 %v4414
        %v4473 = vpop.xlane.xlu0 %4472
        %4474 = vadd.xlane.f32.xlu0 %v4415
        %v4475 = vpop.xlane.xlu0 %4474
        %4476 = vadd.xlane.f32.xlu0 %v4416
        %v4477 = vpop.xlane.xlu0 %4476
        %4478 = vadd.xlane.f32.xlu0 %v4417
        %v4479 = vpop.xlane.xlu0 %4478
        %4480 = vadd.xlane.f32.xlu0 %v4418
        %v4481 = vpop.xlane.xlu0 %4480
        %4482 = vadd.xlane.f32.xlu0 %v4419
        %v4483 = vpop.xlane.xlu0 %4482
        %v4484 = vrcp.pop 128.0
        %v4485 = vmul.f32 %v4421, %v4484
        %v4486 = vmul.f32 %v4423, %v4484
        %v4487 = vmul.f32 %v4425, %v4484
        %v4488 = vmul.f32 %v4427, %v4484
        %v4489 = vmul.f32 %v4429, %v4484
        %v4490 = vmul.f32 %v4431, %v4484
        %v4491 = vmul.f32 %v4433, %v4484
        %v4492 = vmul.f32 %v4435, %v4484
        %v4493 = vmul.f32 %v4437, %v4484
        %v4494 = vmul.f32 %v4439, %v4484
        %v4495 = vmul.f32 %v4441, %v4484
        %v4496 = vmul.f32 %v4443, %v4484
        %v4497 = vmul.f32 %v4445, %v4484
        %v4498 = vmul.f32 %v4447, %v4484
        %v4499 = vmul.f32 %v4449, %v4484
        %v4500 = vmul.f32 %v4451, %v4484
        %v4501 = vmul.f32 %v4453, %v4484
        %v4502 = vmul.f32 %v4455, %v4484
        %v4503 = vmul.f32 %v4457, %v4484
        %v4504 = vmul.f32 %v4459, %v4484
        %v4505 = vmul.f32 %v4461, %v4484
        %v4506 = vmul.f32 %v4463, %v4484
        %v4507 = vmul.f32 %v4465, %v4484
        %v4508 = vmul.f32 %v4467, %v4484
        %v4509 = vmul.f32 %v4469, %v4484
        %v4510 = vmul.f32 %v4471, %v4484
        %v4511 = vmul.f32 %v4473, %v4484
        %v4512 = vmul.f32 %v4475, %v4484
        %v4513 = vmul.f32 %v4477, %v4484
        %v4514 = vmul.f32 %v4479, %v4484
        %v4515 = vmul.f32 %v4481, %v4484
        %v4516 = vmul.f32 %v4483, %v4484
        %v4517 = vadd.f32 %v4485, 1e-05
        %v4518 = vadd.f32 %v4486, 1e-05
        %v4519 = vadd.f32 %v4487, 1e-05
        %v4520 = vadd.f32 %v4488, 1e-05
        %v4521 = vadd.f32 %v4489, 1e-05
        %v4522 = vadd.f32 %v4490, 1e-05
        %v4523 = vadd.f32 %v4491, 1e-05
        %v4524 = vadd.f32 %v4492, 1e-05
        %v4525 = vadd.f32 %v4493, 1e-05
        %v4526 = vadd.f32 %v4494, 1e-05
        %v4527 = vadd.f32 %v4495, 1e-05
        %v4528 = vadd.f32 %v4496, 1e-05
        %v4529 = vadd.f32 %v4497, 1e-05
        %v4530 = vadd.f32 %v4498, 1e-05
        %v4531 = vadd.f32 %v4499, 1e-05
        %v4532 = vadd.f32 %v4500, 1e-05
        %v4533 = vadd.f32 %v4501, 1e-05
        %v4534 = vadd.f32 %v4502, 1e-05
        %v4535 = vadd.f32 %v4503, 1e-05
        %v4536 = vadd.f32 %v4504, 1e-05
        %v4537 = vadd.f32 %v4505, 1e-05
        %v4538 = vadd.f32 %v4506, 1e-05
        %v4539 = vadd.f32 %v4507, 1e-05
        %v4540 = vadd.f32 %v4508, 1e-05
        %v4541 = vadd.f32 %v4509, 1e-05
        %v4542 = vadd.f32 %v4510, 1e-05
        %v4543 = vadd.f32 %v4511, 1e-05
        %v4544 = vadd.f32 %v4512, 1e-05
        %v4545 = vadd.f32 %v4513, 1e-05
        %v4546 = vadd.f32 %v4514, 1e-05
        %v4547 = vadd.f32 %v4515, 1e-05
        %v4548 = vadd.f32 %v4516, 1e-05
        %v4549 = vrsqrt.pop %v4517
        %v4550 = vrsqrt.pop %v4518
        %v4551 = vrsqrt.pop %v4519
        %v4552 = vrsqrt.pop %v4520
        %v4553 = vrsqrt.pop %v4521
        %v4554 = vrsqrt.pop %v4522
        %v4555 = vrsqrt.pop %v4523
        %v4556 = vrsqrt.pop %v4524
        %v4557 = vrsqrt.pop %v4525
        %v4558 = vrsqrt.pop %v4526
        %v4559 = vrsqrt.pop %v4527
        %v4560 = vrsqrt.pop %v4528
        %v4561 = vrsqrt.pop %v4529
        %v4562 = vrsqrt.pop %v4530
        %v4563 = vrsqrt.pop %v4531
        %v4564 = vrsqrt.pop %v4532
        %v4565 = vrsqrt.pop %v4533
        %v4566 = vrsqrt.pop %v4534
        %v4567 = vrsqrt.pop %v4535
        %v4568 = vrsqrt.pop %v4536
        %v4569 = vrsqrt.pop %v4537
        %v4570 = vrsqrt.pop %v4538
        %v4571 = vrsqrt.pop %v4539
        %v4572 = vrsqrt.pop %v4540
        %v4573 = vrsqrt.pop %v4541
        %v4574 = vrsqrt.pop %v4542
        %v4575 = vrsqrt.pop %v4543
        %v4576 = vrsqrt.pop %v4544
        %v4577 = vrsqrt.pop %v4545
        %v4578 = vrsqrt.pop %v4546
        %v4579 = vrsqrt.pop %v4547
        %v4580 = vrsqrt.pop %v4548
        %v4581 = vmul.f32 %v4262, %v4549
        %v4582 = vmul.f32 %v4265, %v4550
        %v4583 = vmul.f32 %v4270, %v4551
        %v4584 = vmul.f32 %v4273, %v4552
        %v4585 = vmul.f32 %v4278, %v4553
        %v4586 = vmul.f32 %v4281, %v4554
        %v4587 = vmul.f32 %v4286, %v4555
        %v4588 = vmul.f32 %v4289, %v4556
        %v4589 = vmul.f32 %v4294, %v4557
        %v4590 = vmul.f32 %v4297, %v4558
        %v4591 = vmul.f32 %v4302, %v4559
        %v4592 = vmul.f32 %v4305, %v4560
        %v4593 = vmul.f32 %v4310, %v4561
        %v4594 = vmul.f32 %v4313, %v4562
        %v4595 = vmul.f32 %v4318, %v4563
        %v4596 = vmul.f32 %v4321, %v4564
        %v4597 = vmul.f32 %v4326, %v4565
        %v4598 = vmul.f32 %v4329, %v4566
        %v4599 = vmul.f32 %v4334, %v4567
        %v4600 = vmul.f32 %v4337, %v4568
        %v4601 = vmul.f32 %v4342, %v4569
        %v4602 = vmul.f32 %v4345, %v4570
        %v4603 = vmul.f32 %v4350, %v4571
        %v4604 = vmul.f32 %v4353, %v4572
        %v4605 = vmul.f32 %v4358, %v4573
        %v4606 = vmul.f32 %v4361, %v4574
        %v4607 = vmul.f32 %v4366, %v4575
        %v4608 = vmul.f32 %v4369, %v4576
        %v4609 = vmul.f32 %v4374, %v4577
        %v4610 = vmul.f32 %v4377, %v4578
        %v4611 = vmul.f32 %v4382, %v4579
        %v4612 = vmul.f32 %v4385, %v4580
        %v4613 = vld [vmem:[#allocation17] sm:$0x1]
        %v4615 = vlaneseq
        %v4616 = vshrl.u32 %v4615, 7
        %v4617 = vsub.s32 0, %v4616
        %v4618 = vrot.slane %v4613, %v4617
        %v4620 = vmul.f32 %v4581, %v4618
        %v4621 = vmul.f32 %v4582, %v4618
        %v4622 = vmul.f32 %v4583, %v4618
        %v4623 = vmul.f32 %v4584, %v4618
        %v4624 = vmul.f32 %v4585, %v4618
        %v4625 = vmul.f32 %v4586, %v4618
        %v4626 = vmul.f32 %v4587, %v4618
        %v4627 = vmul.f32 %v4588, %v4618
        %v4628 = vmul.f32 %v4589, %v4618
        %v4629 = vmul.f32 %v4590, %v4618
        %v4630 = vmul.f32 %v4591, %v4618
        %v4631 = vmul.f32 %v4592, %v4618
        %v4632 = vmul.f32 %v4593, %v4618
        %v4633 = vmul.f32 %v4594, %v4618
        %v4634 = vmul.f32 %v4595, %v4618
        %v4635 = vmul.f32 %v4596, %v4618
        %v4636 = vmul.f32 %v4597, %v4618
        %v4637 = vmul.f32 %v4598, %v4618
        %v4638 = vmul.f32 %v4599, %v4618
        %v4639 = vmul.f32 %v4600, %v4618
        %v4640 = vmul.f32 %v4601, %v4618
        %v4641 = vmul.f32 %v4602, %v4618
        %v4642 = vmul.f32 %v4603, %v4618
        %v4643 = vmul.f32 %v4604, %v4618
        %v4644 = vmul.f32 %v4605, %v4618
        %v4645 = vmul.f32 %v4606, %v4618
        %v4646 = vmul.f32 %v4607, %v4618
        %v4647 = vmul.f32 %v4608, %v4618
        %v4648 = vmul.f32 %v4609, %v4618
        %v4649 = vmul.f32 %v4610, %v4618
        %v4650 = vmul.f32 %v4611, %v4618
        %v4651 = vmul.f32 %v4612, %v4618
        %v4652 = vmul.f32 %v4620, 0.2
        %v4653 = vmul.f32 %v4621, 0.2
        %v4654 = vmul.f32 %v4622, 0.2
        %v4655 = vmul.f32 %v4623, 0.2
        %v4656 = vmul.f32 %v4624, 0.2
        %v4657 = vmul.f32 %v4625, 0.2
        %v4658 = vmul.f32 %v4626, 0.2
        %v4659 = vmul.f32 %v4627, 0.2
        %v4660 = vmul.f32 %v4628, 0.2
        %v4661 = vmul.f32 %v4629, 0.2
        %v4662 = vmul.f32 %v4630, 0.2
        %v4663 = vmul.f32 %v4631, 0.2
        %v4664 = vmul.f32 %v4632, 0.2
        %v4665 = vmul.f32 %v4633, 0.2
        %v4666 = vmul.f32 %v4634, 0.2
        %v4667 = vmul.f32 %v4635, 0.2
        %v4668 = vmul.f32 %v4636, 0.2
        %v4669 = vmul.f32 %v4637, 0.2
        %v4670 = vmul.f32 %v4638, 0.2
        %v4671 = vmul.f32 %v4639, 0.2
        %v4672 = vmul.f32 %v4640, 0.2
        %v4673 = vmul.f32 %v4641, 0.2
        %v4674 = vmul.f32 %v4642, 0.2
        %v4675 = vmul.f32 %v4643, 0.2
        %v4676 = vmul.f32 %v4644, 0.2
        %v4677 = vmul.f32 %v4645, 0.2
        %v4678 = vmul.f32 %v4646, 0.2
        %v4679 = vmul.f32 %v4647, 0.2
        %v4680 = vmul.f32 %v4648, 0.2
        %v4681 = vmul.f32 %v4649, 0.2
        %v4682 = vmul.f32 %v4650, 0.2
        %v4683 = vmul.f32 %v4651, 0.2
        %v4684 = vld [vmem:[%s628] sm:$0xff]
        %v4685 = vld [vmem:[%s628 + $0x8] sm:$0xff]
        %v4686 = vld [vmem:[%s628 + $0x10] sm:$0xff]
        %v4687 = vld [vmem:[%s628 + $0x18] sm:$0xff]
        %v4688 = vld [vmem:[%s628 + $0x20] sm:$0xff]
        %v4689 = vld [vmem:[%s628 + $0x28] sm:$0xff]
        %v4690 = vld [vmem:[%s628 + $0x30] sm:$0xff]
        %v4691 = vld [vmem:[%s628 + $0x38] sm:$0xff]
        %v4692 = vld [vmem:[%s628 + $0x40] sm:$0xff]
        %v4693 = vld [vmem:[%s628 + $0x48] sm:$0xff]
        %v4694 = vld [vmem:[%s628 + $0x50] sm:$0xff]
        %v4695 = vld [vmem:[%s628 + $0x58] sm:$0xff]
        %v4696 = vld [vmem:[%s628 + $0x60] sm:$0xff]
        %v4697 = vld [vmem:[%s628 + $0x68] sm:$0xff]
        %v4698 = vld [vmem:[%s628 + $0x70] sm:$0xff]
        %v4699 = vld [vmem:[%s628 + $0x78] sm:$0xff]
        %v4700 = vld [vmem:[%s628 + $0x80] sm:$0xff]
        %v4701 = vld [vmem:[%s628 + $0x88] sm:$0xff]
        %v4702 = vld [vmem:[%s628 + $0x90] sm:$0xff]
        %v4703 = vld [vmem:[%s628 + $0x98] sm:$0xff]
        %v4704 = vld [vmem:[%s628 + $0xa0] sm:$0xff]
        %v4705 = vld [vmem:[%s628 + $0xa8] sm:$0xff]
        %v4706 = vld [vmem:[%s628 + $0xb0] sm:$0xff]
        %v4707 = vld [vmem:[%s628 + $0xb8] sm:$0xff]
        %v4708 = vld [vmem:[%s628 + $0xc0] sm:$0xff]
        %v4709 = vld [vmem:[%s628 + $0xc8] sm:$0xff]
        %v4710 = vld [vmem:[%s628 + $0xd0] sm:$0xff]
        %v4711 = vld [vmem:[%s628 + $0xd8] sm:$0xff]
        %v4712 = vld [vmem:[%s628 + $0xe0] sm:$0xff]
        %v4713 = vld [vmem:[%s628 + $0xe8] sm:$0xff]
        %v4714 = vld [vmem:[%s628 + $0xf0] sm:$0xff]
        %v4715 = vld [vmem:[%s628 + $0xf8] sm:$0xff]
        %v4716 = vpack.c.bf16 %v4653, %v4652
        %v4717 = vpack.c.bf16 %v4655, %v4654
        %v4718 = vpack.c.bf16 %v4657, %v4656
        %v4719 = vpack.c.bf16 %v4659, %v4658
        %v4720 = vpack.c.bf16 %v4661, %v4660
        %v4721 = vpack.c.bf16 %v4663, %v4662
        %v4722 = vpack.c.bf16 %v4665, %v4664
        %v4723 = vpack.c.bf16 %v4667, %v4666
        %v4724 = vpack.c.bf16 %v4669, %v4668
        %v4725 = vpack.c.bf16 %v4671, %v4670
        %v4726 = vpack.c.bf16 %v4673, %v4672
        %v4727 = vpack.c.bf16 %v4675, %v4674
        %v4728 = vpack.c.bf16 %v4677, %v4676
        %v4729 = vpack.c.bf16 %v4679, %v4678
        %v4730 = vpack.c.bf16 %v4681, %v4680
        %v4731 = vpack.c.bf16 %v4683, %v4682
        %v4748 = vunpack.c.l.b16 %v1319
        %v4749 = vunpack.c.l.b16 %v1320
        %v4750 = vunpack.c.l.b16 %v1321
        %v4751 = vunpack.c.l.b16 %v1322
        %v4752 = vunpack.c.l.b16 %v1323
        %v4753 = vunpack.c.l.b16 %v1324
        %v4754 = vunpack.c.l.b16 %v1325
        %v4755 = vunpack.c.l.b16 %v1326
        %v4756 = vunpack.c.l.b16 %v1327
        %v4757 = vunpack.c.l.b16 %v1328
        %v4758 = vunpack.c.l.b16 %v1329
        %v4759 = vunpack.c.l.b16 %v1330
        %v4760 = vunpack.c.l.b16 %v1331
        %v4761 = vunpack.c.l.b16 %v1332
        %v4762 = vunpack.c.l.b16 %v1333
        %v4763 = vunpack.c.l.b16 %v1334
        %v4764 = vpack.c.b16 %v4749, %v4748
        %v4765 = vpack.c.b16 %v4751, %v4750
        %v4766 = vpack.c.b16 %v4753, %v4752
        %v4767 = vpack.c.b16 %v4755, %v4754
        %v4768 = vpack.c.b16 %v4757, %v4756
        %v4769 = vpack.c.b16 %v4759, %v4758
        %v4770 = vpack.c.b16 %v4761, %v4760
        %v4771 = vpack.c.b16 %v4763, %v4762
        %4780 = vmatprep.subr.bf16.mxu0 0
        %4781 = vmatpush1.bf16.msra.mxu0 %v4764
        %4782 = vmatprep.subr.bf16.mxu0 0
        %4783 = vmatpush1.bf16.msra.mxu0 %v4765
        %4784 = vmatprep.subr.bf16.mxu0 0
        %4785 = vmatpush1.bf16.msra.mxu0 %v4766
        %4786 = vmatprep.subr.bf16.mxu0 0
        %4787 = vmatpush1.bf16.msra.mxu0 %v4767
        %4788 = vmatprep.subr.bf16.mxu0 0
        %4789 = vmatpush1.bf16.msra.mxu0 %v4768
        %4790 = vmatprep.subr.bf16.mxu0 0
        %4791 = vmatpush1.bf16.msra.mxu0 %v4769
        %4792 = vmatprep.subr.bf16.mxu0 0
        %4793 = vmatpush1.bf16.msra.mxu0 %v4770
        %4794 = vmatprep.subr.bf16.mxu0 0
        %4795 = vmatpush1.bf16.msra.mxu0 %v4771
        %4796 = vmatprep.subr.bf16.mxu0 0
        %4797 = vmatpush1.bf16.msra.mxu0 0
        %4798 = vmatprep.subr.bf16.mxu0 0
        %4799 = vmatpush1.bf16.msra.mxu0 0
        %4800 = vmatprep.subr.bf16.mxu0 0
        %4801 = vmatpush1.bf16.msra.mxu0 0
        %4802 = vmatprep.subr.bf16.mxu0 0
        %4803 = vmatpush1.bf16.msra.mxu0 0
        %4804 = vmatprep.subr.bf16.mxu0 0
        %4805 = vmatpush1.bf16.msra.mxu0 0
        %4806 = vmatprep.subr.bf16.mxu0 0
        %4807 = vmatpush1.bf16.msra.mxu0 0
        %4808 = vmatprep.subr.bf16.mxu0 0
        %4809 = vmatpush1.bf16.msra.mxu0 0
        %4810 = vmatprep.subr.bf16.mxu0 0
        %4811 = vmatpush1.bf16.msra.mxu0 0
        %4812 = vmatprep.mubr.bf16.mxu0 0
        %4813 = vmatmul.mubr.bf16.gmra.mrb[0].mxu0 %v4716
        %v4814 = vpop.f32.mrb[0].mxu0
        %v4815 = vadd.f32 0.0, %v4814
        %v4816 = vpop.f32.mrb[0].mxu0
        %v4817 = vpop.f32.mrb[0].mxu0
        %v4818 = vadd.f32 0.0, %v4817
        %v4819 = vpop.f32.mrb[0].mxu0
        %4820 = vmatprep.mubr.bf16.mxu0 0
        %4821 = vmatmul.mubr.bf16.gmra.mrb[0].mxu0 %v4717
        %v4822 = vpop.f32.mrb[0].mxu0
        %v4823 = vadd.f32 0.0, %v4822
        %v4824 = vpop.f32.mrb[0].mxu0
        %v4825 = vpop.f32.mrb[0].mxu0
        %v4826 = vadd.f32 0.0, %v4825
        %v4827 = vpop.f32.mrb[0].mxu0
        %4828 = vmatprep.mubr.bf16.mxu0 0
        %4829 = vmatmul.mubr.bf16.gmra.mrb[0].mxu0 %v4718
        %v4830 = vpop.f32.mrb[0].mxu0
        %v4831 = vadd.f32 0.0, %v4830
        %v4832 = vpop.f32.mrb[0].mxu0
        %v4833 = vpop.f32.mrb[0].mxu0
        %v4834 = vadd.f32 0.0, %v4833
        %v4835 = vpop.f32.mrb[0].mxu0
        %4836 = vmatprep.mubr.bf16.mxu0 0
        %4837 = vmatmul.mubr.bf16.gmra.mrb[0].mxu0 %v4719
        %v4838 = vpop.f32.mrb[0].mxu0
        %v4839 = vadd.f32 0.0, %v4838
        %v4840 = vpop.f32.mrb[0].mxu0
        %v4841 = vpop.f32.mrb[0].mxu0
        %v4842 = vadd.f32 0.0, %v4841
        %v4843 = vpop.f32.mrb[0].mxu0
        %4844 = vmatprep.mubr.bf16.mxu0 0
        %4845 = vmatmul.mubr.bf16.gmra.mrb[0].mxu0 %v4720
        %v4846 = vpop.f32.mrb[0].mxu0
        %v4847 = vadd.f32 0.0, %v4846
        %v4848 = vpop.f32.mrb[0].mxu0
        %v4849 = vpop.f32.mrb[0].mxu0
        %v4850 = vadd.f32 0.0, %v4849
        %v4851 = vpop.f32.mrb[0].mxu0
        %4852 = vmatprep.mubr.bf16.mxu0 0
        %4853 = vmatmul.mubr.bf16.gmra.mrb[0].mxu0 %v4721
        %v4854 = vpop.f32.mrb[0].mxu0
        %v4855 = vadd.f32 0.0, %v4854
        %v4856 = vpop.f32.mrb[0].mxu0
        %v4857 = vpop.f32.mrb[0].mxu0
        %v4858 = vadd.f32 0.0, %v4857
        %v4859 = vpop.f32.mrb[0].mxu0
        %4860 = vmatprep.mubr.bf16.mxu0 0
        %4861 = vmatmul.mubr.bf16.gmra.mrb[0].mxu0 %v4722
        %v4862 = vpop.f32.mrb[0].mxu0
        %v4863 = vadd.f32 0.0, %v4862
        %v4864 = vpop.f32.mrb[0].mxu0
        %v4865 = vpop.f32.mrb[0].mxu0
        %v4866 = vadd.f32 0.0, %v4865
        %v4867 = vpop.f32.mrb[0].mxu0
        %4868 = vmatprep.mubr.bf16.mxu0 0
        %4869 = vmatmul.mubr.bf16.gmra.mrb[0].mxu0 %v4723
        %v4870 = vpop.f32.mrb[0].mxu0
        %v4871 = vadd.f32 0.0, %v4870
        %v4872 = vpop.f32.mrb[0].mxu0
        %v4873 = vpop.f32.mrb[0].mxu0
        %v4874 = vadd.f32 0.0, %v4873
        %v4875 = vpop.f32.mrb[0].mxu0
        %4876 = vmatprep.mubr.bf16.mxu0 0
        %4877 = vmatmul.mubr.bf16.gmra.mrb[0].mxu0 %v4724
        %v4878 = vpop.f32.mrb[0].mxu0
        %v4879 = vadd.f32 0.0, %v4878
        %v4880 = vpop.f32.mrb[0].mxu0
        %v4881 = vpop.f32.mrb[0].mxu0
        %v4882 = vadd.f32 0.0, %v4881
        %v4883 = vpop.f32.mrb[0].mxu0
        %4884 = vmatprep.mubr.bf16.mxu0 0
        %4885 = vmatmul.mubr.bf16.gmra.mrb[0].mxu0 %v4725
        %v4886 = vpop.f32.mrb[0].mxu0
        %v4887 = vadd.f32 0.0, %v4886
        %v4888 = vpop.f32.mrb[0].mxu0
        %v4889 = vpop.f32.mrb[0].mxu0
        %v4890 = vadd.f32 0.0, %v4889
        %v4891 = vpop.f32.mrb[0].mxu0
        %4892 = vmatprep.mubr.bf16.mxu0 0
        %4893 = vmatmul.mubr.bf16.gmra.mrb[0].mxu0 %v4726
        %v4894 = vpop.f32.mrb[0].mxu0
        %v4895 = vadd.f32 0.0, %v4894
        %v4896 = vpop.f32.mrb[0].mxu0
        %v4897 = vpop.f32.mrb[0].mxu0
        %v4898 = vadd.f32 0.0, %v4897
        %v4899 = vpop.f32.mrb[0].mxu0
        %4900 = vmatprep.mubr.bf16.mxu0 0
        %4901 = vmatmul.mubr.bf16.gmra.mrb[0].mxu0 %v4727
        %v4902 = vpop.f32.mrb[0].mxu0
        %v4903 = vadd.f32 0.0, %v4902
        %v4904 = vpop.f32.mrb[0].mxu0
        %v4905 = vpop.f32.mrb[0].mxu0
        %v4906 = vadd.f32 0.0, %v4905
        %v4907 = vpop.f32.mrb[0].mxu0
        %4908 = vmatprep.mubr.bf16.mxu0 0
        %4909 = vmatmul.mubr.bf16.gmra.mrb[0].mxu0 %v4728
        %v4910 = vpop.f32.mrb[0].mxu0
        %v4911 = vadd.f32 0.0, %v4910
        %v4912 = vpop.f32.mrb[0].mxu0
        %v4913 = vpop.f32.mrb[0].mxu0
        %v4914 = vadd.f32 0.0, %v4913
        %v4915 = vpop.f32.mrb[0].mxu0
        %4916 = vmatprep.mubr.bf16.mxu0 0
        %4917 = vmatmul.mubr.bf16.gmra.mrb[0].mxu0 %v4729
        %v4918 = vpop.f32.mrb[0].mxu0
        %v4919 = vadd.f32 0.0, %v4918
        %v4920 = vpop.f32.mrb[0].mxu0
        %v4921 = vpop.f32.mrb[0].mxu0
        %v4922 = vadd.f32 0.0, %v4921
        %v4923 = vpop.f32.mrb[0].mxu0
        %4924 = vmatprep.mubr.bf16.mxu0 0
        %4925 = vmatmul.mubr.bf16.gmra.mrb[0].mxu0 %v4730
        %v4926 = vpop.f32.mrb[0].mxu0
        %v4927 = vadd.f32 0.0, %v4926
        %v4928 = vpop.f32.mrb[0].mxu0
        %v4929 = vpop.f32.mrb[0].mxu0
        %v4930 = vadd.f32 0.0, %v4929
        %v4931 = vpop.f32.mrb[0].mxu0
        %4932 = vmatprep.mubr.bf16.mxu0 0
        %4933 = vmatmul.mubr.bf16.gmra.mrb[0].mxu0 %v4731
        %v4934 = vpop.f32.mrb[0].mxu0
        %v4935 = vadd.f32 0.0, %v4934
        %v4936 = vpop.f32.mrb[0].mxu0
        %v4937 = vpop.f32.mrb[0].mxu0
        %v4938 = vadd.f32 0.0, %v4937
        %v4939 = vpop.f32.mrb[0].mxu0
        %4940 = vdwg.mxu0
        %v4941 = vadd.f32 %v4684, %v4815
        %v4942 = vadd.f32 %v4685, %v4818
        %v4943 = vadd.f32 %v4686, %v4823
        %v4944 = vadd.f32 %v4687, %v4826
        %v4945 = vadd.f32 %v4688, %v4831
        %v4946 = vadd.f32 %v4689, %v4834
        %v4947 = vadd.f32 %v4690, %v4839
        %v4948 = vadd.f32 %v4691, %v4842
        %v4949 = vadd.f32 %v4692, %v4847
        %v4950 = vadd.f32 %v4693, %v4850
        %v4951 = vadd.f32 %v4694, %v4855
        %v4952 = vadd.f32 %v4695, %v4858
        %v4953 = vadd.f32 %v4696, %v4863
        %v4954 = vadd.f32 %v4697, %v4866
        %v4955 = vadd.f32 %v4698, %v4871
        %v4956 = vadd.f32 %v4699, %v4874
        %v4957 = vadd.f32 %v4700, %v4879
        %v4958 = vadd.f32 %v4701, %v4882
        %v4959 = vadd.f32 %v4702, %v4887
        %v4960 = vadd.f32 %v4703, %v4890
        %v4961 = vadd.f32 %v4704, %v4895
        %v4962 = vadd.f32 %v4705, %v4898
        %v4963 = vadd.f32 %v4706, %v4903
        %v4964 = vadd.f32 %v4707, %v4906
        %v4965 = vadd.f32 %v4708, %v4911
        %v4966 = vadd.f32 %v4709, %v4914
        %v4967 = vadd.f32 %v4710, %v4919
        %v4968 = vadd.f32 %v4711, %v4922
        %v4969 = vadd.f32 %v4712, %v4927
        %v4970 = vadd.f32 %v4713, %v4930
        %v4971 = vadd.f32 %v4714, %v4935
        %v4972 = vadd.f32 %v4715, %v4938
        %4973 = vst [vmem:[%s628] sm:$0xff] %v4941
        %4974 = vst [vmem:[%s628 + $0x8] sm:$0xff] %v4942
        %4975 = vst [vmem:[%s628 + $0x10] sm:$0xff] %v4943
        %4976 = vst [vmem:[%s628 + $0x18] sm:$0xff] %v4944
        %4977 = vst [vmem:[%s628 + $0x20] sm:$0xff] %v4945
        %4978 = vst [vmem:[%s628 + $0x28] sm:$0xff] %v4946
        %4979 = vst [vmem:[%s628 + $0x30] sm:$0xff] %v4947
        %4980 = vst [vmem:[%s628 + $0x38] sm:$0xff] %v4948
        %4981 = vst [vmem:[%s628 + $0x40] sm:$0xff] %v4949
        %4982 = vst [vmem:[%s628 + $0x48] sm:$0xff] %v4950
        %4983 = vst [vmem:[%s628 + $0x50] sm:$0xff] %v4951
        %4984 = vst [vmem:[%s628 + $0x58] sm:$0xff] %v4952
        %4985 = vst [vmem:[%s628 + $0x60] sm:$0xff] %v4953
        %4986 = vst [vmem:[%s628 + $0x68] sm:$0xff] %v4954
        %4987 = vst [vmem:[%s628 + $0x70] sm:$0xff] %v4955
        %4988 = vst [vmem:[%s628 + $0x78] sm:$0xff] %v4956
        %4989 = vst [vmem:[%s628 + $0x80] sm:$0xff] %v4957
        %4990 = vst [vmem:[%s628 + $0x88] sm:$0xff] %v4958
        %4991 = vst [vmem:[%s628 + $0x90] sm:$0xff] %v4959
        %4992 = vst [vmem:[%s628 + $0x98] sm:$0xff] %v4960
        %4993 = vst [vmem:[%s628 + $0xa0] sm:$0xff] %v4961
        %4994 = vst [vmem:[%s628 + $0xa8] sm:$0xff] %v4962
        %4995 = vst [vmem:[%s628 + $0xb0] sm:$0xff] %v4963
        %4996 = vst [vmem:[%s628 + $0xb8] sm:$0xff] %v4964
        %4997 = vst [vmem:[%s628 + $0xc0] sm:$0xff] %v4965
        %4998 = vst [vmem:[%s628 + $0xc8] sm:$0xff] %v4966
        %4999 = vst [vmem:[%s628 + $0xd0] sm:$0xff] %v4967
        %5000 = vst [vmem:[%s628 + $0xd8] sm:$0xff] %v4968
        %5001 = vst [vmem:[%s628 + $0xe0] sm:$0xff] %v4969
        %5002 = vst [vmem:[%s628 + $0xe8] sm:$0xff] %v4970
        %5003 = vst [vmem:[%s628 + $0xf0] sm:$0xff] %v4971
        %5004 = vst [vmem:[%s628 + $0xf8] sm:$0xff] %v4972
        %s5005 = sand.u32 %s292, 1
        %s5006 = scalar_lea.sflag [#allocation5], %s5005
        %s5007 = sand.u32 %s292, 1
        %s5008 = smul.addr %s5007, 256
        %s5009 = scalar_lea.vmem [#allocation18], %s5008
        // Predicated region
        $region105: #{diff_transformer_layer.2} parent=59 // pred_check
          %p5010 = pneg %p302
        $region106: #{diff_transformer_layer.2} parent=59 // pred_check_branch
          %5012 = sbr.rel (%p5010) target = $region108
        $region107: #{diff_transformer_layer.2} parent=59 // pred_region
          %s5014 = ssub.s32 4096, 4096
          %5015 = vsyncadd %s5006, %s5014
          %s5016 = smul.addr %s36, 32
          %s5017 = smul.addr %s5016, 128
          %s5018 = scalar_lea.hbm %s10, %s5017
          %s5019 = sshll.u32 %s5009, 4
          %s5020 = int_to_ptr.vmem [resolvable:$true] %s5019
          %5025 = dma.vmem_to_hbm [thread:$0]  %s5020, 4096, %s5018, %s5006, 128, 128, 8
        $region108: #{diff_transformer_layer.2} parent=59 // pred_fallthru
          _
      $region60: #{diff_transformer_layer.2} parent=5 // pred_fallthru
        _
      %p5026 = scmp.le.s32.totalorder 2, %s27
      // Predicated region
      $region109: #{diff_transformer_layer.2} parent=5 // pred_check
        %p5027 = pneg %p5026
      $region110: #{diff_transformer_layer.2} parent=5 // pred_check_branch
        %5029 = sbr.rel (%p5027) target = $region112
      $region111: #{diff_transformer_layer.2} parent=5 // pred_region
        %s5030 = ssub.s32 %s27, 2
        // Predicated region
        $region113: #{diff_transformer_layer.2} parent=111 // pred_check
          %p5031 = pneg %p308
        $region114: #{diff_transformer_layer.2} parent=111 // pred_check_branch
          %5033 = sbr.rel (%p5031) target = $region116
        $region115: #{diff_transformer_layer.2} parent=111 // pred_region
          %s5034 = sand.u32 %s293, 1
          %s5035 = scalar_lea.sflag [#allocation5], %s5034
          %s5036 = sand.u32 %s293, 1
          %s5037 = smul.addr %s5036, 256
          %s5038 = scalar_lea.vmem [#allocation18], %s5037
          %5039 = dma.done %s5035, 4096
        $region116: #{diff_transformer_layer.2} parent=111 // pred_fallthru
          _
      $region112: #{diff_transformer_layer.2} parent=5 // pred_fallthru
        _
    $region6: #{diff_transformer_layer.2} parent=1 // loop_footer
      %s31 = sadd.s32 1, %s27
    $region7: #{diff_transformer_layer.2} parent=1 // loop_footer_branch
      %26 = sbr.rel target = $region3
    $region8: #{diff_transformer_layer.2} parent=1 // loop_exit
      _
    %5040 = vsyncpa [#allocation4], 1
    %s5041 = scalar_lea.sflag [#allocation4], 1
    %5042 = vsyncpa %s5041, 1
    %5043 = vsyncpa [#allocation9], 1
    %s5044 = scalar_lea.sflag [#allocation9], 1
    %5045 = vsyncpa %s5044, 1
    %5046 = vsyncpa [#allocation12], 1
    %5047 = vsyncpa [#allocation5], 1
    %s5048 = scalar_lea.sflag [#allocation5], 1
    %5049 = vsyncpa %s5048, 1
    %5050 = vsyncpa [#allocation6], 1
    %s5051 = scalar_lea.sflag [#allocation6], 1
    %5052 = vsyncpa %s5051, 1

</llo_original>
